<compile_context>
chip_gen: v7x
topology: tpu7x:2x2x1
jax: 0.10.0
libtpu: 0.0.40
codegen_flags: <defaults>
</compile_context>

<pallas_src>
import functools

import jax
import jax.numpy as jnp
from jax.experimental import pallas as pl
from jax.experimental.pallas import tpu as pltpu

NEG_SLOPE = 0.01    # F.leaky_relu default
BN_EPS = 1e-5       # nn.BatchNorm3d default
VMEM_LIMIT = 32 * 1024 * 1024


# ----------------------------- Pallas kernels -----------------------------

def _bn_lrelu(conv, gamma, beta, minv):
    """Training-mode BatchNorm (batch stats over rows) + LeakyReLU, in f32."""
    s = jnp.sum(conv, axis=0, keepdims=True)
    ss = jnp.sum(conv * conv, axis=0, keepdims=True)
    mean = s * minv
    var = jnp.maximum(ss * minv - mean * mean, 0.0)      # biased var (train BN)
    scale = gamma * jax.lax.rsqrt(var + BN_EPS)
    shift = beta - mean * scale
    y = conv * scale + shift
    return jnp.where(y >= 0.0, y, NEG_SLOPE * y)


def _bconv_kernel(m, a_ref, b_ref, gamma_ref, beta_ref, o_ref):
    """Fused conv(matmul) + batch-stat BN + LeakyReLU for one BasicConv3d."""
    conv = jnp.dot(a_ref[...], b_ref[...], preferred_element_type=jnp.float32)
    # Zero-padded rows of A contribute 0 to both sums; divisor is the true m.
    o_ref[...] = _bn_lrelu(conv, gamma_ref[...], beta_ref[...], 1.0 / float(m))


def _bconv_chain_kernel(m, mp, a_ref, b1_ref, g1_ref, be1_ref,
                        b2_ref, g2_ref, be2_ref, o_ref):
    """Fused (conv + BN + LReLU) -> (1x1 conv + BN + LReLU) chain."""
    minv = 1.0 / float(m)
    c1 = jnp.dot(a_ref[...], b1_ref[...], preferred_element_type=jnp.float32)
    y1 = _bn_lrelu(c1, g1_ref[...], be1_ref[...], minv)
    if mp != m:
        # Padded rows would otherwise be non-zero after BN shift and pollute
        # the second conv's batch statistics — zero them out.
        rows = jax.lax.broadcasted_iota(jnp.int32, y1.shape, 0)
        y1 = jnp.where(rows < m, y1, 0.0)
    c2 = jnp.dot(y1.astype(jnp.bfloat16), b2_ref[...],
                 preferred_element_type=jnp.float32)
    o_ref[...] = _bn_lrelu(c2, g2_ref[...], be2_ref[...], minv)


def _full_spec(shape):
    return pl.BlockSpec(shape, lambda i: tuple(0 for _ in shape))


def _params(**kw):
    return pltpu.CompilerParams(dimension_semantics=("arbitrary",),
                                vmem_limit_bytes=VMEM_LIMIT, **kw)


def fused_conv_bn_lrelu(patches_p, wmat, gamma, beta, m):
    """patches_p: (Mp, K) f32 (rows >= m zero-padded); wmat: (K, Cout) f32."""
    mp, k = patches_p.shape
    cout = wmat.shape[1]
    kern = functools.partial(_bconv_kernel, m)
    return pl.pallas_call(
        kern,
        out_shape=jax.ShapeDtypeStruct((mp, cout), jnp.float32),
        grid=(1,),
        in_specs=[_full_spec((mp, k)), _full_spec((k, cout)),
                  _full_spec((1, cout)), _full_spec((1, cout))],
        out_specs=_full_spec((mp, cout)),
        compiler_params=_params(),
    )(patches_p.astype(jnp.bfloat16), wmat.astype(jnp.bfloat16),
      gamma.reshape(1, cout).astype(jnp.float32),
      beta.reshape(1, cout).astype(jnp.float32))


def fused_conv_chain(patches_p, w1, g1, b1, w2, g2, b2, m):
    """Two stacked BasicConv3d (second one 1x1) in one pallas_call."""
    mp, k = patches_p.shape
    c1 = w1.shape[1]
    c2 = w2.shape[1]
    kern = functools.partial(_bconv_chain_kernel, m, mp)
    return pl.pallas_call(
        kern,
        out_shape=jax.ShapeDtypeStruct((mp, c2), jnp.float32),
        grid=(1,),
        in_specs=[_full_spec((mp, k)),
                  _full_spec((k, c1)), _full_spec((1, c1)), _full_spec((1, c1)),
                  _full_spec((c1, c2)), _full_spec((1, c2)), _full_spec((1, c2))],
        out_specs=_full_spec((mp, c2)),
        compiler_params=_params(),
    )(patches_p.astype(jnp.bfloat16),
      w1.astype(jnp.bfloat16),
      g1.reshape(1, c1).astype(jnp.float32), b1.reshape(1, c1).astype(jnp.float32),
      w2.astype(jnp.bfloat16),
      g2.reshape(1, c2).astype(jnp.float32), b2.reshape(1, c2).astype(jnp.float32))


# ----------------------------- conv glue -----------------------------

def _pad_rows(a, mult=8):
    m = a.shape[0]
    mp = ((m + mult - 1) // mult) * mult
    if mp != m:
        a = jnp.pad(a, ((0, mp - m), (0, 0)))
    return a


def _im2col(x, k, stride, pad):
    # x: (N, D, H, W, C) -> (N*Do*Ho*Wo, k^3*C), column order (kd, kh, kw, c)
    # TODO(synk): for large spatial inputs, move this into the kernel as a
    # tap-axis grid (shifted-window accumulation) instead of an XLA gather.
    n, d, h, w, c = x.shape
    xp = jnp.pad(x, ((0, 0), (pad, pad), (pad, pad), (pad, pad), (0, 0)))
    do = (d + 2 * pad - k) // stride + 1
    ho = (h + 2 * pad - k) // stride + 1
    wo = (w + 2 * pad - k) // stride + 1
    cols = []
    for kd in range(k):
        for kh in range(k):
            for kw in range(k):
                cols.append(xp[:, kd:kd + stride * do:stride,
                               kh:kh + stride * ho:stride,
                               kw:kw + stride * wo:stride, :])
    p = jnp.stack(cols, axis=4)                      # (n, do, ho, wo, k^3, c)
    return p.reshape(n * do * ho * wo, k * k * k * c), (n, do, ho, wo)


def _wmat(w):
    # (cout, cin, k, k, k) (PyTorch layout) -> (k^3*cin, cout), rows (kd,kh,kw,c)
    cout, cin, k = w.shape[0], w.shape[1], w.shape[2]
    return jnp.transpose(w, (2, 3, 4, 1, 0)).reshape(k * k * k * cin, cout)


def _patches_for(x, k, stride, pad):
    if k == 1 and stride == 1 and pad == 0:
        n, d, h, ww, c = x.shape
        return x.reshape(n * d * h * ww, c), (n, d, h, ww)
    return _im2col(x, k, stride, pad)


def basic_conv3d(x, params, stride, pad):
    # Conv3d(bias=False) + BatchNorm3d (batch stats) + LeakyReLU(0.01), fused.
    w = params["w"]
    cout, k = w.shape[0], w.shape[2]
    patches, shape_out = _patches_for(x, k, stride, pad)
    m = patches.shape[0]
    y_p = fused_conv_bn_lrelu(_pad_rows(patches), _wmat(w),
                              params["gamma"], params["beta"], m)
    n, do, ho, wo = shape_out
    return y_p[:m].reshape(n, do, ho, wo, cout)


def conv_then_1x1(x, p_a, stride, pad, p_b):
    # BasicConv3d(p_a) followed by BasicConv3d(p_b, kernel=1) in one kernel.
    w_a = p_a["w"]
    k = w_a.shape[2]
    cout_b = p_b["w"].shape[0]
    patches, shape_out = _patches_for(x, k, stride, pad)
    m = patches.shape[0]
    y_p = fused_conv_chain(_pad_rows(patches),
                           _wmat(w_a), p_a["gamma"], p_a["beta"],
                           _wmat(p_b["w"]), p_b["gamma"], p_b["beta"], m)
    n, do, ho, wo = shape_out
    return y_p[:m].reshape(n, do, ho, wo, cout_b)


# ----------------------------- inception block -----------------------------

def _embed_center(w_small, k_small, k_big):
    # Embed a (cout, cin, ks, ks, ks) kernel at the center of a kb^3 kernel.
    cout, cin = w_small.shape[0], w_small.shape[1]
    off = (k_big - k_small) // 2
    big = jnp.zeros((cout, cin, k_big, k_big, k_big), w_small.dtype)
    return big.at[:, :, off:off + k_small, off:off + k_small,
                  off:off + k_small].set(w_small)


def inception_e(x, p):
    # Fold all four branches into one 5x5x5 conv (pad=2, stride=1):
    #   1x1 -> center tap; 3x3 -> center 3^3 region; 5x5 -> full;
    #   avg_pool3d(3,1,1,count_include_pad=True) + 1x1 -> w/27 over center 3^3.
    # Output channel order matches torch.cat([b1, b3, b5, b_pool], dim=1),
    # and batch stats per channel are identical to per-branch BatchNorms.
    w1 = _embed_center(p["b1"]["w"], 1, 5)
    w3 = _embed_center(p["b3"]["w"], 3, 5)
    w5 = p["b5"]["w"]
    wp = _embed_center(jnp.tile(p["bp"]["w"], (1, 1, 3, 3, 3)) / 27.0, 3, 5)
    fused = {
        "w": jnp.concatenate([w1, w3, w5, wp], axis=0),
        "gamma": jnp.concatenate([p["b1"]["gamma"], p["b3"]["gamma"],
                                  p["b5"]["gamma"], p["bp"]["gamma"]]),
        "beta": jnp.concatenate([p["b1"]["beta"], p["b3"]["beta"],
                                 p["b5"]["beta"], p["bp"]["beta"]]),
    }
    return basic_conv3d(x, fused, 1, 2)


# ----------------------------- model structure -----------------------------

def inception_forward(x, params, reg=0):
    x = basic_conv3d(x, params["convm1"], 1, 1)
    x = inception_e(x, params["incep1"])
    x = basic_conv3d(x, params["conv0"], 2, 1)            # stride-2 downsample
    x = basic_conv3d(x, params["conv1"], 1, 1)
    x = inception_e(x, params["incep2"])
    x = conv_then_1x1(x, params["conv2"], 1, 1, params["conv3"])  # fused tail
    if reg:
        x = jnp.squeeze(x, axis=-1)                        # matches torch squeeze(1)
    return x


# ----------------------------- parameters -----------------------------

def make_bconv(key, cin, cout, k):
    w = jax.random.normal(key, (cout, cin, k, k, k), jnp.float32) * 0.1
    return {"w": w,
            "gamma": jnp.ones((cout,), jnp.float32),   # BN default affine
            "beta": jnp.zeros((cout,), jnp.float32)}


def make_incep(key, cin, c1, c3, c5, cp):
    k1, k3, k5, kp = jax.random.split(key, 4)
    return {"b1": make_bconv(k1, cin, c1, 1),
            "b3": make_bconv(k3, cin, c3, 3),
            "b5": make_bconv(k5, cin, c5, 5),
            "bp": make_bconv(kp, cin, cp, 1)}


def make_inception_params(key, channels, c1, c3, c5, reg=0):
    ks = jax.random.split(key, 7)
    p = {}
    p["convm1"] = make_bconv(ks[0], channels, 4, 3)
    p["incep1"] = make_incep(ks[1], 4, c1 // 2, c3 // 2, c5 // 2, 2)
    conv_in = c1 // 2 + c3 // 2 + c5 // 2 + 2
    p["conv0"] = make_bconv(ks[2], conv_in, conv_in + 6, 3)
    p["conv1"] = make_bconv(ks[3], conv_in + 6, 8, 3)
    p["incep2"] = make_incep(ks[4], 8, c1, c3, c5, 3)
    conv_in2 = c1 + c3 + c5 + 3
    p["conv2"] = make_bconv(ks[5], conv_in2, conv_in2 // 2, 3)
    dim_out = 1 if reg else 2
    p["conv3"] = make_bconv(ks[6], conv_in2 // 2, dim_out, 1)
    return p


# ----------------------------- main -----------------------------

if __name__ == "__main__":
    key = jax.random.PRNGKey(0)
    kx, kp = jax.random.split(key)

    channels, c1, c3, c5 = 3, 4, 6, 8
    # PyTorch-layout input NCDHW: (batch=2, channels=3, D=H=W=8)
    x_ncdhw = jax.random.normal(kx, (2, channels, 8, 8, 8), jnp.float32)
    params = make_inception_params(kp, channels, c1, c3, c5, reg=0)

    fwd = jax.jit(functools.partial(inception_forward, reg=0))
    x_ndhwc = jnp.transpose(x_ncdhw, (0, 2, 3, 4, 1))
    y_ndhwc = fwd(x_ndhwc, params)
    y = jnp.transpose(y_ndhwc, (0, 4, 1, 2, 3))   # back to NCDHW
    jax.block_until_ready(y)

    assert y.shape == (2, 2, 4, 4, 4), y.shape     # stride-2 conv halves D/H/W
    assert bool(jnp.all(jnp.isfinite(y)))
    print("KERNEL_OK")
</pallas_src>

<mosaic_0001>
module attributes {stable_mosaic.version = 11 : i64} {
  func.func @_bconv_kernel(%arg0: i32, %arg1: memref<1024x81xbf16, #tpu.memory_space<vmem>>, %arg2: memref<81x4xbf16, #tpu.memory_space<vmem>>, %arg3: memref<1x4xf32, #tpu.memory_space<vmem>>, %arg4: memref<1x4xf32, #tpu.memory_space<vmem>>, %arg5: memref<1024x4xf32, #tpu.memory_space<vmem>>) attributes {dimension_semantics = [#tpu.dimension_semantics<arbitrary>], iteration_bounds = array<i64: 1>, scalar_prefetch = 0 : i64, scratch_operands = 0 : i64, tpu.core_type = #tpu.core_type<tc>, window_params = [{pipeline_mode = #tpu.pipeline_mode<synchronous>, transform_indices = @transform_0, window_bounds = array<i64: 1024, 81>}, {pipeline_mode = #tpu.pipeline_mode<synchronous>, transform_indices = @transform_1, window_bounds = array<i64: 81, 4>}, {pipeline_mode = #tpu.pipeline_mode<synchronous>, transform_indices = @transform_2, window_bounds = array<i64: 1, 4>}, {pipeline_mode = #tpu.pipeline_mode<synchronous>, transform_indices = @transform_3, window_bounds = array<i64: 1, 4>}, {pipeline_mode = #tpu.pipeline_mode<synchronous>, transform_indices = @transform_4, window_bounds = array<i64: 1024, 4>}]} {
    %c0 = arith.constant 0 : index
    %c0_0 = arith.constant 0 : index
    %0 = vector.load %arg1[%c0, %c0_0] : memref<1024x81xbf16, #tpu.memory_space<vmem>>, vector<1024x81xbf16>
    %c0_1 = arith.constant 0 : index
    %c0_2 = arith.constant 0 : index
    %1 = vector.load %arg2[%c0_1, %c0_2] : memref<81x4xbf16, #tpu.memory_space<vmem>>, vector<81x4xbf16>
    %cst = arith.constant dense<0.000000e+00> : vector<1024x4xf32>
    %2 = tpu.matmul %0, %1, %cst {dimension_numbers = #tpu.dot_dimension_numbers<[1], [0], [0], [1], [0, 0, 1, 1], [], []>} : vector<1024x81xbf16>, vector<81x4xbf16>, vector<1024x4xf32> -> vector<1024x4xf32>
    %c0_3 = arith.constant 0 : index
    %c0_4 = arith.constant 0 : index
    %3 = vector.load %arg3[%c0_3, %c0_4] : memref<1x4xf32, #tpu.memory_space<vmem>>, vector<1x4xf32>
    %c0_5 = arith.constant 0 : index
    %c0_6 = arith.constant 0 : index
    %4 = vector.load %arg4[%c0_5, %c0_6] : memref<1x4xf32, #tpu.memory_space<vmem>>, vector<1x4xf32>
    %cst_7 = arith.constant dense<0.000000e+00> : vector<4xf32>
    %5 = vector.multi_reduction <add>, %2, %cst_7 [0] : vector<1024x4xf32> to vector<4xf32>
    %6 = vector.shape_cast %5 : vector<4xf32> to vector<1x4xf32>
    %7 = arith.mulf %2, %2 : vector<1024x4xf32>
    %cst_8 = arith.constant dense<0.000000e+00> : vector<4xf32>
    %8 = vector.multi_reduction <add>, %7, %cst_8 [0] : vector<1024x4xf32> to vector<4xf32>
    %9 = vector.shape_cast %8 : vector<4xf32> to vector<1x4xf32>
    %cst_9 = arith.constant 9.765625E-4 : f32
    %10 = vector.broadcast %cst_9 : f32 to vector<1x4xf32>
    %11 = arith.mulf %6, %10 : vector<1x4xf32>
    %cst_10 = arith.constant 9.765625E-4 : f32
    %12 = vector.broadcast %cst_10 : f32 to vector<1x4xf32>
    %13 = arith.mulf %9, %12 : vector<1x4xf32>
    %14 = arith.mulf %11, %11 : vector<1x4xf32>
    %15 = arith.subf %13, %14 : vector<1x4xf32>
    %cst_11 = arith.constant 0.000000e+00 : f32
    %16 = vector.broadcast %cst_11 : f32 to vector<1x4xf32>
    %17 = arith.maximumf %15, %16 : vector<1x4xf32>
    %cst_12 = arith.constant 9.99999974E-6 : f32
    %18 = vector.broadcast %cst_12 : f32 to vector<1x4xf32>
    %19 = arith.addf %17, %18 : vector<1x4xf32>
    %20 = math.rsqrt %19 : vector<1x4xf32>
    %21 = arith.mulf %3, %20 : vector<1x4xf32>
    %22 = arith.mulf %11, %21 : vector<1x4xf32>
    %23 = arith.subf %4, %22 : vector<1x4xf32>
    %24 = vector.broadcast %21 : vector<1x4xf32> to vector<1024x4xf32>
    %25 = arith.mulf %2, %24 : vector<1024x4xf32>
    %26 = vector.broadcast %23 : vector<1x4xf32> to vector<1024x4xf32>
    %27 = arith.addf %25, %26 : vector<1024x4xf32>
    %cst_13 = arith.constant 0.000000e+00 : f32
    %28 = vector.broadcast %cst_13 : f32 to vector<1024x4xf32>
    %29 = arith.cmpf oge, %27, %28 : vector<1024x4xf32>
    %cst_14 = arith.constant 0.00999999977 : f32
    %30 = vector.broadcast %cst_14 : f32 to vector<1024x4xf32>
    %31 = arith.mulf %30, %27 : vector<1024x4xf32>
    %32 = arith.select %29, %27, %31 : vector<1024x4xi1>, vector<1024x4xf32>
    %c0_15 = arith.constant 0 : index
    %c0_16 = arith.constant 0 : index
    %33 = vector.load %arg5[%c0_15, %c0_16] : memref<1024x4xf32, #tpu.memory_space<vmem>>, vector<1024x4xf32>
    tpu.vector_store %arg5[%c0_15, %c0_16], %32 {strides = array<i32>} : memref<1024x4xf32, #tpu.memory_space<vmem>>, vector<1024x4xf32>,
    return
  }
  func.func @transform_0(%arg0: i32) -> (i32, i32) {
    %c0_i32 = arith.constant 0 : i32
    %c0_i32_0 = arith.constant 0 : i32
    %c0_i32_1 = arith.constant 0 : i32
    return %c0_i32, %c0_i32_0 : i32, i32
  }
  func.func @transform_1(%arg0: i32) -> (i32, i32) {
    %c0_i32 = arith.constant 0 : i32
    %c0_i32_0 = arith.constant 0 : i32
    %c0_i32_1 = arith.constant 0 : i32
    return %c0_i32, %c0_i32_0 : i32, i32
  }
  func.func @transform_2(%arg0: i32) -> (i32, i32) {
    %c0_i32 = arith.constant 0 : i32
    %c0_i32_0 = arith.constant 0 : i32
    %c0_i32_1 = arith.constant 0 : i32
    return %c0_i32, %c0_i32_0 : i32, i32
  }
  func.func @transform_3(%arg0: i32) -> (i32, i32) {
    %c0_i32 = arith.constant 0 : i32
    %c0_i32_0 = arith.constant 0 : i32
    %c0_i32_1 = arith.constant 0 : i32
    return %c0_i32, %c0_i32_0 : i32, i32
  }
  func.func @transform_4(%arg0: i32) -> (i32, i32) {
    %c0_i32 = arith.constant 0 : i32
    %c0_i32_0 = arith.constant 0 : i32
    %c0_i32_1 = arith.constant 0 : i32
    return %c0_i32, %c0_i32_0 : i32, i32
  }
}

module attributes {stable_mosaic.version = 11 : i64} {
  func.func @_bconv_kernel(%arg0: i32, %arg1: memref<1024x500xbf16, #tpu.memory_space<vmem>>, %arg2: memref<500x11xbf16, #tpu.memory_space<vmem>>, %arg3: memref<1x11xf32, #tpu.memory_space<vmem>>, %arg4: memref<1x11xf32, #tpu.memory_space<vmem>>, %arg5: memref<1024x11xf32, #tpu.memory_space<vmem>>) attributes {dimension_semantics = [#tpu.dimension_semantics<arbitrary>], iteration_bounds = array<i64: 1>, scalar_prefetch = 0 : i64, scratch_operands = 0 : i64, tpu.core_type = #tpu.core_type<tc>, window_params = [{pipeline_mode = #tpu.pipeline_mode<synchronous>, transform_indices = @transform_0, window_bounds = array<i64: 1024, 500>}, {pipeline_mode = #tpu.pipeline_mode<synchronous>, transform_indices = @transform_1, window_bounds = array<i64: 500, 11>}, {pipeline_mode = #tpu.pipeline_mode<synchronous>, transform_indices = @transform_2, window_bounds = array<i64: 1, 11>}, {pipeline_mode = #tpu.pipeline_mode<synchronous>, transform_indices = @transform_3, window_bounds = array<i64: 1, 11>}, {pipeline_mode = #tpu.pipeline_mode<synchronous>, transform_indices = @transform_4, window_bounds = array<i64: 1024, 11>}]} {
    %c0 = arith.constant 0 : index
    %c0_0 = arith.constant 0 : index
    %0 = vector.load %arg1[%c0, %c0_0] : memref<1024x500xbf16, #tpu.memory_space<vmem>>, vector<1024x500xbf16>
    %c0_1 = arith.constant 0 : index
    %c0_2 = arith.constant 0 : index
    %1 = vector.load %arg2[%c0_1, %c0_2] : memref<500x11xbf16, #tpu.memory_space<vmem>>, vector<500x11xbf16>
    %cst = arith.constant dense<0.000000e+00> : vector<1024x11xf32>
    %2 = tpu.matmul %0, %1, %cst {dimension_numbers = #tpu.dot_dimension_numbers<[1], [0], [0], [1], [0, 0, 1, 1], [], []>} : vector<1024x500xbf16>, vector<500x11xbf16>, vector<1024x11xf32> -> vector<1024x11xf32>
    %c0_3 = arith.constant 0 : index
    %c0_4 = arith.constant 0 : index
    %3 = vector.load %arg3[%c0_3, %c0_4] : memref<1x11xf32, #tpu.memory_space<vmem>>, vector<1x11xf32>
    %c0_5 = arith.constant 0 : index
    %c0_6 = arith.constant 0 : index
    %4 = vector.load %arg4[%c0_5, %c0_6] : memref<1x11xf32, #tpu.memory_space<vmem>>, vector<1x11xf32>
    %cst_7 = arith.constant dense<0.000000e+00> : vector<11xf32>
    %5 = vector.multi_reduction <add>, %2, %cst_7 [0] : vector<1024x11xf32> to vector<11xf32>
    %6 = vector.shape_cast %5 : vector<11xf32> to vector<1x11xf32>
    %7 = arith.mulf %2, %2 : vector<1024x11xf32>
    %cst_8 = arith.constant dense<0.000000e+00> : vector<11xf32>
    %8 = vector.multi_reduction <add>, %7, %cst_8 [0] : vector<1024x11xf32> to vector<11xf32>
    %9 = vector.shape_cast %8 : vector<11xf32> to vector<1x11xf32>
    %cst_9 = arith.constant 9.765625E-4 : f32
    %10 = vector.broadcast %cst_9 : f32 to vector<1x11xf32>
    %11 = arith.mulf %6, %10 : vector<1x11xf32>
    %cst_10 = arith.constant 9.765625E-4 : f32
    %12 = vector.broadcast %cst_10 : f32 to vector<1x11xf32>
    %13 = arith.mulf %9, %12 : vector<1x11xf32>
    %14 = arith.mulf %11, %11 : vector<1x11xf32>
    %15 = arith.subf %13, %14 : vector<1x11xf32>
    %cst_11 = arith.constant 0.000000e+00 : f32
    %16 = vector.broadcast %cst_11 : f32 to vector<1x11xf32>
    %17 = arith.maximumf %15, %16 : vector<1x11xf32>
    %cst_12 = arith.constant 9.99999974E-6 : f32
    %18 = vector.broadcast %cst_12 : f32 to vector<1x11xf32>
    %19 = arith.addf %17, %18 : vector<1x11xf32>
    %20 = math.rsqrt %19 : vector<1x11xf32>
    %21 = arith.mulf %3, %20 : vector<1x11xf32>
    %22 = arith.mulf %11, %21 : vector<1x11xf32>
    %23 = arith.subf %4, %22 : vector<1x11xf32>
    %24 = vector.broadcast %21 : vector<1x11xf32> to vector<1024x11xf32>
    %25 = arith.mulf %2, %24 : vector<1024x11xf32>
    %26 = vector.broadcast %23 : vector<1x11xf32> to vector<1024x11xf32>
    %27 = arith.addf %25, %26 : vector<1024x11xf32>
    %cst_13 = arith.constant 0.000000e+00 : f32
    %28 = vector.broadcast %cst_13 : f32 to vector<1024x11xf32>
    %29 = arith.cmpf oge, %27, %28 : vector<1024x11xf32>
    %cst_14 = arith.constant 0.00999999977 : f32
    %30 = vector.broadcast %cst_14 : f32 to vector<1024x11xf32>
    %31 = arith.mulf %30, %27 : vector<1024x11xf32>
    %32 = arith.select %29, %27, %31 : vector<1024x11xi1>, vector<1024x11xf32>
    %c0_15 = arith.constant 0 : index
    %c0_16 = arith.constant 0 : index
    %33 = vector.load %arg5[%c0_15, %c0_16] : memref<1024x11xf32, #tpu.memory_space<vmem>>, vector<1024x11xf32>
    tpu.vector_store %arg5[%c0_15, %c0_16], %32 {strides = array<i32>} : memref<1024x11xf32, #tpu.memory_space<vmem>>, vector<1024x11xf32>,
    return
  }
  func.func @transform_0(%arg0: i32) -> (i32, i32) {
    %c0_i32 = arith.constant 0 : i32
    %c0_i32_0 = arith.constant 0 : i32
    %c0_i32_1 = arith.constant 0 : i32
    return %c0_i32, %c0_i32_0 : i32, i32
  }
  func.func @transform_1(%arg0: i32) -> (i32, i32) {
    %c0_i32 = arith.constant 0 : i32
    %c0_i32_0 = arith.constant 0 : i32
    %c0_i32_1 = arith.constant 0 : i32
    return %c0_i32, %c0_i32_0 : i32, i32
  }
  func.func @transform_2(%arg0: i32) -> (i32, i32) {
    %c0_i32 = arith.constant 0 : i32
    %c0_i32_0 = arith.constant 0 : i32
    %c0_i32_1 = arith.constant 0 : i32
    return %c0_i32, %c0_i32_0 : i32, i32
  }
  func.func @transform_3(%arg0: i32) -> (i32, i32) {
    %c0_i32 = arith.constant 0 : i32
    %c0_i32_0 = arith.constant 0 : i32
    %c0_i32_1 = arith.constant 0 : i32
    return %c0_i32, %c0_i32_0 : i32, i32
  }
  func.func @transform_4(%arg0: i32) -> (i32, i32) {
    %c0_i32 = arith.constant 0 : i32
    %c0_i32_0 = arith.constant 0 : i32
    %c0_i32_1 = arith.constant 0 : i32
    return %c0_i32, %c0_i32_0 : i32, i32
  }
}

module attributes {stable_mosaic.version = 11 : i64} {
  func.func @_bconv_kernel(%arg0: i32, %arg1: memref<128x297xbf16, #tpu.memory_space<vmem>>, %arg2: memref<297x17xbf16, #tpu.memory_space<vmem>>, %arg3: memref<1x17xf32, #tpu.memory_space<vmem>>, %arg4: memref<1x17xf32, #tpu.memory_space<vmem>>, %arg5: memref<128x17xf32, #tpu.memory_space<vmem>>) attributes {dimension_semantics = [#tpu.dimension_semantics<arbitrary>], iteration_bounds = array<i64: 1>, scalar_prefetch = 0 : i64, scratch_operands = 0 : i64, tpu.core_type = #tpu.core_type<tc>, window_params = [{pipeline_mode = #tpu.pipeline_mode<synchronous>, transform_indices = @transform_0, window_bounds = array<i64: 128, 297>}, {pipeline_mode = #tpu.pipeline_mode<synchronous>, transform_indices = @transform_1, window_bounds = array<i64: 297, 17>}, {pipeline_mode = #tpu.pipeline_mode<synchronous>, transform_indices = @transform_2, window_bounds = array<i64: 1, 17>}, {pipeline_mode = #tpu.pipeline_mode<synchronous>, transform_indices = @transform_3, window_bounds = array<i64: 1, 17>}, {pipeline_mode = #tpu.pipeline_mode<synchronous>, transform_indices = @transform_4, window_bounds = array<i64: 128, 17>}]} {
    %c0 = arith.constant 0 : index
    %c0_0 = arith.constant 0 : index
    %0 = vector.load %arg1[%c0, %c0_0] : memref<128x297xbf16, #tpu.memory_space<vmem>>, vector<128x297xbf16>
    %c0_1 = arith.constant 0 : index
    %c0_2 = arith.constant 0 : index
    %1 = vector.load %arg2[%c0_1, %c0_2] : memref<297x17xbf16, #tpu.memory_space<vmem>>, vector<297x17xbf16>
    %cst = arith.constant dense<0.000000e+00> : vector<128x17xf32>
    %2 = tpu.matmul %0, %1, %cst {dimension_numbers = #tpu.dot_dimension_numbers<[1], [0], [0], [1], [0, 0, 1, 1], [], []>} : vector<128x297xbf16>, vector<297x17xbf16>, vector<128x17xf32> -> vector<128x17xf32>
    %c0_3 = arith.constant 0 : index
    %c0_4 = arith.constant 0 : index
    %3 = vector.load %arg3[%c0_3, %c0_4] : memref<1x17xf32, #tpu.memory_space<vmem>>, vector<1x17xf32>
    %c0_5 = arith.constant 0 : index
    %c0_6 = arith.constant 0 : index
    %4 = vector.load %arg4[%c0_5, %c0_6] : memref<1x17xf32, #tpu.memory_space<vmem>>, vector<1x17xf32>
    %cst_7 = arith.constant dense<0.000000e+00> : vector<17xf32>
    %5 = vector.multi_reduction <add>, %2, %cst_7 [0] : vector<128x17xf32> to vector<17xf32>
    %6 = vector.shape_cast %5 : vector<17xf32> to vector<1x17xf32>
    %7 = arith.mulf %2, %2 : vector<128x17xf32>
    %cst_8 = arith.constant dense<0.000000e+00> : vector<17xf32>
    %8 = vector.multi_reduction <add>, %7, %cst_8 [0] : vector<128x17xf32> to vector<17xf32>
    %9 = vector.shape_cast %8 : vector<17xf32> to vector<1x17xf32>
    %cst_9 = arith.constant 7.812500e-03 : f32
    %10 = vector.broadcast %cst_9 : f32 to vector<1x17xf32>
    %11 = arith.mulf %6, %10 : vector<1x17xf32>
    %cst_10 = arith.constant 7.812500e-03 : f32
    %12 = vector.broadcast %cst_10 : f32 to vector<1x17xf32>
    %13 = arith.mulf %9, %12 : vector<1x17xf32>
    %14 = arith.mulf %11, %11 : vector<1x17xf32>
    %15 = arith.subf %13, %14 : vector<1x17xf32>
    %cst_11 = arith.constant 0.000000e+00 : f32
    %16 = vector.broadcast %cst_11 : f32 to vector<1x17xf32>
    %17 = arith.maximumf %15, %16 : vector<1x17xf32>
    %cst_12 = arith.constant 9.99999974E-6 : f32
    %18 = vector.broadcast %cst_12 : f32 to vector<1x17xf32>
    %19 = arith.addf %17, %18 : vector<1x17xf32>
    %20 = math.rsqrt %19 : vector<1x17xf32>
    %21 = arith.mulf %3, %20 : vector<1x17xf32>
    %22 = arith.mulf %11, %21 : vector<1x17xf32>
    %23 = arith.subf %4, %22 : vector<1x17xf32>
    %24 = vector.broadcast %21 : vector<1x17xf32> to vector<128x17xf32>
    %25 = arith.mulf %2, %24 : vector<128x17xf32>
    %26 = vector.broadcast %23 : vector<1x17xf32> to vector<128x17xf32>
    %27 = arith.addf %25, %26 : vector<128x17xf32>
    %cst_13 = arith.constant 0.000000e+00 : f32
    %28 = vector.broadcast %cst_13 : f32 to vector<128x17xf32>
    %29 = arith.cmpf oge, %27, %28 : vector<128x17xf32>
    %cst_14 = arith.constant 0.00999999977 : f32
    %30 = vector.broadcast %cst_14 : f32 to vector<128x17xf32>
    %31 = arith.mulf %30, %27 : vector<128x17xf32>
    %32 = arith.select %29, %27, %31 : vector<128x17xi1>, vector<128x17xf32>
    %c0_15 = arith.constant 0 : index
    %c0_16 = arith.constant 0 : index
    %33 = vector.load %arg5[%c0_15, %c0_16] : memref<128x17xf32, #tpu.memory_space<vmem>>, vector<128x17xf32>
    tpu.vector_store %arg5[%c0_15, %c0_16], %32 {strides = array<i32>} : memref<128x17xf32, #tpu.memory_space<vmem>>, vector<128x17xf32>,
    return
  }
  func.func @transform_0(%arg0: i32) -> (i32, i32) {
    %c0_i32 = arith.constant 0 : i32
    %c0_i32_0 = arith.constant 0 : i32
    %c0_i32_1 = arith.constant 0 : i32
    return %c0_i32, %c0_i32_0 : i32, i32
  }
  func.func @transform_1(%arg0: i32) -> (i32, i32) {
    %c0_i32 = arith.constant 0 : i32
    %c0_i32_0 = arith.constant 0 : i32
    %c0_i32_1 = arith.constant 0 : i32
    return %c0_i32, %c0_i32_0 : i32, i32
  }
  func.func @transform_2(%arg0: i32) -> (i32, i32) {
    %c0_i32 = arith.constant 0 : i32
    %c0_i32_0 = arith.constant 0 : i32
    %c0_i32_1 = arith.constant 0 : i32
    return %c0_i32, %c0_i32_0 : i32, i32
  }
  func.func @transform_3(%arg0: i32) -> (i32, i32) {
    %c0_i32 = arith.constant 0 : i32
    %c0_i32_0 = arith.constant 0 : i32
    %c0_i32_1 = arith.constant 0 : i32
    return %c0_i32, %c0_i32_0 : i32, i32
  }
  func.func @transform_4(%arg0: i32) -> (i32, i32) {
    %c0_i32 = arith.constant 0 : i32
    %c0_i32_0 = arith.constant 0 : i32
    %c0_i32_1 = arith.constant 0 : i32
    return %c0_i32, %c0_i32_0 : i32, i32
  }
}

module attributes {stable_mosaic.version = 11 : i64} {
  func.func @_bconv_kernel(%arg0: i32, %arg1: memref<128x459xbf16, #tpu.memory_space<vmem>>, %arg2: memref<459x8xbf16, #tpu.memory_space<vmem>>, %arg3: memref<1x8xf32, #tpu.memory_space<vmem>>, %arg4: memref<1x8xf32, #tpu.memory_space<vmem>>, %arg5: memref<128x8xf32, #tpu.memory_space<vmem>>) attributes {dimension_semantics = [#tpu.dimension_semantics<arbitrary>], iteration_bounds = array<i64: 1>, scalar_prefetch = 0 : i64, scratch_operands = 0 : i64, tpu.core_type = #tpu.core_type<tc>, window_params = [{pipeline_mode = #tpu.pipeline_mode<synchronous>, transform_indices = @transform_0, window_bounds = array<i64: 128, 459>}, {pipeline_mode = #tpu.pipeline_mode<synchronous>, transform_indices = @transform_1, window_bounds = array<i64: 459, 8>}, {pipeline_mode = #tpu.pipeline_mode<synchronous>, transform_indices = @transform_2, window_bounds = array<i64: 1, 8>}, {pipeline_mode = #tpu.pipeline_mode<synchronous>, transform_indices = @transform_3, window_bounds = array<i64: 1, 8>}, {pipeline_mode = #tpu.pipeline_mode<synchronous>, transform_indices = @transform_4, window_bounds = array<i64: 128, 8>}]} {
    %c0 = arith.constant 0 : index
    %c0_0 = arith.constant 0 : index
    %0 = vector.load %arg1[%c0, %c0_0] : memref<128x459xbf16, #tpu.memory_space<vmem>>, vector<128x459xbf16>
    %c0_1 = arith.constant 0 : index
    %c0_2 = arith.constant 0 : index
    %1 = vector.load %arg2[%c0_1, %c0_2] : memref<459x8xbf16, #tpu.memory_space<vmem>>, vector<459x8xbf16>
    %cst = arith.constant dense<0.000000e+00> : vector<128x8xf32>
    %2 = tpu.matmul %0, %1, %cst {dimension_numbers = #tpu.dot_dimension_numbers<[1], [0], [0], [1], [0, 0, 1, 1], [], []>} : vector<128x459xbf16>, vector<459x8xbf16>, vector<128x8xf32> -> vector<128x8xf32>
    %c0_3 = arith.constant 0 : index
    %c0_4 = arith.constant 0 : index
    %3 = vector.load %arg3[%c0_3, %c0_4] : memref<1x8xf32, #tpu.memory_space<vmem>>, vector<1x8xf32>
    %c0_5 = arith.constant 0 : index
    %c0_6 = arith.constant 0 : index
    %4 = vector.load %arg4[%c0_5, %c0_6] : memref<1x8xf32, #tpu.memory_space<vmem>>, vector<1x8xf32>
    %cst_7 = arith.constant dense<0.000000e+00> : vector<8xf32>
    %5 = vector.multi_reduction <add>, %2, %cst_7 [0] : vector<128x8xf32> to vector<8xf32>
    %6 = vector.shape_cast %5 : vector<8xf32> to vector<1x8xf32>
    %7 = arith.mulf %2, %2 : vector<128x8xf32>
    %cst_8 = arith.constant dense<0.000000e+00> : vector<8xf32>
    %8 = vector.multi_reduction <add>, %7, %cst_8 [0] : vector<128x8xf32> to vector<8xf32>
    %9 = vector.shape_cast %8 : vector<8xf32> to vector<1x8xf32>
    %cst_9 = arith.constant 7.812500e-03 : f32
    %10 = vector.broadcast %cst_9 : f32 to vector<1x8xf32>
    %11 = arith.mulf %6, %10 : vector<1x8xf32>
    %cst_10 = arith.constant 7.812500e-03 : f32
    %12 = vector.broadcast %cst_10 : f32 to vector<1x8xf32>
    %13 = arith.mulf %9, %12 : vector<1x8xf32>
    %14 = arith.mulf %11, %11 : vector<1x8xf32>
    %15 = arith.subf %13, %14 : vector<1x8xf32>
    %cst_11 = arith.constant 0.000000e+00 : f32
    %16 = vector.broadcast %cst_11 : f32 to vector<1x8xf32>
    %17 = arith.maximumf %15, %16 : vector<1x8xf32>
    %cst_12 = arith.constant 9.99999974E-6 : f32
    %18 = vector.broadcast %cst_12 : f32 to vector<1x8xf32>
    %19 = arith.addf %17, %18 : vector<1x8xf32>
    %20 = math.rsqrt %19 : vector<1x8xf32>
    %21 = arith.mulf %3, %20 : vector<1x8xf32>
    %22 = arith.mulf %11, %21 : vector<1x8xf32>
    %23 = arith.subf %4, %22 : vector<1x8xf32>
    %24 = vector.broadcast %21 : vector<1x8xf32> to vector<128x8xf32>
    %25 = arith.mulf %2, %24 : vector<128x8xf32>
    %26 = vector.broadcast %23 : vector<1x8xf32> to vector<128x8xf32>
    %27 = arith.addf %25, %26 : vector<128x8xf32>
    %cst_13 = arith.constant 0.000000e+00 : f32
    %28 = vector.broadcast %cst_13 : f32 to vector<128x8xf32>
    %29 = arith.cmpf oge, %27, %28 : vector<128x8xf32>
    %cst_14 = arith.constant 0.00999999977 : f32
    %30 = vector.broadcast %cst_14 : f32 to vector<128x8xf32>
    %31 = arith.mulf %30, %27 : vector<128x8xf32>
    %32 = arith.select %29, %27, %31 : vector<128x8xi1>, vector<128x8xf32>
    %c0_15 = arith.constant 0 : index
    %c0_16 = arith.constant 0 : index
    %33 = vector.load %arg5[%c0_15, %c0_16] : memref<128x8xf32, #tpu.memory_space<vmem>>, vector<128x8xf32>
    tpu.vector_store %arg5[%c0_15, %c0_16], %32 {strides = array<i32>} : memref<128x8xf32, #tpu.memory_space<vmem>>, vector<128x8xf32>,
    return
  }
  func.func @transform_0(%arg0: i32) -> (i32, i32) {
    %c0_i32 = arith.constant 0 : i32
    %c0_i32_0 = arith.constant 0 : i32
    %c0_i32_1 = arith.constant 0 : i32
    return %c0_i32, %c0_i32_0 : i32, i32
  }
  func.func @transform_1(%arg0: i32) -> (i32, i32) {
    %c0_i32 = arith.constant 0 : i32
    %c0_i32_0 = arith.constant 0 : i32
    %c0_i32_1 = arith.constant 0 : i32
    return %c0_i32, %c0_i32_0 : i32, i32
  }
  func.func @transform_2(%arg0: i32) -> (i32, i32) {
    %c0_i32 = arith.constant 0 : i32
    %c0_i32_0 = arith.constant 0 : i32
    %c0_i32_1 = arith.constant 0 : i32
    return %c0_i32, %c0_i32_0 : i32, i32
  }
  func.func @transform_3(%arg0: i32) -> (i32, i32) {
    %c0_i32 = arith.constant 0 : i32
    %c0_i32_0 = arith.constant 0 : i32
    %c0_i32_1 = arith.constant 0 : i32
    return %c0_i32, %c0_i32_0 : i32, i32
  }
  func.func @transform_4(%arg0: i32) -> (i32, i32) {
    %c0_i32 = arith.constant 0 : i32
    %c0_i32_0 = arith.constant 0 : i32
    %c0_i32_1 = arith.constant 0 : i32
    return %c0_i32, %c0_i32_0 : i32, i32
  }
}

module attributes {stable_mosaic.version = 11 : i64} {
  func.func @_bconv_kernel(%arg0: i32, %arg1: memref<128x1000xbf16, #tpu.memory_space<vmem>>, %arg2: memref<1000x21xbf16, #tpu.memory_space<vmem>>, %arg3: memref<1x21xf32, #tpu.memory_space<vmem>>, %arg4: memref<1x21xf32, #tpu.memory_space<vmem>>, %arg5: memref<128x21xf32, #tpu.memory_space<vmem>>) attributes {dimension_semantics = [#tpu.dimension_semantics<arbitrary>], iteration_bounds = array<i64: 1>, scalar_prefetch = 0 : i64, scratch_operands = 0 : i64, tpu.core_type = #tpu.core_type<tc>, window_params = [{pipeline_mode = #tpu.pipeline_mode<synchronous>, transform_indices = @transform_0, window_bounds = array<i64: 128, 1000>}, {pipeline_mode = #tpu.pipeline_mode<synchronous>, transform_indices = @transform_1, window_bounds = array<i64: 1000, 21>}, {pipeline_mode = #tpu.pipeline_mode<synchronous>, transform_indices = @transform_2, window_bounds = array<i64: 1, 21>}, {pipeline_mode = #tpu.pipeline_mode<synchronous>, transform_indices = @transform_3, window_bounds = array<i64: 1, 21>}, {pipeline_mode = #tpu.pipeline_mode<synchronous>, transform_indices = @transform_4, window_bounds = array<i64: 128, 21>}]} {
    %c0 = arith.constant 0 : index
    %c0_0 = arith.constant 0 : index
    %0 = vector.load %arg1[%c0, %c0_0] : memref<128x1000xbf16, #tpu.memory_space<vmem>>, vector<128x1000xbf16>
    %c0_1 = arith.constant 0 : index
    %c0_2 = arith.constant 0 : index
    %1 = vector.load %arg2[%c0_1, %c0_2] : memref<1000x21xbf16, #tpu.memory_space<vmem>>, vector<1000x21xbf16>
    %cst = arith.constant dense<0.000000e+00> : vector<128x21xf32>
    %2 = tpu.matmul %0, %1, %cst {dimension_numbers = #tpu.dot_dimension_numbers<[1], [0], [0], [1], [0, 0, 1, 1], [], []>} : vector<128x1000xbf16>, vector<1000x21xbf16>, vector<128x21xf32> -> vector<128x21xf32>
    %c0_3 = arith.constant 0 : index
    %c0_4 = arith.constant 0 : index
    %3 = vector.load %arg3[%c0_3, %c0_4] : memref<1x21xf32, #tpu.memory_space<vmem>>, vector<1x21xf32>
    %c0_5 = arith.constant 0 : index
    %c0_6 = arith.constant 0 : index
    %4 = vector.load %arg4[%c0_5, %c0_6] : memref<1x21xf32, #tpu.memory_space<vmem>>, vector<1x21xf32>
    %cst_7 = arith.constant dense<0.000000e+00> : vector<21xf32>
    %5 = vector.multi_reduction <add>, %2, %cst_7 [0] : vector<128x21xf32> to vector<21xf32>
    %6 = vector.shape_cast %5 : vector<21xf32> to vector<1x21xf32>
    %7 = arith.mulf %2, %2 : vector<128x21xf32>
    %cst_8 = arith.constant dense<0.000000e+00> : vector<21xf32>
    %8 = vector.multi_reduction <add>, %7, %cst_8 [0] : vector<128x21xf32> to vector<21xf32>
    %9 = vector.shape_cast %8 : vector<21xf32> to vector<1x21xf32>
    %cst_9 = arith.constant 7.812500e-03 : f32
    %10 = vector.broadcast %cst_9 : f32 to vector<1x21xf32>
    %11 = arith.mulf %6, %10 : vector<1x21xf32>
    %cst_10 = arith.constant 7.812500e-03 : f32
    %12 = vector.broadcast %cst_10 : f32 to vector<1x21xf32>
    %13 = arith.mulf %9, %12 : vector<1x21xf32>
    %14 = arith.mulf %11, %11 : vector<1x21xf32>
    %15 = arith.subf %13, %14 : vector<1x21xf32>
    %cst_11 = arith.constant 0.000000e+00 : f32
    %16 = vector.broadcast %cst_11 : f32 to vector<1x21xf32>
    %17 = arith.maximumf %15, %16 : vector<1x21xf32>
    %cst_12 = arith.constant 9.99999974E-6 : f32
    %18 = vector.broadcast %cst_12 : f32 to vector<1x21xf32>
    %19 = arith.addf %17, %18 : vector<1x21xf32>
    %20 = math.rsqrt %19 : vector<1x21xf32>
    %21 = arith.mulf %3, %20 : vector<1x21xf32>
    %22 = arith.mulf %11, %21 : vector<1x21xf32>
    %23 = arith.subf %4, %22 : vector<1x21xf32>
    %24 = vector.broadcast %21 : vector<1x21xf32> to vector<128x21xf32>
    %25 = arith.mulf %2, %24 : vector<128x21xf32>
    %26 = vector.broadcast %23 : vector<1x21xf32> to vector<128x21xf32>
    %27 = arith.addf %25, %26 : vector<128x21xf32>
    %cst_13 = arith.constant 0.000000e+00 : f32
    %28 = vector.broadcast %cst_13 : f32 to vector<128x21xf32>
    %29 = arith.cmpf oge, %27, %28 : vector<128x21xf32>
    %cst_14 = arith.constant 0.00999999977 : f32
    %30 = vector.broadcast %cst_14 : f32 to vector<128x21xf32>
    %31 = arith.mulf %30, %27 : vector<128x21xf32>
    %32 = arith.select %29, %27, %31 : vector<128x21xi1>, vector<128x21xf32>
    %c0_15 = arith.constant 0 : index
    %c0_16 = arith.constant 0 : index
    %33 = vector.load %arg5[%c0_15, %c0_16] : memref<128x21xf32, #tpu.memory_space<vmem>>, vector<128x21xf32>
    tpu.vector_store %arg5[%c0_15, %c0_16], %32 {strides = array<i32>} : memref<128x21xf32, #tpu.memory_space<vmem>>, vector<128x21xf32>,
    return
  }
  func.func @transform_0(%arg0: i32) -> (i32, i32) {
    %c0_i32 = arith.constant 0 : i32
    %c0_i32_0 = arith.constant 0 : i32
    %c0_i32_1 = arith.constant 0 : i32
    return %c0_i32, %c0_i32_0 : i32, i32
  }
  func.func @transform_1(%arg0: i32) -> (i32, i32) {
    %c0_i32 = arith.constant 0 : i32
    %c0_i32_0 = arith.constant 0 : i32
    %c0_i32_1 = arith.constant 0 : i32
    return %c0_i32, %c0_i32_0 : i32, i32
  }
  func.func @transform_2(%arg0: i32) -> (i32, i32) {
    %c0_i32 = arith.constant 0 : i32
    %c0_i32_0 = arith.constant 0 : i32
    %c0_i32_1 = arith.constant 0 : i32
    return %c0_i32, %c0_i32_0 : i32, i32
  }
  func.func @transform_3(%arg0: i32) -> (i32, i32) {
    %c0_i32 = arith.constant 0 : i32
    %c0_i32_0 = arith.constant 0 : i32
    %c0_i32_1 = arith.constant 0 : i32
    return %c0_i32, %c0_i32_0 : i32, i32
  }
  func.func @transform_4(%arg0: i32) -> (i32, i32) {
    %c0_i32 = arith.constant 0 : i32
    %c0_i32_0 = arith.constant 0 : i32
    %c0_i32_1 = arith.constant 0 : i32
    return %c0_i32, %c0_i32_0 : i32, i32
  }
}

module attributes {stable_mosaic.version = 11 : i64} {
  func.func @_bconv_chain_kernel(%arg0: i32, %arg1: memref<128x567xbf16, #tpu.memory_space<vmem>>, %arg2: memref<567x10xbf16, #tpu.memory_space<vmem>>, %arg3: memref<1x10xf32, #tpu.memory_space<vmem>>, %arg4: memref<1x10xf32, #tpu.memory_space<vmem>>, %arg5: memref<10x2xbf16, #tpu.memory_space<vmem>>, %arg6: memref<1x2xf32, #tpu.memory_space<vmem>>, %arg7: memref<1x2xf32, #tpu.memory_space<vmem>>, %arg8: memref<128x2xf32, #tpu.memory_space<vmem>>) attributes {dimension_semantics = [#tpu.dimension_semantics<arbitrary>], iteration_bounds = array<i64: 1>, scalar_prefetch = 0 : i64, scratch_operands = 0 : i64, tpu.core_type = #tpu.core_type<tc>, window_params = [{pipeline_mode = #tpu.pipeline_mode<synchronous>, transform_indices = @transform_0, window_bounds = array<i64: 128, 567>}, {pipeline_mode = #tpu.pipeline_mode<synchronous>, transform_indices = @transform_1, window_bounds = array<i64: 567, 10>}, {pipeline_mode = #tpu.pipeline_mode<synchronous>, transform_indices = @transform_2, window_bounds = array<i64: 1, 10>}, {pipeline_mode = #tpu.pipeline_mode<synchronous>, transform_indices = @transform_3, window_bounds = array<i64: 1, 10>}, {pipeline_mode = #tpu.pipeline_mode<synchronous>, transform_indices = @transform_4, window_bounds = array<i64: 10, 2>}, {pipeline_mode = #tpu.pipeline_mode<synchronous>, transform_indices = @transform_5, window_bounds = array<i64: 1, 2>}, {pipeline_mode = #tpu.pipeline_mode<synchronous>, transform_indices = @transform_6, window_bounds = array<i64: 1, 2>}, {pipeline_mode = #tpu.pipeline_mode<synchronous>, transform_indices = @transform_7, window_bounds = array<i64: 128, 2>}]} {
    %c0 = arith.constant 0 : index
    %c0_0 = arith.constant 0 : index
    %0 = vector.load %arg1[%c0, %c0_0] : memref<128x567xbf16, #tpu.memory_space<vmem>>, vector<128x567xbf16>
    %c0_1 = arith.constant 0 : index
    %c0_2 = arith.constant 0 : index
    %1 = vector.load %arg2[%c0_1, %c0_2] : memref<567x10xbf16, #tpu.memory_space<vmem>>, vector<567x10xbf16>
    %cst = arith.constant dense<0.000000e+00> : vector<128x10xf32>
    %2 = tpu.matmul %0, %1, %cst {dimension_numbers = #tpu.dot_dimension_numbers<[1], [0], [0], [1], [0, 0, 1, 1], [], []>} : vector<128x567xbf16>, vector<567x10xbf16>, vector<128x10xf32> -> vector<128x10xf32>
    %c0_3 = arith.constant 0 : index
    %c0_4 = arith.constant 0 : index
    %3 = vector.load %arg3[%c0_3, %c0_4] : memref<1x10xf32, #tpu.memory_space<vmem>>, vector<1x10xf32>
    %c0_5 = arith.constant 0 : index
    %c0_6 = arith.constant 0 : index
    %4 = vector.load %arg4[%c0_5, %c0_6] : memref<1x10xf32, #tpu.memory_space<vmem>>, vector<1x10xf32>
    %cst_7 = arith.constant dense<0.000000e+00> : vector<10xf32>
    %5 = vector.multi_reduction <add>, %2, %cst_7 [0] : vector<128x10xf32> to vector<10xf32>
    %6 = vector.shape_cast %5 : vector<10xf32> to vector<1x10xf32>
    %7 = arith.mulf %2, %2 : vector<128x10xf32>
    %cst_8 = arith.constant dense<0.000000e+00> : vector<10xf32>
    %8 = vector.multi_reduction <add>, %7, %cst_8 [0] : vector<128x10xf32> to vector<10xf32>
    %9 = vector.shape_cast %8 : vector<10xf32> to vector<1x10xf32>
    %cst_9 = arith.constant 7.812500e-03 : f32
    %10 = vector.broadcast %cst_9 : f32 to vector<1x10xf32>
    %11 = arith.mulf %6, %10 : vector<1x10xf32>
    %cst_10 = arith.constant 7.812500e-03 : f32
    %12 = vector.broadcast %cst_10 : f32 to vector<1x10xf32>
    %13 = arith.mulf %9, %12 : vector<1x10xf32>
    %14 = arith.mulf %11, %11 : vector<1x10xf32>
    %15 = arith.subf %13, %14 : vector<1x10xf32>
    %cst_11 = arith.constant 0.000000e+00 : f32
    %16 = vector.broadcast %cst_11 : f32 to vector<1x10xf32>
    %17 = arith.maximumf %15, %16 : vector<1x10xf32>
    %cst_12 = arith.constant 9.99999974E-6 : f32
    %18 = vector.broadcast %cst_12 : f32 to vector<1x10xf32>
    %19 = arith.addf %17, %18 : vector<1x10xf32>
    %20 = math.rsqrt %19 : vector<1x10xf32>
    %21 = arith.mulf %3, %20 : vector<1x10xf32>
    %22 = arith.mulf %11, %21 : vector<1x10xf32>
    %23 = arith.subf %4, %22 : vector<1x10xf32>
    %24 = vector.broadcast %21 : vector<1x10xf32> to vector<128x10xf32>
    %25 = arith.mulf %2, %24 : vector<128x10xf32>
    %26 = vector.broadcast %23 : vector<1x10xf32> to vector<128x10xf32>
    %27 = arith.addf %25, %26 : vector<128x10xf32>
    %cst_13 = arith.constant 0.000000e+00 : f32
    %28 = vector.broadcast %cst_13 : f32 to vector<128x10xf32>
    %29 = arith.cmpf oge, %27, %28 : vector<128x10xf32>
    %cst_14 = arith.constant 0.00999999977 : f32
    %30 = vector.broadcast %cst_14 : f32 to vector<128x10xf32>
    %31 = arith.mulf %30, %27 : vector<128x10xf32>
    %32 = arith.select %29, %27, %31 : vector<128x10xi1>, vector<128x10xf32>
    %33 = arith.truncf %32 : vector<128x10xf32> to vector<128x10xbf16>
    %c0_15 = arith.constant 0 : index
    %c0_16 = arith.constant 0 : index
    %34 = vector.load %arg5[%c0_15, %c0_16] : memref<10x2xbf16, #tpu.memory_space<vmem>>, vector<10x2xbf16>
    %cst_17 = arith.constant dense<0.000000e+00> : vector<128x2xf32>
    %35 = tpu.matmul %33, %34, %cst_17 {dimension_numbers = #tpu.dot_dimension_numbers<[1], [0], [0], [1], [0, 0, 1, 1], [], []>} : vector<128x10xbf16>, vector<10x2xbf16>, vector<128x2xf32> -> vector<128x2xf32>
    %c0_18 = arith.constant 0 : index
    %c0_19 = arith.constant 0 : index
    %36 = vector.load %arg6[%c0_18, %c0_19] : memref<1x2xf32, #tpu.memory_space<vmem>>, vector<1x2xf32>
    %c0_20 = arith.constant 0 : index
    %c0_21 = arith.constant 0 : index
    %37 = vector.load %arg7[%c0_20, %c0_21] : memref<1x2xf32, #tpu.memory_space<vmem>>, vector<1x2xf32>
    %cst_22 = arith.constant dense<0.000000e+00> : vector<2xf32>
    %38 = vector.multi_reduction <add>, %35, %cst_22 [0] : vector<128x2xf32> to vector<2xf32>
    %39 = vector.shape_cast %38 : vector<2xf32> to vector<1x2xf32>
    %40 = arith.mulf %35, %35 : vector<128x2xf32>
    %cst_23 = arith.constant dense<0.000000e+00> : vector<2xf32>
    %41 = vector.multi_reduction <add>, %40, %cst_23 [0] : vector<128x2xf32> to vector<2xf32>
    %42 = vector.shape_cast %41 : vector<2xf32> to vector<1x2xf32>
    %cst_24 = arith.constant 7.812500e-03 : f32
    %43 = vector.broadcast %cst_24 : f32 to vector<1x2xf32>
    %44 = arith.mulf %39, %43 : vector<1x2xf32>
    %cst_25 = arith.constant 7.812500e-03 : f32
    %45 = vector.broadcast %cst_25 : f32 to vector<1x2xf32>
    %46 = arith.mulf %42, %45 : vector<1x2xf32>
    %47 = arith.mulf %44, %44 : vector<1x2xf32>
    %48 = arith.subf %46, %47 : vector<1x2xf32>
    %cst_26 = arith.constant 0.000000e+00 : f32
    %49 = vector.broadcast %cst_26 : f32 to vector<1x2xf32>
    %50 = arith.maximumf %48, %49 : vector<1x2xf32>
    %cst_27 = arith.constant 9.99999974E-6 : f32
    %51 = vector.broadcast %cst_27 : f32 to vector<1x2xf32>
    %52 = arith.addf %50, %51 : vector<1x2xf32>
    %53 = math.rsqrt %52 : vector<1x2xf32>
    %54 = arith.mulf %36, %53 : vector<1x2xf32>
    %55 = arith.mulf %44, %54 : vector<1x2xf32>
    %56 = arith.subf %37, %55 : vector<1x2xf32>
    %57 = vector.broadcast %54 : vector<1x2xf32> to vector<128x2xf32>
    %58 = arith.mulf %35, %57 : vector<128x2xf32>
    %59 = vector.broadcast %56 : vector<1x2xf32> to vector<128x2xf32>
    %60 = arith.addf %58, %59 : vector<128x2xf32>
    %cst_28 = arith.constant 0.000000e+00 : f32
    %61 = vector.broadcast %cst_28 : f32 to vector<128x2xf32>
    %62 = arith.cmpf oge, %60, %61 : vector<128x2xf32>
    %cst_29 = arith.constant 0.00999999977 : f32
    %63 = vector.broadcast %cst_29 : f32 to vector<128x2xf32>
    %64 = arith.mulf %63, %60 : vector<128x2xf32>
    %65 = arith.select %62, %60, %64 : vector<128x2xi1>, vector<128x2xf32>
    %c0_30 = arith.constant 0 : index
    %c0_31 = arith.constant 0 : index
    %66 = vector.load %arg8[%c0_30, %c0_31] : memref<128x2xf32, #tpu.memory_space<vmem>>, vector<128x2xf32>
    tpu.vector_store %arg8[%c0_30, %c0_31], %65 {strides = array<i32>} : memref<128x2xf32, #tpu.memory_space<vmem>>, vector<128x2xf32>,
    return
  }
  func.func @transform_0(%arg0: i32) -> (i32, i32) {
    %c0_i32 = arith.constant 0 : i32
    %c0_i32_0 = arith.constant 0 : i32
    %c0_i32_1 = arith.constant 0 : i32
    return %c0_i32, %c0_i32_0 : i32, i32
  }
  func.func @transform_1(%arg0: i32) -> (i32, i32) {
    %c0_i32 = arith.constant 0 : i32
    %c0_i32_0 = arith.constant 0 : i32
    %c0_i32_1 = arith.constant 0 : i32
    return %c0_i32, %c0_i32_0 : i32, i32
  }
  func.func @transform_2(%arg0: i32) -> (i32, i32) {
    %c0_i32 = arith.constant 0 : i32
    %c0_i32_0 = arith.constant 0 : i32
    %c0_i32_1 = arith.constant 0 : i32
    return %c0_i32, %c0_i32_0 : i32, i32
  }
  func.func @transform_3(%arg0: i32) -> (i32, i32) {
    %c0_i32 = arith.constant 0 : i32
    %c0_i32_0 = arith.constant 0 : i32
    %c0_i32_1 = arith.constant 0 : i32
    return %c0_i32, %c0_i32_0 : i32, i32
  }
  func.func @transform_4(%arg0: i32) -> (i32, i32) {
    %c0_i32 = arith.constant 0 : i32
    %c0_i32_0 = arith.constant 0 : i32
    %c0_i32_1 = arith.constant 0 : i32
    return %c0_i32, %c0_i32_0 : i32, i32
  }
  func.func @transform_5(%arg0: i32) -> (i32, i32) {
    %c0_i32 = arith.constant 0 : i32
    %c0_i32_0 = arith.constant 0 : i32
    %c0_i32_1 = arith.constant 0 : i32
    return %c0_i32, %c0_i32_0 : i32, i32
  }
  func.func @transform_6(%arg0: i32) -> (i32, i32) {
    %c0_i32 = arith.constant 0 : i32
    %c0_i32_0 = arith.constant 0 : i32
    %c0_i32_1 = arith.constant 0 : i32
    return %c0_i32, %c0_i32_0 : i32, i32
  }
  func.func @transform_7(%arg0: i32) -> (i32, i32) {
    %c0_i32 = arith.constant 0 : i32
    %c0_i32_0 = arith.constant 0 : i32
    %c0_i32_1 = arith.constant 0 : i32
    return %c0_i32, %c0_i32_0 : i32, i32
  }
}

</mosaic_0001>

<llo_original>
// kernel: inception_forward.6
$region0: #{inception_forward.6}
  #allocation0 [shape = 'u32[]', space=smem, size = 0x4, offset = 0x4, fixed_abs, tag = 'smem constant byte address 0x4 - core index']
  #allocation1 [shape = 'u32[144,128]{1,0:T(1,128)}', space=vmem, size = 0x12000, scoped, tag = 'internal scratch']
  %s0 = inlined_call_operand.vmem [shape: bf16[1024,81], index: 0, kind: input, shape index: {}]
  %s1 = inlined_call_operand.vmem [shape: bf16[81,4], index: 1, kind: input, shape index: {}]
  %s2 = inlined_call_operand.vmem [shape: f32[1,4], index: 2, kind: input, shape index: {}]
  %s3 = inlined_call_operand.vmem [shape: f32[1,4], index: 3, kind: input, shape index: {}]
  %s4 = inlined_call_operand.vmem [shape: f32[1024,4], index: 4, kind: output, shape index: {}]
  %s5 = sld [smem:[#allocation0]]
  $region26: #{inception_forward.6} parent=0
    _
  %s7 = ssub.s32 1, %s5
  %s8 = scalar_select 0, %s7, %s5
  // Predicated region
  $region2: #{inception_forward.6} parent=0 // pred_check
    _
  $region3: #{inception_forward.6} parent=0 // pred_check_branch
    %10 = sbr.rel (0) target = $region5
  $region4: #{inception_forward.6} parent=0 // pred_region
    _
  $region5: #{inception_forward.6} parent=0 // pred_fallthru
    _
  // Predicated region
  $region6: #{inception_forward.6} parent=0 // pred_check
    _
  $region7: #{inception_forward.6} parent=0 // pred_check_branch
    %12 = sbr.rel (0) target = $region9
  $region8: #{inception_forward.6} parent=0 // pred_region
    _
  $region9: #{inception_forward.6} parent=0 // pred_fallthru
    _
  // Predicated region
  $region10: #{inception_forward.6} parent=0 // pred_check
    _
  $region11: #{inception_forward.6} parent=0 // pred_check_branch
    %14 = sbr.rel (0) target = $region13
  $region12: #{inception_forward.6} parent=0 // pred_region
    _
  $region13: #{inception_forward.6} parent=0 // pred_fallthru
    _
  // Predicated region
  $region14: #{inception_forward.6} parent=0 // pred_check
    _
  $region15: #{inception_forward.6} parent=0 // pred_check_branch
    %16 = sbr.rel (0) target = $region17
  $region16: #{inception_forward.6} parent=0 // pred_region
    _
  $region17: #{inception_forward.6} parent=0 // pred_fallthru
    _
  %v18 = vld [vmem:[%s0] sm:$0xf]
  %v19 = vld [vmem:[%s0 + $0x4] sm:$0xf]
  %v20 = vld [vmem:[%s0 + $0x8] sm:$0xf]
  %v21 = vld [vmem:[%s0 + $0xc] sm:$0xf]
  %v22 = vld [vmem:[%s0 + $0x10] sm:$0xf]
  %v23 = vld [vmem:[%s0 + $0x14] sm:$0xf]
  %v24 = vld [vmem:[%s0 + $0x18] sm:$0xf]
  %v25 = vld [vmem:[%s0 + $0x1c] sm:$0xf]
  %v26 = vld [vmem:[%s0 + $0x20] sm:$0xf]
  %v27 = vld [vmem:[%s0 + $0x24] sm:$0xf]
  %v28 = vld [vmem:[%s0 + $0x28] sm:$0xf]
  %v29 = vld [vmem:[%s0 + $0x2c] sm:$0xf]
  %v30 = vld [vmem:[%s0 + $0x30] sm:$0xf]
  %v31 = vld [vmem:[%s0 + $0x34] sm:$0xf]
  %v32 = vld [vmem:[%s0 + $0x38] sm:$0xf]
  %v33 = vld [vmem:[%s0 + $0x3c] sm:$0xf]
  %v34 = vld [vmem:[%s0 + $0x40] sm:$0xf]
  %v35 = vld [vmem:[%s0 + $0x44] sm:$0xf]
  %v36 = vld [vmem:[%s0 + $0x48] sm:$0xf]
  %v37 = vld [vmem:[%s0 + $0x4c] sm:$0xf]
  %v38 = vld [vmem:[%s0 + $0x50] sm:$0xf]
  %v39 = vld [vmem:[%s0 + $0x54] sm:$0xf]
  %v40 = vld [vmem:[%s0 + $0x58] sm:$0xf]
  %v41 = vld [vmem:[%s0 + $0x5c] sm:$0xf]
  %v42 = vld [vmem:[%s0 + $0x60] sm:$0xf]
  %v43 = vld [vmem:[%s0 + $0x64] sm:$0xf]
  %v44 = vld [vmem:[%s0 + $0x68] sm:$0xf]
  %v45 = vld [vmem:[%s0 + $0x6c] sm:$0xf]
  %v46 = vld [vmem:[%s0 + $0x70] sm:$0xf]
  %v47 = vld [vmem:[%s0 + $0x74] sm:$0xf]
  %v48 = vld [vmem:[%s0 + $0x78] sm:$0xf]
  %v49 = vld [vmem:[%s0 + $0x7c] sm:$0xf]
  %v50 = vld [vmem:[%s0 + $0x80] sm:$0xf]
  %v51 = vld [vmem:[%s0 + $0x84] sm:$0xf]
  %v52 = vld [vmem:[%s0 + $0x88] sm:$0xf]
  %v53 = vld [vmem:[%s0 + $0x8c] sm:$0xf]
  %v54 = vld [vmem:[%s0 + $0x90] sm:$0xf]
  %v55 = vld [vmem:[%s0 + $0x94] sm:$0xf]
  %v56 = vld [vmem:[%s0 + $0x98] sm:$0xf]
  %v57 = vld [vmem:[%s0 + $0x9c] sm:$0xf]
  %v58 = vld [vmem:[%s0 + $0xa0] sm:$0xf]
  %v59 = vld [vmem:[%s0 + $0xa4] sm:$0xf]
  %v60 = vld [vmem:[%s0 + $0xa8] sm:$0xf]
  %v61 = vld [vmem:[%s0 + $0xac] sm:$0xf]
  %v62 = vld [vmem:[%s0 + $0xb0] sm:$0xf]
  %v63 = vld [vmem:[%s0 + $0xb4] sm:$0xf]
  %v64 = vld [vmem:[%s0 + $0xb8] sm:$0xf]
  %v65 = vld [vmem:[%s0 + $0xbc] sm:$0xf]
  %v66 = vld [vmem:[%s0 + $0xc0] sm:$0xf]
  %v67 = vld [vmem:[%s0 + $0xc4] sm:$0xf]
  %v68 = vld [vmem:[%s0 + $0xc8] sm:$0xf]
  %v69 = vld [vmem:[%s0 + $0xcc] sm:$0xf]
  %v70 = vld [vmem:[%s0 + $0xd0] sm:$0xf]
  %v71 = vld [vmem:[%s0 + $0xd4] sm:$0xf]
  %v72 = vld [vmem:[%s0 + $0xd8] sm:$0xf]
  %v73 = vld [vmem:[%s0 + $0xdc] sm:$0xf]
  %v74 = vld [vmem:[%s0 + $0xe0] sm:$0xf]
  %v75 = vld [vmem:[%s0 + $0xe4] sm:$0xf]
  %v76 = vld [vmem:[%s0 + $0xe8] sm:$0xf]
  %v77 = vld [vmem:[%s0 + $0xec] sm:$0xf]
  %v78 = vld [vmem:[%s0 + $0xf0] sm:$0xf]
  %v79 = vld [vmem:[%s0 + $0xf4] sm:$0xf]
  %v80 = vld [vmem:[%s0 + $0xf8] sm:$0xf]
  %v81 = vld [vmem:[%s0 + $0xfc] sm:$0xf]
  %v82 = vld [vmem:[%s0 + $0x100] sm:$0xf]
  %v83 = vld [vmem:[%s0 + $0x104] sm:$0xf]
  %v84 = vld [vmem:[%s0 + $0x108] sm:$0xf]
  %v85 = vld [vmem:[%s0 + $0x10c] sm:$0xf]
  %v86 = vld [vmem:[%s0 + $0x110] sm:$0xf]
  %v87 = vld [vmem:[%s0 + $0x114] sm:$0xf]
  %v88 = vld [vmem:[%s0 + $0x118] sm:$0xf]
  %v89 = vld [vmem:[%s0 + $0x11c] sm:$0xf]
  %v90 = vld [vmem:[%s0 + $0x120] sm:$0xf]
  %v91 = vld [vmem:[%s0 + $0x124] sm:$0xf]
  %v92 = vld [vmem:[%s0 + $0x128] sm:$0xf]
  %v93 = vld [vmem:[%s0 + $0x12c] sm:$0xf]
  %v94 = vld [vmem:[%s0 + $0x130] sm:$0xf]
  %v95 = vld [vmem:[%s0 + $0x134] sm:$0xf]
  %v96 = vld [vmem:[%s0 + $0x138] sm:$0xf]
  %v97 = vld [vmem:[%s0 + $0x13c] sm:$0xf]
  %v98 = vld [vmem:[%s0 + $0x140] sm:$0xf]
  %v99 = vld [vmem:[%s0 + $0x144] sm:$0xf]
  %v100 = vld [vmem:[%s0 + $0x148] sm:$0xf]
  %v101 = vld [vmem:[%s0 + $0x14c] sm:$0xf]
  %v102 = vld [vmem:[%s0 + $0x150] sm:$0xf]
  %v103 = vld [vmem:[%s0 + $0x154] sm:$0xf]
  %v104 = vld [vmem:[%s0 + $0x158] sm:$0xf]
  %v105 = vld [vmem:[%s0 + $0x15c] sm:$0xf]
  %v106 = vld [vmem:[%s0 + $0x160] sm:$0xf]
  %v107 = vld [vmem:[%s0 + $0x164] sm:$0xf]
  %v108 = vld [vmem:[%s0 + $0x168] sm:$0xf]
  %v109 = vld [vmem:[%s0 + $0x16c] sm:$0xf]
  %v110 = vld [vmem:[%s0 + $0x170] sm:$0xf]
  %v111 = vld [vmem:[%s0 + $0x174] sm:$0xf]
  %v112 = vld [vmem:[%s0 + $0x178] sm:$0xf]
  %v113 = vld [vmem:[%s0 + $0x17c] sm:$0xf]
  %v114 = vld [vmem:[%s0 + $0x180] sm:$0xf]
  %v115 = vld [vmem:[%s0 + $0x184] sm:$0xf]
  %v116 = vld [vmem:[%s0 + $0x188] sm:$0xf]
  %v117 = vld [vmem:[%s0 + $0x18c] sm:$0xf]
  %v118 = vld [vmem:[%s0 + $0x190] sm:$0xf]
  %v119 = vld [vmem:[%s0 + $0x194] sm:$0xf]
  %v120 = vld [vmem:[%s0 + $0x198] sm:$0xf]
  %v121 = vld [vmem:[%s0 + $0x19c] sm:$0xf]
  %v122 = vld [vmem:[%s0 + $0x1a0] sm:$0xf]
  %v123 = vld [vmem:[%s0 + $0x1a4] sm:$0xf]
  %v124 = vld [vmem:[%s0 + $0x1a8] sm:$0xf]
  %v125 = vld [vmem:[%s0 + $0x1ac] sm:$0xf]
  %v126 = vld [vmem:[%s0 + $0x1b0] sm:$0xf]
  %v127 = vld [vmem:[%s0 + $0x1b4] sm:$0xf]
  %v128 = vld [vmem:[%s0 + $0x1b8] sm:$0xf]
  %v129 = vld [vmem:[%s0 + $0x1bc] sm:$0xf]
  %v130 = vld [vmem:[%s0 + $0x1c0] sm:$0xf]
  %v131 = vld [vmem:[%s0 + $0x1c4] sm:$0xf]
  %v132 = vld [vmem:[%s0 + $0x1c8] sm:$0xf]
  %v133 = vld [vmem:[%s0 + $0x1cc] sm:$0xf]
  %v134 = vld [vmem:[%s0 + $0x1d0] sm:$0xf]
  %v135 = vld [vmem:[%s0 + $0x1d4] sm:$0xf]
  %v136 = vld [vmem:[%s0 + $0x1d8] sm:$0xf]
  %v137 = vld [vmem:[%s0 + $0x1dc] sm:$0xf]
  %v138 = vld [vmem:[%s0 + $0x1e0] sm:$0xf]
  %v139 = vld [vmem:[%s0 + $0x1e4] sm:$0xf]
  %v140 = vld [vmem:[%s0 + $0x1e8] sm:$0xf]
  %v141 = vld [vmem:[%s0 + $0x1ec] sm:$0xf]
  %v142 = vld [vmem:[%s0 + $0x1f0] sm:$0xf]
  %v143 = vld [vmem:[%s0 + $0x1f4] sm:$0xf]
  %v144 = vld [vmem:[%s0 + $0x1f8] sm:$0xf]
  %v145 = vld [vmem:[%s0 + $0x1fc] sm:$0xf]
  %v146 = vld [vmem:[%s1] sm:$0xf]
  %v147 = vld [vmem:[%s1 + $0x4] sm:$0xf]
  %v148 = vld [vmem:[%s1 + $0x8] sm:$0xf]
  %v149 = vld [vmem:[%s1 + $0xc] sm:$0xf]
  %v150 = vld [vmem:[%s1 + $0x10] sm:$0xf]
  %v151 = vld [vmem:[%s1 + $0x14] sm:$0xf]
  %v152 = vld [vmem:[%s1 + $0x18] sm:$0xf]
  %v153 = vld [vmem:[%s1 + $0x1c] sm:$0xf]
  %v154 = vld [vmem:[%s1 + $0x20] sm:$0xf]
  %v155 = vld [vmem:[%s1 + $0x24] sm:$0xf]
  %v156 = vld [vmem:[%s1 + $0x28] sm:$0x1]
  %v285 = vunpack.c.l.b16 %v18
  %v286 = vunpack.c.l.b16 %v19
  %v287 = vunpack.c.l.b16 %v20
  %v288 = vunpack.c.l.b16 %v21
  %v289 = vunpack.c.l.b16 %v22
  %v290 = vunpack.c.l.b16 %v23
  %v291 = vunpack.c.l.b16 %v24
  %v292 = vunpack.c.l.b16 %v25
  %v293 = vunpack.c.l.b16 %v26
  %v294 = vunpack.c.l.b16 %v27
  %v295 = vunpack.c.l.b16 %v28
  %v296 = vunpack.c.l.b16 %v29
  %v297 = vunpack.c.l.b16 %v30
  %v298 = vunpack.c.l.b16 %v31
  %v299 = vunpack.c.l.b16 %v32
  %v300 = vunpack.c.l.b16 %v33
  %v301 = vunpack.c.l.b16 %v34
  %v302 = vunpack.c.l.b16 %v35
  %v303 = vunpack.c.l.b16 %v36
  %v304 = vunpack.c.l.b16 %v37
  %v305 = vunpack.c.l.b16 %v38
  %v306 = vunpack.c.l.b16 %v39
  %v307 = vunpack.c.l.b16 %v40
  %v308 = vunpack.c.l.b16 %v41
  %v309 = vunpack.c.l.b16 %v42
  %v310 = vunpack.c.l.b16 %v43
  %v311 = vunpack.c.l.b16 %v44
  %v312 = vunpack.c.l.b16 %v45
  %v313 = vunpack.c.l.b16 %v46
  %v314 = vunpack.c.l.b16 %v47
  %v315 = vunpack.c.l.b16 %v48
  %v316 = vunpack.c.l.b16 %v49
  %v317 = vunpack.c.l.b16 %v50
  %v318 = vunpack.c.l.b16 %v51
  %v319 = vunpack.c.l.b16 %v52
  %v320 = vunpack.c.l.b16 %v53
  %v321 = vunpack.c.l.b16 %v54
  %v322 = vunpack.c.l.b16 %v55
  %v323 = vunpack.c.l.b16 %v56
  %v324 = vunpack.c.l.b16 %v57
  %v325 = vunpack.c.l.b16 %v58
  %v326 = vunpack.c.l.b16 %v59
  %v327 = vunpack.c.l.b16 %v60
  %v328 = vunpack.c.l.b16 %v61
  %v329 = vunpack.c.l.b16 %v62
  %v330 = vunpack.c.l.b16 %v63
  %v331 = vunpack.c.l.b16 %v64
  %v332 = vunpack.c.l.b16 %v65
  %v333 = vunpack.c.l.b16 %v66
  %v334 = vunpack.c.l.b16 %v67
  %v335 = vunpack.c.l.b16 %v68
  %v336 = vunpack.c.l.b16 %v69
  %v337 = vunpack.c.l.b16 %v70
  %v338 = vunpack.c.l.b16 %v71
  %v339 = vunpack.c.l.b16 %v72
  %v340 = vunpack.c.l.b16 %v73
  %v341 = vunpack.c.l.b16 %v74
  %v342 = vunpack.c.l.b16 %v75
  %v343 = vunpack.c.l.b16 %v76
  %v344 = vunpack.c.l.b16 %v77
  %v345 = vunpack.c.l.b16 %v78
  %v346 = vunpack.c.l.b16 %v79
  %v347 = vunpack.c.l.b16 %v80
  %v348 = vunpack.c.l.b16 %v81
  %v349 = vunpack.c.l.b16 %v82
  %v350 = vunpack.c.l.b16 %v83
  %v351 = vunpack.c.l.b16 %v84
  %v352 = vunpack.c.l.b16 %v85
  %v353 = vunpack.c.l.b16 %v86
  %v354 = vunpack.c.l.b16 %v87
  %v355 = vunpack.c.l.b16 %v88
  %v356 = vunpack.c.l.b16 %v89
  %v357 = vunpack.c.l.b16 %v90
  %v358 = vunpack.c.l.b16 %v91
  %v359 = vunpack.c.l.b16 %v92
  %v360 = vunpack.c.l.b16 %v93
  %v361 = vunpack.c.l.b16 %v94
  %v362 = vunpack.c.l.b16 %v95
  %v363 = vunpack.c.l.b16 %v96
  %v364 = vunpack.c.l.b16 %v97
  %v365 = vunpack.c.l.b16 %v98
  %v366 = vunpack.c.l.b16 %v99
  %v367 = vunpack.c.l.b16 %v100
  %v368 = vunpack.c.l.b16 %v101
  %v369 = vunpack.c.l.b16 %v102
  %v370 = vunpack.c.l.b16 %v103
  %v371 = vunpack.c.l.b16 %v104
  %v372 = vunpack.c.l.b16 %v105
  %v373 = vunpack.c.l.b16 %v106
  %v374 = vunpack.c.l.b16 %v107
  %v375 = vunpack.c.l.b16 %v108
  %v376 = vunpack.c.l.b16 %v109
  %v377 = vunpack.c.l.b16 %v110
  %v378 = vunpack.c.l.b16 %v111
  %v379 = vunpack.c.l.b16 %v112
  %v380 = vunpack.c.l.b16 %v113
  %v381 = vunpack.c.l.b16 %v114
  %v382 = vunpack.c.l.b16 %v115
  %v383 = vunpack.c.l.b16 %v116
  %v384 = vunpack.c.l.b16 %v117
  %v385 = vunpack.c.l.b16 %v118
  %v386 = vunpack.c.l.b16 %v119
  %v387 = vunpack.c.l.b16 %v120
  %v388 = vunpack.c.l.b16 %v121
  %v389 = vunpack.c.l.b16 %v122
  %v390 = vunpack.c.l.b16 %v123
  %v391 = vunpack.c.l.b16 %v124
  %v392 = vunpack.c.l.b16 %v125
  %v393 = vunpack.c.l.b16 %v126
  %v394 = vunpack.c.l.b16 %v127
  %v395 = vunpack.c.l.b16 %v128
  %v396 = vunpack.c.l.b16 %v129
  %v397 = vunpack.c.l.b16 %v130
  %v398 = vunpack.c.l.b16 %v131
  %v399 = vunpack.c.l.b16 %v132
  %v400 = vunpack.c.l.b16 %v133
  %v401 = vunpack.c.l.b16 %v134
  %v402 = vunpack.c.l.b16 %v135
  %v403 = vunpack.c.l.b16 %v136
  %v404 = vunpack.c.l.b16 %v137
  %v405 = vunpack.c.l.b16 %v138
  %v406 = vunpack.c.l.b16 %v139
  %v407 = vunpack.c.l.b16 %v140
  %v408 = vunpack.c.l.b16 %v141
  %v409 = vunpack.c.l.b16 %v142
  %v410 = vunpack.c.l.b16 %v143
  %v411 = vunpack.c.l.b16 %v144
  %v412 = vunpack.c.l.b16 %v145
  %v413 = vpack.c.b16 %v286, %v285
  %v414 = vpack.c.b16 %v288, %v287
  %v415 = vpack.c.b16 %v290, %v289
  %v416 = vpack.c.b16 %v292, %v291
  %v417 = vpack.c.b16 %v294, %v293
  %v418 = vpack.c.b16 %v296, %v295
  %v419 = vpack.c.b16 %v298, %v297
  %v420 = vpack.c.b16 %v300, %v299
  %v421 = vpack.c.b16 %v302, %v301
  %v422 = vpack.c.b16 %v304, %v303
  %v423 = vpack.c.b16 %v306, %v305
  %v424 = vpack.c.b16 %v308, %v307
  %v425 = vpack.c.b16 %v310, %v309
  %v426 = vpack.c.b16 %v312, %v311
  %v427 = vpack.c.b16 %v314, %v313
  %v428 = vpack.c.b16 %v316, %v315
  %v429 = vpack.c.b16 %v318, %v317
  %v430 = vpack.c.b16 %v320, %v319
  %v431 = vpack.c.b16 %v322, %v321
  %v432 = vpack.c.b16 %v324, %v323
  %v433 = vpack.c.b16 %v326, %v325
  %v434 = vpack.c.b16 %v328, %v327
  %v435 = vpack.c.b16 %v330, %v329
  %v436 = vpack.c.b16 %v332, %v331
  %v437 = vpack.c.b16 %v334, %v333
  %v438 = vpack.c.b16 %v336, %v335
  %v439 = vpack.c.b16 %v338, %v337
  %v440 = vpack.c.b16 %v340, %v339
  %v441 = vpack.c.b16 %v342, %v341
  %v442 = vpack.c.b16 %v344, %v343
  %v443 = vpack.c.b16 %v346, %v345
  %v444 = vpack.c.b16 %v348, %v347
  %v445 = vpack.c.b16 %v350, %v349
  %v446 = vpack.c.b16 %v352, %v351
  %v447 = vpack.c.b16 %v354, %v353
  %v448 = vpack.c.b16 %v356, %v355
  %v449 = vpack.c.b16 %v358, %v357
  %v450 = vpack.c.b16 %v360, %v359
  %v451 = vpack.c.b16 %v362, %v361
  %v452 = vpack.c.b16 %v364, %v363
  %v453 = vpack.c.b16 %v366, %v365
  %v454 = vpack.c.b16 %v368, %v367
  %v455 = vpack.c.b16 %v370, %v369
  %v456 = vpack.c.b16 %v372, %v371
  %v457 = vpack.c.b16 %v374, %v373
  %v458 = vpack.c.b16 %v376, %v375
  %v459 = vpack.c.b16 %v378, %v377
  %v460 = vpack.c.b16 %v380, %v379
  %v461 = vpack.c.b16 %v382, %v381
  %v462 = vpack.c.b16 %v384, %v383
  %v463 = vpack.c.b16 %v386, %v385
  %v464 = vpack.c.b16 %v388, %v387
  %v465 = vpack.c.b16 %v390, %v389
  %v466 = vpack.c.b16 %v392, %v391
  %v467 = vpack.c.b16 %v394, %v393
  %v468 = vpack.c.b16 %v396, %v395
  %v469 = vpack.c.b16 %v398, %v397
  %v470 = vpack.c.b16 %v400, %v399
  %v471 = vpack.c.b16 %v402, %v401
  %v472 = vpack.c.b16 %v404, %v403
  %v473 = vpack.c.b16 %v406, %v405
  %v474 = vpack.c.b16 %v408, %v407
  %v475 = vpack.c.b16 %v410, %v409
  %v476 = vpack.c.b16 %v412, %v411
  %v488 = vunpack.c.l.b16 %v146
  %v489 = vunpack.c.l.b16 %v147
  %v490 = vunpack.c.l.b16 %v148
  %v491 = vunpack.c.l.b16 %v149
  %v492 = vunpack.c.l.b16 %v150
  %v493 = vunpack.c.l.b16 %v151
  %v494 = vunpack.c.l.b16 %v152
  %v495 = vunpack.c.l.b16 %v153
  %v496 = vunpack.c.l.b16 %v154
  %v497 = vunpack.c.l.b16 %v155
  %v498 = vunpack.c.l.b16 %v156
  %v499 = vpack.c.b16 %v489, %v488
  %v500 = vpack.c.b16 %v491, %v490
  %v501 = vpack.c.b16 %v493, %v492
  %v502 = vpack.c.b16 %v495, %v494
  %v503 = vpack.c.b16 %v497, %v496
  %v504 = vpack.c.b16 %v498, %v498
  %vm510 = vcmask 662528
  %v512 = vsel %vm510, %v413, 0
  %v515 = vsel %vm510, %v414, 0
  %v518 = vsel %vm510, %v415, 0
  %v521 = vsel %vm510, %v416, 0
  %v524 = vsel %vm510, %v417, 0
  %v527 = vsel %vm510, %v418, 0
  %v530 = vsel %vm510, %v419, 0
  %v533 = vsel %vm510, %v420, 0
  %v536 = vsel %vm510, %v421, 0
  %v539 = vsel %vm510, %v422, 0
  %v542 = vsel %vm510, %v423, 0
  %v545 = vsel %vm510, %v424, 0
  %v548 = vsel %vm510, %v425, 0
  %v551 = vsel %vm510, %v426, 0
  %v554 = vsel %vm510, %v427, 0
  %v557 = vsel %vm510, %v428, 0
  %v560 = vsel %vm510, %v429, 0
  %v563 = vsel %vm510, %v430, 0
  %v566 = vsel %vm510, %v431, 0
  %v569 = vsel %vm510, %v432, 0
  %v572 = vsel %vm510, %v433, 0
  %v575 = vsel %vm510, %v434, 0
  %v578 = vsel %vm510, %v435, 0
  %v581 = vsel %vm510, %v436, 0
  %v584 = vsel %vm510, %v437, 0
  %v587 = vsel %vm510, %v438, 0
  %v590 = vsel %vm510, %v439, 0
  %v593 = vsel %vm510, %v440, 0
  %v596 = vsel %vm510, %v441, 0
  %v599 = vsel %vm510, %v442, 0
  %v602 = vsel %vm510, %v443, 0
  %v605 = vsel %vm510, %v444, 0
  %v608 = vsel %vm510, %v445, 0
  %v611 = vsel %vm510, %v446, 0
  %v614 = vsel %vm510, %v447, 0
  %v617 = vsel %vm510, %v448, 0
  %v620 = vsel %vm510, %v449, 0
  %v623 = vsel %vm510, %v450, 0
  %v626 = vsel %vm510, %v451, 0
  %v629 = vsel %vm510, %v452, 0
  %v632 = vsel %vm510, %v453, 0
  %v635 = vsel %vm510, %v454, 0
  %v638 = vsel %vm510, %v455, 0
  %v641 = vsel %vm510, %v456, 0
  %v644 = vsel %vm510, %v457, 0
  %v647 = vsel %vm510, %v458, 0
  %v650 = vsel %vm510, %v459, 0
  %v653 = vsel %vm510, %v460, 0
  %v656 = vsel %vm510, %v461, 0
  %v659 = vsel %vm510, %v462, 0
  %v662 = vsel %vm510, %v463, 0
  %v665 = vsel %vm510, %v464, 0
  %v668 = vsel %vm510, %v465, 0
  %v671 = vsel %vm510, %v466, 0
  %v674 = vsel %vm510, %v467, 0
  %v677 = vsel %vm510, %v468, 0
  %v680 = vsel %vm510, %v469, 0
  %v683 = vsel %vm510, %v470, 0
  %v686 = vsel %vm510, %v471, 0
  %v689 = vsel %vm510, %v472, 0
  %v692 = vsel %vm510, %v473, 0
  %v695 = vsel %vm510, %v474, 0
  %v698 = vsel %vm510, %v475, 0
  %v701 = vsel %vm510, %v476, 0
  %vm703 = vcmask 1040384
  %v704 = vsel 0, 4294967295, 65535
  %v705 = vsel %vm703, %v704, 0
  %v707 = vand.u32 %v504, %v705
  %709 = vmatprep.subr.bf16.mxu0 0
  %710 = vmatpush1.bf16.msra.mxu0 %v499
  %711 = vmatprep.subr.bf16.mxu0 0
  %712 = vmatpush1.bf16.msra.mxu0 %v500
  %713 = vmatprep.subr.bf16.mxu0 0
  %714 = vmatpush1.bf16.msra.mxu0 %v501
  %715 = vmatprep.subr.bf16.mxu0 0
  %716 = vmatpush1.bf16.msra.mxu0 %v502
  %717 = vmatprep.subr.bf16.mxu0 0
  %718 = vmatpush1.bf16.msra.mxu0 %v503
  %719 = vmatprep.subr.bf16.mxu0 0
  %720 = vmatpush1.bf16.msra.mxu0 %v707
  %721 = vmatprep.subr.bf16.mxu0 0
  %722 = vmatpush1.bf16.msra.mxu0 0
  %723 = vmatprep.subr.bf16.mxu0 0
  %724 = vmatpush1.bf16.msra.mxu0 0
  %725 = vmatprep.subr.bf16.mxu0 0
  %726 = vmatpush1.bf16.msra.mxu0 0
  %727 = vmatprep.subr.bf16.mxu0 0
  %728 = vmatpush1.bf16.msra.mxu0 0
  %729 = vmatprep.subr.bf16.mxu0 0
  %730 = vmatpush1.bf16.msra.mxu0 0
  %731 = vmatprep.subr.bf16.mxu0 0
  %732 = vmatpush1.bf16.msra.mxu0 0
  %733 = vmatprep.subr.bf16.mxu0 0
  %734 = vmatpush1.bf16.msra.mxu0 0
  %735 = vmatprep.subr.bf16.mxu0 0
  %736 = vmatpush1.bf16.msra.mxu0 0
  %737 = vmatprep.subr.bf16.mxu0 0
  %738 = vmatpush1.bf16.msra.mxu0 0
  %739 = vmatprep.subr.bf16.mxu0 0
  %740 = vmatpush1.bf16.msra.mxu0 0
  %741 = vmatprep.mubr.bf16.mxu0 0
  %742 = vmatmul.mubr.bf16.gmra.mrb[0].mxu0 %v512
  %v743 = vpop.f32.mrb[0].mxu0
  %v744 = vadd.f32 0.0, %v743
  %v745 = vpop.f32.mrb[0].mxu0
  %v746 = vpop.f32.mrb[0].mxu0
  %v747 = vadd.f32 0.0, %v746
  %v748 = vpop.f32.mrb[0].mxu0
  %749 = vmatprep.mubr.bf16.mxu0 0
  %750 = vmatmul.mubr.bf16.gmra.mrb[0].mxu0 %v515
  %v751 = vpop.f32.mrb[0].mxu0
  %v752 = vadd.f32 0.0, %v751
  %v753 = vpop.f32.mrb[0].mxu0
  %v754 = vpop.f32.mrb[0].mxu0
  %v755 = vadd.f32 0.0, %v754
  %v756 = vpop.f32.mrb[0].mxu0
  %757 = vmatprep.mubr.bf16.mxu0 0
  %758 = vmatmul.mubr.bf16.gmra.mrb[0].mxu0 %v518
  %v759 = vpop.f32.mrb[0].mxu0
  %v760 = vadd.f32 0.0, %v759
  %v761 = vpop.f32.mrb[0].mxu0
  %v762 = vpop.f32.mrb[0].mxu0
  %v763 = vadd.f32 0.0, %v762
  %v764 = vpop.f32.mrb[0].mxu0
  %765 = vmatprep.mubr.bf16.mxu0 0
  %766 = vmatmul.mubr.bf16.gmra.mrb[0].mxu0 %v521
  %v767 = vpop.f32.mrb[0].mxu0
  %v768 = vadd.f32 0.0, %v767
  %v769 = vpop.f32.mrb[0].mxu0
  %v770 = vpop.f32.mrb[0].mxu0
  %v771 = vadd.f32 0.0, %v770
  %v772 = vpop.f32.mrb[0].mxu0
  %773 = vmatprep.mubr.bf16.mxu0 0
  %774 = vmatmul.mubr.bf16.gmra.mrb[0].mxu0 %v524
  %v775 = vpop.f32.mrb[0].mxu0
  %v776 = vadd.f32 0.0, %v775
  %v777 = vpop.f32.mrb[0].mxu0
  %v778 = vpop.f32.mrb[0].mxu0
  %v779 = vadd.f32 0.0, %v778
  %v780 = vpop.f32.mrb[0].mxu0
  %781 = vmatprep.mubr.bf16.mxu0 0
  %782 = vmatmul.mubr.bf16.gmra.mrb[0].mxu0 %v527
  %v783 = vpop.f32.mrb[0].mxu0
  %v784 = vadd.f32 0.0, %v783
  %v785 = vpop.f32.mrb[0].mxu0
  %v786 = vpop.f32.mrb[0].mxu0
  %v787 = vadd.f32 0.0, %v786
  %v788 = vpop.f32.mrb[0].mxu0
  %789 = vmatprep.mubr.bf16.mxu0 0
  %790 = vmatmul.mubr.bf16.gmra.mrb[0].mxu0 %v530
  %v791 = vpop.f32.mrb[0].mxu0
  %v792 = vadd.f32 0.0, %v791
  %v793 = vpop.f32.mrb[0].mxu0
  %v794 = vpop.f32.mrb[0].mxu0
  %v795 = vadd.f32 0.0, %v794
  %v796 = vpop.f32.mrb[0].mxu0
  %797 = vmatprep.mubr.bf16.mxu0 0
  %798 = vmatmul.mubr.bf16.gmra.mrb[0].mxu0 %v533
  %v799 = vpop.f32.mrb[0].mxu0
  %v800 = vadd.f32 0.0, %v799
  %v801 = vpop.f32.mrb[0].mxu0
  %v802 = vpop.f32.mrb[0].mxu0
  %v803 = vadd.f32 0.0, %v802
  %v804 = vpop.f32.mrb[0].mxu0
  %805 = vmatprep.mubr.bf16.mxu0 0
  %806 = vmatmul.mubr.bf16.gmra.mrb[0].mxu0 %v536
  %v807 = vpop.f32.mrb[0].mxu0
  %v808 = vadd.f32 0.0, %v807
  %v809 = vpop.f32.mrb[0].mxu0
  %v810 = vpop.f32.mrb[0].mxu0
  %v811 = vadd.f32 0.0, %v810
  %v812 = vpop.f32.mrb[0].mxu0
  %813 = vmatprep.mubr.bf16.mxu0 0
  %814 = vmatmul.mubr.bf16.gmra.mrb[0].mxu0 %v539
  %v815 = vpop.f32.mrb[0].mxu0
  %v816 = vadd.f32 0.0, %v815
  %v817 = vpop.f32.mrb[0].mxu0
  %v818 = vpop.f32.mrb[0].mxu0
  %v819 = vadd.f32 0.0, %v818
  %v820 = vpop.f32.mrb[0].mxu0
  %821 = vmatprep.mubr.bf16.mxu0 0
  %822 = vmatmul.mubr.bf16.gmra.mrb[0].mxu0 %v542
  %v823 = vpop.f32.mrb[0].mxu0
  %v824 = vadd.f32 0.0, %v823
  %v825 = vpop.f32.mrb[0].mxu0
  %v826 = vpop.f32.mrb[0].mxu0
  %v827 = vadd.f32 0.0, %v826
  %v828 = vpop.f32.mrb[0].mxu0
  %829 = vmatprep.mubr.bf16.mxu0 0
  %830 = vmatmul.mubr.bf16.gmra.mrb[0].mxu0 %v545
  %v831 = vpop.f32.mrb[0].mxu0
  %v832 = vadd.f32 0.0, %v831
  %v833 = vpop.f32.mrb[0].mxu0
  %v834 = vpop.f32.mrb[0].mxu0
  %v835 = vadd.f32 0.0, %v834
  %v836 = vpop.f32.mrb[0].mxu0
  %837 = vmatprep.mubr.bf16.mxu0 0
  %838 = vmatmul.mubr.bf16.gmra.mrb[0].mxu0 %v548
  %v839 = vpop.f32.mrb[0].mxu0
  %v840 = vadd.f32 0.0, %v839
  %v841 = vpop.f32.mrb[0].mxu0
  %v842 = vpop.f32.mrb[0].mxu0
  %v843 = vadd.f32 0.0, %v842
  %v844 = vpop.f32.mrb[0].mxu0
  %845 = vmatprep.mubr.bf16.mxu0 0
  %846 = vmatmul.mubr.bf16.gmra.mrb[0].mxu0 %v551
  %v847 = vpop.f32.mrb[0].mxu0
  %v848 = vadd.f32 0.0, %v847
  %v849 = vpop.f32.mrb[0].mxu0
  %v850 = vpop.f32.mrb[0].mxu0
  %v851 = vadd.f32 0.0, %v850
  %v852 = vpop.f32.mrb[0].mxu0
  %853 = vmatprep.mubr.bf16.mxu0 0
  %854 = vmatmul.mubr.bf16.gmra.mrb[0].mxu0 %v554
  %v855 = vpop.f32.mrb[0].mxu0
  %v856 = vadd.f32 0.0, %v855
  %v857 = vpop.f32.mrb[0].mxu0
  %v858 = vpop.f32.mrb[0].mxu0
  %v859 = vadd.f32 0.0, %v858
  %v860 = vpop.f32.mrb[0].mxu0
  %861 = vmatprep.mubr.bf16.mxu0 0
  %862 = vmatmul.mubr.bf16.gmra.mrb[0].mxu0 %v557
  %v863 = vpop.f32.mrb[0].mxu0
  %v864 = vadd.f32 0.0, %v863
  %v865 = vpop.f32.mrb[0].mxu0
  %v866 = vpop.f32.mrb[0].mxu0
  %v867 = vadd.f32 0.0, %v866
  %v868 = vpop.f32.mrb[0].mxu0
  %869 = vmatprep.mubr.bf16.mxu0 0
  %870 = vmatmul.mubr.bf16.gmra.mrb[0].mxu0 %v560
  %v871 = vpop.f32.mrb[0].mxu0
  %v872 = vadd.f32 0.0, %v871
  %v873 = vpop.f32.mrb[0].mxu0
  %v874 = vpop.f32.mrb[0].mxu0
  %v875 = vadd.f32 0.0, %v874
  %v876 = vpop.f32.mrb[0].mxu0
  %877 = vmatprep.mubr.bf16.mxu0 0
  %878 = vmatmul.mubr.bf16.gmra.mrb[0].mxu0 %v563
  %v879 = vpop.f32.mrb[0].mxu0
  %v880 = vadd.f32 0.0, %v879
  %v881 = vpop.f32.mrb[0].mxu0
  %v882 = vpop.f32.mrb[0].mxu0
  %v883 = vadd.f32 0.0, %v882
  %v884 = vpop.f32.mrb[0].mxu0
  %885 = vmatprep.mubr.bf16.mxu0 0
  %886 = vmatmul.mubr.bf16.gmra.mrb[0].mxu0 %v566
  %v887 = vpop.f32.mrb[0].mxu0
  %v888 = vadd.f32 0.0, %v887
  %v889 = vpop.f32.mrb[0].mxu0
  %v890 = vpop.f32.mrb[0].mxu0
  %v891 = vadd.f32 0.0, %v890
  %v892 = vpop.f32.mrb[0].mxu0
  %893 = vmatprep.mubr.bf16.mxu0 0
  %894 = vmatmul.mubr.bf16.gmra.mrb[0].mxu0 %v569
  %v895 = vpop.f32.mrb[0].mxu0
  %v896 = vadd.f32 0.0, %v895
  %v897 = vpop.f32.mrb[0].mxu0
  %v898 = vpop.f32.mrb[0].mxu0
  %v899 = vadd.f32 0.0, %v898
  %v900 = vpop.f32.mrb[0].mxu0
  %901 = vmatprep.mubr.bf16.mxu0 0
  %902 = vmatmul.mubr.bf16.gmra.mrb[0].mxu0 %v572
  %v903 = vpop.f32.mrb[0].mxu0
  %v904 = vadd.f32 0.0, %v903
  %v905 = vpop.f32.mrb[0].mxu0
  %v906 = vpop.f32.mrb[0].mxu0
  %v907 = vadd.f32 0.0, %v906
  %v908 = vpop.f32.mrb[0].mxu0
  %909 = vmatprep.mubr.bf16.mxu0 0
  %910 = vmatmul.mubr.bf16.gmra.mrb[0].mxu0 %v575
  %v911 = vpop.f32.mrb[0].mxu0
  %v912 = vadd.f32 0.0, %v911
  %v913 = vpop.f32.mrb[0].mxu0
  %v914 = vpop.f32.mrb[0].mxu0
  %v915 = vadd.f32 0.0, %v914
  %v916 = vpop.f32.mrb[0].mxu0
  %917 = vmatprep.mubr.bf16.mxu0 0
  %918 = vmatmul.mubr.bf16.gmra.mrb[0].mxu0 %v578
  %v919 = vpop.f32.mrb[0].mxu0
  %v920 = vadd.f32 0.0, %v919
  %v921 = vpop.f32.mrb[0].mxu0
  %v922 = vpop.f32.mrb[0].mxu0
  %v923 = vadd.f32 0.0, %v922
  %v924 = vpop.f32.mrb[0].mxu0
  %925 = vmatprep.mubr.bf16.mxu0 0
  %926 = vmatmul.mubr.bf16.gmra.mrb[0].mxu0 %v581
  %v927 = vpop.f32.mrb[0].mxu0
  %v928 = vadd.f32 0.0, %v927
  %v929 = vpop.f32.mrb[0].mxu0
  %v930 = vpop.f32.mrb[0].mxu0
  %v931 = vadd.f32 0.0, %v930
  %v932 = vpop.f32.mrb[0].mxu0
  %933 = vmatprep.mubr.bf16.mxu0 0
  %934 = vmatmul.mubr.bf16.gmra.mrb[0].mxu0 %v584
  %v935 = vpop.f32.mrb[0].mxu0
  %v936 = vadd.f32 0.0, %v935
  %v937 = vpop.f32.mrb[0].mxu0
  %v938 = vpop.f32.mrb[0].mxu0
  %v939 = vadd.f32 0.0, %v938
  %v940 = vpop.f32.mrb[0].mxu0
  %941 = vmatprep.mubr.bf16.mxu0 0
  %942 = vmatmul.mubr.bf16.gmra.mrb[0].mxu0 %v587
  %v943 = vpop.f32.mrb[0].mxu0
  %v944 = vadd.f32 0.0, %v943
  %v945 = vpop.f32.mrb[0].mxu0
  %v946 = vpop.f32.mrb[0].mxu0
  %v947 = vadd.f32 0.0, %v946
  %v948 = vpop.f32.mrb[0].mxu0
  %949 = vmatprep.mubr.bf16.mxu0 0
  %950 = vmatmul.mubr.bf16.gmra.mrb[0].mxu0 %v590
  %v951 = vpop.f32.mrb[0].mxu0
  %v952 = vadd.f32 0.0, %v951
  %v953 = vpop.f32.mrb[0].mxu0
  %v954 = vpop.f32.mrb[0].mxu0
  %v955 = vadd.f32 0.0, %v954
  %v956 = vpop.f32.mrb[0].mxu0
  %957 = vmatprep.mubr.bf16.mxu0 0
  %958 = vmatmul.mubr.bf16.gmra.mrb[0].mxu0 %v593
  %v959 = vpop.f32.mrb[0].mxu0
  %v960 = vadd.f32 0.0, %v959
  %v961 = vpop.f32.mrb[0].mxu0
  %v962 = vpop.f32.mrb[0].mxu0
  %v963 = vadd.f32 0.0, %v962
  %v964 = vpop.f32.mrb[0].mxu0
  %965 = vmatprep.mubr.bf16.mxu0 0
  %966 = vmatmul.mubr.bf16.gmra.mrb[0].mxu0 %v596
  %v967 = vpop.f32.mrb[0].mxu0
  %v968 = vadd.f32 0.0, %v967
  %v969 = vpop.f32.mrb[0].mxu0
  %v970 = vpop.f32.mrb[0].mxu0
  %v971 = vadd.f32 0.0, %v970
  %v972 = vpop.f32.mrb[0].mxu0
  %973 = vmatprep.mubr.bf16.mxu0 0
  %974 = vmatmul.mubr.bf16.gmra.mrb[0].mxu0 %v599
  %v975 = vpop.f32.mrb[0].mxu0
  %v976 = vadd.f32 0.0, %v975
  %v977 = vpop.f32.mrb[0].mxu0
  %v978 = vpop.f32.mrb[0].mxu0
  %v979 = vadd.f32 0.0, %v978
  %v980 = vpop.f32.mrb[0].mxu0
  %981 = vmatprep.mubr.bf16.mxu0 0
  %982 = vmatmul.mubr.bf16.gmra.mrb[0].mxu0 %v602
  %v983 = vpop.f32.mrb[0].mxu0
  %v984 = vadd.f32 0.0, %v983
  %v985 = vpop.f32.mrb[0].mxu0
  %v986 = vpop.f32.mrb[0].mxu0
  %v987 = vadd.f32 0.0, %v986
  %v988 = vpop.f32.mrb[0].mxu0
  %989 = vmatprep.mubr.bf16.mxu0 0
  %990 = vmatmul.mubr.bf16.gmra.mrb[0].mxu0 %v605
  %v991 = vpop.f32.mrb[0].mxu0
  %v992 = vadd.f32 0.0, %v991
  %v993 = vpop.f32.mrb[0].mxu0
  %v994 = vpop.f32.mrb[0].mxu0
  %v995 = vadd.f32 0.0, %v994
  %v996 = vpop.f32.mrb[0].mxu0
  %997 = vmatprep.mubr.bf16.mxu0 0
  %998 = vmatmul.mubr.bf16.gmra.mrb[0].mxu0 %v608
  %v999 = vpop.f32.mrb[0].mxu0
  %v1000 = vadd.f32 0.0, %v999
  %v1001 = vpop.f32.mrb[0].mxu0
  %v1002 = vpop.f32.mrb[0].mxu0
  %v1003 = vadd.f32 0.0, %v1002
  %v1004 = vpop.f32.mrb[0].mxu0
  %1005 = vmatprep.mubr.bf16.mxu0 0
  %1006 = vmatmul.mubr.bf16.gmra.mrb[0].mxu0 %v611
  %v1007 = vpop.f32.mrb[0].mxu0
  %v1008 = vadd.f32 0.0, %v1007
  %v1009 = vpop.f32.mrb[0].mxu0
  %v1010 = vpop.f32.mrb[0].mxu0
  %v1011 = vadd.f32 0.0, %v1010
  %v1012 = vpop.f32.mrb[0].mxu0
  %1013 = vmatprep.mubr.bf16.mxu0 0
  %1014 = vmatmul.mubr.bf16.gmra.mrb[0].mxu0 %v614
  %v1015 = vpop.f32.mrb[0].mxu0
  %v1016 = vadd.f32 0.0, %v1015
  %v1017 = vpop.f32.mrb[0].mxu0
  %v1018 = vpop.f32.mrb[0].mxu0
  %v1019 = vadd.f32 0.0, %v1018
  %v1020 = vpop.f32.mrb[0].mxu0
  %1021 = vmatprep.mubr.bf16.mxu0 0
  %1022 = vmatmul.mubr.bf16.gmra.mrb[0].mxu0 %v617
  %v1023 = vpop.f32.mrb[0].mxu0
  %v1024 = vadd.f32 0.0, %v1023
  %v1025 = vpop.f32.mrb[0].mxu0
  %v1026 = vpop.f32.mrb[0].mxu0
  %v1027 = vadd.f32 0.0, %v1026
  %v1028 = vpop.f32.mrb[0].mxu0
  %1029 = vmatprep.mubr.bf16.mxu0 0
  %1030 = vmatmul.mubr.bf16.gmra.mrb[0].mxu0 %v620
  %v1031 = vpop.f32.mrb[0].mxu0
  %v1032 = vadd.f32 0.0, %v1031
  %v1033 = vpop.f32.mrb[0].mxu0
  %v1034 = vpop.f32.mrb[0].mxu0
  %v1035 = vadd.f32 0.0, %v1034
  %v1036 = vpop.f32.mrb[0].mxu0
  %1037 = vmatprep.mubr.bf16.mxu0 0
  %1038 = vmatmul.mubr.bf16.gmra.mrb[0].mxu0 %v623
  %v1039 = vpop.f32.mrb[0].mxu0
  %v1040 = vadd.f32 0.0, %v1039
  %v1041 = vpop.f32.mrb[0].mxu0
  %v1042 = vpop.f32.mrb[0].mxu0
  %v1043 = vadd.f32 0.0, %v1042
  %v1044 = vpop.f32.mrb[0].mxu0
  %1045 = vmatprep.mubr.bf16.mxu0 0
  %1046 = vmatmul.mubr.bf16.gmra.mrb[0].mxu0 %v626
  %v1047 = vpop.f32.mrb[0].mxu0
  %v1048 = vadd.f32 0.0, %v1047
  %v1049 = vpop.f32.mrb[0].mxu0
  %v1050 = vpop.f32.mrb[0].mxu0
  %v1051 = vadd.f32 0.0, %v1050
  %v1052 = vpop.f32.mrb[0].mxu0
  %1053 = vmatprep.mubr.bf16.mxu0 0
  %1054 = vmatmul.mubr.bf16.gmra.mrb[0].mxu0 %v629
  %v1055 = vpop.f32.mrb[0].mxu0
  %v1056 = vadd.f32 0.0, %v1055
  %v1057 = vpop.f32.mrb[0].mxu0
  %v1058 = vpop.f32.mrb[0].mxu0
  %v1059 = vadd.f32 0.0, %v1058
  %v1060 = vpop.f32.mrb[0].mxu0
  %1061 = vmatprep.mubr.bf16.mxu0 0
  %1062 = vmatmul.mubr.bf16.gmra.mrb[0].mxu0 %v632
  %v1063 = vpop.f32.mrb[0].mxu0
  %v1064 = vadd.f32 0.0, %v1063
  %v1065 = vpop.f32.mrb[0].mxu0
  %v1066 = vpop.f32.mrb[0].mxu0
  %v1067 = vadd.f32 0.0, %v1066
  %v1068 = vpop.f32.mrb[0].mxu0
  %1069 = vmatprep.mubr.bf16.mxu0 0
  %1070 = vmatmul.mubr.bf16.gmra.mrb[0].mxu0 %v635
  %v1071 = vpop.f32.mrb[0].mxu0
  %v1072 = vadd.f32 0.0, %v1071
  %v1073 = vpop.f32.mrb[0].mxu0
  %v1074 = vpop.f32.mrb[0].mxu0
  %v1075 = vadd.f32 0.0, %v1074
  %v1076 = vpop.f32.mrb[0].mxu0
  %1077 = vmatprep.mubr.bf16.mxu0 0
  %1078 = vmatmul.mubr.bf16.gmra.mrb[0].mxu0 %v638
  %v1079 = vpop.f32.mrb[0].mxu0
  %v1080 = vadd.f32 0.0, %v1079
  %v1081 = vpop.f32.mrb[0].mxu0
  %v1082 = vpop.f32.mrb[0].mxu0
  %v1083 = vadd.f32 0.0, %v1082
  %v1084 = vpop.f32.mrb[0].mxu0
  %1085 = vmatprep.mubr.bf16.mxu0 0
  %1086 = vmatmul.mubr.bf16.gmra.mrb[0].mxu0 %v641
  %v1087 = vpop.f32.mrb[0].mxu0
  %v1088 = vadd.f32 0.0, %v1087
  %v1089 = vpop.f32.mrb[0].mxu0
  %v1090 = vpop.f32.mrb[0].mxu0
  %v1091 = vadd.f32 0.0, %v1090
  %v1092 = vpop.f32.mrb[0].mxu0
  %1093 = vmatprep.mubr.bf16.mxu0 0
  %1094 = vmatmul.mubr.bf16.gmra.mrb[0].mxu0 %v644
  %v1095 = vpop.f32.mrb[0].mxu0
  %v1096 = vadd.f32 0.0, %v1095
  %v1097 = vpop.f32.mrb[0].mxu0
  %v1098 = vpop.f32.mrb[0].mxu0
  %v1099 = vadd.f32 0.0, %v1098
  %v1100 = vpop.f32.mrb[0].mxu0
  %1101 = vmatprep.mubr.bf16.mxu0 0
  %1102 = vmatmul.mubr.bf16.gmra.mrb[0].mxu0 %v647
  %v1103 = vpop.f32.mrb[0].mxu0
  %v1104 = vadd.f32 0.0, %v1103
  %v1105 = vpop.f32.mrb[0].mxu0
  %v1106 = vpop.f32.mrb[0].mxu0
  %v1107 = vadd.f32 0.0, %v1106
  %v1108 = vpop.f32.mrb[0].mxu0
  %1109 = vmatprep.mubr.bf16.mxu0 0
  %1110 = vmatmul.mubr.bf16.gmra.mrb[0].mxu0 %v650
  %v1111 = vpop.f32.mrb[0].mxu0
  %v1112 = vadd.f32 0.0, %v1111
  %v1113 = vpop.f32.mrb[0].mxu0
  %v1114 = vpop.f32.mrb[0].mxu0
  %v1115 = vadd.f32 0.0, %v1114
  %v1116 = vpop.f32.mrb[0].mxu0
  %1117 = vmatprep.mubr.bf16.mxu0 0
  %1118 = vmatmul.mubr.bf16.gmra.mrb[0].mxu0 %v653
  %v1119 = vpop.f32.mrb[0].mxu0
  %v1120 = vadd.f32 0.0, %v1119
  %v1121 = vpop.f32.mrb[0].mxu0
  %v1122 = vpop.f32.mrb[0].mxu0
  %v1123 = vadd.f32 0.0, %v1122
  %v1124 = vpop.f32.mrb[0].mxu0
  %1125 = vmatprep.mubr.bf16.mxu0 0
  %1126 = vmatmul.mubr.bf16.gmra.mrb[0].mxu0 %v656
  %v1127 = vpop.f32.mrb[0].mxu0
  %v1128 = vadd.f32 0.0, %v1127
  %v1129 = vpop.f32.mrb[0].mxu0
  %v1130 = vpop.f32.mrb[0].mxu0
  %v1131 = vadd.f32 0.0, %v1130
  %v1132 = vpop.f32.mrb[0].mxu0
  %1133 = vmatprep.mubr.bf16.mxu0 0
  %1134 = vmatmul.mubr.bf16.gmra.mrb[0].mxu0 %v659
  %v1135 = vpop.f32.mrb[0].mxu0
  %v1136 = vadd.f32 0.0, %v1135
  %v1137 = vpop.f32.mrb[0].mxu0
  %v1138 = vpop.f32.mrb[0].mxu0
  %v1139 = vadd.f32 0.0, %v1138
  %v1140 = vpop.f32.mrb[0].mxu0
  %1141 = vmatprep.mubr.bf16.mxu0 0
  %1142 = vmatmul.mubr.bf16.gmra.mrb[0].mxu0 %v662
  %v1143 = vpop.f32.mrb[0].mxu0
  %v1144 = vadd.f32 0.0, %v1143
  %v1145 = vpop.f32.mrb[0].mxu0
  %v1146 = vpop.f32.mrb[0].mxu0
  %v1147 = vadd.f32 0.0, %v1146
  %v1148 = vpop.f32.mrb[0].mxu0
  %1149 = vmatprep.mubr.bf16.mxu0 0
  %1150 = vmatmul.mubr.bf16.gmra.mrb[0].mxu0 %v665
  %v1151 = vpop.f32.mrb[0].mxu0
  %v1152 = vadd.f32 0.0, %v1151
  %v1153 = vpop.f32.mrb[0].mxu0
  %v1154 = vpop.f32.mrb[0].mxu0
  %v1155 = vadd.f32 0.0, %v1154
  %v1156 = vpop.f32.mrb[0].mxu0
  %1157 = vmatprep.mubr.bf16.mxu0 0
  %1158 = vmatmul.mubr.bf16.gmra.mrb[0].mxu0 %v668
  %v1159 = vpop.f32.mrb[0].mxu0
  %v1160 = vadd.f32 0.0, %v1159
  %v1161 = vpop.f32.mrb[0].mxu0
  %v1162 = vpop.f32.mrb[0].mxu0
  %v1163 = vadd.f32 0.0, %v1162
  %v1164 = vpop.f32.mrb[0].mxu0
  %1165 = vmatprep.mubr.bf16.mxu0 0
  %1166 = vmatmul.mubr.bf16.gmra.mrb[0].mxu0 %v671
  %v1167 = vpop.f32.mrb[0].mxu0
  %v1168 = vadd.f32 0.0, %v1167
  %v1169 = vpop.f32.mrb[0].mxu0
  %v1170 = vpop.f32.mrb[0].mxu0
  %v1171 = vadd.f32 0.0, %v1170
  %v1172 = vpop.f32.mrb[0].mxu0
  %1173 = vmatprep.mubr.bf16.mxu0 0
  %1174 = vmatmul.mubr.bf16.gmra.mrb[0].mxu0 %v674
  %v1175 = vpop.f32.mrb[0].mxu0
  %v1176 = vadd.f32 0.0, %v1175
  %v1177 = vpop.f32.mrb[0].mxu0
  %v1178 = vpop.f32.mrb[0].mxu0
  %v1179 = vadd.f32 0.0, %v1178
  %v1180 = vpop.f32.mrb[0].mxu0
  %1181 = vmatprep.mubr.bf16.mxu0 0
  %1182 = vmatmul.mubr.bf16.gmra.mrb[0].mxu0 %v677
  %v1183 = vpop.f32.mrb[0].mxu0
  %v1184 = vadd.f32 0.0, %v1183
  %v1185 = vpop.f32.mrb[0].mxu0
  %v1186 = vpop.f32.mrb[0].mxu0
  %v1187 = vadd.f32 0.0, %v1186
  %v1188 = vpop.f32.mrb[0].mxu0
  %1189 = vmatprep.mubr.bf16.mxu0 0
  %1190 = vmatmul.mubr.bf16.gmra.mrb[0].mxu0 %v680
  %v1191 = vpop.f32.mrb[0].mxu0
  %v1192 = vadd.f32 0.0, %v1191
  %v1193 = vpop.f32.mrb[0].mxu0
  %v1194 = vpop.f32.mrb[0].mxu0
  %v1195 = vadd.f32 0.0, %v1194
  %v1196 = vpop.f32.mrb[0].mxu0
  %1197 = vmatprep.mubr.bf16.mxu0 0
  %1198 = vmatmul.mubr.bf16.gmra.mrb[0].mxu0 %v683
  %v1199 = vpop.f32.mrb[0].mxu0
  %v1200 = vadd.f32 0.0, %v1199
  %v1201 = vpop.f32.mrb[0].mxu0
  %v1202 = vpop.f32.mrb[0].mxu0
  %v1203 = vadd.f32 0.0, %v1202
  %v1204 = vpop.f32.mrb[0].mxu0
  %1205 = vmatprep.mubr.bf16.mxu0 0
  %1206 = vmatmul.mubr.bf16.gmra.mrb[0].mxu0 %v686
  %v1207 = vpop.f32.mrb[0].mxu0
  %v1208 = vadd.f32 0.0, %v1207
  %v1209 = vpop.f32.mrb[0].mxu0
  %v1210 = vpop.f32.mrb[0].mxu0
  %v1211 = vadd.f32 0.0, %v1210
  %v1212 = vpop.f32.mrb[0].mxu0
  %1213 = vmatprep.mubr.bf16.mxu0 0
  %1214 = vmatmul.mubr.bf16.gmra.mrb[0].mxu0 %v689
  %v1215 = vpop.f32.mrb[0].mxu0
  %v1216 = vadd.f32 0.0, %v1215
  %v1217 = vpop.f32.mrb[0].mxu0
  %v1218 = vpop.f32.mrb[0].mxu0
  %v1219 = vadd.f32 0.0, %v1218
  %v1220 = vpop.f32.mrb[0].mxu0
  %1221 = vmatprep.mubr.bf16.mxu0 0
  %1222 = vmatmul.mubr.bf16.gmra.mrb[0].mxu0 %v692
  %v1223 = vpop.f32.mrb[0].mxu0
  %v1224 = vadd.f32 0.0, %v1223
  %v1225 = vpop.f32.mrb[0].mxu0
  %v1226 = vpop.f32.mrb[0].mxu0
  %v1227 = vadd.f32 0.0, %v1226
  %v1228 = vpop.f32.mrb[0].mxu0
  %1229 = vmatprep.mubr.bf16.mxu0 0
  %1230 = vmatmul.mubr.bf16.gmra.mrb[0].mxu0 %v695
  %v1231 = vpop.f32.mrb[0].mxu0
  %v1232 = vadd.f32 0.0, %v1231
  %v1233 = vpop.f32.mrb[0].mxu0
  %v1234 = vpop.f32.mrb[0].mxu0
  %v1235 = vadd.f32 0.0, %v1234
  %v1236 = vpop.f32.mrb[0].mxu0
  %1237 = vmatprep.mubr.bf16.mxu0 0
  %1238 = vmatmul.mubr.bf16.gmra.mrb[0].mxu0 %v698
  %v1239 = vpop.f32.mrb[0].mxu0
  %v1240 = vadd.f32 0.0, %v1239
  %v1241 = vpop.f32.mrb[0].mxu0
  %v1242 = vpop.f32.mrb[0].mxu0
  %v1243 = vadd.f32 0.0, %v1242
  %v1244 = vpop.f32.mrb[0].mxu0
  %1245 = vmatprep.mubr.bf16.mxu0 0
  %1246 = vmatmul.mubr.bf16.gmra.mrb[0].mxu0 %v701
  %v1247 = vpop.f32.mrb[0].mxu0
  %v1248 = vadd.f32 0.0, %v1247
  %v1249 = vpop.f32.mrb[0].mxu0
  %v1250 = vpop.f32.mrb[0].mxu0
  %v1251 = vadd.f32 0.0, %v1250
  %v1252 = vpop.f32.mrb[0].mxu0
  %1253 = vdwg.mxu0
  %v1254 = vld [vmem:[%s2] sm:$0x1]
  %v1255 = vld [vmem:[%s3] sm:$0x1]
  %vm1256 = vcmask 31744
  %v1257 = vsel %vm1256, %v744, 0.0
  %v1258 = vsel %vm1256, %v747, 0.0
  %v1259 = vadd.f32 %v1257, %v1258
  %v1260 = vsel %vm1256, %v752, 0.0
  %v1261 = vadd.f32 %v1259, %v1260
  %v1262 = vsel %vm1256, %v755, 0.0
  %v1263 = vadd.f32 %v1261, %v1262
  %v1264 = vsel %vm1256, %v760, 0.0
  %v1265 = vadd.f32 %v1263, %v1264
  %v1266 = vsel %vm1256, %v763, 0.0
  %v1267 = vadd.f32 %v1265, %v1266
  %v1268 = vsel %vm1256, %v768, 0.0
  %v1269 = vadd.f32 %v1267, %v1268
  %v1270 = vsel %vm1256, %v771, 0.0
  %v1271 = vadd.f32 %v1269, %v1270
  %v1272 = vsel %vm1256, %v776, 0.0
  %v1273 = vadd.f32 %v1271, %v1272
  %v1274 = vsel %vm1256, %v779, 0.0
  %v1275 = vadd.f32 %v1273, %v1274
  %v1276 = vsel %vm1256, %v784, 0.0
  %v1277 = vadd.f32 %v1275, %v1276
  %v1278 = vsel %vm1256, %v787, 0.0
  %v1279 = vadd.f32 %v1277, %v1278
  %v1280 = vsel %vm1256, %v792, 0.0
  %v1281 = vadd.f32 %v1279, %v1280
  %v1282 = vsel %vm1256, %v795, 0.0
  %v1283 = vadd.f32 %v1281, %v1282
  %v1284 = vsel %vm1256, %v800, 0.0
  %v1285 = vadd.f32 %v1283, %v1284
  %v1286 = vsel %vm1256, %v803, 0.0
  %v1287 = vadd.f32 %v1285, %v1286
  %v1288 = vsel %vm1256, %v808, 0.0
  %v1289 = vadd.f32 %v1287, %v1288
  %v1290 = vsel %vm1256, %v811, 0.0
  %v1291 = vadd.f32 %v1289, %v1290
  %v1292 = vsel %vm1256, %v816, 0.0
  %v1293 = vadd.f32 %v1291, %v1292
  %v1294 = vsel %vm1256, %v819, 0.0
  %v1295 = vadd.f32 %v1293, %v1294
  %v1296 = vsel %vm1256, %v824, 0.0
  %v1297 = vadd.f32 %v1295, %v1296
  %v1298 = vsel %vm1256, %v827, 0.0
  %v1299 = vadd.f32 %v1297, %v1298
  %v1300 = vsel %vm1256, %v832, 0.0
  %v1301 = vadd.f32 %v1299, %v1300
  %v1302 = vsel %vm1256, %v835, 0.0
  %v1303 = vadd.f32 %v1301, %v1302
  %v1304 = vsel %vm1256, %v840, 0.0
  %v1305 = vadd.f32 %v1303, %v1304
  %v1306 = vsel %vm1256, %v843, 0.0
  %v1307 = vadd.f32 %v1305, %v1306
  %v1308 = vsel %vm1256, %v848, 0.0
  %v1309 = vadd.f32 %v1307, %v1308
  %v1310 = vsel %vm1256, %v851, 0.0
  %v1311 = vadd.f32 %v1309, %v1310
  %v1312 = vsel %vm1256, %v856, 0.0
  %v1313 = vadd.f32 %v1311, %v1312
  %v1314 = vsel %vm1256, %v859, 0.0
  %v1315 = vadd.f32 %v1313, %v1314
  %v1316 = vsel %vm1256, %v864, 0.0
  %v1317 = vadd.f32 %v1315, %v1316
  %v1318 = vsel %vm1256, %v867, 0.0
  %v1319 = vadd.f32 %v1317, %v1318
  %v1320 = vsel %vm1256, %v872, 0.0
  %v1321 = vadd.f32 %v1319, %v1320
  %v1322 = vsel %vm1256, %v875, 0.0
  %v1323 = vadd.f32 %v1321, %v1322
  %v1324 = vsel %vm1256, %v880, 0.0
  %v1325 = vadd.f32 %v1323, %v1324
  %v1326 = vsel %vm1256, %v883, 0.0
  %v1327 = vadd.f32 %v1325, %v1326
  %v1328 = vsel %vm1256, %v888, 0.0
  %v1329 = vadd.f32 %v1327, %v1328
  %v1330 = vsel %vm1256, %v891, 0.0
  %v1331 = vadd.f32 %v1329, %v1330
  %v1332 = vsel %vm1256, %v896, 0.0
  %v1333 = vadd.f32 %v1331, %v1332
  %v1334 = vsel %vm1256, %v899, 0.0
  %v1335 = vadd.f32 %v1333, %v1334
  %v1336 = vsel %vm1256, %v904, 0.0
  %v1337 = vadd.f32 %v1335, %v1336
  %v1338 = vsel %vm1256, %v907, 0.0
  %v1339 = vadd.f32 %v1337, %v1338
  %v1340 = vsel %vm1256, %v912, 0.0
  %v1341 = vadd.f32 %v1339, %v1340
  %v1342 = vsel %vm1256, %v915, 0.0
  %v1343 = vadd.f32 %v1341, %v1342
  %v1344 = vsel %vm1256, %v920, 0.0
  %v1345 = vadd.f32 %v1343, %v1344
  %v1346 = vsel %vm1256, %v923, 0.0
  %v1347 = vadd.f32 %v1345, %v1346
  %v1348 = vsel %vm1256, %v928, 0.0
  %v1349 = vadd.f32 %v1347, %v1348
  %v1350 = vsel %vm1256, %v931, 0.0
  %v1351 = vadd.f32 %v1349, %v1350
  %v1352 = vsel %vm1256, %v936, 0.0
  %v1353 = vadd.f32 %v1351, %v1352
  %v1354 = vsel %vm1256, %v939, 0.0
  %v1355 = vadd.f32 %v1353, %v1354
  %v1356 = vsel %vm1256, %v944, 0.0
  %v1357 = vadd.f32 %v1355, %v1356
  %v1358 = vsel %vm1256, %v947, 0.0
  %v1359 = vadd.f32 %v1357, %v1358
  %v1360 = vsel %vm1256, %v952, 0.0
  %v1361 = vadd.f32 %v1359, %v1360
  %v1362 = vsel %vm1256, %v955, 0.0
  %v1363 = vadd.f32 %v1361, %v1362
  %v1364 = vsel %vm1256, %v960, 0.0
  %v1365 = vadd.f32 %v1363, %v1364
  %v1366 = vsel %vm1256, %v963, 0.0
  %v1367 = vadd.f32 %v1365, %v1366
  %v1368 = vsel %vm1256, %v968, 0.0
  %v1369 = vadd.f32 %v1367, %v1368
  %v1370 = vsel %vm1256, %v971, 0.0
  %v1371 = vadd.f32 %v1369, %v1370
  %v1372 = vsel %vm1256, %v976, 0.0
  %v1373 = vadd.f32 %v1371, %v1372
  %v1374 = vsel %vm1256, %v979, 0.0
  %v1375 = vadd.f32 %v1373, %v1374
  %v1376 = vsel %vm1256, %v984, 0.0
  %v1377 = vadd.f32 %v1375, %v1376
  %v1378 = vsel %vm1256, %v987, 0.0
  %v1379 = vadd.f32 %v1377, %v1378
  %v1380 = vsel %vm1256, %v992, 0.0
  %v1381 = vadd.f32 %v1379, %v1380
  %v1382 = vsel %vm1256, %v995, 0.0
  %v1383 = vadd.f32 %v1381, %v1382
  %v1384 = vsel %vm1256, %v1000, 0.0
  %v1385 = vadd.f32 %v1383, %v1384
  %v1386 = vsel %vm1256, %v1003, 0.0
  %v1387 = vadd.f32 %v1385, %v1386
  %v1388 = vsel %vm1256, %v1008, 0.0
  %v1389 = vadd.f32 %v1387, %v1388
  %v1390 = vsel %vm1256, %v1011, 0.0
  %v1391 = vadd.f32 %v1389, %v1390
  %v1392 = vsel %vm1256, %v1016, 0.0
  %v1393 = vadd.f32 %v1391, %v1392
  %v1394 = vsel %vm1256, %v1019, 0.0
  %v1395 = vadd.f32 %v1393, %v1394
  %v1396 = vsel %vm1256, %v1024, 0.0
  %v1397 = vadd.f32 %v1395, %v1396
  %v1398 = vsel %vm1256, %v1027, 0.0
  %v1399 = vadd.f32 %v1397, %v1398
  %v1400 = vsel %vm1256, %v1032, 0.0
  %v1401 = vadd.f32 %v1399, %v1400
  %v1402 = vsel %vm1256, %v1035, 0.0
  %v1403 = vadd.f32 %v1401, %v1402
  %v1404 = vsel %vm1256, %v1040, 0.0
  %v1405 = vadd.f32 %v1403, %v1404
  %v1406 = vsel %vm1256, %v1043, 0.0
  %v1407 = vadd.f32 %v1405, %v1406
  %v1408 = vsel %vm1256, %v1048, 0.0
  %v1409 = vadd.f32 %v1407, %v1408
  %v1410 = vsel %vm1256, %v1051, 0.0
  %v1411 = vadd.f32 %v1409, %v1410
  %v1412 = vsel %vm1256, %v1056, 0.0
  %v1413 = vadd.f32 %v1411, %v1412
  %v1414 = vsel %vm1256, %v1059, 0.0
  %v1415 = vadd.f32 %v1413, %v1414
  %v1416 = vsel %vm1256, %v1064, 0.0
  %v1417 = vadd.f32 %v1415, %v1416
  %v1418 = vsel %vm1256, %v1067, 0.0
  %v1419 = vadd.f32 %v1417, %v1418
  %v1420 = vsel %vm1256, %v1072, 0.0
  %v1421 = vadd.f32 %v1419, %v1420
  %v1422 = vsel %vm1256, %v1075, 0.0
  %v1423 = vadd.f32 %v1421, %v1422
  %v1424 = vsel %vm1256, %v1080, 0.0
  %v1425 = vadd.f32 %v1423, %v1424
  %v1426 = vsel %vm1256, %v1083, 0.0
  %v1427 = vadd.f32 %v1425, %v1426
  %v1428 = vsel %vm1256, %v1088, 0.0
  %v1429 = vadd.f32 %v1427, %v1428
  %v1430 = vsel %vm1256, %v1091, 0.0
  %v1431 = vadd.f32 %v1429, %v1430
  %v1432 = vsel %vm1256, %v1096, 0.0
  %v1433 = vadd.f32 %v1431, %v1432
  %v1434 = vsel %vm1256, %v1099, 0.0
  %v1435 = vadd.f32 %v1433, %v1434
  %v1436 = vsel %vm1256, %v1104, 0.0
  %v1437 = vadd.f32 %v1435, %v1436
  %v1438 = vsel %vm1256, %v1107, 0.0
  %v1439 = vadd.f32 %v1437, %v1438
  %v1440 = vsel %vm1256, %v1112, 0.0
  %v1441 = vadd.f32 %v1439, %v1440
  %v1442 = vsel %vm1256, %v1115, 0.0
  %v1443 = vadd.f32 %v1441, %v1442
  %v1444 = vsel %vm1256, %v1120, 0.0
  %v1445 = vadd.f32 %v1443, %v1444
  %v1446 = vsel %vm1256, %v1123, 0.0
  %v1447 = vadd.f32 %v1445, %v1446
  %v1448 = vsel %vm1256, %v1128, 0.0
  %v1449 = vadd.f32 %v1447, %v1448
  %v1450 = vsel %vm1256, %v1131, 0.0
  %v1451 = vadd.f32 %v1449, %v1450
  %v1452 = vsel %vm1256, %v1136, 0.0
  %v1453 = vadd.f32 %v1451, %v1452
  %v1454 = vsel %vm1256, %v1139, 0.0
  %v1455 = vadd.f32 %v1453, %v1454
  %v1456 = vsel %vm1256, %v1144, 0.0
  %v1457 = vadd.f32 %v1455, %v1456
  %v1458 = vsel %vm1256, %v1147, 0.0
  %v1459 = vadd.f32 %v1457, %v1458
  %v1460 = vsel %vm1256, %v1152, 0.0
  %v1461 = vadd.f32 %v1459, %v1460
  %v1462 = vsel %vm1256, %v1155, 0.0
  %v1463 = vadd.f32 %v1461, %v1462
  %v1464 = vsel %vm1256, %v1160, 0.0
  %v1465 = vadd.f32 %v1463, %v1464
  %v1466 = vsel %vm1256, %v1163, 0.0
  %v1467 = vadd.f32 %v1465, %v1466
  %v1468 = vsel %vm1256, %v1168, 0.0
  %v1469 = vadd.f32 %v1467, %v1468
  %v1470 = vsel %vm1256, %v1171, 0.0
  %v1471 = vadd.f32 %v1469, %v1470
  %v1472 = vsel %vm1256, %v1176, 0.0
  %v1473 = vadd.f32 %v1471, %v1472
  %v1474 = vsel %vm1256, %v1179, 0.0
  %v1475 = vadd.f32 %v1473, %v1474
  %v1476 = vsel %vm1256, %v1184, 0.0
  %v1477 = vadd.f32 %v1475, %v1476
  %v1478 = vsel %vm1256, %v1187, 0.0
  %v1479 = vadd.f32 %v1477, %v1478
  %v1480 = vsel %vm1256, %v1192, 0.0
  %v1481 = vadd.f32 %v1479, %v1480
  %v1482 = vsel %vm1256, %v1195, 0.0
  %v1483 = vadd.f32 %v1481, %v1482
  %v1484 = vsel %vm1256, %v1200, 0.0
  %v1485 = vadd.f32 %v1483, %v1484
  %v1486 = vsel %vm1256, %v1203, 0.0
  %v1487 = vadd.f32 %v1485, %v1486
  %v1488 = vsel %vm1256, %v1208, 0.0
  %v1489 = vadd.f32 %v1487, %v1488
  %v1490 = vsel %vm1256, %v1211, 0.0
  %v1491 = vadd.f32 %v1489, %v1490
  %v1492 = vsel %vm1256, %v1216, 0.0
  %v1493 = vadd.f32 %v1491, %v1492
  %v1494 = vsel %vm1256, %v1219, 0.0
  %v1495 = vadd.f32 %v1493, %v1494
  %v1496 = vsel %vm1256, %v1224, 0.0
  %v1497 = vadd.f32 %v1495, %v1496
  %v1498 = vsel %vm1256, %v1227, 0.0
  %v1499 = vadd.f32 %v1497, %v1498
  %v1500 = vsel %vm1256, %v1232, 0.0
  %v1501 = vadd.f32 %v1499, %v1500
  %v1502 = vsel %vm1256, %v1235, 0.0
  %v1503 = vadd.f32 %v1501, %v1502
  %v1504 = vsel %vm1256, %v1240, 0.0
  %v1505 = vadd.f32 %v1503, %v1504
  %v1506 = vsel %vm1256, %v1243, 0.0
  %v1507 = vadd.f32 %v1505, %v1506
  %v1508 = vsel %vm1256, %v1248, 0.0
  %v1509 = vadd.f32 %v1507, %v1508
  %v1510 = vsel %vm1256, %v1251, 0.0
  %v1511 = vadd.f32 %v1509, %v1510
  %v1512 = vrot.slane %v1511, 4
  %v1513 = vadd.f32 %v1511, %v1512
  %v1514 = vrot.slane %v1513, 2
  %v1515 = vadd.f32 %v1513, %v1514
  %v1516 = vrot.slane %v1515, 1
  %v1517 = vadd.f32 %v1515, %v1516
  %v1518 = vmul.f32 %v744, %v744
  %v1519 = vmul.f32 %v747, %v747
  %v1520 = vmul.f32 %v752, %v752
  %v1521 = vmul.f32 %v755, %v755
  %v1522 = vmul.f32 %v760, %v760
  %v1523 = vmul.f32 %v763, %v763
  %v1524 = vmul.f32 %v768, %v768
  %v1525 = vmul.f32 %v771, %v771
  %v1526 = vmul.f32 %v776, %v776
  %v1527 = vmul.f32 %v779, %v779
  %v1528 = vmul.f32 %v784, %v784
  %v1529 = vmul.f32 %v787, %v787
  %v1530 = vmul.f32 %v792, %v792
  %v1531 = vmul.f32 %v795, %v795
  %v1532 = vmul.f32 %v800, %v800
  %v1533 = vmul.f32 %v803, %v803
  %v1534 = vmul.f32 %v808, %v808
  %v1535 = vmul.f32 %v811, %v811
  %v1536 = vmul.f32 %v816, %v816
  %v1537 = vmul.f32 %v819, %v819
  %v1538 = vmul.f32 %v824, %v824
  %v1539 = vmul.f32 %v827, %v827
  %v1540 = vmul.f32 %v832, %v832
  %v1541 = vmul.f32 %v835, %v835
  %v1542 = vmul.f32 %v840, %v840
  %v1543 = vmul.f32 %v843, %v843
  %v1544 = vmul.f32 %v848, %v848
  %v1545 = vmul.f32 %v851, %v851
  %v1546 = vmul.f32 %v856, %v856
  %v1547 = vmul.f32 %v859, %v859
  %v1548 = vmul.f32 %v864, %v864
  %v1549 = vmul.f32 %v867, %v867
  %v1550 = vmul.f32 %v872, %v872
  %v1551 = vmul.f32 %v875, %v875
  %v1552 = vmul.f32 %v880, %v880
  %v1553 = vmul.f32 %v883, %v883
  %v1554 = vmul.f32 %v888, %v888
  %v1555 = vmul.f32 %v891, %v891
  %v1556 = vmul.f32 %v896, %v896
  %v1557 = vmul.f32 %v899, %v899
  %v1558 = vmul.f32 %v904, %v904
  %v1559 = vmul.f32 %v907, %v907
  %v1560 = vmul.f32 %v912, %v912
  %v1561 = vmul.f32 %v915, %v915
  %v1562 = vmul.f32 %v920, %v920
  %v1563 = vmul.f32 %v923, %v923
  %v1564 = vmul.f32 %v928, %v928
  %v1565 = vmul.f32 %v931, %v931
  %v1566 = vmul.f32 %v936, %v936
  %v1567 = vmul.f32 %v939, %v939
  %v1568 = vmul.f32 %v944, %v944
  %v1569 = vmul.f32 %v947, %v947
  %v1570 = vmul.f32 %v952, %v952
  %v1571 = vmul.f32 %v955, %v955
  %v1572 = vmul.f32 %v960, %v960
  %v1573 = vmul.f32 %v963, %v963
  %v1574 = vmul.f32 %v968, %v968
  %v1575 = vmul.f32 %v971, %v971
  %v1576 = vmul.f32 %v976, %v976
  %v1577 = vmul.f32 %v979, %v979
  %v1578 = vmul.f32 %v984, %v984
  %v1579 = vmul.f32 %v987, %v987
  %v1580 = vmul.f32 %v992, %v992
  %v1581 = vmul.f32 %v995, %v995
  %v1582 = vmul.f32 %v1000, %v1000
  %v1583 = vmul.f32 %v1003, %v1003
  %v1584 = vmul.f32 %v1008, %v1008
  %v1585 = vmul.f32 %v1011, %v1011
  %v1586 = vmul.f32 %v1016, %v1016
  %v1587 = vmul.f32 %v1019, %v1019
  %v1588 = vmul.f32 %v1024, %v1024
  %v1589 = vmul.f32 %v1027, %v1027
  %v1590 = vmul.f32 %v1032, %v1032
  %v1591 = vmul.f32 %v1035, %v1035
  %v1592 = vmul.f32 %v1040, %v1040
  %v1593 = vmul.f32 %v1043, %v1043
  %v1594 = vmul.f32 %v1048, %v1048
  %v1595 = vmul.f32 %v1051, %v1051
  %v1596 = vmul.f32 %v1056, %v1056
  %v1597 = vmul.f32 %v1059, %v1059
  %v1598 = vmul.f32 %v1064, %v1064
  %v1599 = vmul.f32 %v1067, %v1067
  %v1600 = vmul.f32 %v1072, %v1072
  %v1601 = vmul.f32 %v1075, %v1075
  %v1602 = vmul.f32 %v1080, %v1080
  %v1603 = vmul.f32 %v1083, %v1083
  %v1604 = vmul.f32 %v1088, %v1088
  %v1605 = vmul.f32 %v1091, %v1091
  %v1606 = vmul.f32 %v1096, %v1096
  %v1607 = vmul.f32 %v1099, %v1099
  %v1608 = vmul.f32 %v1104, %v1104
  %v1609 = vmul.f32 %v1107, %v1107
  %v1610 = vmul.f32 %v1112, %v1112
  %v1611 = vmul.f32 %v1115, %v1115
  %v1612 = vmul.f32 %v1120, %v1120
  %v1613 = vmul.f32 %v1123, %v1123
  %v1614 = vmul.f32 %v1128, %v1128
  %v1615 = vmul.f32 %v1131, %v1131
  %v1616 = vmul.f32 %v1136, %v1136
  %v1617 = vmul.f32 %v1139, %v1139
  %v1618 = vmul.f32 %v1144, %v1144
  %v1619 = vmul.f32 %v1147, %v1147
  %v1620 = vmul.f32 %v1152, %v1152
  %v1621 = vmul.f32 %v1155, %v1155
  %v1622 = vmul.f32 %v1160, %v1160
  %v1623 = vmul.f32 %v1163, %v1163
  %v1624 = vmul.f32 %v1168, %v1168
  %v1625 = vmul.f32 %v1171, %v1171
  %v1626 = vmul.f32 %v1176, %v1176
  %v1627 = vmul.f32 %v1179, %v1179
  %v1628 = vmul.f32 %v1184, %v1184
  %v1629 = vmul.f32 %v1187, %v1187
  %v1630 = vmul.f32 %v1192, %v1192
  %v1631 = vmul.f32 %v1195, %v1195
  %v1632 = vmul.f32 %v1200, %v1200
  %v1633 = vmul.f32 %v1203, %v1203
  %v1634 = vmul.f32 %v1208, %v1208
  %v1635 = vmul.f32 %v1211, %v1211
  %v1636 = vmul.f32 %v1216, %v1216
  %v1637 = vmul.f32 %v1219, %v1219
  %v1638 = vmul.f32 %v1224, %v1224
  %v1639 = vmul.f32 %v1227, %v1227
  %v1640 = vmul.f32 %v1232, %v1232
  %v1641 = vmul.f32 %v1235, %v1235
  %v1642 = vmul.f32 %v1240, %v1240
  %v1643 = vmul.f32 %v1243, %v1243
  %v1644 = vmul.f32 %v1248, %v1248
  %v1645 = vmul.f32 %v1251, %v1251
  %v1646 = vsel %vm1256, %v1518, 0.0
  %v1647 = vsel %vm1256, %v1519, 0.0
  %v1648 = vadd.f32 %v1646, %v1647
  %v1649 = vsel %vm1256, %v1520, 0.0
  %v1650 = vadd.f32 %v1648, %v1649
  %v1651 = vsel %vm1256, %v1521, 0.0
  %v1652 = vadd.f32 %v1650, %v1651
  %v1653 = vsel %vm1256, %v1522, 0.0
  %v1654 = vadd.f32 %v1652, %v1653
  %v1655 = vsel %vm1256, %v1523, 0.0
  %v1656 = vadd.f32 %v1654, %v1655
  %v1657 = vsel %vm1256, %v1524, 0.0
  %v1658 = vadd.f32 %v1656, %v1657
  %v1659 = vsel %vm1256, %v1525, 0.0
  %v1660 = vadd.f32 %v1658, %v1659
  %v1661 = vsel %vm1256, %v1526, 0.0
  %v1662 = vadd.f32 %v1660, %v1661
  %v1663 = vsel %vm1256, %v1527, 0.0
  %v1664 = vadd.f32 %v1662, %v1663
  %v1665 = vsel %vm1256, %v1528, 0.0
  %v1666 = vadd.f32 %v1664, %v1665
  %v1667 = vsel %vm1256, %v1529, 0.0
  %v1668 = vadd.f32 %v1666, %v1667
  %v1669 = vsel %vm1256, %v1530, 0.0
  %v1670 = vadd.f32 %v1668, %v1669
  %v1671 = vsel %vm1256, %v1531, 0.0
  %v1672 = vadd.f32 %v1670, %v1671
  %v1673 = vsel %vm1256, %v1532, 0.0
  %v1674 = vadd.f32 %v1672, %v1673
  %v1675 = vsel %vm1256, %v1533, 0.0
  %v1676 = vadd.f32 %v1674, %v1675
  %v1677 = vsel %vm1256, %v1534, 0.0
  %v1678 = vadd.f32 %v1676, %v1677
  %v1679 = vsel %vm1256, %v1535, 0.0
  %v1680 = vadd.f32 %v1678, %v1679
  %v1681 = vsel %vm1256, %v1536, 0.0
  %v1682 = vadd.f32 %v1680, %v1681
  %v1683 = vsel %vm1256, %v1537, 0.0
  %v1684 = vadd.f32 %v1682, %v1683
  %v1685 = vsel %vm1256, %v1538, 0.0
  %v1686 = vadd.f32 %v1684, %v1685
  %v1687 = vsel %vm1256, %v1539, 0.0
  %v1688 = vadd.f32 %v1686, %v1687
  %v1689 = vsel %vm1256, %v1540, 0.0
  %v1690 = vadd.f32 %v1688, %v1689
  %v1691 = vsel %vm1256, %v1541, 0.0
  %v1692 = vadd.f32 %v1690, %v1691
  %v1693 = vsel %vm1256, %v1542, 0.0
  %v1694 = vadd.f32 %v1692, %v1693
  %v1695 = vsel %vm1256, %v1543, 0.0
  %v1696 = vadd.f32 %v1694, %v1695
  %v1697 = vsel %vm1256, %v1544, 0.0
  %v1698 = vadd.f32 %v1696, %v1697
  %v1699 = vsel %vm1256, %v1545, 0.0
  %v1700 = vadd.f32 %v1698, %v1699
  %v1701 = vsel %vm1256, %v1546, 0.0
  %v1702 = vadd.f32 %v1700, %v1701
  %v1703 = vsel %vm1256, %v1547, 0.0
  %v1704 = vadd.f32 %v1702, %v1703
  %v1705 = vsel %vm1256, %v1548, 0.0
  %v1706 = vadd.f32 %v1704, %v1705
  %v1707 = vsel %vm1256, %v1549, 0.0
  %v1708 = vadd.f32 %v1706, %v1707
  %v1709 = vsel %vm1256, %v1550, 0.0
  %v1710 = vadd.f32 %v1708, %v1709
  %v1711 = vsel %vm1256, %v1551, 0.0
  %v1712 = vadd.f32 %v1710, %v1711
  %v1713 = vsel %vm1256, %v1552, 0.0
  %v1714 = vadd.f32 %v1712, %v1713
  %v1715 = vsel %vm1256, %v1553, 0.0
  %v1716 = vadd.f32 %v1714, %v1715
  %v1717 = vsel %vm1256, %v1554, 0.0
  %v1718 = vadd.f32 %v1716, %v1717
  %v1719 = vsel %vm1256, %v1555, 0.0
  %v1720 = vadd.f32 %v1718, %v1719
  %v1721 = vsel %vm1256, %v1556, 0.0
  %v1722 = vadd.f32 %v1720, %v1721
  %v1723 = vsel %vm1256, %v1557, 0.0
  %v1724 = vadd.f32 %v1722, %v1723
  %v1725 = vsel %vm1256, %v1558, 0.0
  %v1726 = vadd.f32 %v1724, %v1725
  %v1727 = vsel %vm1256, %v1559, 0.0
  %v1728 = vadd.f32 %v1726, %v1727
  %v1729 = vsel %vm1256, %v1560, 0.0
  %v1730 = vadd.f32 %v1728, %v1729
  %v1731 = vsel %vm1256, %v1561, 0.0
  %v1732 = vadd.f32 %v1730, %v1731
  %v1733 = vsel %vm1256, %v1562, 0.0
  %v1734 = vadd.f32 %v1732, %v1733
  %v1735 = vsel %vm1256, %v1563, 0.0
  %v1736 = vadd.f32 %v1734, %v1735
  %v1737 = vsel %vm1256, %v1564, 0.0
  %v1738 = vadd.f32 %v1736, %v1737
  %v1739 = vsel %vm1256, %v1565, 0.0
  %v1740 = vadd.f32 %v1738, %v1739
  %v1741 = vsel %vm1256, %v1566, 0.0
  %v1742 = vadd.f32 %v1740, %v1741
  %v1743 = vsel %vm1256, %v1567, 0.0
  %v1744 = vadd.f32 %v1742, %v1743
  %v1745 = vsel %vm1256, %v1568, 0.0
  %v1746 = vadd.f32 %v1744, %v1745
  %v1747 = vsel %vm1256, %v1569, 0.0
  %v1748 = vadd.f32 %v1746, %v1747
  %v1749 = vsel %vm1256, %v1570, 0.0
  %v1750 = vadd.f32 %v1748, %v1749
  %v1751 = vsel %vm1256, %v1571, 0.0
  %v1752 = vadd.f32 %v1750, %v1751
  %v1753 = vsel %vm1256, %v1572, 0.0
  %v1754 = vadd.f32 %v1752, %v1753
  %v1755 = vsel %vm1256, %v1573, 0.0
  %v1756 = vadd.f32 %v1754, %v1755
  %v1757 = vsel %vm1256, %v1574, 0.0
  %v1758 = vadd.f32 %v1756, %v1757
  %v1759 = vsel %vm1256, %v1575, 0.0
  %v1760 = vadd.f32 %v1758, %v1759
  %v1761 = vsel %vm1256, %v1576, 0.0
  %v1762 = vadd.f32 %v1760, %v1761
  %v1763 = vsel %vm1256, %v1577, 0.0
  %v1764 = vadd.f32 %v1762, %v1763
  %v1765 = vsel %vm1256, %v1578, 0.0
  %v1766 = vadd.f32 %v1764, %v1765
  %v1767 = vsel %vm1256, %v1579, 0.0
  %v1768 = vadd.f32 %v1766, %v1767
  %v1769 = vsel %vm1256, %v1580, 0.0
  %v1770 = vadd.f32 %v1768, %v1769
  %v1771 = vsel %vm1256, %v1581, 0.0
  %v1772 = vadd.f32 %v1770, %v1771
  %v1773 = vsel %vm1256, %v1582, 0.0
  %v1774 = vadd.f32 %v1772, %v1773
  %v1775 = vsel %vm1256, %v1583, 0.0
  %v1776 = vadd.f32 %v1774, %v1775
  %v1777 = vsel %vm1256, %v1584, 0.0
  %v1778 = vadd.f32 %v1776, %v1777
  %v1779 = vsel %vm1256, %v1585, 0.0
  %v1780 = vadd.f32 %v1778, %v1779
  %v1781 = vsel %vm1256, %v1586, 0.0
  %v1782 = vadd.f32 %v1780, %v1781
  %v1783 = vsel %vm1256, %v1587, 0.0
  %v1784 = vadd.f32 %v1782, %v1783
  %v1785 = vsel %vm1256, %v1588, 0.0
  %v1786 = vadd.f32 %v1784, %v1785
  %v1787 = vsel %vm1256, %v1589, 0.0
  %v1788 = vadd.f32 %v1786, %v1787
  %v1789 = vsel %vm1256, %v1590, 0.0
  %v1790 = vadd.f32 %v1788, %v1789
  %v1791 = vsel %vm1256, %v1591, 0.0
  %v1792 = vadd.f32 %v1790, %v1791
  %v1793 = vsel %vm1256, %v1592, 0.0
  %v1794 = vadd.f32 %v1792, %v1793
  %v1795 = vsel %vm1256, %v1593, 0.0
  %v1796 = vadd.f32 %v1794, %v1795
  %v1797 = vsel %vm1256, %v1594, 0.0
  %v1798 = vadd.f32 %v1796, %v1797
  %v1799 = vsel %vm1256, %v1595, 0.0
  %v1800 = vadd.f32 %v1798, %v1799
  %v1801 = vsel %vm1256, %v1596, 0.0
  %v1802 = vadd.f32 %v1800, %v1801
  %v1803 = vsel %vm1256, %v1597, 0.0
  %v1804 = vadd.f32 %v1802, %v1803
  %v1805 = vsel %vm1256, %v1598, 0.0
  %v1806 = vadd.f32 %v1804, %v1805
  %v1807 = vsel %vm1256, %v1599, 0.0
  %v1808 = vadd.f32 %v1806, %v1807
  %v1809 = vsel %vm1256, %v1600, 0.0
  %v1810 = vadd.f32 %v1808, %v1809
  %v1811 = vsel %vm1256, %v1601, 0.0
  %v1812 = vadd.f32 %v1810, %v1811
  %v1813 = vsel %vm1256, %v1602, 0.0
  %v1814 = vadd.f32 %v1812, %v1813
  %v1815 = vsel %vm1256, %v1603, 0.0
  %v1816 = vadd.f32 %v1814, %v1815
  %v1817 = vsel %vm1256, %v1604, 0.0
  %v1818 = vadd.f32 %v1816, %v1817
  %v1819 = vsel %vm1256, %v1605, 0.0
  %v1820 = vadd.f32 %v1818, %v1819
  %v1821 = vsel %vm1256, %v1606, 0.0
  %v1822 = vadd.f32 %v1820, %v1821
  %v1823 = vsel %vm1256, %v1607, 0.0
  %v1824 = vadd.f32 %v1822, %v1823
  %v1825 = vsel %vm1256, %v1608, 0.0
  %v1826 = vadd.f32 %v1824, %v1825
  %v1827 = vsel %vm1256, %v1609, 0.0
  %v1828 = vadd.f32 %v1826, %v1827
  %v1829 = vsel %vm1256, %v1610, 0.0
  %v1830 = vadd.f32 %v1828, %v1829
  %v1831 = vsel %vm1256, %v1611, 0.0
  %v1832 = vadd.f32 %v1830, %v1831
  %v1833 = vsel %vm1256, %v1612, 0.0
  %v1834 = vadd.f32 %v1832, %v1833
  %v1835 = vsel %vm1256, %v1613, 0.0
  %v1836 = vadd.f32 %v1834, %v1835
  %v1837 = vsel %vm1256, %v1614, 0.0
  %v1838 = vadd.f32 %v1836, %v1837
  %v1839 = vsel %vm1256, %v1615, 0.0
  %v1840 = vadd.f32 %v1838, %v1839
  %v1841 = vsel %vm1256, %v1616, 0.0
  %v1842 = vadd.f32 %v1840, %v1841
  %v1843 = vsel %vm1256, %v1617, 0.0
  %v1844 = vadd.f32 %v1842, %v1843
  %v1845 = vsel %vm1256, %v1618, 0.0
  %v1846 = vadd.f32 %v1844, %v1845
  %v1847 = vsel %vm1256, %v1619, 0.0
  %v1848 = vadd.f32 %v1846, %v1847
  %v1849 = vsel %vm1256, %v1620, 0.0
  %v1850 = vadd.f32 %v1848, %v1849
  %v1851 = vsel %vm1256, %v1621, 0.0
  %v1852 = vadd.f32 %v1850, %v1851
  %v1853 = vsel %vm1256, %v1622, 0.0
  %v1854 = vadd.f32 %v1852, %v1853
  %v1855 = vsel %vm1256, %v1623, 0.0
  %v1856 = vadd.f32 %v1854, %v1855
  %v1857 = vsel %vm1256, %v1624, 0.0
  %v1858 = vadd.f32 %v1856, %v1857
  %v1859 = vsel %vm1256, %v1625, 0.0
  %v1860 = vadd.f32 %v1858, %v1859
  %v1861 = vsel %vm1256, %v1626, 0.0
  %v1862 = vadd.f32 %v1860, %v1861
  %v1863 = vsel %vm1256, %v1627, 0.0
  %v1864 = vadd.f32 %v1862, %v1863
  %v1865 = vsel %vm1256, %v1628, 0.0
  %v1866 = vadd.f32 %v1864, %v1865
  %v1867 = vsel %vm1256, %v1629, 0.0
  %v1868 = vadd.f32 %v1866, %v1867
  %v1869 = vsel %vm1256, %v1630, 0.0
  %v1870 = vadd.f32 %v1868, %v1869
  %v1871 = vsel %vm1256, %v1631, 0.0
  %v1872 = vadd.f32 %v1870, %v1871
  %v1873 = vsel %vm1256, %v1632, 0.0
  %v1874 = vadd.f32 %v1872, %v1873
  %v1875 = vsel %vm1256, %v1633, 0.0
  %v1876 = vadd.f32 %v1874, %v1875
  %v1877 = vsel %vm1256, %v1634, 0.0
  %v1878 = vadd.f32 %v1876, %v1877
  %v1879 = vsel %vm1256, %v1635, 0.0
  %v1880 = vadd.f32 %v1878, %v1879
  %v1881 = vsel %vm1256, %v1636, 0.0
  %v1882 = vadd.f32 %v1880, %v1881
  %v1883 = vsel %vm1256, %v1637, 0.0
  %v1884 = vadd.f32 %v1882, %v1883
  %v1885 = vsel %vm1256, %v1638, 0.0
  %v1886 = vadd.f32 %v1884, %v1885
  %v1887 = vsel %vm1256, %v1639, 0.0
  %v1888 = vadd.f32 %v1886, %v1887
  %v1889 = vsel %vm1256, %v1640, 0.0
  %v1890 = vadd.f32 %v1888, %v1889
  %v1891 = vsel %vm1256, %v1641, 0.0
  %v1892 = vadd.f32 %v1890, %v1891
  %v1893 = vsel %vm1256, %v1642, 0.0
  %v1894 = vadd.f32 %v1892, %v1893
  %v1895 = vsel %vm1256, %v1643, 0.0
  %v1896 = vadd.f32 %v1894, %v1895
  %v1897 = vsel %vm1256, %v1644, 0.0
  %v1898 = vadd.f32 %v1896, %v1897
  %v1899 = vsel %vm1256, %v1645, 0.0
  %v1900 = vadd.f32 %v1898, %v1899
  %v1901 = vrot.slane %v1900, 4
  %v1902 = vadd.f32 %v1900, %v1901
  %v1903 = vrot.slane %v1902, 2
  %v1904 = vadd.f32 %v1902, %v1903
  %v1905 = vrot.slane %v1904, 1
  %v1906 = vadd.f32 %v1904, %v1905
  %v1907 = vmul.f32 %v1517, 0.0009765625
  %v1908 = vmul.f32 %v1906, 0.0009765625
  %v1909 = vmul.f32 %v1907, %v1907
  %v1910 = vsub.f32 %v1908, %v1909
  %v1911 = vmax.f32 %v1910, 0.0
  %v1912 = vadd.f32 %v1911, 1e-05
  %v1913 = vrsqrt.pop %v1912
  %v1914 = vmul.f32 %v1254, %v1913
  %v1915 = vmul.f32 %v1907, %v1914
  %v1916 = vsub.f32 %v1255, %v1915
  %v1918 = vlaneseq
  %v1919 = vshrl.u32 %v1918, 7
  %v1920 = vsub.s32 0, %v1919
  %v1921 = vrot.slane %v1914, %v1920
  %v1923 = vmul.f32 %v744, %v1921
  %v1924 = vmul.f32 %v747, %v1921
  %v1925 = vmul.f32 %v752, %v1921
  %v1926 = vmul.f32 %v755, %v1921
  %v1927 = vmul.f32 %v760, %v1921
  %v1928 = vmul.f32 %v763, %v1921
  %v1929 = vmul.f32 %v768, %v1921
  %v1930 = vmul.f32 %v771, %v1921
  %v1931 = vmul.f32 %v776, %v1921
  %v1932 = vmul.f32 %v779, %v1921
  %v1933 = vmul.f32 %v784, %v1921
  %v1934 = vmul.f32 %v787, %v1921
  %v1935 = vmul.f32 %v792, %v1921
  %v1936 = vmul.f32 %v795, %v1921
  %v1937 = vmul.f32 %v800, %v1921
  %v1938 = vmul.f32 %v803, %v1921
  %v1939 = vmul.f32 %v808, %v1921
  %v1940 = vmul.f32 %v811, %v1921
  %v1941 = vmul.f32 %v816, %v1921
  %v1942 = vmul.f32 %v819, %v1921
  %v1943 = vmul.f32 %v824, %v1921
  %v1944 = vmul.f32 %v827, %v1921
  %v1945 = vmul.f32 %v832, %v1921
  %v1946 = vmul.f32 %v835, %v1921
  %v1947 = vmul.f32 %v840, %v1921
  %v1948 = vmul.f32 %v843, %v1921
  %v1949 = vmul.f32 %v848, %v1921
  %v1950 = vmul.f32 %v851, %v1921
  %v1951 = vmul.f32 %v856, %v1921
  %v1952 = vmul.f32 %v859, %v1921
  %v1953 = vmul.f32 %v864, %v1921
  %v1954 = vmul.f32 %v867, %v1921
  %v1955 = vmul.f32 %v872, %v1921
  %v1956 = vmul.f32 %v875, %v1921
  %v1957 = vmul.f32 %v880, %v1921
  %v1958 = vmul.f32 %v883, %v1921
  %v1959 = vmul.f32 %v888, %v1921
  %v1960 = vmul.f32 %v891, %v1921
  %v1961 = vmul.f32 %v896, %v1921
  %v1962 = vmul.f32 %v899, %v1921
  %v1963 = vmul.f32 %v904, %v1921
  %v1964 = vmul.f32 %v907, %v1921
  %v1965 = vmul.f32 %v912, %v1921
  %v1966 = vmul.f32 %v915, %v1921
  %v1967 = vmul.f32 %v920, %v1921
  %v1968 = vmul.f32 %v923, %v1921
  %v1969 = vmul.f32 %v928, %v1921
  %v1970 = vmul.f32 %v931, %v1921
  %v1971 = vmul.f32 %v936, %v1921
  %v1972 = vmul.f32 %v939, %v1921
  %v1973 = vmul.f32 %v944, %v1921
  %v1974 = vmul.f32 %v947, %v1921
  %v1975 = vmul.f32 %v952, %v1921
  %v1976 = vmul.f32 %v955, %v1921
  %v1977 = vmul.f32 %v960, %v1921
  %v1978 = vmul.f32 %v963, %v1921
  %v1979 = vmul.f32 %v968, %v1921
  %v1980 = vmul.f32 %v971, %v1921
  %v1981 = vmul.f32 %v976, %v1921
  %v1982 = vmul.f32 %v979, %v1921
  %v1983 = vmul.f32 %v984, %v1921
  %v1984 = vmul.f32 %v987, %v1921
  %v1985 = vmul.f32 %v992, %v1921
  %v1986 = vmul.f32 %v995, %v1921
  %v1987 = vmul.f32 %v1000, %v1921
  %v1988 = vmul.f32 %v1003, %v1921
  %v1989 = vmul.f32 %v1008, %v1921
  %v1990 = vmul.f32 %v1011, %v1921
  %v1991 = vmul.f32 %v1016, %v1921
  %v1992 = vmul.f32 %v1019, %v1921
  %v1993 = vmul.f32 %v1024, %v1921
  %v1994 = vmul.f32 %v1027, %v1921
  %v1995 = vmul.f32 %v1032, %v1921
  %v1996 = vmul.f32 %v1035, %v1921
  %v1997 = vmul.f32 %v1040, %v1921
  %v1998 = vmul.f32 %v1043, %v1921
  %v1999 = vmul.f32 %v1048, %v1921
  %v2000 = vmul.f32 %v1051, %v1921
  %v2001 = vmul.f32 %v1056, %v1921
  %v2002 = vmul.f32 %v1059, %v1921
  %v2003 = vmul.f32 %v1064, %v1921
  %v2004 = vmul.f32 %v1067, %v1921
  %v2005 = vmul.f32 %v1072, %v1921
  %v2006 = vmul.f32 %v1075, %v1921
  %v2007 = vmul.f32 %v1080, %v1921
  %v2008 = vmul.f32 %v1083, %v1921
  %v2009 = vmul.f32 %v1088, %v1921
  %v2010 = vmul.f32 %v1091, %v1921
  %v2011 = vmul.f32 %v1096, %v1921
  %v2012 = vmul.f32 %v1099, %v1921
  %v2013 = vmul.f32 %v1104, %v1921
  %v2014 = vmul.f32 %v1107, %v1921
  %v2015 = vmul.f32 %v1112, %v1921
  %v2016 = vmul.f32 %v1115, %v1921
  %v2017 = vmul.f32 %v1120, %v1921
  %v2018 = vmul.f32 %v1123, %v1921
  %v2019 = vmul.f32 %v1128, %v1921
  %v2020 = vmul.f32 %v1131, %v1921
  %v2021 = vmul.f32 %v1136, %v1921
  %v2022 = vmul.f32 %v1139, %v1921
  %v2023 = vmul.f32 %v1144, %v1921
  %v2024 = vmul.f32 %v1147, %v1921
  %v2025 = vmul.f32 %v1152, %v1921
  %v2026 = vmul.f32 %v1155, %v1921
  %v2027 = vmul.f32 %v1160, %v1921
  %v2028 = vmul.f32 %v1163, %v1921
  %v2029 = vmul.f32 %v1168, %v1921
  %v2030 = vmul.f32 %v1171, %v1921
  %v2031 = vmul.f32 %v1176, %v1921
  %v2032 = vmul.f32 %v1179, %v1921
  %v2033 = vmul.f32 %v1184, %v1921
  %v2034 = vmul.f32 %v1187, %v1921
  %v2035 = vmul.f32 %v1192, %v1921
  %v2036 = vmul.f32 %v1195, %v1921
  %v2037 = vmul.f32 %v1200, %v1921
  %v2038 = vmul.f32 %v1203, %v1921
  %v2039 = vmul.f32 %v1208, %v1921
  %v2040 = vmul.f32 %v1211, %v1921
  %v2041 = vmul.f32 %v1216, %v1921
  %v2042 = vmul.f32 %v1219, %v1921
  %v2043 = vmul.f32 %v1224, %v1921
  %v2044 = vmul.f32 %v1227, %v1921
  %v2045 = vmul.f32 %v1232, %v1921
  %v2046 = vmul.f32 %v1235, %v1921
  %v2047 = vmul.f32 %v1240, %v1921
  %v2048 = vmul.f32 %v1243, %v1921
  %v2049 = vmul.f32 %v1248, %v1921
  %v2050 = vmul.f32 %v1251, %v1921
  %v2052 = vlaneseq
  %v2053 = vshrl.u32 %v2052, 7
  %v2054 = vsub.s32 0, %v2053
  %v2055 = vrot.slane %v1916, %v2054
  %v2057 = vadd.f32 %v1923, %v2055
  %v2058 = vadd.f32 %v1924, %v2055
  %v2059 = vadd.f32 %v1925, %v2055
  %v2060 = vadd.f32 %v1926, %v2055
  %v2061 = vadd.f32 %v1927, %v2055
  %v2062 = vadd.f32 %v1928, %v2055
  %v2063 = vadd.f32 %v1929, %v2055
  %v2064 = vadd.f32 %v1930, %v2055
  %v2065 = vadd.f32 %v1931, %v2055
  %v2066 = vadd.f32 %v1932, %v2055
  %v2067 = vadd.f32 %v1933, %v2055
  %v2068 = vadd.f32 %v1934, %v2055
  %v2069 = vadd.f32 %v1935, %v2055
  %v2070 = vadd.f32 %v1936, %v2055
  %v2071 = vadd.f32 %v1937, %v2055
  %v2072 = vadd.f32 %v1938, %v2055
  %v2073 = vadd.f32 %v1939, %v2055
  %v2074 = vadd.f32 %v1940, %v2055
  %v2075 = vadd.f32 %v1941, %v2055
  %v2076 = vadd.f32 %v1942, %v2055
  %v2077 = vadd.f32 %v1943, %v2055
  %v2078 = vadd.f32 %v1944, %v2055
  %v2079 = vadd.f32 %v1945, %v2055
  %v2080 = vadd.f32 %v1946, %v2055
  %v2081 = vadd.f32 %v1947, %v2055
  %v2082 = vadd.f32 %v1948, %v2055
  %v2083 = vadd.f32 %v1949, %v2055
  %v2084 = vadd.f32 %v1950, %v2055
  %v2085 = vadd.f32 %v1951, %v2055
  %v2086 = vadd.f32 %v1952, %v2055
  %v2087 = vadd.f32 %v1953, %v2055
  %v2088 = vadd.f32 %v1954, %v2055
  %v2089 = vadd.f32 %v1955, %v2055
  %v2090 = vadd.f32 %v1956, %v2055
  %v2091 = vadd.f32 %v1957, %v2055
  %v2092 = vadd.f32 %v1958, %v2055
  %v2093 = vadd.f32 %v1959, %v2055
  %v2094 = vadd.f32 %v1960, %v2055
  %v2095 = vadd.f32 %v1961, %v2055
  %v2096 = vadd.f32 %v1962, %v2055
  %v2097 = vadd.f32 %v1963, %v2055
  %v2098 = vadd.f32 %v1964, %v2055
  %v2099 = vadd.f32 %v1965, %v2055
  %v2100 = vadd.f32 %v1966, %v2055
  %v2101 = vadd.f32 %v1967, %v2055
  %v2102 = vadd.f32 %v1968, %v2055
  %v2103 = vadd.f32 %v1969, %v2055
  %v2104 = vadd.f32 %v1970, %v2055
  %v2105 = vadd.f32 %v1971, %v2055
  %v2106 = vadd.f32 %v1972, %v2055
  %v2107 = vadd.f32 %v1973, %v2055
  %v2108 = vadd.f32 %v1974, %v2055
  %v2109 = vadd.f32 %v1975, %v2055
  %v2110 = vadd.f32 %v1976, %v2055
  %v2111 = vadd.f32 %v1977, %v2055
  %v2112 = vadd.f32 %v1978, %v2055
  %v2113 = vadd.f32 %v1979, %v2055
  %v2114 = vadd.f32 %v1980, %v2055
  %v2115 = vadd.f32 %v1981, %v2055
  %v2116 = vadd.f32 %v1982, %v2055
  %v2117 = vadd.f32 %v1983, %v2055
  %v2118 = vadd.f32 %v1984, %v2055
  %v2119 = vadd.f32 %v1985, %v2055
  %v2120 = vadd.f32 %v1986, %v2055
  %v2121 = vadd.f32 %v1987, %v2055
  %v2122 = vadd.f32 %v1988, %v2055
  %v2123 = vadd.f32 %v1989, %v2055
  %v2124 = vadd.f32 %v1990, %v2055
  %v2125 = vadd.f32 %v1991, %v2055
  %v2126 = vadd.f32 %v1992, %v2055
  %v2127 = vadd.f32 %v1993, %v2055
  %v2128 = vadd.f32 %v1994, %v2055
  %v2129 = vadd.f32 %v1995, %v2055
  %v2130 = vadd.f32 %v1996, %v2055
  %v2131 = vadd.f32 %v1997, %v2055
  %v2132 = vadd.f32 %v1998, %v2055
  %v2133 = vadd.f32 %v1999, %v2055
  %v2134 = vadd.f32 %v2000, %v2055
  %v2135 = vadd.f32 %v2001, %v2055
  %v2136 = vadd.f32 %v2002, %v2055
  %v2137 = vadd.f32 %v2003, %v2055
  %v2138 = vadd.f32 %v2004, %v2055
  %v2139 = vadd.f32 %v2005, %v2055
  %v2140 = vadd.f32 %v2006, %v2055
  %v2141 = vadd.f32 %v2007, %v2055
  %v2142 = vadd.f32 %v2008, %v2055
  %v2143 = vadd.f32 %v2009, %v2055
  %v2144 = vadd.f32 %v2010, %v2055
  %v2145 = vadd.f32 %v2011, %v2055
  %v2146 = vadd.f32 %v2012, %v2055
  %v2147 = vadd.f32 %v2013, %v2055
  %v2148 = vadd.f32 %v2014, %v2055
  %v2149 = vadd.f32 %v2015, %v2055
  %v2150 = vadd.f32 %v2016, %v2055
  %v2151 = vadd.f32 %v2017, %v2055
  %v2152 = vadd.f32 %v2018, %v2055
  %v2153 = vadd.f32 %v2019, %v2055
  %v2154 = vadd.f32 %v2020, %v2055
  %v2155 = vadd.f32 %v2021, %v2055
  %v2156 = vadd.f32 %v2022, %v2055
  %v2157 = vadd.f32 %v2023, %v2055
  %v2158 = vadd.f32 %v2024, %v2055
  %v2159 = vadd.f32 %v2025, %v2055
  %v2160 = vadd.f32 %v2026, %v2055
  %v2161 = vadd.f32 %v2027, %v2055
  %v2162 = vadd.f32 %v2028, %v2055
  %v2163 = vadd.f32 %v2029, %v2055
  %v2164 = vadd.f32 %v2030, %v2055
  %v2165 = vadd.f32 %v2031, %v2055
  %v2166 = vadd.f32 %v2032, %v2055
  %v2167 = vadd.f32 %v2033, %v2055
  %v2168 = vadd.f32 %v2034, %v2055
  %v2169 = vadd.f32 %v2035, %v2055
  %v2170 = vadd.f32 %v2036, %v2055
  %v2171 = vadd.f32 %v2037, %v2055
  %v2172 = vadd.f32 %v2038, %v2055
  %v2173 = vadd.f32 %v2039, %v2055
  %v2174 = vadd.f32 %v2040, %v2055
  %v2175 = vadd.f32 %v2041, %v2055
  %v2176 = vadd.f32 %v2042, %v2055
  %v2177 = vadd.f32 %v2043, %v2055
  %v2178 = vadd.f32 %v2044, %v2055
  %v2179 = vadd.f32 %v2045, %v2055
  %v2180 = vadd.f32 %v2046, %v2055
  %v2181 = vadd.f32 %v2047, %v2055
  %v2182 = vadd.f32 %v2048, %v2055
  %v2183 = vadd.f32 %v2049, %v2055
  %v2184 = vadd.f32 %v2050, %v2055
  %vm2185 = vcmp.ge.f32.partialorder %v2057, 0.0
  %vm2186 = vcmp.ge.f32.partialorder %v2058, 0.0
  %vm2187 = vcmp.ge.f32.partialorder %v2059, 0.0
  %vm2188 = vcmp.ge.f32.partialorder %v2060, 0.0
  %vm2189 = vcmp.ge.f32.partialorder %v2061, 0.0
  %vm2190 = vcmp.ge.f32.partialorder %v2062, 0.0
  %vm2191 = vcmp.ge.f32.partialorder %v2063, 0.0
  %vm2192 = vcmp.ge.f32.partialorder %v2064, 0.0
  %vm2193 = vcmp.ge.f32.partialorder %v2065, 0.0
  %vm2194 = vcmp.ge.f32.partialorder %v2066, 0.0
  %vm2195 = vcmp.ge.f32.partialorder %v2067, 0.0
  %vm2196 = vcmp.ge.f32.partialorder %v2068, 0.0
  %vm2197 = vcmp.ge.f32.partialorder %v2069, 0.0
  %vm2198 = vcmp.ge.f32.partialorder %v2070, 0.0
  %vm2199 = vcmp.ge.f32.partialorder %v2071, 0.0
  %vm2200 = vcmp.ge.f32.partialorder %v2072, 0.0
  %vm2201 = vcmp.ge.f32.partialorder %v2073, 0.0
  %vm2202 = vcmp.ge.f32.partialorder %v2074, 0.0
  %vm2203 = vcmp.ge.f32.partialorder %v2075, 0.0
  %vm2204 = vcmp.ge.f32.partialorder %v2076, 0.0
  %vm2205 = vcmp.ge.f32.partialorder %v2077, 0.0
  %vm2206 = vcmp.ge.f32.partialorder %v2078, 0.0
  %vm2207 = vcmp.ge.f32.partialorder %v2079, 0.0
  %vm2208 = vcmp.ge.f32.partialorder %v2080, 0.0
  %vm2209 = vcmp.ge.f32.partialorder %v2081, 0.0
  %vm2210 = vcmp.ge.f32.partialorder %v2082, 0.0
  %vm2211 = vcmp.ge.f32.partialorder %v2083, 0.0
  %vm2212 = vcmp.ge.f32.partialorder %v2084, 0.0
  %vm2213 = vcmp.ge.f32.partialorder %v2085, 0.0
  %vm2214 = vcmp.ge.f32.partialorder %v2086, 0.0
  %vm2215 = vcmp.ge.f32.partialorder %v2087, 0.0
  %vm2216 = vcmp.ge.f32.partialorder %v2088, 0.0
  %vm2217 = vcmp.ge.f32.partialorder %v2089, 0.0
  %vm2218 = vcmp.ge.f32.partialorder %v2090, 0.0
  %vm2219 = vcmp.ge.f32.partialorder %v2091, 0.0
  %vm2220 = vcmp.ge.f32.partialorder %v2092, 0.0
  %vm2221 = vcmp.ge.f32.partialorder %v2093, 0.0
  %vm2222 = vcmp.ge.f32.partialorder %v2094, 0.0
  %vm2223 = vcmp.ge.f32.partialorder %v2095, 0.0
  %vm2224 = vcmp.ge.f32.partialorder %v2096, 0.0
  %vm2225 = vcmp.ge.f32.partialorder %v2097, 0.0
  %vm2226 = vcmp.ge.f32.partialorder %v2098, 0.0
  %vm2227 = vcmp.ge.f32.partialorder %v2099, 0.0
  %vm2228 = vcmp.ge.f32.partialorder %v2100, 0.0
  %vm2229 = vcmp.ge.f32.partialorder %v2101, 0.0
  %vm2230 = vcmp.ge.f32.partialorder %v2102, 0.0
  %vm2231 = vcmp.ge.f32.partialorder %v2103, 0.0
  %vm2232 = vcmp.ge.f32.partialorder %v2104, 0.0
  %vm2233 = vcmp.ge.f32.partialorder %v2105, 0.0
  %vm2234 = vcmp.ge.f32.partialorder %v2106, 0.0
  %vm2235 = vcmp.ge.f32.partialorder %v2107, 0.0
  %vm2236 = vcmp.ge.f32.partialorder %v2108, 0.0
  %vm2237 = vcmp.ge.f32.partialorder %v2109, 0.0
  %vm2238 = vcmp.ge.f32.partialorder %v2110, 0.0
  %vm2239 = vcmp.ge.f32.partialorder %v2111, 0.0
  %vm2240 = vcmp.ge.f32.partialorder %v2112, 0.0
  %vm2241 = vcmp.ge.f32.partialorder %v2113, 0.0
  %vm2242 = vcmp.ge.f32.partialorder %v2114, 0.0
  %vm2243 = vcmp.ge.f32.partialorder %v2115, 0.0
  %vm2244 = vcmp.ge.f32.partialorder %v2116, 0.0
  %vm2245 = vcmp.ge.f32.partialorder %v2117, 0.0
  %vm2246 = vcmp.ge.f32.partialorder %v2118, 0.0
  %vm2247 = vcmp.ge.f32.partialorder %v2119, 0.0
  %vm2248 = vcmp.ge.f32.partialorder %v2120, 0.0
  %vm2249 = vcmp.ge.f32.partialorder %v2121, 0.0
  %vm2250 = vcmp.ge.f32.partialorder %v2122, 0.0
  %vm2251 = vcmp.ge.f32.partialorder %v2123, 0.0
  %vm2252 = vcmp.ge.f32.partialorder %v2124, 0.0
  %vm2253 = vcmp.ge.f32.partialorder %v2125, 0.0
  %vm2254 = vcmp.ge.f32.partialorder %v2126, 0.0
  %vm2255 = vcmp.ge.f32.partialorder %v2127, 0.0
  %vm2256 = vcmp.ge.f32.partialorder %v2128, 0.0
  %vm2257 = vcmp.ge.f32.partialorder %v2129, 0.0
  %vm2258 = vcmp.ge.f32.partialorder %v2130, 0.0
  %vm2259 = vcmp.ge.f32.partialorder %v2131, 0.0
  %vm2260 = vcmp.ge.f32.partialorder %v2132, 0.0
  %vm2261 = vcmp.ge.f32.partialorder %v2133, 0.0
  %vm2262 = vcmp.ge.f32.partialorder %v2134, 0.0
  %vm2263 = vcmp.ge.f32.partialorder %v2135, 0.0
  %vm2264 = vcmp.ge.f32.partialorder %v2136, 0.0
  %vm2265 = vcmp.ge.f32.partialorder %v2137, 0.0
  %vm2266 = vcmp.ge.f32.partialorder %v2138, 0.0
  %vm2267 = vcmp.ge.f32.partialorder %v2139, 0.0
  %vm2268 = vcmp.ge.f32.partialorder %v2140, 0.0
  %vm2269 = vcmp.ge.f32.partialorder %v2141, 0.0
  %vm2270 = vcmp.ge.f32.partialorder %v2142, 0.0
  %vm2271 = vcmp.ge.f32.partialorder %v2143, 0.0
  %vm2272 = vcmp.ge.f32.partialorder %v2144, 0.0
  %vm2273 = vcmp.ge.f32.partialorder %v2145, 0.0
  %vm2274 = vcmp.ge.f32.partialorder %v2146, 0.0
  %vm2275 = vcmp.ge.f32.partialorder %v2147, 0.0
  %vm2276 = vcmp.ge.f32.partialorder %v2148, 0.0
  %vm2277 = vcmp.ge.f32.partialorder %v2149, 0.0
  %vm2278 = vcmp.ge.f32.partialorder %v2150, 0.0
  %vm2279 = vcmp.ge.f32.partialorder %v2151, 0.0
  %vm2280 = vcmp.ge.f32.partialorder %v2152, 0.0
  %vm2281 = vcmp.ge.f32.partialorder %v2153, 0.0
  %vm2282 = vcmp.ge.f32.partialorder %v2154, 0.0
  %vm2283 = vcmp.ge.f32.partialorder %v2155, 0.0
  %vm2284 = vcmp.ge.f32.partialorder %v2156, 0.0
  %vm2285 = vcmp.ge.f32.partialorder %v2157, 0.0
  %vm2286 = vcmp.ge.f32.partialorder %v2158, 0.0
  %vm2287 = vcmp.ge.f32.partialorder %v2159, 0.0
  %vm2288 = vcmp.ge.f32.partialorder %v2160, 0.0
  %vm2289 = vcmp.ge.f32.partialorder %v2161, 0.0
  %vm2290 = vcmp.ge.f32.partialorder %v2162, 0.0
  %vm2291 = vcmp.ge.f32.partialorder %v2163, 0.0
  %vm2292 = vcmp.ge.f32.partialorder %v2164, 0.0
  %vm2293 = vcmp.ge.f32.partialorder %v2165, 0.0
  %vm2294 = vcmp.ge.f32.partialorder %v2166, 0.0
  %vm2295 = vcmp.ge.f32.partialorder %v2167, 0.0
  %vm2296 = vcmp.ge.f32.partialorder %v2168, 0.0
  %vm2297 = vcmp.ge.f32.partialorder %v2169, 0.0
  %vm2298 = vcmp.ge.f32.partialorder %v2170, 0.0
  %vm2299 = vcmp.ge.f32.partialorder %v2171, 0.0
  %vm2300 = vcmp.ge.f32.partialorder %v2172, 0.0
  %vm2301 = vcmp.ge.f32.partialorder %v2173, 0.0
  %vm2302 = vcmp.ge.f32.partialorder %v2174, 0.0
  %vm2303 = vcmp.ge.f32.partialorder %v2175, 0.0
  %vm2304 = vcmp.ge.f32.partialorder %v2176, 0.0
  %vm2305 = vcmp.ge.f32.partialorder %v2177, 0.0
  %vm2306 = vcmp.ge.f32.partialorder %v2178, 0.0
  %vm2307 = vcmp.ge.f32.partialorder %v2179, 0.0
  %vm2308 = vcmp.ge.f32.partialorder %v2180, 0.0
  %vm2309 = vcmp.ge.f32.partialorder %v2181, 0.0
  %vm2310 = vcmp.ge.f32.partialorder %v2182, 0.0
  %vm2311 = vcmp.ge.f32.partialorder %v2183, 0.0
  %vm2312 = vcmp.ge.f32.partialorder %v2184, 0.0
  %v2313 = vmul.f32 %v2057, 0.01
  %v2314 = vmul.f32 %v2058, 0.01
  %v2315 = vmul.f32 %v2059, 0.01
  %v2316 = vmul.f32 %v2060, 0.01
  %v2317 = vmul.f32 %v2061, 0.01
  %v2318 = vmul.f32 %v2062, 0.01
  %v2319 = vmul.f32 %v2063, 0.01
  %v2320 = vmul.f32 %v2064, 0.01
  %v2321 = vmul.f32 %v2065, 0.01
  %v2322 = vmul.f32 %v2066, 0.01
  %v2323 = vmul.f32 %v2067, 0.01
  %v2324 = vmul.f32 %v2068, 0.01
  %v2325 = vmul.f32 %v2069, 0.01
  %v2326 = vmul.f32 %v2070, 0.01
  %v2327 = vmul.f32 %v2071, 0.01
  %v2328 = vmul.f32 %v2072, 0.01
  %v2329 = vmul.f32 %v2073, 0.01
  %v2330 = vmul.f32 %v2074, 0.01
  %v2331 = vmul.f32 %v2075, 0.01
  %v2332 = vmul.f32 %v2076, 0.01
  %v2333 = vmul.f32 %v2077, 0.01
  %v2334 = vmul.f32 %v2078, 0.01
  %v2335 = vmul.f32 %v2079, 0.01
  %v2336 = vmul.f32 %v2080, 0.01
  %v2337 = vmul.f32 %v2081, 0.01
  %v2338 = vmul.f32 %v2082, 0.01
  %v2339 = vmul.f32 %v2083, 0.01
  %v2340 = vmul.f32 %v2084, 0.01
  %v2341 = vmul.f32 %v2085, 0.01
  %v2342 = vmul.f32 %v2086, 0.01
  %v2343 = vmul.f32 %v2087, 0.01
  %v2344 = vmul.f32 %v2088, 0.01
  %v2345 = vmul.f32 %v2089, 0.01
  %v2346 = vmul.f32 %v2090, 0.01
  %v2347 = vmul.f32 %v2091, 0.01
  %v2348 = vmul.f32 %v2092, 0.01
  %v2349 = vmul.f32 %v2093, 0.01
  %v2350 = vmul.f32 %v2094, 0.01
  %v2351 = vmul.f32 %v2095, 0.01
  %v2352 = vmul.f32 %v2096, 0.01
  %v2353 = vmul.f32 %v2097, 0.01
  %v2354 = vmul.f32 %v2098, 0.01
  %v2355 = vmul.f32 %v2099, 0.01
  %v2356 = vmul.f32 %v2100, 0.01
  %v2357 = vmul.f32 %v2101, 0.01
  %v2358 = vmul.f32 %v2102, 0.01
  %v2359 = vmul.f32 %v2103, 0.01
  %v2360 = vmul.f32 %v2104, 0.01
  %v2361 = vmul.f32 %v2105, 0.01
  %v2362 = vmul.f32 %v2106, 0.01
  %v2363 = vmul.f32 %v2107, 0.01
  %v2364 = vmul.f32 %v2108, 0.01
  %v2365 = vmul.f32 %v2109, 0.01
  %v2366 = vmul.f32 %v2110, 0.01
  %v2367 = vmul.f32 %v2111, 0.01
  %v2368 = vmul.f32 %v2112, 0.01
  %v2369 = vmul.f32 %v2113, 0.01
  %v2370 = vmul.f32 %v2114, 0.01
  %v2371 = vmul.f32 %v2115, 0.01
  %v2372 = vmul.f32 %v2116, 0.01
  %v2373 = vmul.f32 %v2117, 0.01
  %v2374 = vmul.f32 %v2118, 0.01
  %v2375 = vmul.f32 %v2119, 0.01
  %v2376 = vmul.f32 %v2120, 0.01
  %v2377 = vmul.f32 %v2121, 0.01
  %v2378 = vmul.f32 %v2122, 0.01
  %v2379 = vmul.f32 %v2123, 0.01
  %v2380 = vmul.f32 %v2124, 0.01
  %v2381 = vmul.f32 %v2125, 0.01
  %v2382 = vmul.f32 %v2126, 0.01
  %v2383 = vmul.f32 %v2127, 0.01
  %v2384 = vmul.f32 %v2128, 0.01
  %v2385 = vmul.f32 %v2129, 0.01
  %v2386 = vmul.f32 %v2130, 0.01
  %v2387 = vmul.f32 %v2131, 0.01
  %v2388 = vmul.f32 %v2132, 0.01
  %v2389 = vmul.f32 %v2133, 0.01
  %v2390 = vmul.f32 %v2134, 0.01
  %v2391 = vmul.f32 %v2135, 0.01
  %v2392 = vmul.f32 %v2136, 0.01
  %v2393 = vmul.f32 %v2137, 0.01
  %v2394 = vmul.f32 %v2138, 0.01
  %v2395 = vmul.f32 %v2139, 0.01
  %v2396 = vmul.f32 %v2140, 0.01
  %v2397 = vmul.f32 %v2141, 0.01
  %v2398 = vmul.f32 %v2142, 0.01
  %v2399 = vmul.f32 %v2143, 0.01
  %v2400 = vmul.f32 %v2144, 0.01
  %v2401 = vmul.f32 %v2145, 0.01
  %v2402 = vmul.f32 %v2146, 0.01
  %v2403 = vmul.f32 %v2147, 0.01
  %v2404 = vmul.f32 %v2148, 0.01
  %v2405 = vmul.f32 %v2149, 0.01
  %v2406 = vmul.f32 %v2150, 0.01
  %v2407 = vmul.f32 %v2151, 0.01
  %v2408 = vmul.f32 %v2152, 0.01
  %v2409 = vmul.f32 %v2153, 0.01
  %v2410 = vmul.f32 %v2154, 0.01
  %v2411 = vmul.f32 %v2155, 0.01
  %v2412 = vmul.f32 %v2156, 0.01
  %v2413 = vmul.f32 %v2157, 0.01
  %v2414 = vmul.f32 %v2158, 0.01
  %v2415 = vmul.f32 %v2159, 0.01
  %v2416 = vmul.f32 %v2160, 0.01
  %v2417 = vmul.f32 %v2161, 0.01
  %v2418 = vmul.f32 %v2162, 0.01
  %v2419 = vmul.f32 %v2163, 0.01
  %v2420 = vmul.f32 %v2164, 0.01
  %v2421 = vmul.f32 %v2165, 0.01
  %v2422 = vmul.f32 %v2166, 0.01
  %v2423 = vmul.f32 %v2167, 0.01
  %v2424 = vmul.f32 %v2168, 0.01
  %v2425 = vmul.f32 %v2169, 0.01
  %v2426 = vmul.f32 %v2170, 0.01
  %v2427 = vmul.f32 %v2171, 0.01
  %v2428 = vmul.f32 %v2172, 0.01
  %v2429 = vmul.f32 %v2173, 0.01
  %v2430 = vmul.f32 %v2174, 0.01
  %v2431 = vmul.f32 %v2175, 0.01
  %v2432 = vmul.f32 %v2176, 0.01
  %v2433 = vmul.f32 %v2177, 0.01
  %v2434 = vmul.f32 %v2178, 0.01
  %v2435 = vmul.f32 %v2179, 0.01
  %v2436 = vmul.f32 %v2180, 0.01
  %v2437 = vmul.f32 %v2181, 0.01
  %v2438 = vmul.f32 %v2182, 0.01
  %v2439 = vmul.f32 %v2183, 0.01
  %v2440 = vmul.f32 %v2184, 0.01
  %v2441 = vsel %vm2185, %v2057, %v2313
  %v2442 = vsel %vm2186, %v2058, %v2314
  %v2443 = vsel %vm2187, %v2059, %v2315
  %v2444 = vsel %vm2188, %v2060, %v2316
  %v2445 = vsel %vm2189, %v2061, %v2317
  %v2446 = vsel %vm2190, %v2062, %v2318
  %v2447 = vsel %vm2191, %v2063, %v2319
  %v2448 = vsel %vm2192, %v2064, %v2320
  %v2449 = vsel %vm2193, %v2065, %v2321
  %v2450 = vsel %vm2194, %v2066, %v2322
  %v2451 = vsel %vm2195, %v2067, %v2323
  %v2452 = vsel %vm2196, %v2068, %v2324
  %v2453 = vsel %vm2197, %v2069, %v2325
  %v2454 = vsel %vm2198, %v2070, %v2326
  %v2455 = vsel %vm2199, %v2071, %v2327
  %v2456 = vsel %vm2200, %v2072, %v2328
  %v2457 = vsel %vm2201, %v2073, %v2329
  %v2458 = vsel %vm2202, %v2074, %v2330
  %v2459 = vsel %vm2203, %v2075, %v2331
  %v2460 = vsel %vm2204, %v2076, %v2332
  %v2461 = vsel %vm2205, %v2077, %v2333
  %v2462 = vsel %vm2206, %v2078, %v2334
  %v2463 = vsel %vm2207, %v2079, %v2335
  %v2464 = vsel %vm2208, %v2080, %v2336
  %v2465 = vsel %vm2209, %v2081, %v2337
  %v2466 = vsel %vm2210, %v2082, %v2338
  %v2467 = vsel %vm2211, %v2083, %v2339
  %v2468 = vsel %vm2212, %v2084, %v2340
  %v2469 = vsel %vm2213, %v2085, %v2341
  %v2470 = vsel %vm2214, %v2086, %v2342
  %v2471 = vsel %vm2215, %v2087, %v2343
  %v2472 = vsel %vm2216, %v2088, %v2344
  %v2473 = vsel %vm2217, %v2089, %v2345
  %v2474 = vsel %vm2218, %v2090, %v2346
  %v2475 = vsel %vm2219, %v2091, %v2347
  %v2476 = vsel %vm2220, %v2092, %v2348
  %v2477 = vsel %vm2221, %v2093, %v2349
  %v2478 = vsel %vm2222, %v2094, %v2350
  %v2479 = vsel %vm2223, %v2095, %v2351
  %v2480 = vsel %vm2224, %v2096, %v2352
  %v2481 = vsel %vm2225, %v2097, %v2353
  %v2482 = vsel %vm2226, %v2098, %v2354
  %v2483 = vsel %vm2227, %v2099, %v2355
  %v2484 = vsel %vm2228, %v2100, %v2356
  %v2485 = vsel %vm2229, %v2101, %v2357
  %v2486 = vsel %vm2230, %v2102, %v2358
  %v2487 = vsel %vm2231, %v2103, %v2359
  %v2488 = vsel %vm2232, %v2104, %v2360
  %v2489 = vsel %vm2233, %v2105, %v2361
  %v2490 = vsel %vm2234, %v2106, %v2362
  %v2491 = vsel %vm2235, %v2107, %v2363
  %v2492 = vsel %vm2236, %v2108, %v2364
  %v2493 = vsel %vm2237, %v2109, %v2365
  %v2494 = vsel %vm2238, %v2110, %v2366
  %v2495 = vsel %vm2239, %v2111, %v2367
  %v2496 = vsel %vm2240, %v2112, %v2368
  %v2497 = vsel %vm2241, %v2113, %v2369
  %v2498 = vsel %vm2242, %v2114, %v2370
  %v2499 = vsel %vm2243, %v2115, %v2371
  %v2500 = vsel %vm2244, %v2116, %v2372
  %v2501 = vsel %vm2245, %v2117, %v2373
  %v2502 = vsel %vm2246, %v2118, %v2374
  %v2503 = vsel %vm2247, %v2119, %v2375
  %v2504 = vsel %vm2248, %v2120, %v2376
  %v2505 = vsel %vm2249, %v2121, %v2377
  %v2506 = vsel %vm2250, %v2122, %v2378
  %v2507 = vsel %vm2251, %v2123, %v2379
  %v2508 = vsel %vm2252, %v2124, %v2380
  %v2509 = vsel %vm2253, %v2125, %v2381
  %v2510 = vsel %vm2254, %v2126, %v2382
  %v2511 = vsel %vm2255, %v2127, %v2383
  %v2512 = vsel %vm2256, %v2128, %v2384
  %v2513 = vsel %vm2257, %v2129, %v2385
  %v2514 = vsel %vm2258, %v2130, %v2386
  %v2515 = vsel %vm2259, %v2131, %v2387
  %v2516 = vsel %vm2260, %v2132, %v2388
  %v2517 = vsel %vm2261, %v2133, %v2389
  %v2518 = vsel %vm2262, %v2134, %v2390
  %v2519 = vsel %vm2263, %v2135, %v2391
  %v2520 = vsel %vm2264, %v2136, %v2392
  %v2521 = vsel %vm2265, %v2137, %v2393
  %v2522 = vsel %vm2266, %v2138, %v2394
  %v2523 = vsel %vm2267, %v2139, %v2395
  %v2524 = vsel %vm2268, %v2140, %v2396
  %v2525 = vsel %vm2269, %v2141, %v2397
  %v2526 = vsel %vm2270, %v2142, %v2398
  %v2527 = vsel %vm2271, %v2143, %v2399
  %v2528 = vsel %vm2272, %v2144, %v2400
  %v2529 = vsel %vm2273, %v2145, %v2401
  %v2530 = vsel %vm2274, %v2146, %v2402
  %v2531 = vsel %vm2275, %v2147, %v2403
  %v2532 = vsel %vm2276, %v2148, %v2404
  %v2533 = vsel %vm2277, %v2149, %v2405
  %v2534 = vsel %vm2278, %v2150, %v2406
  %v2535 = vsel %vm2279, %v2151, %v2407
  %v2536 = vsel %vm2280, %v2152, %v2408
  %v2537 = vsel %vm2281, %v2153, %v2409
  %v2538 = vsel %vm2282, %v2154, %v2410
  %v2539 = vsel %vm2283, %v2155, %v2411
  %v2540 = vsel %vm2284, %v2156, %v2412
  %v2541 = vsel %vm2285, %v2157, %v2413
  %v2542 = vsel %vm2286, %v2158, %v2414
  %v2543 = vsel %vm2287, %v2159, %v2415
  %v2544 = vsel %vm2288, %v2160, %v2416
  %v2545 = vsel %vm2289, %v2161, %v2417
  %v2546 = vsel %vm2290, %v2162, %v2418
  %v2547 = vsel %vm2291, %v2163, %v2419
  %v2548 = vsel %vm2292, %v2164, %v2420
  %v2549 = vsel %vm2293, %v2165, %v2421
  %v2550 = vsel %vm2294, %v2166, %v2422
  %v2551 = vsel %vm2295, %v2167, %v2423
  %v2552 = vsel %vm2296, %v2168, %v2424
  %v2553 = vsel %vm2297, %v2169, %v2425
  %v2554 = vsel %vm2298, %v2170, %v2426
  %v2555 = vsel %vm2299, %v2171, %v2427
  %v2556 = vsel %vm2300, %v2172, %v2428
  %v2557 = vsel %vm2301, %v2173, %v2429
  %v2558 = vsel %vm2302, %v2174, %v2430
  %v2559 = vsel %vm2303, %v2175, %v2431
  %v2560 = vsel %vm2304, %v2176, %v2432
  %v2561 = vsel %vm2305, %v2177, %v2433
  %v2562 = vsel %vm2306, %v2178, %v2434
  %v2563 = vsel %vm2307, %v2179, %v2435
  %v2564 = vsel %vm2308, %v2180, %v2436
  %v2565 = vsel %vm2309, %v2181, %v2437
  %v2566 = vsel %vm2310, %v2182, %v2438
  %v2567 = vsel %vm2311, %v2183, %v2439
  %v2568 = vsel %vm2312, %v2184, %v2440
  %2569 = vst.msk [vmem:[%s4] sm:$0xff] %vm1256, %v2441
  %2570 = vst.msk [vmem:[%s4 + $0x8] sm:$0xff] %vm1256, %v2442
  %2571 = vst.msk [vmem:[%s4 + $0x10] sm:$0xff] %vm1256, %v2443
  %2572 = vst.msk [vmem:[%s4 + $0x18] sm:$0xff] %vm1256, %v2444
  %2573 = vst.msk [vmem:[%s4 + $0x20] sm:$0xff] %vm1256, %v2445
  %2574 = vst.msk [vmem:[%s4 + $0x28] sm:$0xff] %vm1256, %v2446
  %2575 = vst.msk [vmem:[%s4 + $0x30] sm:$0xff] %vm1256, %v2447
  %2576 = vst.msk [vmem:[%s4 + $0x38] sm:$0xff] %vm1256, %v2448
  %2577 = vst.msk [vmem:[%s4 + $0x40] sm:$0xff] %vm1256, %v2449
  %2578 = vst.msk [vmem:[%s4 + $0x48] sm:$0xff] %vm1256, %v2450
  %2579 = vst.msk [vmem:[%s4 + $0x50] sm:$0xff] %vm1256, %v2451
  %2580 = vst.msk [vmem:[%s4 + $0x58] sm:$0xff] %vm1256, %v2452
  %2581 = vst.msk [vmem:[%s4 + $0x60] sm:$0xff] %vm1256, %v2453
  %2582 = vst.msk [vmem:[%s4 + $0x68] sm:$0xff] %vm1256, %v2454
  %2583 = vst.msk [vmem:[%s4 + $0x70] sm:$0xff] %vm1256, %v2455
  %2584 = vst.msk [vmem:[%s4 + $0x78] sm:$0xff] %vm1256, %v2456
  %2585 = vst.msk [vmem:[%s4 + $0x80] sm:$0xff] %vm1256, %v2457
  %2586 = vst.msk [vmem:[%s4 + $0x88] sm:$0xff] %vm1256, %v2458
  %2587 = vst.msk [vmem:[%s4 + $0x90] sm:$0xff] %vm1256, %v2459
  %2588 = vst.msk [vmem:[%s4 + $0x98] sm:$0xff] %vm1256, %v2460
  %2589 = vst.msk [vmem:[%s4 + $0xa0] sm:$0xff] %vm1256, %v2461
  %2590 = vst.msk [vmem:[%s4 + $0xa8] sm:$0xff] %vm1256, %v2462
  %2591 = vst.msk [vmem:[%s4 + $0xb0] sm:$0xff] %vm1256, %v2463
  %2592 = vst.msk [vmem:[%s4 + $0xb8] sm:$0xff] %vm1256, %v2464
  %2593 = vst.msk [vmem:[%s4 + $0xc0] sm:$0xff] %vm1256, %v2465
  %2594 = vst.msk [vmem:[%s4 + $0xc8] sm:$0xff] %vm1256, %v2466
  %2595 = vst.msk [vmem:[%s4 + $0xd0] sm:$0xff] %vm1256, %v2467
  %2596 = vst.msk [vmem:[%s4 + $0xd8] sm:$0xff] %vm1256, %v2468
  %2597 = vst.msk [vmem:[%s4 + $0xe0] sm:$0xff] %vm1256, %v2469
  %2598 = vst.msk [vmem:[%s4 + $0xe8] sm:$0xff] %vm1256, %v2470
  %2599 = vst.msk [vmem:[%s4 + $0xf0] sm:$0xff] %vm1256, %v2471
  %2600 = vst.msk [vmem:[%s4 + $0xf8] sm:$0xff] %vm1256, %v2472
  %2601 = vst.msk [vmem:[%s4 + $0x100] sm:$0xff] %vm1256, %v2473
  %2602 = vst.msk [vmem:[%s4 + $0x108] sm:$0xff] %vm1256, %v2474
  %2603 = vst.msk [vmem:[%s4 + $0x110] sm:$0xff] %vm1256, %v2475
  %2604 = vst.msk [vmem:[%s4 + $0x118] sm:$0xff] %vm1256, %v2476
  %2605 = vst.msk [vmem:[%s4 + $0x120] sm:$0xff] %vm1256, %v2477
  %2606 = vst.msk [vmem:[%s4 + $0x128] sm:$0xff] %vm1256, %v2478
  %2607 = vst.msk [vmem:[%s4 + $0x130] sm:$0xff] %vm1256, %v2479
  %2608 = vst.msk [vmem:[%s4 + $0x138] sm:$0xff] %vm1256, %v2480
  %2609 = vst.msk [vmem:[%s4 + $0x140] sm:$0xff] %vm1256, %v2481
  %2610 = vst.msk [vmem:[%s4 + $0x148] sm:$0xff] %vm1256, %v2482
  %2611 = vst.msk [vmem:[%s4 + $0x150] sm:$0xff] %vm1256, %v2483
  %2612 = vst.msk [vmem:[%s4 + $0x158] sm:$0xff] %vm1256, %v2484
  %2613 = vst.msk [vmem:[%s4 + $0x160] sm:$0xff] %vm1256, %v2485
  %2614 = vst.msk [vmem:[%s4 + $0x168] sm:$0xff] %vm1256, %v2486
  %2615 = vst.msk [vmem:[%s4 + $0x170] sm:$0xff] %vm1256, %v2487
  %2616 = vst.msk [vmem:[%s4 + $0x178] sm:$0xff] %vm1256, %v2488
  %2617 = vst.msk [vmem:[%s4 + $0x180] sm:$0xff] %vm1256, %v2489
  %2618 = vst.msk [vmem:[%s4 + $0x188] sm:$0xff] %vm1256, %v2490
  %2619 = vst.msk [vmem:[%s4 + $0x190] sm:$0xff] %vm1256, %v2491
  %2620 = vst.msk [vmem:[%s4 + $0x198] sm:$0xff] %vm1256, %v2492
  %2621 = vst.msk [vmem:[%s4 + $0x1a0] sm:$0xff] %vm1256, %v2493
  %2622 = vst.msk [vmem:[%s4 + $0x1a8] sm:$0xff] %vm1256, %v2494
  %2623 = vst.msk [vmem:[%s4 + $0x1b0] sm:$0xff] %vm1256, %v2495
  %2624 = vst.msk [vmem:[%s4 + $0x1b8] sm:$0xff] %vm1256, %v2496
  %2625 = vst.msk [vmem:[%s4 + $0x1c0] sm:$0xff] %vm1256, %v2497
  %2626 = vst.msk [vmem:[%s4 + $0x1c8] sm:$0xff] %vm1256, %v2498
  %2627 = vst.msk [vmem:[%s4 + $0x1d0] sm:$0xff] %vm1256, %v2499
  %2628 = vst.msk [vmem:[%s4 + $0x1d8] sm:$0xff] %vm1256, %v2500
  %2629 = vst.msk [vmem:[%s4 + $0x1e0] sm:$0xff] %vm1256, %v2501
  %2630 = vst.msk [vmem:[%s4 + $0x1e8] sm:$0xff] %vm1256, %v2502
  %2631 = vst.msk [vmem:[%s4 + $0x1f0] sm:$0xff] %vm1256, %v2503
  %2632 = vst.msk [vmem:[%s4 + $0x1f8] sm:$0xff] %vm1256, %v2504
  %2633 = vst.msk [vmem:[%s4 + $0x200] sm:$0xff] %vm1256, %v2505
  %2634 = vst.msk [vmem:[%s4 + $0x208] sm:$0xff] %vm1256, %v2506
  %2635 = vst.msk [vmem:[%s4 + $0x210] sm:$0xff] %vm1256, %v2507
  %2636 = vst.msk [vmem:[%s4 + $0x218] sm:$0xff] %vm1256, %v2508
  %2637 = vst.msk [vmem:[%s4 + $0x220] sm:$0xff] %vm1256, %v2509
  %2638 = vst.msk [vmem:[%s4 + $0x228] sm:$0xff] %vm1256, %v2510
  %2639 = vst.msk [vmem:[%s4 + $0x230] sm:$0xff] %vm1256, %v2511
  %2640 = vst.msk [vmem:[%s4 + $0x238] sm:$0xff] %vm1256, %v2512
  %2641 = vst.msk [vmem:[%s4 + $0x240] sm:$0xff] %vm1256, %v2513
  %2642 = vst.msk [vmem:[%s4 + $0x248] sm:$0xff] %vm1256, %v2514
  %2643 = vst.msk [vmem:[%s4 + $0x250] sm:$0xff] %vm1256, %v2515
  %2644 = vst.msk [vmem:[%s4 + $0x258] sm:$0xff] %vm1256, %v2516
  %2645 = vst.msk [vmem:[%s4 + $0x260] sm:$0xff] %vm1256, %v2517
  %2646 = vst.msk [vmem:[%s4 + $0x268] sm:$0xff] %vm1256, %v2518
  %2647 = vst.msk [vmem:[%s4 + $0x270] sm:$0xff] %vm1256, %v2519
  %2648 = vst.msk [vmem:[%s4 + $0x278] sm:$0xff] %vm1256, %v2520
  %2649 = vst.msk [vmem:[%s4 + $0x280] sm:$0xff] %vm1256, %v2521
  %2650 = vst.msk [vmem:[%s4 + $0x288] sm:$0xff] %vm1256, %v2522
  %2651 = vst.msk [vmem:[%s4 + $0x290] sm:$0xff] %vm1256, %v2523
  %2652 = vst.msk [vmem:[%s4 + $0x298] sm:$0xff] %vm1256, %v2524
  %2653 = vst.msk [vmem:[%s4 + $0x2a0] sm:$0xff] %vm1256, %v2525
  %2654 = vst.msk [vmem:[%s4 + $0x2a8] sm:$0xff] %vm1256, %v2526
  %2655 = vst.msk [vmem:[%s4 + $0x2b0] sm:$0xff] %vm1256, %v2527
  %2656 = vst.msk [vmem:[%s4 + $0x2b8] sm:$0xff] %vm1256, %v2528
  %2657 = vst.msk [vmem:[%s4 + $0x2c0] sm:$0xff] %vm1256, %v2529
  %2658 = vst.msk [vmem:[%s4 + $0x2c8] sm:$0xff] %vm1256, %v2530
  %2659 = vst.msk [vmem:[%s4 + $0x2d0] sm:$0xff] %vm1256, %v2531
  %2660 = vst.msk [vmem:[%s4 + $0x2d8] sm:$0xff] %vm1256, %v2532
  %2661 = vst.msk [vmem:[%s4 + $0x2e0] sm:$0xff] %vm1256, %v2533
  %2662 = vst.msk [vmem:[%s4 + $0x2e8] sm:$0xff] %vm1256, %v2534
  %2663 = vst.msk [vmem:[%s4 + $0x2f0] sm:$0xff] %vm1256, %v2535
  %2664 = vst.msk [vmem:[%s4 + $0x2f8] sm:$0xff] %vm1256, %v2536
  %2665 = vst.msk [vmem:[%s4 + $0x300] sm:$0xff] %vm1256, %v2537
  %2666 = vst.msk [vmem:[%s4 + $0x308] sm:$0xff] %vm1256, %v2538
  %2667 = vst.msk [vmem:[%s4 + $0x310] sm:$0xff] %vm1256, %v2539
  %2668 = vst.msk [vmem:[%s4 + $0x318] sm:$0xff] %vm1256, %v2540
  %2669 = vst.msk [vmem:[%s4 + $0x320] sm:$0xff] %vm1256, %v2541
  %2670 = vst.msk [vmem:[%s4 + $0x328] sm:$0xff] %vm1256, %v2542
  %2671 = vst.msk [vmem:[%s4 + $0x330] sm:$0xff] %vm1256, %v2543
  %2672 = vst.msk [vmem:[%s4 + $0x338] sm:$0xff] %vm1256, %v2544
  %2673 = vst.msk [vmem:[%s4 + $0x340] sm:$0xff] %vm1256, %v2545
  %2674 = vst.msk [vmem:[%s4 + $0x348] sm:$0xff] %vm1256, %v2546
  %2675 = vst.msk [vmem:[%s4 + $0x350] sm:$0xff] %vm1256, %v2547
  %2676 = vst.msk [vmem:[%s4 + $0x358] sm:$0xff] %vm1256, %v2548
  %2677 = vst.msk [vmem:[%s4 + $0x360] sm:$0xff] %vm1256, %v2549
  %2678 = vst.msk [vmem:[%s4 + $0x368] sm:$0xff] %vm1256, %v2550
  %2679 = vst.msk [vmem:[%s4 + $0x370] sm:$0xff] %vm1256, %v2551
  %2680 = vst.msk [vmem:[%s4 + $0x378] sm:$0xff] %vm1256, %v2552
  %2681 = vst.msk [vmem:[%s4 + $0x380] sm:$0xff] %vm1256, %v2553
  %2682 = vst.msk [vmem:[%s4 + $0x388] sm:$0xff] %vm1256, %v2554
  %2683 = vst.msk [vmem:[%s4 + $0x390] sm:$0xff] %vm1256, %v2555
  %2684 = vst.msk [vmem:[%s4 + $0x398] sm:$0xff] %vm1256, %v2556
  %2685 = vst.msk [vmem:[%s4 + $0x3a0] sm:$0xff] %vm1256, %v2557
  %2686 = vst.msk [vmem:[%s4 + $0x3a8] sm:$0xff] %vm1256, %v2558
  %2687 = vst.msk [vmem:[%s4 + $0x3b0] sm:$0xff] %vm1256, %v2559
  %2688 = vst.msk [vmem:[%s4 + $0x3b8] sm:$0xff] %vm1256, %v2560
  %2689 = vst.msk [vmem:[%s4 + $0x3c0] sm:$0xff] %vm1256, %v2561
  %2690 = vst.msk [vmem:[%s4 + $0x3c8] sm:$0xff] %vm1256, %v2562
  %2691 = vst.msk [vmem:[%s4 + $0x3d0] sm:$0xff] %vm1256, %v2563
  %2692 = vst.msk [vmem:[%s4 + $0x3d8] sm:$0xff] %vm1256, %v2564
  %2693 = vst.msk [vmem:[%s4 + $0x3e0] sm:$0xff] %vm1256, %v2565
  %2694 = vst.msk [vmem:[%s4 + $0x3e8] sm:$0xff] %vm1256, %v2566
  %2695 = vst.msk [vmem:[%s4 + $0x3f0] sm:$0xff] %vm1256, %v2567
  %2696 = vst.msk [vmem:[%s4 + $0x3f8] sm:$0xff] %vm1256, %v2568
  // Predicated region
  $region18: #{inception_forward.6} parent=0 // pred_check
    _
  $region19: #{inception_forward.6} parent=0 // pred_check_branch
    %2698 = sbr.rel (0) target = $region21
  $region20: #{inception_forward.6} parent=0 // pred_region
    _
  $region21: #{inception_forward.6} parent=0 // pred_fallthru
    _
  // Predicated region
  $region22: #{inception_forward.6} parent=0 // pred_check
    _
  $region23: #{inception_forward.6} parent=0 // pred_check_branch
    %2700 = sbr.rel (0) target = $region25
  $region24: #{inception_forward.6} parent=0 // pred_region
    _
  $region25: #{inception_forward.6} parent=0 // pred_fallthru
    _

// kernel: inception_forward.7
$region0: #{inception_forward.7}
  #allocation0 [shape = 'u32[]', space=smem, size = 0x4, offset = 0x4, fixed_abs, tag = 'smem constant byte address 0x4 - core index']
  #allocation1 [shape = 'u32[144,128]{1,0:T(1,128)}', space=vmem, size = 0x12000, scoped, tag = 'internal scratch']
  %s0 = inlined_call_operand.vmem [shape: bf16[1024,500], index: 0, kind: input, shape index: {}]
  %s1 = inlined_call_operand.vmem [shape: bf16[500,11], index: 1, kind: input, shape index: {}]
  %s2 = inlined_call_operand.vmem [shape: f32[1,11], index: 2, kind: input, shape index: {}]
  %s3 = inlined_call_operand.vmem [shape: f32[1,11], index: 3, kind: input, shape index: {}]
  %s4 = inlined_call_operand.vmem [shape: f32[1024,11], index: 4, kind: output, shape index: {}]
  %s5 = sld [smem:[#allocation0]]
  $region26: #{inception_forward.7} parent=0
    _
  %s7 = ssub.s32 1, %s5
  %s8 = scalar_select 0, %s7, %s5
  // Predicated region
  $region2: #{inception_forward.7} parent=0 // pred_check
    _
  $region3: #{inception_forward.7} parent=0 // pred_check_branch
    %10 = sbr.rel (0) target = $region5
  $region4: #{inception_forward.7} parent=0 // pred_region
    _
  $region5: #{inception_forward.7} parent=0 // pred_fallthru
    _
  // Predicated region
  $region6: #{inception_forward.7} parent=0 // pred_check
    _
  $region7: #{inception_forward.7} parent=0 // pred_check_branch
    %12 = sbr.rel (0) target = $region9
  $region8: #{inception_forward.7} parent=0 // pred_region
    _
  $region9: #{inception_forward.7} parent=0 // pred_fallthru
    _
  // Predicated region
  $region10: #{inception_forward.7} parent=0 // pred_check
    _
  $region11: #{inception_forward.7} parent=0 // pred_check_branch
    %14 = sbr.rel (0) target = $region13
  $region12: #{inception_forward.7} parent=0 // pred_region
    _
  $region13: #{inception_forward.7} parent=0 // pred_fallthru
    _
  // Predicated region
  $region14: #{inception_forward.7} parent=0 // pred_check
    _
  $region15: #{inception_forward.7} parent=0 // pred_check_branch
    %16 = sbr.rel (0) target = $region17
  $region16: #{inception_forward.7} parent=0 // pred_region
    _
  $region17: #{inception_forward.7} parent=0 // pred_fallthru
    _
  %v18 = vld [vmem:[%s0] sm:$0xff]
  %v19 = vld [vmem:[%s0 + $0x8] sm:$0xff]
  %v20 = vld [vmem:[%s0 + $0x10] sm:$0xff]
  %v21 = vld [vmem:[%s0 + $0x18] sm:$0xff]
  %v22 = vld [vmem:[%s0 + $0x20] sm:$0xff]
  %v23 = vld [vmem:[%s0 + $0x28] sm:$0xff]
  %v24 = vld [vmem:[%s0 + $0x30] sm:$0xff]
  %v25 = vld [vmem:[%s0 + $0x38] sm:$0xff]
  %v26 = vld [vmem:[%s0 + $0x40] sm:$0xff]
  %v27 = vld [vmem:[%s0 + $0x48] sm:$0xff]
  %v28 = vld [vmem:[%s0 + $0x50] sm:$0xff]
  %v29 = vld [vmem:[%s0 + $0x58] sm:$0xff]
  %v30 = vld [vmem:[%s0 + $0x60] sm:$0xff]
  %v31 = vld [vmem:[%s0 + $0x68] sm:$0xff]
  %v32 = vld [vmem:[%s0 + $0x70] sm:$0xff]
  %v33 = vld [vmem:[%s0 + $0x78] sm:$0xff]
  %v34 = vld [vmem:[%s0 + $0x80] sm:$0xff]
  %v35 = vld [vmem:[%s0 + $0x88] sm:$0xff]
  %v36 = vld [vmem:[%s0 + $0x90] sm:$0xff]
  %v37 = vld [vmem:[%s0 + $0x98] sm:$0xff]
  %v38 = vld [vmem:[%s0 + $0xa0] sm:$0xff]
  %v39 = vld [vmem:[%s0 + $0xa8] sm:$0xff]
  %v40 = vld [vmem:[%s0 + $0xb0] sm:$0xff]
  %v41 = vld [vmem:[%s0 + $0xb8] sm:$0xff]
  %v42 = vld [vmem:[%s0 + $0xc0] sm:$0xff]
  %v43 = vld [vmem:[%s0 + $0xc8] sm:$0xff]
  %v44 = vld [vmem:[%s0 + $0xd0] sm:$0xff]
  %v45 = vld [vmem:[%s0 + $0xd8] sm:$0xff]
  %v46 = vld [vmem:[%s0 + $0xe0] sm:$0xff]
  %v47 = vld [vmem:[%s0 + $0xe8] sm:$0xff]
  %v48 = vld [vmem:[%s0 + $0xf0] sm:$0xff]
  %v49 = vld [vmem:[%s0 + $0xf8] sm:$0xff]
  %v50 = vld [vmem:[%s0 + $0x100] sm:$0xff]
  %v51 = vld [vmem:[%s0 + $0x108] sm:$0xff]
  %v52 = vld [vmem:[%s0 + $0x110] sm:$0xff]
  %v53 = vld [vmem:[%s0 + $0x118] sm:$0xff]
  %v54 = vld [vmem:[%s0 + $0x120] sm:$0xff]
  %v55 = vld [vmem:[%s0 + $0x128] sm:$0xff]
  %v56 = vld [vmem:[%s0 + $0x130] sm:$0xff]
  %v57 = vld [vmem:[%s0 + $0x138] sm:$0xff]
  %v58 = vld [vmem:[%s0 + $0x140] sm:$0xff]
  %v59 = vld [vmem:[%s0 + $0x148] sm:$0xff]
  %v60 = vld [vmem:[%s0 + $0x150] sm:$0xff]
  %v61 = vld [vmem:[%s0 + $0x158] sm:$0xff]
  %v62 = vld [vmem:[%s0 + $0x160] sm:$0xff]
  %v63 = vld [vmem:[%s0 + $0x168] sm:$0xff]
  %v64 = vld [vmem:[%s0 + $0x170] sm:$0xff]
  %v65 = vld [vmem:[%s0 + $0x178] sm:$0xff]
  %v66 = vld [vmem:[%s0 + $0x180] sm:$0xff]
  %v67 = vld [vmem:[%s0 + $0x188] sm:$0xff]
  %v68 = vld [vmem:[%s0 + $0x190] sm:$0xff]
  %v69 = vld [vmem:[%s0 + $0x198] sm:$0xff]
  %v70 = vld [vmem:[%s0 + $0x1a0] sm:$0xff]
  %v71 = vld [vmem:[%s0 + $0x1a8] sm:$0xff]
  %v72 = vld [vmem:[%s0 + $0x1b0] sm:$0xff]
  %v73 = vld [vmem:[%s0 + $0x1b8] sm:$0xff]
  %v74 = vld [vmem:[%s0 + $0x1c0] sm:$0xff]
  %v75 = vld [vmem:[%s0 + $0x1c8] sm:$0xff]
  %v76 = vld [vmem:[%s0 + $0x1d0] sm:$0xff]
  %v77 = vld [vmem:[%s0 + $0x1d8] sm:$0xff]
  %v78 = vld [vmem:[%s0 + $0x1e0] sm:$0xff]
  %v79 = vld [vmem:[%s0 + $0x1e8] sm:$0xff]
  %v80 = vld [vmem:[%s0 + $0x1f0] sm:$0xff]
  %v81 = vld [vmem:[%s0 + $0x1f8] sm:$0xff]
  %v82 = vld [vmem:[%s0 + $0x200] sm:$0xff]
  %v83 = vld [vmem:[%s0 + $0x208] sm:$0xff]
  %v84 = vld [vmem:[%s0 + $0x210] sm:$0xff]
  %v85 = vld [vmem:[%s0 + $0x218] sm:$0xff]
  %v86 = vld [vmem:[%s0 + $0x220] sm:$0xff]
  %v87 = vld [vmem:[%s0 + $0x228] sm:$0xff]
  %v88 = vld [vmem:[%s0 + $0x230] sm:$0xff]
  %v89 = vld [vmem:[%s0 + $0x238] sm:$0xff]
  %v90 = vld [vmem:[%s0 + $0x240] sm:$0xff]
  %v91 = vld [vmem:[%s0 + $0x248] sm:$0xff]
  %v92 = vld [vmem:[%s0 + $0x250] sm:$0xff]
  %v93 = vld [vmem:[%s0 + $0x258] sm:$0xff]
  %v94 = vld [vmem:[%s0 + $0x260] sm:$0xff]
  %v95 = vld [vmem:[%s0 + $0x268] sm:$0xff]
  %v96 = vld [vmem:[%s0 + $0x270] sm:$0xff]
  %v97 = vld [vmem:[%s0 + $0x278] sm:$0xff]
  %v98 = vld [vmem:[%s0 + $0x280] sm:$0xff]
  %v99 = vld [vmem:[%s0 + $0x288] sm:$0xff]
  %v100 = vld [vmem:[%s0 + $0x290] sm:$0xff]
  %v101 = vld [vmem:[%s0 + $0x298] sm:$0xff]
  %v102 = vld [vmem:[%s0 + $0x2a0] sm:$0xff]
  %v103 = vld [vmem:[%s0 + $0x2a8] sm:$0xff]
  %v104 = vld [vmem:[%s0 + $0x2b0] sm:$0xff]
  %v105 = vld [vmem:[%s0 + $0x2b8] sm:$0xff]
  %v106 = vld [vmem:[%s0 + $0x2c0] sm:$0xff]
  %v107 = vld [vmem:[%s0 + $0x2c8] sm:$0xff]
  %v108 = vld [vmem:[%s0 + $0x2d0] sm:$0xff]
  %v109 = vld [vmem:[%s0 + $0x2d8] sm:$0xff]
  %v110 = vld [vmem:[%s0 + $0x2e0] sm:$0xff]
  %v111 = vld [vmem:[%s0 + $0x2e8] sm:$0xff]
  %v112 = vld [vmem:[%s0 + $0x2f0] sm:$0xff]
  %v113 = vld [vmem:[%s0 + $0x2f8] sm:$0xff]
  %v114 = vld [vmem:[%s0 + $0x300] sm:$0xff]
  %v115 = vld [vmem:[%s0 + $0x308] sm:$0xff]
  %v116 = vld [vmem:[%s0 + $0x310] sm:$0xff]
  %v117 = vld [vmem:[%s0 + $0x318] sm:$0xff]
  %v118 = vld [vmem:[%s0 + $0x320] sm:$0xff]
  %v119 = vld [vmem:[%s0 + $0x328] sm:$0xff]
  %v120 = vld [vmem:[%s0 + $0x330] sm:$0xff]
  %v121 = vld [vmem:[%s0 + $0x338] sm:$0xff]
  %v122 = vld [vmem:[%s0 + $0x340] sm:$0xff]
  %v123 = vld [vmem:[%s0 + $0x348] sm:$0xff]
  %v124 = vld [vmem:[%s0 + $0x350] sm:$0xff]
  %v125 = vld [vmem:[%s0 + $0x358] sm:$0xff]
  %v126 = vld [vmem:[%s0 + $0x360] sm:$0xff]
  %v127 = vld [vmem:[%s0 + $0x368] sm:$0xff]
  %v128 = vld [vmem:[%s0 + $0x370] sm:$0xff]
  %v129 = vld [vmem:[%s0 + $0x378] sm:$0xff]
  %v130 = vld [vmem:[%s0 + $0x380] sm:$0xff]
  %v131 = vld [vmem:[%s0 + $0x388] sm:$0xff]
  %v132 = vld [vmem:[%s0 + $0x390] sm:$0xff]
  %v133 = vld [vmem:[%s0 + $0x398] sm:$0xff]
  %v134 = vld [vmem:[%s0 + $0x3a0] sm:$0xff]
  %v135 = vld [vmem:[%s0 + $0x3a8] sm:$0xff]
  %v136 = vld [vmem:[%s0 + $0x3b0] sm:$0xff]
  %v137 = vld [vmem:[%s0 + $0x3b8] sm:$0xff]
  %v138 = vld [vmem:[%s0 + $0x3c0] sm:$0xff]
  %v139 = vld [vmem:[%s0 + $0x3c8] sm:$0xff]
  %v140 = vld [vmem:[%s0 + $0x3d0] sm:$0xff]
  %v141 = vld [vmem:[%s0 + $0x3d8] sm:$0xff]
  %v142 = vld [vmem:[%s0 + $0x3e0] sm:$0xff]
  %v143 = vld [vmem:[%s0 + $0x3e8] sm:$0xff]
  %v144 = vld [vmem:[%s0 + $0x3f0] sm:$0xff]
  %v145 = vld [vmem:[%s0 + $0x3f8] sm:$0xff]
  %v146 = vld [vmem:[%s0 + $0x400] sm:$0xff]
  %v147 = vld [vmem:[%s0 + $0x408] sm:$0xff]
  %v148 = vld [vmem:[%s0 + $0x410] sm:$0xff]
  %v149 = vld [vmem:[%s0 + $0x418] sm:$0xff]
  %v150 = vld [vmem:[%s0 + $0x420] sm:$0xff]
  %v151 = vld [vmem:[%s0 + $0x428] sm:$0xff]
  %v152 = vld [vmem:[%s0 + $0x430] sm:$0xff]
  %v153 = vld [vmem:[%s0 + $0x438] sm:$0xff]
  %v154 = vld [vmem:[%s0 + $0x440] sm:$0xff]
  %v155 = vld [vmem:[%s0 + $0x448] sm:$0xff]
  %v156 = vld [vmem:[%s0 + $0x450] sm:$0xff]
  %v157 = vld [vmem:[%s0 + $0x458] sm:$0xff]
  %v158 = vld [vmem:[%s0 + $0x460] sm:$0xff]
  %v159 = vld [vmem:[%s0 + $0x468] sm:$0xff]
  %v160 = vld [vmem:[%s0 + $0x470] sm:$0xff]
  %v161 = vld [vmem:[%s0 + $0x478] sm:$0xff]
  %v162 = vld [vmem:[%s0 + $0x480] sm:$0xff]
  %v163 = vld [vmem:[%s0 + $0x488] sm:$0xff]
  %v164 = vld [vmem:[%s0 + $0x490] sm:$0xff]
  %v165 = vld [vmem:[%s0 + $0x498] sm:$0xff]
  %v166 = vld [vmem:[%s0 + $0x4a0] sm:$0xff]
  %v167 = vld [vmem:[%s0 + $0x4a8] sm:$0xff]
  %v168 = vld [vmem:[%s0 + $0x4b0] sm:$0xff]
  %v169 = vld [vmem:[%s0 + $0x4b8] sm:$0xff]
  %v170 = vld [vmem:[%s0 + $0x4c0] sm:$0xff]
  %v171 = vld [vmem:[%s0 + $0x4c8] sm:$0xff]
  %v172 = vld [vmem:[%s0 + $0x4d0] sm:$0xff]
  %v173 = vld [vmem:[%s0 + $0x4d8] sm:$0xff]
  %v174 = vld [vmem:[%s0 + $0x4e0] sm:$0xff]
  %v175 = vld [vmem:[%s0 + $0x4e8] sm:$0xff]
  %v176 = vld [vmem:[%s0 + $0x4f0] sm:$0xff]
  %v177 = vld [vmem:[%s0 + $0x4f8] sm:$0xff]
  %v178 = vld [vmem:[%s0 + $0x500] sm:$0xff]
  %v179 = vld [vmem:[%s0 + $0x508] sm:$0xff]
  %v180 = vld [vmem:[%s0 + $0x510] sm:$0xff]
  %v181 = vld [vmem:[%s0 + $0x518] sm:$0xff]
  %v182 = vld [vmem:[%s0 + $0x520] sm:$0xff]
  %v183 = vld [vmem:[%s0 + $0x528] sm:$0xff]
  %v184 = vld [vmem:[%s0 + $0x530] sm:$0xff]
  %v185 = vld [vmem:[%s0 + $0x538] sm:$0xff]
  %v186 = vld [vmem:[%s0 + $0x540] sm:$0xff]
  %v187 = vld [vmem:[%s0 + $0x548] sm:$0xff]
  %v188 = vld [vmem:[%s0 + $0x550] sm:$0xff]
  %v189 = vld [vmem:[%s0 + $0x558] sm:$0xff]
  %v190 = vld [vmem:[%s0 + $0x560] sm:$0xff]
  %v191 = vld [vmem:[%s0 + $0x568] sm:$0xff]
  %v192 = vld [vmem:[%s0 + $0x570] sm:$0xff]
  %v193 = vld [vmem:[%s0 + $0x578] sm:$0xff]
  %v194 = vld [vmem:[%s0 + $0x580] sm:$0xff]
  %v195 = vld [vmem:[%s0 + $0x588] sm:$0xff]
  %v196 = vld [vmem:[%s0 + $0x590] sm:$0xff]
  %v197 = vld [vmem:[%s0 + $0x598] sm:$0xff]
  %v198 = vld [vmem:[%s0 + $0x5a0] sm:$0xff]
  %v199 = vld [vmem:[%s0 + $0x5a8] sm:$0xff]
  %v200 = vld [vmem:[%s0 + $0x5b0] sm:$0xff]
  %v201 = vld [vmem:[%s0 + $0x5b8] sm:$0xff]
  %v202 = vld [vmem:[%s0 + $0x5c0] sm:$0xff]
  %v203 = vld [vmem:[%s0 + $0x5c8] sm:$0xff]
  %v204 = vld [vmem:[%s0 + $0x5d0] sm:$0xff]
  %v205 = vld [vmem:[%s0 + $0x5d8] sm:$0xff]
  %v206 = vld [vmem:[%s0 + $0x5e0] sm:$0xff]
  %v207 = vld [vmem:[%s0 + $0x5e8] sm:$0xff]
  %v208 = vld [vmem:[%s0 + $0x5f0] sm:$0xff]
  %v209 = vld [vmem:[%s0 + $0x5f8] sm:$0xff]
  %v210 = vld [vmem:[%s0 + $0x600] sm:$0xff]
  %v211 = vld [vmem:[%s0 + $0x608] sm:$0xff]
  %v212 = vld [vmem:[%s0 + $0x610] sm:$0xff]
  %v213 = vld [vmem:[%s0 + $0x618] sm:$0xff]
  %v214 = vld [vmem:[%s0 + $0x620] sm:$0xff]
  %v215 = vld [vmem:[%s0 + $0x628] sm:$0xff]
  %v216 = vld [vmem:[%s0 + $0x630] sm:$0xff]
  %v217 = vld [vmem:[%s0 + $0x638] sm:$0xff]
  %v218 = vld [vmem:[%s0 + $0x640] sm:$0xff]
  %v219 = vld [vmem:[%s0 + $0x648] sm:$0xff]
  %v220 = vld [vmem:[%s0 + $0x650] sm:$0xff]
  %v221 = vld [vmem:[%s0 + $0x658] sm:$0xff]
  %v222 = vld [vmem:[%s0 + $0x660] sm:$0xff]
  %v223 = vld [vmem:[%s0 + $0x668] sm:$0xff]
  %v224 = vld [vmem:[%s0 + $0x670] sm:$0xff]
  %v225 = vld [vmem:[%s0 + $0x678] sm:$0xff]
  %v226 = vld [vmem:[%s0 + $0x680] sm:$0xff]
  %v227 = vld [vmem:[%s0 + $0x688] sm:$0xff]
  %v228 = vld [vmem:[%s0 + $0x690] sm:$0xff]
  %v229 = vld [vmem:[%s0 + $0x698] sm:$0xff]
  %v230 = vld [vmem:[%s0 + $0x6a0] sm:$0xff]
  %v231 = vld [vmem:[%s0 + $0x6a8] sm:$0xff]
  %v232 = vld [vmem:[%s0 + $0x6b0] sm:$0xff]
  %v233 = vld [vmem:[%s0 + $0x6b8] sm:$0xff]
  %v234 = vld [vmem:[%s0 + $0x6c0] sm:$0xff]
  %v235 = vld [vmem:[%s0 + $0x6c8] sm:$0xff]
  %v236 = vld [vmem:[%s0 + $0x6d0] sm:$0xff]
  %v237 = vld [vmem:[%s0 + $0x6d8] sm:$0xff]
  %v238 = vld [vmem:[%s0 + $0x6e0] sm:$0xff]
  %v239 = vld [vmem:[%s0 + $0x6e8] sm:$0xff]
  %v240 = vld [vmem:[%s0 + $0x6f0] sm:$0xff]
  %v241 = vld [vmem:[%s0 + $0x6f8] sm:$0xff]
  %v242 = vld [vmem:[%s0 + $0x700] sm:$0xff]
  %v243 = vld [vmem:[%s0 + $0x708] sm:$0xff]
  %v244 = vld [vmem:[%s0 + $0x710] sm:$0xff]
  %v245 = vld [vmem:[%s0 + $0x718] sm:$0xff]
  %v246 = vld [vmem:[%s0 + $0x720] sm:$0xff]
  %v247 = vld [vmem:[%s0 + $0x728] sm:$0xff]
  %v248 = vld [vmem:[%s0 + $0x730] sm:$0xff]
  %v249 = vld [vmem:[%s0 + $0x738] sm:$0xff]
  %v250 = vld [vmem:[%s0 + $0x740] sm:$0xff]
  %v251 = vld [vmem:[%s0 + $0x748] sm:$0xff]
  %v252 = vld [vmem:[%s0 + $0x750] sm:$0xff]
  %v253 = vld [vmem:[%s0 + $0x758] sm:$0xff]
  %v254 = vld [vmem:[%s0 + $0x760] sm:$0xff]
  %v255 = vld [vmem:[%s0 + $0x768] sm:$0xff]
  %v256 = vld [vmem:[%s0 + $0x770] sm:$0xff]
  %v257 = vld [vmem:[%s0 + $0x778] sm:$0xff]
  %v258 = vld [vmem:[%s0 + $0x780] sm:$0xff]
  %v259 = vld [vmem:[%s0 + $0x788] sm:$0xff]
  %v260 = vld [vmem:[%s0 + $0x790] sm:$0xff]
  %v261 = vld [vmem:[%s0 + $0x798] sm:$0xff]
  %v262 = vld [vmem:[%s0 + $0x7a0] sm:$0xff]
  %v263 = vld [vmem:[%s0 + $0x7a8] sm:$0xff]
  %v264 = vld [vmem:[%s0 + $0x7b0] sm:$0xff]
  %v265 = vld [vmem:[%s0 + $0x7b8] sm:$0xff]
  %v266 = vld [vmem:[%s0 + $0x7c0] sm:$0xff]
  %v267 = vld [vmem:[%s0 + $0x7c8] sm:$0xff]
  %v268 = vld [vmem:[%s0 + $0x7d0] sm:$0xff]
  %v269 = vld [vmem:[%s0 + $0x7d8] sm:$0xff]
  %v270 = vld [vmem:[%s0 + $0x7e0] sm:$0xff]
  %v271 = vld [vmem:[%s0 + $0x7e8] sm:$0xff]
  %v272 = vld [vmem:[%s0 + $0x7f0] sm:$0xff]
  %v273 = vld [vmem:[%s0 + $0x7f8] sm:$0xff]
  %v274 = vld [vmem:[%s1] sm:$0xf]
  %v275 = vld [vmem:[%s1 + $0x4] sm:$0xf]
  %v276 = vld [vmem:[%s1 + $0x8] sm:$0xf]
  %v277 = vld [vmem:[%s1 + $0xc] sm:$0xf]
  %v278 = vld [vmem:[%s1 + $0x10] sm:$0xf]
  %v279 = vld [vmem:[%s1 + $0x14] sm:$0xf]
  %v280 = vld [vmem:[%s1 + $0x18] sm:$0xf]
  %v281 = vld [vmem:[%s1 + $0x1c] sm:$0xf]
  %v282 = vld [vmem:[%s1 + $0x20] sm:$0xf]
  %v283 = vld [vmem:[%s1 + $0x24] sm:$0xf]
  %v284 = vld [vmem:[%s1 + $0x28] sm:$0xf]
  %v285 = vld [vmem:[%s1 + $0x2c] sm:$0xf]
  %v286 = vld [vmem:[%s1 + $0x30] sm:$0xf]
  %v287 = vld [vmem:[%s1 + $0x34] sm:$0xf]
  %v288 = vld [vmem:[%s1 + $0x38] sm:$0xf]
  %v289 = vld [vmem:[%s1 + $0x3c] sm:$0xf]
  %v290 = vld [vmem:[%s1 + $0x40] sm:$0xf]
  %v291 = vld [vmem:[%s1 + $0x44] sm:$0xf]
  %v292 = vld [vmem:[%s1 + $0x48] sm:$0xf]
  %v293 = vld [vmem:[%s1 + $0x4c] sm:$0xf]
  %v294 = vld [vmem:[%s1 + $0x50] sm:$0xf]
  %v295 = vld [vmem:[%s1 + $0x54] sm:$0xf]
  %v296 = vld [vmem:[%s1 + $0x58] sm:$0xf]
  %v297 = vld [vmem:[%s1 + $0x5c] sm:$0xf]
  %v298 = vld [vmem:[%s1 + $0x60] sm:$0xf]
  %v299 = vld [vmem:[%s1 + $0x64] sm:$0xf]
  %v300 = vld [vmem:[%s1 + $0x68] sm:$0xf]
  %v301 = vld [vmem:[%s1 + $0x6c] sm:$0xf]
  %v302 = vld [vmem:[%s1 + $0x70] sm:$0xf]
  %v303 = vld [vmem:[%s1 + $0x74] sm:$0xf]
  %v304 = vld [vmem:[%s1 + $0x78] sm:$0xf]
  %v305 = vld [vmem:[%s1 + $0x7c] sm:$0xf]
  %v306 = vld [vmem:[%s1 + $0x80] sm:$0xf]
  %v307 = vld [vmem:[%s1 + $0x84] sm:$0xf]
  %v308 = vld [vmem:[%s1 + $0x88] sm:$0xf]
  %v309 = vld [vmem:[%s1 + $0x8c] sm:$0xf]
  %v310 = vld [vmem:[%s1 + $0x90] sm:$0xf]
  %v311 = vld [vmem:[%s1 + $0x94] sm:$0xf]
  %v312 = vld [vmem:[%s1 + $0x98] sm:$0xf]
  %v313 = vld [vmem:[%s1 + $0x9c] sm:$0xf]
  %v314 = vld [vmem:[%s1 + $0xa0] sm:$0xf]
  %v315 = vld [vmem:[%s1 + $0xa4] sm:$0xf]
  %v316 = vld [vmem:[%s1 + $0xa8] sm:$0xf]
  %v317 = vld [vmem:[%s1 + $0xac] sm:$0xf]
  %v318 = vld [vmem:[%s1 + $0xb0] sm:$0xf]
  %v319 = vld [vmem:[%s1 + $0xb4] sm:$0xf]
  %v320 = vld [vmem:[%s1 + $0xb8] sm:$0xf]
  %v321 = vld [vmem:[%s1 + $0xbc] sm:$0xf]
  %v322 = vld [vmem:[%s1 + $0xc0] sm:$0xf]
  %v323 = vld [vmem:[%s1 + $0xc4] sm:$0xf]
  %v324 = vld [vmem:[%s1 + $0xc8] sm:$0xf]
  %v325 = vld [vmem:[%s1 + $0xcc] sm:$0xf]
  %v326 = vld [vmem:[%s1 + $0xd0] sm:$0xf]
  %v327 = vld [vmem:[%s1 + $0xd4] sm:$0xf]
  %v328 = vld [vmem:[%s1 + $0xd8] sm:$0xf]
  %v329 = vld [vmem:[%s1 + $0xdc] sm:$0xf]
  %v330 = vld [vmem:[%s1 + $0xe0] sm:$0xf]
  %v331 = vld [vmem:[%s1 + $0xe4] sm:$0xf]
  %v332 = vld [vmem:[%s1 + $0xe8] sm:$0xf]
  %v333 = vld [vmem:[%s1 + $0xec] sm:$0xf]
  %v334 = vld [vmem:[%s1 + $0xf0] sm:$0xf]
  %v335 = vld [vmem:[%s1 + $0xf4] sm:$0xf]
  %v336 = vld [vmem:[%s1 + $0xf8] sm:$0x3]
  %v593 = vunpack.c.l.b16 %v18
  %v594 = vunpack.c.h.b16 %v18
  %v595 = vunpack.c.l.b16 %v19
  %v596 = vunpack.c.h.b16 %v19
  %v597 = vunpack.c.l.b16 %v20
  %v598 = vunpack.c.h.b16 %v20
  %v599 = vunpack.c.l.b16 %v21
  %v600 = vunpack.c.h.b16 %v21
  %v601 = vunpack.c.l.b16 %v22
  %v602 = vunpack.c.h.b16 %v22
  %v603 = vunpack.c.l.b16 %v23
  %v604 = vunpack.c.h.b16 %v23
  %v605 = vunpack.c.l.b16 %v24
  %v606 = vunpack.c.h.b16 %v24
  %v607 = vunpack.c.l.b16 %v25
  %v608 = vunpack.c.h.b16 %v25
  %v609 = vunpack.c.l.b16 %v26
  %v610 = vunpack.c.h.b16 %v26
  %v611 = vunpack.c.l.b16 %v27
  %v612 = vunpack.c.h.b16 %v27
  %v613 = vunpack.c.l.b16 %v28
  %v614 = vunpack.c.h.b16 %v28
  %v615 = vunpack.c.l.b16 %v29
  %v616 = vunpack.c.h.b16 %v29
  %v617 = vunpack.c.l.b16 %v30
  %v618 = vunpack.c.h.b16 %v30
  %v619 = vunpack.c.l.b16 %v31
  %v620 = vunpack.c.h.b16 %v31
  %v621 = vunpack.c.l.b16 %v32
  %v622 = vunpack.c.h.b16 %v32
  %v623 = vunpack.c.l.b16 %v33
  %v624 = vunpack.c.h.b16 %v33
  %v625 = vunpack.c.l.b16 %v34
  %v626 = vunpack.c.h.b16 %v34
  %v627 = vunpack.c.l.b16 %v35
  %v628 = vunpack.c.h.b16 %v35
  %v629 = vunpack.c.l.b16 %v36
  %v630 = vunpack.c.h.b16 %v36
  %v631 = vunpack.c.l.b16 %v37
  %v632 = vunpack.c.h.b16 %v37
  %v633 = vunpack.c.l.b16 %v38
  %v634 = vunpack.c.h.b16 %v38
  %v635 = vunpack.c.l.b16 %v39
  %v636 = vunpack.c.h.b16 %v39
  %v637 = vunpack.c.l.b16 %v40
  %v638 = vunpack.c.h.b16 %v40
  %v639 = vunpack.c.l.b16 %v41
  %v640 = vunpack.c.h.b16 %v41
  %v641 = vunpack.c.l.b16 %v42
  %v642 = vunpack.c.h.b16 %v42
  %v643 = vunpack.c.l.b16 %v43
  %v644 = vunpack.c.h.b16 %v43
  %v645 = vunpack.c.l.b16 %v44
  %v646 = vunpack.c.h.b16 %v44
  %v647 = vunpack.c.l.b16 %v45
  %v648 = vunpack.c.h.b16 %v45
  %v649 = vunpack.c.l.b16 %v46
  %v650 = vunpack.c.h.b16 %v46
  %v651 = vunpack.c.l.b16 %v47
  %v652 = vunpack.c.h.b16 %v47
  %v653 = vunpack.c.l.b16 %v48
  %v654 = vunpack.c.h.b16 %v48
  %v655 = vunpack.c.l.b16 %v49
  %v656 = vunpack.c.h.b16 %v49
  %v657 = vunpack.c.l.b16 %v50
  %v658 = vunpack.c.h.b16 %v50
  %v659 = vunpack.c.l.b16 %v51
  %v660 = vunpack.c.h.b16 %v51
  %v661 = vunpack.c.l.b16 %v52
  %v662 = vunpack.c.h.b16 %v52
  %v663 = vunpack.c.l.b16 %v53
  %v664 = vunpack.c.h.b16 %v53
  %v665 = vunpack.c.l.b16 %v54
  %v666 = vunpack.c.h.b16 %v54
  %v667 = vunpack.c.l.b16 %v55
  %v668 = vunpack.c.h.b16 %v55
  %v669 = vunpack.c.l.b16 %v56
  %v670 = vunpack.c.h.b16 %v56
  %v671 = vunpack.c.l.b16 %v57
  %v672 = vunpack.c.h.b16 %v57
  %v673 = vunpack.c.l.b16 %v58
  %v674 = vunpack.c.h.b16 %v58
  %v675 = vunpack.c.l.b16 %v59
  %v676 = vunpack.c.h.b16 %v59
  %v677 = vunpack.c.l.b16 %v60
  %v678 = vunpack.c.h.b16 %v60
  %v679 = vunpack.c.l.b16 %v61
  %v680 = vunpack.c.h.b16 %v61
  %v681 = vunpack.c.l.b16 %v62
  %v682 = vunpack.c.h.b16 %v62
  %v683 = vunpack.c.l.b16 %v63
  %v684 = vunpack.c.h.b16 %v63
  %v685 = vunpack.c.l.b16 %v64
  %v686 = vunpack.c.h.b16 %v64
  %v687 = vunpack.c.l.b16 %v65
  %v688 = vunpack.c.h.b16 %v65
  %v689 = vunpack.c.l.b16 %v66
  %v690 = vunpack.c.h.b16 %v66
  %v691 = vunpack.c.l.b16 %v67
  %v692 = vunpack.c.h.b16 %v67
  %v693 = vunpack.c.l.b16 %v68
  %v694 = vunpack.c.h.b16 %v68
  %v695 = vunpack.c.l.b16 %v69
  %v696 = vunpack.c.h.b16 %v69
  %v697 = vunpack.c.l.b16 %v70
  %v698 = vunpack.c.h.b16 %v70
  %v699 = vunpack.c.l.b16 %v71
  %v700 = vunpack.c.h.b16 %v71
  %v701 = vunpack.c.l.b16 %v72
  %v702 = vunpack.c.h.b16 %v72
  %v703 = vunpack.c.l.b16 %v73
  %v704 = vunpack.c.h.b16 %v73
  %v705 = vunpack.c.l.b16 %v74
  %v706 = vunpack.c.h.b16 %v74
  %v707 = vunpack.c.l.b16 %v75
  %v708 = vunpack.c.h.b16 %v75
  %v709 = vunpack.c.l.b16 %v76
  %v710 = vunpack.c.h.b16 %v76
  %v711 = vunpack.c.l.b16 %v77
  %v712 = vunpack.c.h.b16 %v77
  %v713 = vunpack.c.l.b16 %v78
  %v714 = vunpack.c.h.b16 %v78
  %v715 = vunpack.c.l.b16 %v79
  %v716 = vunpack.c.h.b16 %v79
  %v717 = vunpack.c.l.b16 %v80
  %v718 = vunpack.c.h.b16 %v80
  %v719 = vunpack.c.l.b16 %v81
  %v720 = vunpack.c.h.b16 %v81
  %v721 = vunpack.c.l.b16 %v82
  %v722 = vunpack.c.h.b16 %v82
  %v723 = vunpack.c.l.b16 %v83
  %v724 = vunpack.c.h.b16 %v83
  %v725 = vunpack.c.l.b16 %v84
  %v726 = vunpack.c.h.b16 %v84
  %v727 = vunpack.c.l.b16 %v85
  %v728 = vunpack.c.h.b16 %v85
  %v729 = vunpack.c.l.b16 %v86
  %v730 = vunpack.c.h.b16 %v86
  %v731 = vunpack.c.l.b16 %v87
  %v732 = vunpack.c.h.b16 %v87
  %v733 = vunpack.c.l.b16 %v88
  %v734 = vunpack.c.h.b16 %v88
  %v735 = vunpack.c.l.b16 %v89
  %v736 = vunpack.c.h.b16 %v89
  %v737 = vunpack.c.l.b16 %v90
  %v738 = vunpack.c.h.b16 %v90
  %v739 = vunpack.c.l.b16 %v91
  %v740 = vunpack.c.h.b16 %v91
  %v741 = vunpack.c.l.b16 %v92
  %v742 = vunpack.c.h.b16 %v92
  %v743 = vunpack.c.l.b16 %v93
  %v744 = vunpack.c.h.b16 %v93
  %v745 = vunpack.c.l.b16 %v94
  %v746 = vunpack.c.h.b16 %v94
  %v747 = vunpack.c.l.b16 %v95
  %v748 = vunpack.c.h.b16 %v95
  %v749 = vunpack.c.l.b16 %v96
  %v750 = vunpack.c.h.b16 %v96
  %v751 = vunpack.c.l.b16 %v97
  %v752 = vunpack.c.h.b16 %v97
  %v753 = vunpack.c.l.b16 %v98
  %v754 = vunpack.c.h.b16 %v98
  %v755 = vunpack.c.l.b16 %v99
  %v756 = vunpack.c.h.b16 %v99
  %v757 = vunpack.c.l.b16 %v100
  %v758 = vunpack.c.h.b16 %v100
  %v759 = vunpack.c.l.b16 %v101
  %v760 = vunpack.c.h.b16 %v101
  %v761 = vunpack.c.l.b16 %v102
  %v762 = vunpack.c.h.b16 %v102
  %v763 = vunpack.c.l.b16 %v103
  %v764 = vunpack.c.h.b16 %v103
  %v765 = vunpack.c.l.b16 %v104
  %v766 = vunpack.c.h.b16 %v104
  %v767 = vunpack.c.l.b16 %v105
  %v768 = vunpack.c.h.b16 %v105
  %v769 = vunpack.c.l.b16 %v106
  %v770 = vunpack.c.h.b16 %v106
  %v771 = vunpack.c.l.b16 %v107
  %v772 = vunpack.c.h.b16 %v107
  %v773 = vunpack.c.l.b16 %v108
  %v774 = vunpack.c.h.b16 %v108
  %v775 = vunpack.c.l.b16 %v109
  %v776 = vunpack.c.h.b16 %v109
  %v777 = vunpack.c.l.b16 %v110
  %v778 = vunpack.c.h.b16 %v110
  %v779 = vunpack.c.l.b16 %v111
  %v780 = vunpack.c.h.b16 %v111
  %v781 = vunpack.c.l.b16 %v112
  %v782 = vunpack.c.h.b16 %v112
  %v783 = vunpack.c.l.b16 %v113
  %v784 = vunpack.c.h.b16 %v113
  %v785 = vunpack.c.l.b16 %v114
  %v786 = vunpack.c.h.b16 %v114
  %v787 = vunpack.c.l.b16 %v115
  %v788 = vunpack.c.h.b16 %v115
  %v789 = vunpack.c.l.b16 %v116
  %v790 = vunpack.c.h.b16 %v116
  %v791 = vunpack.c.l.b16 %v117
  %v792 = vunpack.c.h.b16 %v117
  %v793 = vunpack.c.l.b16 %v118
  %v794 = vunpack.c.h.b16 %v118
  %v795 = vunpack.c.l.b16 %v119
  %v796 = vunpack.c.h.b16 %v119
  %v797 = vunpack.c.l.b16 %v120
  %v798 = vunpack.c.h.b16 %v120
  %v799 = vunpack.c.l.b16 %v121
  %v800 = vunpack.c.h.b16 %v121
  %v801 = vunpack.c.l.b16 %v122
  %v802 = vunpack.c.h.b16 %v122
  %v803 = vunpack.c.l.b16 %v123
  %v804 = vunpack.c.h.b16 %v123
  %v805 = vunpack.c.l.b16 %v124
  %v806 = vunpack.c.h.b16 %v124
  %v807 = vunpack.c.l.b16 %v125
  %v808 = vunpack.c.h.b16 %v125
  %v809 = vunpack.c.l.b16 %v126
  %v810 = vunpack.c.h.b16 %v126
  %v811 = vunpack.c.l.b16 %v127
  %v812 = vunpack.c.h.b16 %v127
  %v813 = vunpack.c.l.b16 %v128
  %v814 = vunpack.c.h.b16 %v128
  %v815 = vunpack.c.l.b16 %v129
  %v816 = vunpack.c.h.b16 %v129
  %v817 = vunpack.c.l.b16 %v130
  %v818 = vunpack.c.h.b16 %v130
  %v819 = vunpack.c.l.b16 %v131
  %v820 = vunpack.c.h.b16 %v131
  %v821 = vunpack.c.l.b16 %v132
  %v822 = vunpack.c.h.b16 %v132
  %v823 = vunpack.c.l.b16 %v133
  %v824 = vunpack.c.h.b16 %v133
  %v825 = vunpack.c.l.b16 %v134
  %v826 = vunpack.c.h.b16 %v134
  %v827 = vunpack.c.l.b16 %v135
  %v828 = vunpack.c.h.b16 %v135
  %v829 = vunpack.c.l.b16 %v136
  %v830 = vunpack.c.h.b16 %v136
  %v831 = vunpack.c.l.b16 %v137
  %v832 = vunpack.c.h.b16 %v137
  %v833 = vunpack.c.l.b16 %v138
  %v834 = vunpack.c.h.b16 %v138
  %v835 = vunpack.c.l.b16 %v139
  %v836 = vunpack.c.h.b16 %v139
  %v837 = vunpack.c.l.b16 %v140
  %v838 = vunpack.c.h.b16 %v140
  %v839 = vunpack.c.l.b16 %v141
  %v840 = vunpack.c.h.b16 %v141
  %v841 = vunpack.c.l.b16 %v142
  %v842 = vunpack.c.h.b16 %v142
  %v843 = vunpack.c.l.b16 %v143
  %v844 = vunpack.c.h.b16 %v143
  %v845 = vunpack.c.l.b16 %v144
  %v846 = vunpack.c.h.b16 %v144
  %v847 = vunpack.c.l.b16 %v145
  %v848 = vunpack.c.h.b16 %v145
  %v849 = vunpack.c.l.b16 %v146
  %v850 = vunpack.c.h.b16 %v146
  %v851 = vunpack.c.l.b16 %v147
  %v852 = vunpack.c.h.b16 %v147
  %v853 = vunpack.c.l.b16 %v148
  %v854 = vunpack.c.h.b16 %v148
  %v855 = vunpack.c.l.b16 %v149
  %v856 = vunpack.c.h.b16 %v149
  %v857 = vunpack.c.l.b16 %v150
  %v858 = vunpack.c.h.b16 %v150
  %v859 = vunpack.c.l.b16 %v151
  %v860 = vunpack.c.h.b16 %v151
  %v861 = vunpack.c.l.b16 %v152
  %v862 = vunpack.c.h.b16 %v152
  %v863 = vunpack.c.l.b16 %v153
  %v864 = vunpack.c.h.b16 %v153
  %v865 = vunpack.c.l.b16 %v154
  %v866 = vunpack.c.h.b16 %v154
  %v867 = vunpack.c.l.b16 %v155
  %v868 = vunpack.c.h.b16 %v155
  %v869 = vunpack.c.l.b16 %v156
  %v870 = vunpack.c.h.b16 %v156
  %v871 = vunpack.c.l.b16 %v157
  %v872 = vunpack.c.h.b16 %v157
  %v873 = vunpack.c.l.b16 %v158
  %v874 = vunpack.c.h.b16 %v158
  %v875 = vunpack.c.l.b16 %v159
  %v876 = vunpack.c.h.b16 %v159
  %v877 = vunpack.c.l.b16 %v160
  %v878 = vunpack.c.h.b16 %v160
  %v879 = vunpack.c.l.b16 %v161
  %v880 = vunpack.c.h.b16 %v161
  %v881 = vunpack.c.l.b16 %v162
  %v882 = vunpack.c.h.b16 %v162
  %v883 = vunpack.c.l.b16 %v163
  %v884 = vunpack.c.h.b16 %v163
  %v885 = vunpack.c.l.b16 %v164
  %v886 = vunpack.c.h.b16 %v164
  %v887 = vunpack.c.l.b16 %v165
  %v888 = vunpack.c.h.b16 %v165
  %v889 = vunpack.c.l.b16 %v166
  %v890 = vunpack.c.h.b16 %v166
  %v891 = vunpack.c.l.b16 %v167
  %v892 = vunpack.c.h.b16 %v167
  %v893 = vunpack.c.l.b16 %v168
  %v894 = vunpack.c.h.b16 %v168
  %v895 = vunpack.c.l.b16 %v169
  %v896 = vunpack.c.h.b16 %v169
  %v897 = vunpack.c.l.b16 %v170
  %v898 = vunpack.c.h.b16 %v170
  %v899 = vunpack.c.l.b16 %v171
  %v900 = vunpack.c.h.b16 %v171
  %v901 = vunpack.c.l.b16 %v172
  %v902 = vunpack.c.h.b16 %v172
  %v903 = vunpack.c.l.b16 %v173
  %v904 = vunpack.c.h.b16 %v173
  %v905 = vunpack.c.l.b16 %v174
  %v906 = vunpack.c.h.b16 %v174
  %v907 = vunpack.c.l.b16 %v175
  %v908 = vunpack.c.h.b16 %v175
  %v909 = vunpack.c.l.b16 %v176
  %v910 = vunpack.c.h.b16 %v176
  %v911 = vunpack.c.l.b16 %v177
  %v912 = vunpack.c.h.b16 %v177
  %v913 = vunpack.c.l.b16 %v178
  %v914 = vunpack.c.h.b16 %v178
  %v915 = vunpack.c.l.b16 %v179
  %v916 = vunpack.c.h.b16 %v179
  %v917 = vunpack.c.l.b16 %v180
  %v918 = vunpack.c.h.b16 %v180
  %v919 = vunpack.c.l.b16 %v181
  %v920 = vunpack.c.h.b16 %v181
  %v921 = vunpack.c.l.b16 %v182
  %v922 = vunpack.c.h.b16 %v182
  %v923 = vunpack.c.l.b16 %v183
  %v924 = vunpack.c.h.b16 %v183
  %v925 = vunpack.c.l.b16 %v184
  %v926 = vunpack.c.h.b16 %v184
  %v927 = vunpack.c.l.b16 %v185
  %v928 = vunpack.c.h.b16 %v185
  %v929 = vunpack.c.l.b16 %v186
  %v930 = vunpack.c.h.b16 %v186
  %v931 = vunpack.c.l.b16 %v187
  %v932 = vunpack.c.h.b16 %v187
  %v933 = vunpack.c.l.b16 %v188
  %v934 = vunpack.c.h.b16 %v188
  %v935 = vunpack.c.l.b16 %v189
  %v936 = vunpack.c.h.b16 %v189
  %v937 = vunpack.c.l.b16 %v190
  %v938 = vunpack.c.h.b16 %v190
  %v939 = vunpack.c.l.b16 %v191
  %v940 = vunpack.c.h.b16 %v191
  %v941 = vunpack.c.l.b16 %v192
  %v942 = vunpack.c.h.b16 %v192
  %v943 = vunpack.c.l.b16 %v193
  %v944 = vunpack.c.h.b16 %v193
  %v945 = vunpack.c.l.b16 %v194
  %v946 = vunpack.c.h.b16 %v194
  %v947 = vunpack.c.l.b16 %v195
  %v948 = vunpack.c.h.b16 %v195
  %v949 = vunpack.c.l.b16 %v196
  %v950 = vunpack.c.h.b16 %v196
  %v951 = vunpack.c.l.b16 %v197
  %v952 = vunpack.c.h.b16 %v197
  %v953 = vunpack.c.l.b16 %v198
  %v954 = vunpack.c.h.b16 %v198
  %v955 = vunpack.c.l.b16 %v199
  %v956 = vunpack.c.h.b16 %v199
  %v957 = vunpack.c.l.b16 %v200
  %v958 = vunpack.c.h.b16 %v200
  %v959 = vunpack.c.l.b16 %v201
  %v960 = vunpack.c.h.b16 %v201
  %v961 = vunpack.c.l.b16 %v202
  %v962 = vunpack.c.h.b16 %v202
  %v963 = vunpack.c.l.b16 %v203
  %v964 = vunpack.c.h.b16 %v203
  %v965 = vunpack.c.l.b16 %v204
  %v966 = vunpack.c.h.b16 %v204
  %v967 = vunpack.c.l.b16 %v205
  %v968 = vunpack.c.h.b16 %v205
  %v969 = vunpack.c.l.b16 %v206
  %v970 = vunpack.c.h.b16 %v206
  %v971 = vunpack.c.l.b16 %v207
  %v972 = vunpack.c.h.b16 %v207
  %v973 = vunpack.c.l.b16 %v208
  %v974 = vunpack.c.h.b16 %v208
  %v975 = vunpack.c.l.b16 %v209
  %v976 = vunpack.c.h.b16 %v209
  %v977 = vunpack.c.l.b16 %v210
  %v978 = vunpack.c.h.b16 %v210
  %v979 = vunpack.c.l.b16 %v211
  %v980 = vunpack.c.h.b16 %v211
  %v981 = vunpack.c.l.b16 %v212
  %v982 = vunpack.c.h.b16 %v212
  %v983 = vunpack.c.l.b16 %v213
  %v984 = vunpack.c.h.b16 %v213
  %v985 = vunpack.c.l.b16 %v214
  %v986 = vunpack.c.h.b16 %v214
  %v987 = vunpack.c.l.b16 %v215
  %v988 = vunpack.c.h.b16 %v215
  %v989 = vunpack.c.l.b16 %v216
  %v990 = vunpack.c.h.b16 %v216
  %v991 = vunpack.c.l.b16 %v217
  %v992 = vunpack.c.h.b16 %v217
  %v993 = vunpack.c.l.b16 %v218
  %v994 = vunpack.c.h.b16 %v218
  %v995 = vunpack.c.l.b16 %v219
  %v996 = vunpack.c.h.b16 %v219
  %v997 = vunpack.c.l.b16 %v220
  %v998 = vunpack.c.h.b16 %v220
  %v999 = vunpack.c.l.b16 %v221
  %v1000 = vunpack.c.h.b16 %v221
  %v1001 = vunpack.c.l.b16 %v222
  %v1002 = vunpack.c.h.b16 %v222
  %v1003 = vunpack.c.l.b16 %v223
  %v1004 = vunpack.c.h.b16 %v223
  %v1005 = vunpack.c.l.b16 %v224
  %v1006 = vunpack.c.h.b16 %v224
  %v1007 = vunpack.c.l.b16 %v225
  %v1008 = vunpack.c.h.b16 %v225
  %v1009 = vunpack.c.l.b16 %v226
  %v1010 = vunpack.c.h.b16 %v226
  %v1011 = vunpack.c.l.b16 %v227
  %v1012 = vunpack.c.h.b16 %v227
  %v1013 = vunpack.c.l.b16 %v228
  %v1014 = vunpack.c.h.b16 %v228
  %v1015 = vunpack.c.l.b16 %v229
  %v1016 = vunpack.c.h.b16 %v229
  %v1017 = vunpack.c.l.b16 %v230
  %v1018 = vunpack.c.h.b16 %v230
  %v1019 = vunpack.c.l.b16 %v231
  %v1020 = vunpack.c.h.b16 %v231
  %v1021 = vunpack.c.l.b16 %v232
  %v1022 = vunpack.c.h.b16 %v232
  %v1023 = vunpack.c.l.b16 %v233
  %v1024 = vunpack.c.h.b16 %v233
  %v1025 = vunpack.c.l.b16 %v234
  %v1026 = vunpack.c.h.b16 %v234
  %v1027 = vunpack.c.l.b16 %v235
  %v1028 = vunpack.c.h.b16 %v235
  %v1029 = vunpack.c.l.b16 %v236
  %v1030 = vunpack.c.h.b16 %v236
  %v1031 = vunpack.c.l.b16 %v237
  %v1032 = vunpack.c.h.b16 %v237
  %v1033 = vunpack.c.l.b16 %v238
  %v1034 = vunpack.c.h.b16 %v238
  %v1035 = vunpack.c.l.b16 %v239
  %v1036 = vunpack.c.h.b16 %v239
  %v1037 = vunpack.c.l.b16 %v240
  %v1038 = vunpack.c.h.b16 %v240
  %v1039 = vunpack.c.l.b16 %v241
  %v1040 = vunpack.c.h.b16 %v241
  %v1041 = vunpack.c.l.b16 %v242
  %v1042 = vunpack.c.h.b16 %v242
  %v1043 = vunpack.c.l.b16 %v243
  %v1044 = vunpack.c.h.b16 %v243
  %v1045 = vunpack.c.l.b16 %v244
  %v1046 = vunpack.c.h.b16 %v244
  %v1047 = vunpack.c.l.b16 %v245
  %v1048 = vunpack.c.h.b16 %v245
  %v1049 = vunpack.c.l.b16 %v246
  %v1050 = vunpack.c.h.b16 %v246
  %v1051 = vunpack.c.l.b16 %v247
  %v1052 = vunpack.c.h.b16 %v247
  %v1053 = vunpack.c.l.b16 %v248
  %v1054 = vunpack.c.h.b16 %v248
  %v1055 = vunpack.c.l.b16 %v249
  %v1056 = vunpack.c.h.b16 %v249
  %v1057 = vunpack.c.l.b16 %v250
  %v1058 = vunpack.c.h.b16 %v250
  %v1059 = vunpack.c.l.b16 %v251
  %v1060 = vunpack.c.h.b16 %v251
  %v1061 = vunpack.c.l.b16 %v252
  %v1062 = vunpack.c.h.b16 %v252
  %v1063 = vunpack.c.l.b16 %v253
  %v1064 = vunpack.c.h.b16 %v253
  %v1065 = vunpack.c.l.b16 %v254
  %v1066 = vunpack.c.h.b16 %v254
  %v1067 = vunpack.c.l.b16 %v255
  %v1068 = vunpack.c.h.b16 %v255
  %v1069 = vunpack.c.l.b16 %v256
  %v1070 = vunpack.c.h.b16 %v256
  %v1071 = vunpack.c.l.b16 %v257
  %v1072 = vunpack.c.h.b16 %v257
  %v1073 = vunpack.c.l.b16 %v258
  %v1074 = vunpack.c.h.b16 %v258
  %v1075 = vunpack.c.l.b16 %v259
  %v1076 = vunpack.c.h.b16 %v259
  %v1077 = vunpack.c.l.b16 %v260
  %v1078 = vunpack.c.h.b16 %v260
  %v1079 = vunpack.c.l.b16 %v261
  %v1080 = vunpack.c.h.b16 %v261
  %v1081 = vunpack.c.l.b16 %v262
  %v1082 = vunpack.c.h.b16 %v262
  %v1083 = vunpack.c.l.b16 %v263
  %v1084 = vunpack.c.h.b16 %v263
  %v1085 = vunpack.c.l.b16 %v264
  %v1086 = vunpack.c.h.b16 %v264
  %v1087 = vunpack.c.l.b16 %v265
  %v1088 = vunpack.c.h.b16 %v265
  %v1089 = vunpack.c.l.b16 %v266
  %v1090 = vunpack.c.h.b16 %v266
  %v1091 = vunpack.c.l.b16 %v267
  %v1092 = vunpack.c.h.b16 %v267
  %v1093 = vunpack.c.l.b16 %v268
  %v1094 = vunpack.c.h.b16 %v268
  %v1095 = vunpack.c.l.b16 %v269
  %v1096 = vunpack.c.h.b16 %v269
  %v1097 = vunpack.c.l.b16 %v270
  %v1098 = vunpack.c.h.b16 %v270
  %v1099 = vunpack.c.l.b16 %v271
  %v1100 = vunpack.c.h.b16 %v271
  %v1101 = vunpack.c.l.b16 %v272
  %v1102 = vunpack.c.h.b16 %v272
  %v1103 = vunpack.c.l.b16 %v273
  %v1104 = vunpack.c.h.b16 %v273
  %v1105 = vpack.c.b16 %v597, %v593
  %v1106 = vpack.c.b16 %v598, %v594
  %v1107 = vpack.c.b16 %v599, %v595
  %v1108 = vpack.c.b16 %v600, %v596
  %v1109 = vpack.c.b16 %v605, %v601
  %v1110 = vpack.c.b16 %v606, %v602
  %v1111 = vpack.c.b16 %v607, %v603
  %v1112 = vpack.c.b16 %v608, %v604
  %v1113 = vpack.c.b16 %v613, %v609
  %v1114 = vpack.c.b16 %v614, %v610
  %v1115 = vpack.c.b16 %v615, %v611
  %v1116 = vpack.c.b16 %v616, %v612
  %v1117 = vpack.c.b16 %v621, %v617
  %v1118 = vpack.c.b16 %v622, %v618
  %v1119 = vpack.c.b16 %v623, %v619
  %v1120 = vpack.c.b16 %v624, %v620
  %v1121 = vpack.c.b16 %v629, %v625
  %v1122 = vpack.c.b16 %v630, %v626
  %v1123 = vpack.c.b16 %v631, %v627
  %v1124 = vpack.c.b16 %v632, %v628
  %v1125 = vpack.c.b16 %v637, %v633
  %v1126 = vpack.c.b16 %v638, %v634
  %v1127 = vpack.c.b16 %v639, %v635
  %v1128 = vpack.c.b16 %v640, %v636
  %v1129 = vpack.c.b16 %v645, %v641
  %v1130 = vpack.c.b16 %v646, %v642
  %v1131 = vpack.c.b16 %v647, %v643
  %v1132 = vpack.c.b16 %v648, %v644
  %v1133 = vpack.c.b16 %v653, %v649
  %v1134 = vpack.c.b16 %v654, %v650
  %v1135 = vpack.c.b16 %v655, %v651
  %v1136 = vpack.c.b16 %v656, %v652
  %v1137 = vpack.c.b16 %v661, %v657
  %v1138 = vpack.c.b16 %v662, %v658
  %v1139 = vpack.c.b16 %v663, %v659
  %v1140 = vpack.c.b16 %v664, %v660
  %v1141 = vpack.c.b16 %v669, %v665
  %v1142 = vpack.c.b16 %v670, %v666
  %v1143 = vpack.c.b16 %v671, %v667
  %v1144 = vpack.c.b16 %v672, %v668
  %v1145 = vpack.c.b16 %v677, %v673
  %v1146 = vpack.c.b16 %v678, %v674
  %v1147 = vpack.c.b16 %v679, %v675
  %v1148 = vpack.c.b16 %v680, %v676
  %v1149 = vpack.c.b16 %v685, %v681
  %v1150 = vpack.c.b16 %v686, %v682
  %v1151 = vpack.c.b16 %v687, %v683
  %v1152 = vpack.c.b16 %v688, %v684
  %v1153 = vpack.c.b16 %v693, %v689
  %v1154 = vpack.c.b16 %v694, %v690
  %v1155 = vpack.c.b16 %v695, %v691
  %v1156 = vpack.c.b16 %v696, %v692
  %v1157 = vpack.c.b16 %v701, %v697
  %v1158 = vpack.c.b16 %v702, %v698
  %v1159 = vpack.c.b16 %v703, %v699
  %v1160 = vpack.c.b16 %v704, %v700
  %v1161 = vpack.c.b16 %v709, %v705
  %v1162 = vpack.c.b16 %v710, %v706
  %v1163 = vpack.c.b16 %v711, %v707
  %v1164 = vpack.c.b16 %v712, %v708
  %v1165 = vpack.c.b16 %v717, %v713
  %v1166 = vpack.c.b16 %v718, %v714
  %v1167 = vpack.c.b16 %v719, %v715
  %v1168 = vpack.c.b16 %v720, %v716
  %v1169 = vpack.c.b16 %v725, %v721
  %v1170 = vpack.c.b16 %v726, %v722
  %v1171 = vpack.c.b16 %v727, %v723
  %v1172 = vpack.c.b16 %v728, %v724
  %v1173 = vpack.c.b16 %v733, %v729
  %v1174 = vpack.c.b16 %v734, %v730
  %v1175 = vpack.c.b16 %v735, %v731
  %v1176 = vpack.c.b16 %v736, %v732
  %v1177 = vpack.c.b16 %v741, %v737
  %v1178 = vpack.c.b16 %v742, %v738
  %v1179 = vpack.c.b16 %v743, %v739
  %v1180 = vpack.c.b16 %v744, %v740
  %v1181 = vpack.c.b16 %v749, %v745
  %v1182 = vpack.c.b16 %v750, %v746
  %v1183 = vpack.c.b16 %v751, %v747
  %v1184 = vpack.c.b16 %v752, %v748
  %v1185 = vpack.c.b16 %v757, %v753
  %v1186 = vpack.c.b16 %v758, %v754
  %v1187 = vpack.c.b16 %v759, %v755
  %v1188 = vpack.c.b16 %v760, %v756
  %v1189 = vpack.c.b16 %v765, %v761
  %v1190 = vpack.c.b16 %v766, %v762
  %v1191 = vpack.c.b16 %v767, %v763
  %v1192 = vpack.c.b16 %v768, %v764
  %v1193 = vpack.c.b16 %v773, %v769
  %v1194 = vpack.c.b16 %v774, %v770
  %v1195 = vpack.c.b16 %v775, %v771
  %v1196 = vpack.c.b16 %v776, %v772
  %v1197 = vpack.c.b16 %v781, %v777
  %v1198 = vpack.c.b16 %v782, %v778
  %v1199 = vpack.c.b16 %v783, %v779
  %v1200 = vpack.c.b16 %v784, %v780
  %v1201 = vpack.c.b16 %v789, %v785
  %v1202 = vpack.c.b16 %v790, %v786
  %v1203 = vpack.c.b16 %v791, %v787
  %v1204 = vpack.c.b16 %v792, %v788
  %v1205 = vpack.c.b16 %v797, %v793
  %v1206 = vpack.c.b16 %v798, %v794
  %v1207 = vpack.c.b16 %v799, %v795
  %v1208 = vpack.c.b16 %v800, %v796
  %v1209 = vpack.c.b16 %v805, %v801
  %v1210 = vpack.c.b16 %v806, %v802
  %v1211 = vpack.c.b16 %v807, %v803
  %v1212 = vpack.c.b16 %v808, %v804
  %v1213 = vpack.c.b16 %v813, %v809
  %v1214 = vpack.c.b16 %v814, %v810
  %v1215 = vpack.c.b16 %v815, %v811
  %v1216 = vpack.c.b16 %v816, %v812
  %v1217 = vpack.c.b16 %v821, %v817
  %v1218 = vpack.c.b16 %v822, %v818
  %v1219 = vpack.c.b16 %v823, %v819
  %v1220 = vpack.c.b16 %v824, %v820
  %v1221 = vpack.c.b16 %v829, %v825
  %v1222 = vpack.c.b16 %v830, %v826
  %v1223 = vpack.c.b16 %v831, %v827
  %v1224 = vpack.c.b16 %v832, %v828
  %v1225 = vpack.c.b16 %v837, %v833
  %v1226 = vpack.c.b16 %v838, %v834
  %v1227 = vpack.c.b16 %v839, %v835
  %v1228 = vpack.c.b16 %v840, %v836
  %v1229 = vpack.c.b16 %v845, %v841
  %v1230 = vpack.c.b16 %v846, %v842
  %v1231 = vpack.c.b16 %v847, %v843
  %v1232 = vpack.c.b16 %v848, %v844
  %v1233 = vpack.c.b16 %v853, %v849
  %v1234 = vpack.c.b16 %v854, %v850
  %v1235 = vpack.c.b16 %v855, %v851
  %v1236 = vpack.c.b16 %v856, %v852
  %v1237 = vpack.c.b16 %v861, %v857
  %v1238 = vpack.c.b16 %v862, %v858
  %v1239 = vpack.c.b16 %v863, %v859
  %v1240 = vpack.c.b16 %v864, %v860
  %v1241 = vpack.c.b16 %v869, %v865
  %v1242 = vpack.c.b16 %v870, %v866
  %v1243 = vpack.c.b16 %v871, %v867
  %v1244 = vpack.c.b16 %v872, %v868
  %v1245 = vpack.c.b16 %v877, %v873
  %v1246 = vpack.c.b16 %v878, %v874
  %v1247 = vpack.c.b16 %v879, %v875
  %v1248 = vpack.c.b16 %v880, %v876
  %v1249 = vpack.c.b16 %v885, %v881
  %v1250 = vpack.c.b16 %v886, %v882
  %v1251 = vpack.c.b16 %v887, %v883
  %v1252 = vpack.c.b16 %v888, %v884
  %v1253 = vpack.c.b16 %v893, %v889
  %v1254 = vpack.c.b16 %v894, %v890
  %v1255 = vpack.c.b16 %v895, %v891
  %v1256 = vpack.c.b16 %v896, %v892
  %v1257 = vpack.c.b16 %v901, %v897
  %v1258 = vpack.c.b16 %v902, %v898
  %v1259 = vpack.c.b16 %v903, %v899
  %v1260 = vpack.c.b16 %v904, %v900
  %v1261 = vpack.c.b16 %v909, %v905
  %v1262 = vpack.c.b16 %v910, %v906
  %v1263 = vpack.c.b16 %v911, %v907
  %v1264 = vpack.c.b16 %v912, %v908
  %v1265 = vpack.c.b16 %v917, %v913
  %v1266 = vpack.c.b16 %v918, %v914
  %v1267 = vpack.c.b16 %v919, %v915
  %v1268 = vpack.c.b16 %v920, %v916
  %v1269 = vpack.c.b16 %v925, %v921
  %v1270 = vpack.c.b16 %v926, %v922
  %v1271 = vpack.c.b16 %v927, %v923
  %v1272 = vpack.c.b16 %v928, %v924
  %v1273 = vpack.c.b16 %v933, %v929
  %v1274 = vpack.c.b16 %v934, %v930
  %v1275 = vpack.c.b16 %v935, %v931
  %v1276 = vpack.c.b16 %v936, %v932
  %v1277 = vpack.c.b16 %v941, %v937
  %v1278 = vpack.c.b16 %v942, %v938
  %v1279 = vpack.c.b16 %v943, %v939
  %v1280 = vpack.c.b16 %v944, %v940
  %v1281 = vpack.c.b16 %v949, %v945
  %v1282 = vpack.c.b16 %v950, %v946
  %v1283 = vpack.c.b16 %v951, %v947
  %v1284 = vpack.c.b16 %v952, %v948
  %v1285 = vpack.c.b16 %v957, %v953
  %v1286 = vpack.c.b16 %v958, %v954
  %v1287 = vpack.c.b16 %v959, %v955
  %v1288 = vpack.c.b16 %v960, %v956
  %v1289 = vpack.c.b16 %v965, %v961
  %v1290 = vpack.c.b16 %v966, %v962
  %v1291 = vpack.c.b16 %v967, %v963
  %v1292 = vpack.c.b16 %v968, %v964
  %v1293 = vpack.c.b16 %v973, %v969
  %v1294 = vpack.c.b16 %v974, %v970
  %v1295 = vpack.c.b16 %v975, %v971
  %v1296 = vpack.c.b16 %v976, %v972
  %v1297 = vpack.c.b16 %v981, %v977
  %v1298 = vpack.c.b16 %v982, %v978
  %v1299 = vpack.c.b16 %v983, %v979
  %v1300 = vpack.c.b16 %v984, %v980
  %v1301 = vpack.c.b16 %v989, %v985
  %v1302 = vpack.c.b16 %v990, %v986
  %v1303 = vpack.c.b16 %v991, %v987
  %v1304 = vpack.c.b16 %v992, %v988
  %v1305 = vpack.c.b16 %v997, %v993
  %v1306 = vpack.c.b16 %v998, %v994
  %v1307 = vpack.c.b16 %v999, %v995
  %v1308 = vpack.c.b16 %v1000, %v996
  %v1309 = vpack.c.b16 %v1005, %v1001
  %v1310 = vpack.c.b16 %v1006, %v1002
  %v1311 = vpack.c.b16 %v1007, %v1003
  %v1312 = vpack.c.b16 %v1008, %v1004
  %v1313 = vpack.c.b16 %v1013, %v1009
  %v1314 = vpack.c.b16 %v1014, %v1010
  %v1315 = vpack.c.b16 %v1015, %v1011
  %v1316 = vpack.c.b16 %v1016, %v1012
  %v1317 = vpack.c.b16 %v1021, %v1017
  %v1318 = vpack.c.b16 %v1022, %v1018
  %v1319 = vpack.c.b16 %v1023, %v1019
  %v1320 = vpack.c.b16 %v1024, %v1020
  %v1321 = vpack.c.b16 %v1029, %v1025
  %v1322 = vpack.c.b16 %v1030, %v1026
  %v1323 = vpack.c.b16 %v1031, %v1027
  %v1324 = vpack.c.b16 %v1032, %v1028
  %v1325 = vpack.c.b16 %v1037, %v1033
  %v1326 = vpack.c.b16 %v1038, %v1034
  %v1327 = vpack.c.b16 %v1039, %v1035
  %v1328 = vpack.c.b16 %v1040, %v1036
  %v1329 = vpack.c.b16 %v1045, %v1041
  %v1330 = vpack.c.b16 %v1046, %v1042
  %v1331 = vpack.c.b16 %v1047, %v1043
  %v1332 = vpack.c.b16 %v1048, %v1044
  %v1333 = vpack.c.b16 %v1053, %v1049
  %v1334 = vpack.c.b16 %v1054, %v1050
  %v1335 = vpack.c.b16 %v1055, %v1051
  %v1336 = vpack.c.b16 %v1056, %v1052
  %v1337 = vpack.c.b16 %v1061, %v1057
  %v1338 = vpack.c.b16 %v1062, %v1058
  %v1339 = vpack.c.b16 %v1063, %v1059
  %v1340 = vpack.c.b16 %v1064, %v1060
  %v1341 = vpack.c.b16 %v1069, %v1065
  %v1342 = vpack.c.b16 %v1070, %v1066
  %v1343 = vpack.c.b16 %v1071, %v1067
  %v1344 = vpack.c.b16 %v1072, %v1068
  %v1345 = vpack.c.b16 %v1077, %v1073
  %v1346 = vpack.c.b16 %v1078, %v1074
  %v1347 = vpack.c.b16 %v1079, %v1075
  %v1348 = vpack.c.b16 %v1080, %v1076
  %v1349 = vpack.c.b16 %v1085, %v1081
  %v1350 = vpack.c.b16 %v1086, %v1082
  %v1351 = vpack.c.b16 %v1087, %v1083
  %v1352 = vpack.c.b16 %v1088, %v1084
  %v1353 = vpack.c.b16 %v1093, %v1089
  %v1354 = vpack.c.b16 %v1094, %v1090
  %v1355 = vpack.c.b16 %v1095, %v1091
  %v1356 = vpack.c.b16 %v1096, %v1092
  %v1357 = vpack.c.b16 %v1101, %v1097
  %v1358 = vpack.c.b16 %v1102, %v1098
  %v1359 = vpack.c.b16 %v1103, %v1099
  %v1360 = vpack.c.b16 %v1104, %v1100
  %v1616 = vunpack.c.l.b16 %v274
  %v1617 = vunpack.c.l.b16 %v275
  %v1618 = vunpack.c.l.b16 %v276
  %v1619 = vunpack.c.l.b16 %v277
  %v1620 = vunpack.c.l.b16 %v278
  %v1621 = vunpack.c.l.b16 %v279
  %v1622 = vunpack.c.l.b16 %v280
  %v1623 = vunpack.c.l.b16 %v281
  %v1624 = vunpack.c.l.b16 %v282
  %v1625 = vunpack.c.l.b16 %v283
  %v1626 = vunpack.c.l.b16 %v284
  %v1627 = vunpack.c.l.b16 %v285
  %v1628 = vunpack.c.l.b16 %v286
  %v1629 = vunpack.c.l.b16 %v287
  %v1630 = vunpack.c.l.b16 %v288
  %v1631 = vunpack.c.l.b16 %v289
  %v1632 = vunpack.c.l.b16 %v290
  %v1633 = vunpack.c.l.b16 %v291
  %v1634 = vunpack.c.l.b16 %v292
  %v1635 = vunpack.c.l.b16 %v293
  %v1636 = vunpack.c.l.b16 %v294
  %v1637 = vunpack.c.l.b16 %v295
  %v1638 = vunpack.c.l.b16 %v296
  %v1639 = vunpack.c.l.b16 %v297
  %v1640 = vunpack.c.l.b16 %v298
  %v1641 = vunpack.c.l.b16 %v299
  %v1642 = vunpack.c.l.b16 %v300
  %v1643 = vunpack.c.l.b16 %v301
  %v1644 = vunpack.c.l.b16 %v302
  %v1645 = vunpack.c.l.b16 %v303
  %v1646 = vunpack.c.l.b16 %v304
  %v1647 = vunpack.c.l.b16 %v305
  %v1648 = vunpack.c.l.b16 %v306
  %v1649 = vunpack.c.l.b16 %v307
  %v1650 = vunpack.c.l.b16 %v308
  %v1651 = vunpack.c.l.b16 %v309
  %v1652 = vunpack.c.l.b16 %v310
  %v1653 = vunpack.c.l.b16 %v311
  %v1654 = vunpack.c.l.b16 %v312
  %v1655 = vunpack.c.l.b16 %v313
  %v1656 = vunpack.c.l.b16 %v314
  %v1657 = vunpack.c.l.b16 %v315
  %v1658 = vunpack.c.l.b16 %v316
  %v1659 = vunpack.c.l.b16 %v317
  %v1660 = vunpack.c.l.b16 %v318
  %v1661 = vunpack.c.l.b16 %v319
  %v1662 = vunpack.c.l.b16 %v320
  %v1663 = vunpack.c.l.b16 %v321
  %v1664 = vunpack.c.l.b16 %v322
  %v1665 = vunpack.c.l.b16 %v323
  %v1666 = vunpack.c.l.b16 %v324
  %v1667 = vunpack.c.l.b16 %v325
  %v1668 = vunpack.c.l.b16 %v326
  %v1669 = vunpack.c.l.b16 %v327
  %v1670 = vunpack.c.l.b16 %v328
  %v1671 = vunpack.c.l.b16 %v329
  %v1672 = vunpack.c.l.b16 %v330
  %v1673 = vunpack.c.l.b16 %v331
  %v1674 = vunpack.c.l.b16 %v332
  %v1675 = vunpack.c.l.b16 %v333
  %v1676 = vunpack.c.l.b16 %v334
  %v1677 = vunpack.c.l.b16 %v335
  %v1678 = vunpack.c.l.b16 %v336
  %v1679 = vpack.c.b16 %v1617, %v1616
  %v1680 = vpack.c.b16 %v1619, %v1618
  %v1681 = vpack.c.b16 %v1621, %v1620
  %v1682 = vpack.c.b16 %v1623, %v1622
  %v1683 = vpack.c.b16 %v1625, %v1624
  %v1684 = vpack.c.b16 %v1627, %v1626
  %v1685 = vpack.c.b16 %v1629, %v1628
  %v1686 = vpack.c.b16 %v1631, %v1630
  %v1687 = vpack.c.b16 %v1633, %v1632
  %v1688 = vpack.c.b16 %v1635, %v1634
  %v1689 = vpack.c.b16 %v1637, %v1636
  %v1690 = vpack.c.b16 %v1639, %v1638
  %v1691 = vpack.c.b16 %v1641, %v1640
  %v1692 = vpack.c.b16 %v1643, %v1642
  %v1693 = vpack.c.b16 %v1645, %v1644
  %v1694 = vpack.c.b16 %v1647, %v1646
  %v1695 = vpack.c.b16 %v1649, %v1648
  %v1696 = vpack.c.b16 %v1651, %v1650
  %v1697 = vpack.c.b16 %v1653, %v1652
  %v1698 = vpack.c.b16 %v1655, %v1654
  %v1699 = vpack.c.b16 %v1657, %v1656
  %v1700 = vpack.c.b16 %v1659, %v1658
  %v1701 = vpack.c.b16 %v1661, %v1660
  %v1702 = vpack.c.b16 %v1663, %v1662
  %v1703 = vpack.c.b16 %v1665, %v1664
  %v1704 = vpack.c.b16 %v1667, %v1666
  %v1705 = vpack.c.b16 %v1669, %v1668
  %v1706 = vpack.c.b16 %v1671, %v1670
  %v1707 = vpack.c.b16 %v1673, %v1672
  %v1708 = vpack.c.b16 %v1675, %v1674
  %v1709 = vpack.c.b16 %v1677, %v1676
  %v1710 = vpack.c.b16 %v1678, %v1678
  %vm1742 = vcmask 949248
  %v1744 = vsel %vm1742, %v1108, 0
  %v1747 = vsel %vm1742, %v1112, 0
  %v1750 = vsel %vm1742, %v1116, 0
  %v1753 = vsel %vm1742, %v1120, 0
  %v1756 = vsel %vm1742, %v1124, 0
  %v1759 = vsel %vm1742, %v1128, 0
  %v1762 = vsel %vm1742, %v1132, 0
  %v1765 = vsel %vm1742, %v1136, 0
  %v1768 = vsel %vm1742, %v1140, 0
  %v1771 = vsel %vm1742, %v1144, 0
  %v1774 = vsel %vm1742, %v1148, 0
  %v1777 = vsel %vm1742, %v1152, 0
  %v1780 = vsel %vm1742, %v1156, 0
  %v1783 = vsel %vm1742, %v1160, 0
  %v1786 = vsel %vm1742, %v1164, 0
  %v1789 = vsel %vm1742, %v1168, 0
  %v1792 = vsel %vm1742, %v1172, 0
  %v1795 = vsel %vm1742, %v1176, 0
  %v1798 = vsel %vm1742, %v1180, 0
  %v1801 = vsel %vm1742, %v1184, 0
  %v1804 = vsel %vm1742, %v1188, 0
  %v1807 = vsel %vm1742, %v1192, 0
  %v1810 = vsel %vm1742, %v1196, 0
  %v1813 = vsel %vm1742, %v1200, 0
  %v1816 = vsel %vm1742, %v1204, 0
  %v1819 = vsel %vm1742, %v1208, 0
  %v1822 = vsel %vm1742, %v1212, 0
  %v1825 = vsel %vm1742, %v1216, 0
  %v1828 = vsel %vm1742, %v1220, 0
  %v1831 = vsel %vm1742, %v1224, 0
  %v1834 = vsel %vm1742, %v1228, 0
  %v1837 = vsel %vm1742, %v1232, 0
  %v1840 = vsel %vm1742, %v1236, 0
  %v1843 = vsel %vm1742, %v1240, 0
  %v1846 = vsel %vm1742, %v1244, 0
  %v1849 = vsel %vm1742, %v1248, 0
  %v1852 = vsel %vm1742, %v1252, 0
  %v1855 = vsel %vm1742, %v1256, 0
  %v1858 = vsel %vm1742, %v1260, 0
  %v1861 = vsel %vm1742, %v1264, 0
  %v1864 = vsel %vm1742, %v1268, 0
  %v1867 = vsel %vm1742, %v1272, 0
  %v1870 = vsel %vm1742, %v1276, 0
  %v1873 = vsel %vm1742, %v1280, 0
  %v1876 = vsel %vm1742, %v1284, 0
  %v1879 = vsel %vm1742, %v1288, 0
  %v1882 = vsel %vm1742, %v1292, 0
  %v1885 = vsel %vm1742, %v1296, 0
  %v1888 = vsel %vm1742, %v1300, 0
  %v1891 = vsel %vm1742, %v1304, 0
  %v1894 = vsel %vm1742, %v1308, 0
  %v1897 = vsel %vm1742, %v1312, 0
  %v1900 = vsel %vm1742, %v1316, 0
  %v1903 = vsel %vm1742, %v1320, 0
  %v1906 = vsel %vm1742, %v1324, 0
  %v1909 = vsel %vm1742, %v1328, 0
  %v1912 = vsel %vm1742, %v1332, 0
  %v1915 = vsel %vm1742, %v1336, 0
  %v1918 = vsel %vm1742, %v1340, 0
  %v1921 = vsel %vm1742, %v1344, 0
  %v1924 = vsel %vm1742, %v1348, 0
  %v1927 = vsel %vm1742, %v1352, 0
  %v1930 = vsel %vm1742, %v1356, 0
  %v1933 = vsel %vm1742, %v1360, 0
  %vm1935 = vcmask 1041408
  %v1937 = vsel %vm1935, %v1710, 0
  %1939 = vmatprep.subr.bf16.mxu0 0
  %1940 = vmatpush1.bf16.msra.mxu0 %v1679
  %1941 = vmatprep.subr.bf16.mxu0 0
  %1942 = vmatpush1.bf16.msra.mxu0 %v1680
  %1943 = vmatprep.subr.bf16.mxu0 0
  %1944 = vmatpush1.bf16.msra.mxu0 %v1681
  %1945 = vmatprep.subr.bf16.mxu0 0
  %1946 = vmatpush1.bf16.msra.mxu0 %v1682
  %1947 = vmatprep.subr.bf16.mxu0 0
  %1948 = vmatpush1.bf16.msra.mxu0 %v1683
  %1949 = vmatprep.subr.bf16.mxu0 0
  %1950 = vmatpush1.bf16.msra.mxu0 %v1684
  %1951 = vmatprep.subr.bf16.mxu0 0
  %1952 = vmatpush1.bf16.msra.mxu0 %v1685
  %1953 = vmatprep.subr.bf16.mxu0 0
  %1954 = vmatpush1.bf16.msra.mxu0 %v1686
  %1955 = vmatprep.subr.bf16.mxu0 0
  %1956 = vmatpush1.bf16.msra.mxu0 %v1687
  %1957 = vmatprep.subr.bf16.mxu0 0
  %1958 = vmatpush1.bf16.msra.mxu0 %v1688
  %1959 = vmatprep.subr.bf16.mxu0 0
  %1960 = vmatpush1.bf16.msra.mxu0 %v1689
  %1961 = vmatprep.subr.bf16.mxu0 0
  %1962 = vmatpush1.bf16.msra.mxu0 %v1690
  %1963 = vmatprep.subr.bf16.mxu0 0
  %1964 = vmatpush1.bf16.msra.mxu0 %v1691
  %1965 = vmatprep.subr.bf16.mxu0 0
  %1966 = vmatpush1.bf16.msra.mxu0 %v1692
  %1967 = vmatprep.subr.bf16.mxu0 0
  %1968 = vmatpush1.bf16.msra.mxu0 %v1693
  %1969 = vmatprep.subr.bf16.mxu0 0
  %1970 = vmatpush1.bf16.msra.mxu0 %v1694
  %1971 = vmatprep.mubr.bf16.mxu0 %v1106
  %1972 = vmatmul.mubr.bf16.gmra.mrb[0].mxu0 %v1105
  %v1973 = vpop.f32.mrb[0].mxu0
  %v1974 = vadd.f32 0.0, %v1973
  %v1975 = vpop.f32.mrb[0].mxu0
  %v1976 = vpop.f32.mrb[0].mxu0
  %v1977 = vadd.f32 0.0, %v1976
  %v1978 = vpop.f32.mrb[0].mxu0
  %1979 = vmatprep.mubr.bf16.mxu0 %v1110
  %1980 = vmatmul.mubr.bf16.gmra.mrb[0].mxu0 %v1109
  %v1981 = vpop.f32.mrb[0].mxu0
  %v1982 = vadd.f32 0.0, %v1981
  %v1983 = vpop.f32.mrb[0].mxu0
  %v1984 = vpop.f32.mrb[0].mxu0
  %v1985 = vadd.f32 0.0, %v1984
  %v1986 = vpop.f32.mrb[0].mxu0
  %1987 = vmatprep.mubr.bf16.mxu0 %v1114
  %1988 = vmatmul.mubr.bf16.gmra.mrb[0].mxu0 %v1113
  %v1989 = vpop.f32.mrb[0].mxu0
  %v1990 = vadd.f32 0.0, %v1989
  %v1991 = vpop.f32.mrb[0].mxu0
  %v1992 = vpop.f32.mrb[0].mxu0
  %v1993 = vadd.f32 0.0, %v1992
  %v1994 = vpop.f32.mrb[0].mxu0
  %1995 = vmatprep.mubr.bf16.mxu0 %v1118
  %1996 = vmatmul.mubr.bf16.gmra.mrb[0].mxu0 %v1117
  %v1997 = vpop.f32.mrb[0].mxu0
  %v1998 = vadd.f32 0.0, %v1997
  %v1999 = vpop.f32.mrb[0].mxu0
  %v2000 = vpop.f32.mrb[0].mxu0
  %v2001 = vadd.f32 0.0, %v2000
  %v2002 = vpop.f32.mrb[0].mxu0
  %2003 = vmatprep.mubr.bf16.mxu0 %v1122
  %2004 = vmatmul.mubr.bf16.gmra.mrb[0].mxu0 %v1121
  %v2005 = vpop.f32.mrb[0].mxu0
  %v2006 = vadd.f32 0.0, %v2005
  %v2007 = vpop.f32.mrb[0].mxu0
  %v2008 = vpop.f32.mrb[0].mxu0
  %v2009 = vadd.f32 0.0, %v2008
  %v2010 = vpop.f32.mrb[0].mxu0
  %2011 = vmatprep.mubr.bf16.mxu0 %v1126
  %2012 = vmatmul.mubr.bf16.gmra.mrb[0].mxu0 %v1125
  %v2013 = vpop.f32.mrb[0].mxu0
  %v2014 = vadd.f32 0.0, %v2013
  %v2015 = vpop.f32.mrb[0].mxu0
  %v2016 = vpop.f32.mrb[0].mxu0
  %v2017 = vadd.f32 0.0, %v2016
  %v2018 = vpop.f32.mrb[0].mxu0
  %2019 = vmatprep.mubr.bf16.mxu0 %v1130
  %2020 = vmatmul.mubr.bf16.gmra.mrb[0].mxu0 %v1129
  %v2021 = vpop.f32.mrb[0].mxu0
  %v2022 = vadd.f32 0.0, %v2021
  %v2023 = vpop.f32.mrb[0].mxu0
  %v2024 = vpop.f32.mrb[0].mxu0
  %v2025 = vadd.f32 0.0, %v2024
  %v2026 = vpop.f32.mrb[0].mxu0
  %2027 = vmatprep.mubr.bf16.mxu0 %v1134
  %2028 = vmatmul.mubr.bf16.gmra.mrb[0].mxu0 %v1133
  %v2029 = vpop.f32.mrb[0].mxu0
  %v2030 = vadd.f32 0.0, %v2029
  %v2031 = vpop.f32.mrb[0].mxu0
  %v2032 = vpop.f32.mrb[0].mxu0
  %v2033 = vadd.f32 0.0, %v2032
  %v2034 = vpop.f32.mrb[0].mxu0
  %2035 = vmatprep.mubr.bf16.mxu0 %v1138
  %2036 = vmatmul.mubr.bf16.gmra.mrb[0].mxu0 %v1137
  %v2037 = vpop.f32.mrb[0].mxu0
  %v2038 = vadd.f32 0.0, %v2037
  %v2039 = vpop.f32.mrb[0].mxu0
  %v2040 = vpop.f32.mrb[0].mxu0
  %v2041 = vadd.f32 0.0, %v2040
  %v2042 = vpop.f32.mrb[0].mxu0
  %2043 = vmatprep.mubr.bf16.mxu0 %v1142
  %2044 = vmatmul.mubr.bf16.gmra.mrb[0].mxu0 %v1141
  %v2045 = vpop.f32.mrb[0].mxu0
  %v2046 = vadd.f32 0.0, %v2045
  %v2047 = vpop.f32.mrb[0].mxu0
  %v2048 = vpop.f32.mrb[0].mxu0
  %v2049 = vadd.f32 0.0, %v2048
  %v2050 = vpop.f32.mrb[0].mxu0
  %2051 = vmatprep.mubr.bf16.mxu0 %v1146
  %2052 = vmatmul.mubr.bf16.gmra.mrb[0].mxu0 %v1145
  %v2053 = vpop.f32.mrb[0].mxu0
  %v2054 = vadd.f32 0.0, %v2053
  %v2055 = vpop.f32.mrb[0].mxu0
  %v2056 = vpop.f32.mrb[0].mxu0
  %v2057 = vadd.f32 0.0, %v2056
  %v2058 = vpop.f32.mrb[0].mxu0
  %2059 = vmatprep.mubr.bf16.mxu0 %v1150
  %2060 = vmatmul.mubr.bf16.gmra.mrb[0].mxu0 %v1149
  %v2061 = vpop.f32.mrb[0].mxu0
  %v2062 = vadd.f32 0.0, %v2061
  %v2063 = vpop.f32.mrb[0].mxu0
  %v2064 = vpop.f32.mrb[0].mxu0
  %v2065 = vadd.f32 0.0, %v2064
  %v2066 = vpop.f32.mrb[0].mxu0
  %2067 = vmatprep.mubr.bf16.mxu0 %v1154
  %2068 = vmatmul.mubr.bf16.gmra.mrb[0].mxu0 %v1153
  %v2069 = vpop.f32.mrb[0].mxu0
  %v2070 = vadd.f32 0.0, %v2069
  %v2071 = vpop.f32.mrb[0].mxu0
  %v2072 = vpop.f32.mrb[0].mxu0
  %v2073 = vadd.f32 0.0, %v2072
  %v2074 = vpop.f32.mrb[0].mxu0
  %2075 = vmatprep.mubr.bf16.mxu0 %v1158
  %2076 = vmatmul.mubr.bf16.gmra.mrb[0].mxu0 %v1157
  %v2077 = vpop.f32.mrb[0].mxu0
  %v2078 = vadd.f32 0.0, %v2077
  %v2079 = vpop.f32.mrb[0].mxu0
  %v2080 = vpop.f32.mrb[0].mxu0
  %v2081 = vadd.f32 0.0, %v2080
  %v2082 = vpop.f32.mrb[0].mxu0
  %2083 = vmatprep.mubr.bf16.mxu0 %v1162
  %2084 = vmatmul.mubr.bf16.gmra.mrb[0].mxu0 %v1161
  %v2085 = vpop.f32.mrb[0].mxu0
  %v2086 = vadd.f32 0.0, %v2085
  %v2087 = vpop.f32.mrb[0].mxu0
  %v2088 = vpop.f32.mrb[0].mxu0
  %v2089 = vadd.f32 0.0, %v2088
  %v2090 = vpop.f32.mrb[0].mxu0
  %2091 = vmatprep.mubr.bf16.mxu0 %v1166
  %2092 = vmatmul.mubr.bf16.gmra.mrb[0].mxu0 %v1165
  %v2093 = vpop.f32.mrb[0].mxu0
  %v2094 = vadd.f32 0.0, %v2093
  %v2095 = vpop.f32.mrb[0].mxu0
  %v2096 = vpop.f32.mrb[0].mxu0
  %v2097 = vadd.f32 0.0, %v2096
  %v2098 = vpop.f32.mrb[0].mxu0
  %2099 = vmatprep.mubr.bf16.mxu0 %v1170
  %2100 = vmatmul.mubr.bf16.gmra.mrb[0].mxu0 %v1169
  %v2101 = vpop.f32.mrb[0].mxu0
  %v2102 = vadd.f32 0.0, %v2101
  %v2103 = vpop.f32.mrb[0].mxu0
  %v2104 = vpop.f32.mrb[0].mxu0
  %v2105 = vadd.f32 0.0, %v2104
  %v2106 = vpop.f32.mrb[0].mxu0
  %2107 = vmatprep.mubr.bf16.mxu0 %v1174
  %2108 = vmatmul.mubr.bf16.gmra.mrb[0].mxu0 %v1173
  %v2109 = vpop.f32.mrb[0].mxu0
  %v2110 = vadd.f32 0.0, %v2109
  %v2111 = vpop.f32.mrb[0].mxu0
  %v2112 = vpop.f32.mrb[0].mxu0
  %v2113 = vadd.f32 0.0, %v2112
  %v2114 = vpop.f32.mrb[0].mxu0
  %2115 = vmatprep.mubr.bf16.mxu0 %v1178
  %2116 = vmatmul.mubr.bf16.gmra.mrb[0].mxu0 %v1177
  %v2117 = vpop.f32.mrb[0].mxu0
  %v2118 = vadd.f32 0.0, %v2117
  %v2119 = vpop.f32.mrb[0].mxu0
  %v2120 = vpop.f32.mrb[0].mxu0
  %v2121 = vadd.f32 0.0, %v2120
  %v2122 = vpop.f32.mrb[0].mxu0
  %2123 = vmatprep.mubr.bf16.mxu0 %v1182
  %2124 = vmatmul.mubr.bf16.gmra.mrb[0].mxu0 %v1181
  %v2125 = vpop.f32.mrb[0].mxu0
  %v2126 = vadd.f32 0.0, %v2125
  %v2127 = vpop.f32.mrb[0].mxu0
  %v2128 = vpop.f32.mrb[0].mxu0
  %v2129 = vadd.f32 0.0, %v2128
  %v2130 = vpop.f32.mrb[0].mxu0
  %2131 = vmatprep.mubr.bf16.mxu0 %v1186
  %2132 = vmatmul.mubr.bf16.gmra.mrb[0].mxu0 %v1185
  %v2133 = vpop.f32.mrb[0].mxu0
  %v2134 = vadd.f32 0.0, %v2133
  %v2135 = vpop.f32.mrb[0].mxu0
  %v2136 = vpop.f32.mrb[0].mxu0
  %v2137 = vadd.f32 0.0, %v2136
  %v2138 = vpop.f32.mrb[0].mxu0
  %2139 = vmatprep.mubr.bf16.mxu0 %v1190
  %2140 = vmatmul.mubr.bf16.gmra.mrb[0].mxu0 %v1189
  %v2141 = vpop.f32.mrb[0].mxu0
  %v2142 = vadd.f32 0.0, %v2141
  %v2143 = vpop.f32.mrb[0].mxu0
  %v2144 = vpop.f32.mrb[0].mxu0
  %v2145 = vadd.f32 0.0, %v2144
  %v2146 = vpop.f32.mrb[0].mxu0
  %2147 = vmatprep.mubr.bf16.mxu0 %v1194
  %2148 = vmatmul.mubr.bf16.gmra.mrb[0].mxu0 %v1193
  %v2149 = vpop.f32.mrb[0].mxu0
  %v2150 = vadd.f32 0.0, %v2149
  %v2151 = vpop.f32.mrb[0].mxu0
  %v2152 = vpop.f32.mrb[0].mxu0
  %v2153 = vadd.f32 0.0, %v2152
  %v2154 = vpop.f32.mrb[0].mxu0
  %2155 = vmatprep.mubr.bf16.mxu0 %v1198
  %2156 = vmatmul.mubr.bf16.gmra.mrb[0].mxu0 %v1197
  %v2157 = vpop.f32.mrb[0].mxu0
  %v2158 = vadd.f32 0.0, %v2157
  %v2159 = vpop.f32.mrb[0].mxu0
  %v2160 = vpop.f32.mrb[0].mxu0
  %v2161 = vadd.f32 0.0, %v2160
  %v2162 = vpop.f32.mrb[0].mxu0
  %2163 = vmatprep.mubr.bf16.mxu0 %v1202
  %2164 = vmatmul.mubr.bf16.gmra.mrb[0].mxu0 %v1201
  %v2165 = vpop.f32.mrb[0].mxu0
  %v2166 = vadd.f32 0.0, %v2165
  %v2167 = vpop.f32.mrb[0].mxu0
  %v2168 = vpop.f32.mrb[0].mxu0
  %v2169 = vadd.f32 0.0, %v2168
  %v2170 = vpop.f32.mrb[0].mxu0
  %2171 = vmatprep.mubr.bf16.mxu0 %v1206
  %2172 = vmatmul.mubr.bf16.gmra.mrb[0].mxu0 %v1205
  %v2173 = vpop.f32.mrb[0].mxu0
  %v2174 = vadd.f32 0.0, %v2173
  %v2175 = vpop.f32.mrb[0].mxu0
  %v2176 = vpop.f32.mrb[0].mxu0
  %v2177 = vadd.f32 0.0, %v2176
  %v2178 = vpop.f32.mrb[0].mxu0
  %2179 = vmatprep.mubr.bf16.mxu0 %v1210
  %2180 = vmatmul.mubr.bf16.gmra.mrb[0].mxu0 %v1209
  %v2181 = vpop.f32.mrb[0].mxu0
  %v2182 = vadd.f32 0.0, %v2181
  %v2183 = vpop.f32.mrb[0].mxu0
  %v2184 = vpop.f32.mrb[0].mxu0
  %v2185 = vadd.f32 0.0, %v2184
  %v2186 = vpop.f32.mrb[0].mxu0
  %2187 = vmatprep.mubr.bf16.mxu0 %v1214
  %2188 = vmatmul.mubr.bf16.gmra.mrb[0].mxu0 %v1213
  %v2189 = vpop.f32.mrb[0].mxu0
  %v2190 = vadd.f32 0.0, %v2189
  %v2191 = vpop.f32.mrb[0].mxu0
  %v2192 = vpop.f32.mrb[0].mxu0
  %v2193 = vadd.f32 0.0, %v2192
  %v2194 = vpop.f32.mrb[0].mxu0
  %2195 = vmatprep.mubr.bf16.mxu0 %v1218
  %2196 = vmatmul.mubr.bf16.gmra.mrb[0].mxu0 %v1217
  %v2197 = vpop.f32.mrb[0].mxu0
  %v2198 = vadd.f32 0.0, %v2197
  %v2199 = vpop.f32.mrb[0].mxu0
  %v2200 = vpop.f32.mrb[0].mxu0
  %v2201 = vadd.f32 0.0, %v2200
  %v2202 = vpop.f32.mrb[0].mxu0
  %2203 = vmatprep.mubr.bf16.mxu0 %v1222
  %2204 = vmatmul.mubr.bf16.gmra.mrb[0].mxu0 %v1221
  %v2205 = vpop.f32.mrb[0].mxu0
  %v2206 = vadd.f32 0.0, %v2205
  %v2207 = vpop.f32.mrb[0].mxu0
  %v2208 = vpop.f32.mrb[0].mxu0
  %v2209 = vadd.f32 0.0, %v2208
  %v2210 = vpop.f32.mrb[0].mxu0
  %2211 = vmatprep.mubr.bf16.mxu0 %v1226
  %2212 = vmatmul.mubr.bf16.gmra.mrb[0].mxu0 %v1225
  %v2213 = vpop.f32.mrb[0].mxu0
  %v2214 = vadd.f32 0.0, %v2213
  %v2215 = vpop.f32.mrb[0].mxu0
  %v2216 = vpop.f32.mrb[0].mxu0
  %v2217 = vadd.f32 0.0, %v2216
  %v2218 = vpop.f32.mrb[0].mxu0
  %2219 = vmatprep.mubr.bf16.mxu0 %v1230
  %2220 = vmatmul.mubr.bf16.gmra.mrb[0].mxu0 %v1229
  %v2221 = vpop.f32.mrb[0].mxu0
  %v2222 = vadd.f32 0.0, %v2221
  %v2223 = vpop.f32.mrb[0].mxu0
  %v2224 = vpop.f32.mrb[0].mxu0
  %v2225 = vadd.f32 0.0, %v2224
  %v2226 = vpop.f32.mrb[0].mxu0
  %2227 = vmatprep.mubr.bf16.mxu0 %v1234
  %2228 = vmatmul.mubr.bf16.gmra.mrb[0].mxu0 %v1233
  %v2229 = vpop.f32.mrb[0].mxu0
  %v2230 = vadd.f32 0.0, %v2229
  %v2231 = vpop.f32.mrb[0].mxu0
  %v2232 = vpop.f32.mrb[0].mxu0
  %v2233 = vadd.f32 0.0, %v2232
  %v2234 = vpop.f32.mrb[0].mxu0
  %2235 = vmatprep.mubr.bf16.mxu0 %v1238
  %2236 = vmatmul.mubr.bf16.gmra.mrb[0].mxu0 %v1237
  %v2237 = vpop.f32.mrb[0].mxu0
  %v2238 = vadd.f32 0.0, %v2237
  %v2239 = vpop.f32.mrb[0].mxu0
  %v2240 = vpop.f32.mrb[0].mxu0
  %v2241 = vadd.f32 0.0, %v2240
  %v2242 = vpop.f32.mrb[0].mxu0
  %2243 = vmatprep.mubr.bf16.mxu0 %v1242
  %2244 = vmatmul.mubr.bf16.gmra.mrb[0].mxu0 %v1241
  %v2245 = vpop.f32.mrb[0].mxu0
  %v2246 = vadd.f32 0.0, %v2245
  %v2247 = vpop.f32.mrb[0].mxu0
  %v2248 = vpop.f32.mrb[0].mxu0
  %v2249 = vadd.f32 0.0, %v2248
  %v2250 = vpop.f32.mrb[0].mxu0
  %2251 = vmatprep.mubr.bf16.mxu0 %v1246
  %2252 = vmatmul.mubr.bf16.gmra.mrb[0].mxu0 %v1245
  %v2253 = vpop.f32.mrb[0].mxu0
  %v2254 = vadd.f32 0.0, %v2253
  %v2255 = vpop.f32.mrb[0].mxu0
  %v2256 = vpop.f32.mrb[0].mxu0
  %v2257 = vadd.f32 0.0, %v2256
  %v2258 = vpop.f32.mrb[0].mxu0
  %2259 = vmatprep.mubr.bf16.mxu0 %v1250
  %2260 = vmatmul.mubr.bf16.gmra.mrb[0].mxu0 %v1249
  %v2261 = vpop.f32.mrb[0].mxu0
  %v2262 = vadd.f32 0.0, %v2261
  %v2263 = vpop.f32.mrb[0].mxu0
  %v2264 = vpop.f32.mrb[0].mxu0
  %v2265 = vadd.f32 0.0, %v2264
  %v2266 = vpop.f32.mrb[0].mxu0
  %2267 = vmatprep.mubr.bf16.mxu0 %v1254
  %2268 = vmatmul.mubr.bf16.gmra.mrb[0].mxu0 %v1253
  %v2269 = vpop.f32.mrb[0].mxu0
  %v2270 = vadd.f32 0.0, %v2269
  %v2271 = vpop.f32.mrb[0].mxu0
  %v2272 = vpop.f32.mrb[0].mxu0
  %v2273 = vadd.f32 0.0, %v2272
  %v2274 = vpop.f32.mrb[0].mxu0
  %2275 = vmatprep.mubr.bf16.mxu0 %v1258
  %2276 = vmatmul.mubr.bf16.gmra.mrb[0].mxu0 %v1257
  %v2277 = vpop.f32.mrb[0].mxu0
  %v2278 = vadd.f32 0.0, %v2277
  %v2279 = vpop.f32.mrb[0].mxu0
  %v2280 = vpop.f32.mrb[0].mxu0
  %v2281 = vadd.f32 0.0, %v2280
  %v2282 = vpop.f32.mrb[0].mxu0
  %2283 = vmatprep.mubr.bf16.mxu0 %v1262
  %2284 = vmatmul.mubr.bf16.gmra.mrb[0].mxu0 %v1261
  %v2285 = vpop.f32.mrb[0].mxu0
  %v2286 = vadd.f32 0.0, %v2285
  %v2287 = vpop.f32.mrb[0].mxu0
  %v2288 = vpop.f32.mrb[0].mxu0
  %v2289 = vadd.f32 0.0, %v2288
  %v2290 = vpop.f32.mrb[0].mxu0
  %2291 = vmatprep.mubr.bf16.mxu0 %v1266
  %2292 = vmatmul.mubr.bf16.gmra.mrb[0].mxu0 %v1265
  %v2293 = vpop.f32.mrb[0].mxu0
  %v2294 = vadd.f32 0.0, %v2293
  %v2295 = vpop.f32.mrb[0].mxu0
  %v2296 = vpop.f32.mrb[0].mxu0
  %v2297 = vadd.f32 0.0, %v2296
  %v2298 = vpop.f32.mrb[0].mxu0
  %2299 = vmatprep.mubr.bf16.mxu0 %v1270
  %2300 = vmatmul.mubr.bf16.gmra.mrb[0].mxu0 %v1269
  %v2301 = vpop.f32.mrb[0].mxu0
  %v2302 = vadd.f32 0.0, %v2301
  %v2303 = vpop.f32.mrb[0].mxu0
  %v2304 = vpop.f32.mrb[0].mxu0
  %v2305 = vadd.f32 0.0, %v2304
  %v2306 = vpop.f32.mrb[0].mxu0
  %2307 = vmatprep.mubr.bf16.mxu0 %v1274
  %2308 = vmatmul.mubr.bf16.gmra.mrb[0].mxu0 %v1273
  %v2309 = vpop.f32.mrb[0].mxu0
  %v2310 = vadd.f32 0.0, %v2309
  %v2311 = vpop.f32.mrb[0].mxu0
  %v2312 = vpop.f32.mrb[0].mxu0
  %v2313 = vadd.f32 0.0, %v2312
  %v2314 = vpop.f32.mrb[0].mxu0
  %2315 = vmatprep.mubr.bf16.mxu0 %v1278
  %2316 = vmatmul.mubr.bf16.gmra.mrb[0].mxu0 %v1277
  %v2317 = vpop.f32.mrb[0].mxu0
  %v2318 = vadd.f32 0.0, %v2317
  %v2319 = vpop.f32.mrb[0].mxu0
  %v2320 = vpop.f32.mrb[0].mxu0
  %v2321 = vadd.f32 0.0, %v2320
  %v2322 = vpop.f32.mrb[0].mxu0
  %2323 = vmatprep.mubr.bf16.mxu0 %v1282
  %2324 = vmatmul.mubr.bf16.gmra.mrb[0].mxu0 %v1281
  %v2325 = vpop.f32.mrb[0].mxu0
  %v2326 = vadd.f32 0.0, %v2325
  %v2327 = vpop.f32.mrb[0].mxu0
  %v2328 = vpop.f32.mrb[0].mxu0
  %v2329 = vadd.f32 0.0, %v2328
  %v2330 = vpop.f32.mrb[0].mxu0
  %2331 = vmatprep.mubr.bf16.mxu0 %v1286
  %2332 = vmatmul.mubr.bf16.gmra.mrb[0].mxu0 %v1285
  %v2333 = vpop.f32.mrb[0].mxu0
  %v2334 = vadd.f32 0.0, %v2333
  %v2335 = vpop.f32.mrb[0].mxu0
  %v2336 = vpop.f32.mrb[0].mxu0
  %v2337 = vadd.f32 0.0, %v2336
  %v2338 = vpop.f32.mrb[0].mxu0
  %2339 = vmatprep.mubr.bf16.mxu0 %v1290
  %2340 = vmatmul.mubr.bf16.gmra.mrb[0].mxu0 %v1289
  %v2341 = vpop.f32.mrb[0].mxu0
  %v2342 = vadd.f32 0.0, %v2341
  %v2343 = vpop.f32.mrb[0].mxu0
  %v2344 = vpop.f32.mrb[0].mxu0
  %v2345 = vadd.f32 0.0, %v2344
  %v2346 = vpop.f32.mrb[0].mxu0
  %2347 = vmatprep.mubr.bf16.mxu0 %v1294
  %2348 = vmatmul.mubr.bf16.gmra.mrb[0].mxu0 %v1293
  %v2349 = vpop.f32.mrb[0].mxu0
  %v2350 = vadd.f32 0.0, %v2349
  %v2351 = vpop.f32.mrb[0].mxu0
  %v2352 = vpop.f32.mrb[0].mxu0
  %v2353 = vadd.f32 0.0, %v2352
  %v2354 = vpop.f32.mrb[0].mxu0
  %2355 = vmatprep.mubr.bf16.mxu0 %v1298
  %2356 = vmatmul.mubr.bf16.gmra.mrb[0].mxu0 %v1297
  %v2357 = vpop.f32.mrb[0].mxu0
  %v2358 = vadd.f32 0.0, %v2357
  %v2359 = vpop.f32.mrb[0].mxu0
  %v2360 = vpop.f32.mrb[0].mxu0
  %v2361 = vadd.f32 0.0, %v2360
  %v2362 = vpop.f32.mrb[0].mxu0
  %2363 = vmatprep.mubr.bf16.mxu0 %v1302
  %2364 = vmatmul.mubr.bf16.gmra.mrb[0].mxu0 %v1301
  %v2365 = vpop.f32.mrb[0].mxu0
  %v2366 = vadd.f32 0.0, %v2365
  %v2367 = vpop.f32.mrb[0].mxu0
  %v2368 = vpop.f32.mrb[0].mxu0
  %v2369 = vadd.f32 0.0, %v2368
  %v2370 = vpop.f32.mrb[0].mxu0
  %2371 = vmatprep.mubr.bf16.mxu0 %v1306
  %2372 = vmatmul.mubr.bf16.gmra.mrb[0].mxu0 %v1305
  %v2373 = vpop.f32.mrb[0].mxu0
  %v2374 = vadd.f32 0.0, %v2373
  %v2375 = vpop.f32.mrb[0].mxu0
  %v2376 = vpop.f32.mrb[0].mxu0
  %v2377 = vadd.f32 0.0, %v2376
  %v2378 = vpop.f32.mrb[0].mxu0
  %2379 = vmatprep.mubr.bf16.mxu0 %v1310
  %2380 = vmatmul.mubr.bf16.gmra.mrb[0].mxu0 %v1309
  %v2381 = vpop.f32.mrb[0].mxu0
  %v2382 = vadd.f32 0.0, %v2381
  %v2383 = vpop.f32.mrb[0].mxu0
  %v2384 = vpop.f32.mrb[0].mxu0
  %v2385 = vadd.f32 0.0, %v2384
  %v2386 = vpop.f32.mrb[0].mxu0
  %2387 = vmatprep.mubr.bf16.mxu0 %v1314
  %2388 = vmatmul.mubr.bf16.gmra.mrb[0].mxu0 %v1313
  %v2389 = vpop.f32.mrb[0].mxu0
  %v2390 = vadd.f32 0.0, %v2389
  %v2391 = vpop.f32.mrb[0].mxu0
  %v2392 = vpop.f32.mrb[0].mxu0
  %v2393 = vadd.f32 0.0, %v2392
  %v2394 = vpop.f32.mrb[0].mxu0
  %2395 = vmatprep.mubr.bf16.mxu0 %v1318
  %2396 = vmatmul.mubr.bf16.gmra.mrb[0].mxu0 %v1317
  %v2397 = vpop.f32.mrb[0].mxu0
  %v2398 = vadd.f32 0.0, %v2397
  %v2399 = vpop.f32.mrb[0].mxu0
  %v2400 = vpop.f32.mrb[0].mxu0
  %v2401 = vadd.f32 0.0, %v2400
  %v2402 = vpop.f32.mrb[0].mxu0
  %2403 = vmatprep.mubr.bf16.mxu0 %v1322
  %2404 = vmatmul.mubr.bf16.gmra.mrb[0].mxu0 %v1321
  %v2405 = vpop.f32.mrb[0].mxu0
  %v2406 = vadd.f32 0.0, %v2405
  %v2407 = vpop.f32.mrb[0].mxu0
  %v2408 = vpop.f32.mrb[0].mxu0
  %v2409 = vadd.f32 0.0, %v2408
  %v2410 = vpop.f32.mrb[0].mxu0
  %2411 = vmatprep.mubr.bf16.mxu0 %v1326
  %2412 = vmatmul.mubr.bf16.gmra.mrb[0].mxu0 %v1325
  %v2413 = vpop.f32.mrb[0].mxu0
  %v2414 = vadd.f32 0.0, %v2413
  %v2415 = vpop.f32.mrb[0].mxu0
  %v2416 = vpop.f32.mrb[0].mxu0
  %v2417 = vadd.f32 0.0, %v2416
  %v2418 = vpop.f32.mrb[0].mxu0
  %2419 = vmatprep.mubr.bf16.mxu0 %v1330
  %2420 = vmatmul.mubr.bf16.gmra.mrb[0].mxu0 %v1329
  %v2421 = vpop.f32.mrb[0].mxu0
  %v2422 = vadd.f32 0.0, %v2421
  %v2423 = vpop.f32.mrb[0].mxu0
  %v2424 = vpop.f32.mrb[0].mxu0
  %v2425 = vadd.f32 0.0, %v2424
  %v2426 = vpop.f32.mrb[0].mxu0
  %2427 = vmatprep.mubr.bf16.mxu0 %v1334
  %2428 = vmatmul.mubr.bf16.gmra.mrb[0].mxu0 %v1333
  %v2429 = vpop.f32.mrb[0].mxu0
  %v2430 = vadd.f32 0.0, %v2429
  %v2431 = vpop.f32.mrb[0].mxu0
  %v2432 = vpop.f32.mrb[0].mxu0
  %v2433 = vadd.f32 0.0, %v2432
  %v2434 = vpop.f32.mrb[0].mxu0
  %2435 = vmatprep.mubr.bf16.mxu0 %v1338
  %2436 = vmatmul.mubr.bf16.gmra.mrb[0].mxu0 %v1337
  %v2437 = vpop.f32.mrb[0].mxu0
  %v2438 = vadd.f32 0.0, %v2437
  %v2439 = vpop.f32.mrb[0].mxu0
  %v2440 = vpop.f32.mrb[0].mxu0
  %v2441 = vadd.f32 0.0, %v2440
  %v2442 = vpop.f32.mrb[0].mxu0
  %2443 = vmatprep.mubr.bf16.mxu0 %v1342
  %2444 = vmatmul.mubr.bf16.gmra.mrb[0].mxu0 %v1341
  %v2445 = vpop.f32.mrb[0].mxu0
  %v2446 = vadd.f32 0.0, %v2445
  %v2447 = vpop.f32.mrb[0].mxu0
  %v2448 = vpop.f32.mrb[0].mxu0
  %v2449 = vadd.f32 0.0, %v2448
  %v2450 = vpop.f32.mrb[0].mxu0
  %2451 = vmatprep.mubr.bf16.mxu0 %v1346
  %2452 = vmatmul.mubr.bf16.gmra.mrb[0].mxu0 %v1345
  %v2453 = vpop.f32.mrb[0].mxu0
  %v2454 = vadd.f32 0.0, %v2453
  %v2455 = vpop.f32.mrb[0].mxu0
  %v2456 = vpop.f32.mrb[0].mxu0
  %v2457 = vadd.f32 0.0, %v2456
  %v2458 = vpop.f32.mrb[0].mxu0
  %2459 = vmatprep.mubr.bf16.mxu0 %v1350
  %2460 = vmatmul.mubr.bf16.gmra.mrb[0].mxu0 %v1349
  %v2461 = vpop.f32.mrb[0].mxu0
  %v2462 = vadd.f32 0.0, %v2461
  %v2463 = vpop.f32.mrb[0].mxu0
  %v2464 = vpop.f32.mrb[0].mxu0
  %v2465 = vadd.f32 0.0, %v2464
  %v2466 = vpop.f32.mrb[0].mxu0
  %2467 = vmatprep.mubr.bf16.mxu0 %v1354
  %2468 = vmatmul.mubr.bf16.gmra.mrb[0].mxu0 %v1353
  %v2469 = vpop.f32.mrb[0].mxu0
  %v2470 = vadd.f32 0.0, %v2469
  %v2471 = vpop.f32.mrb[0].mxu0
  %v2472 = vpop.f32.mrb[0].mxu0
  %v2473 = vadd.f32 0.0, %v2472
  %v2474 = vpop.f32.mrb[0].mxu0
  %2475 = vmatprep.mubr.bf16.mxu0 %v1358
  %2476 = vmatmul.mubr.bf16.gmra.mrb[0].mxu0 %v1357
  %v2477 = vpop.f32.mrb[0].mxu0
  %v2478 = vadd.f32 0.0, %v2477
  %v2479 = vpop.f32.mrb[0].mxu0
  %v2480 = vpop.f32.mrb[0].mxu0
  %v2481 = vadd.f32 0.0, %v2480
  %v2482 = vpop.f32.mrb[0].mxu0
  %2483 = vdwg.mxu0
  %2484 = vmatprep.subr.bf16.mxu0 0
  %2485 = vmatpush1.bf16.msra.mxu0 %v1695
  %2486 = vmatprep.subr.bf16.mxu0 0
  %2487 = vmatpush1.bf16.msra.mxu0 %v1696
  %2488 = vmatprep.subr.bf16.mxu0 0
  %2489 = vmatpush1.bf16.msra.mxu0 %v1697
  %2490 = vmatprep.subr.bf16.mxu0 0
  %2491 = vmatpush1.bf16.msra.mxu0 %v1698
  %2492 = vmatprep.subr.bf16.mxu0 0
  %2493 = vmatpush1.bf16.msra.mxu0 %v1699
  %2494 = vmatprep.subr.bf16.mxu0 0
  %2495 = vmatpush1.bf16.msra.mxu0 %v1700
  %2496 = vmatprep.subr.bf16.mxu0 0
  %2497 = vmatpush1.bf16.msra.mxu0 %v1701
  %2498 = vmatprep.subr.bf16.mxu0 0
  %2499 = vmatpush1.bf16.msra.mxu0 %v1702
  %2500 = vmatprep.subr.bf16.mxu0 0
  %2501 = vmatpush1.bf16.msra.mxu0 %v1703
  %2502 = vmatprep.subr.bf16.mxu0 0
  %2503 = vmatpush1.bf16.msra.mxu0 %v1704
  %2504 = vmatprep.subr.bf16.mxu0 0
  %2505 = vmatpush1.bf16.msra.mxu0 %v1705
  %2506 = vmatprep.subr.bf16.mxu0 0
  %2507 = vmatpush1.bf16.msra.mxu0 %v1706
  %2508 = vmatprep.subr.bf16.mxu0 0
  %2509 = vmatpush1.bf16.msra.mxu0 %v1707
  %2510 = vmatprep.subr.bf16.mxu0 0
  %2511 = vmatpush1.bf16.msra.mxu0 %v1708
  %2512 = vmatprep.subr.bf16.mxu0 0
  %2513 = vmatpush1.bf16.msra.mxu0 %v1709
  %2514 = vmatprep.subr.bf16.mxu0 0
  %2515 = vmatpush1.bf16.msra.mxu0 %v1937
  %2516 = vmatprep.mubr.bf16.mxu0 %v1744
  %2517 = vmatmul.mubr.bf16.gmra.mrb[0].mxu0 %v1107
  %v2518 = vpop.f32.mrb[0].mxu0
  %v2519 = vadd.f32 %v1974, %v2518
  %v2520 = vpop.f32.mrb[0].mxu0
  %v2521 = vpop.f32.mrb[0].mxu0
  %v2522 = vadd.f32 %v1977, %v2521
  %v2523 = vpop.f32.mrb[0].mxu0
  %2524 = vmatprep.mubr.bf16.mxu0 %v1747
  %2525 = vmatmul.mubr.bf16.gmra.mrb[0].mxu0 %v1111
  %v2526 = vpop.f32.mrb[0].mxu0
  %v2527 = vadd.f32 %v1982, %v2526
  %v2528 = vpop.f32.mrb[0].mxu0
  %v2529 = vpop.f32.mrb[0].mxu0
  %v2530 = vadd.f32 %v1985, %v2529
  %v2531 = vpop.f32.mrb[0].mxu0
  %2532 = vmatprep.mubr.bf16.mxu0 %v1750
  %2533 = vmatmul.mubr.bf16.gmra.mrb[0].mxu0 %v1115
  %v2534 = vpop.f32.mrb[0].mxu0
  %v2535 = vadd.f32 %v1990, %v2534
  %v2536 = vpop.f32.mrb[0].mxu0
  %v2537 = vpop.f32.mrb[0].mxu0
  %v2538 = vadd.f32 %v1993, %v2537
  %v2539 = vpop.f32.mrb[0].mxu0
  %2540 = vmatprep.mubr.bf16.mxu0 %v1753
  %2541 = vmatmul.mubr.bf16.gmra.mrb[0].mxu0 %v1119
  %v2542 = vpop.f32.mrb[0].mxu0
  %v2543 = vadd.f32 %v1998, %v2542
  %v2544 = vpop.f32.mrb[0].mxu0
  %v2545 = vpop.f32.mrb[0].mxu0
  %v2546 = vadd.f32 %v2001, %v2545
  %v2547 = vpop.f32.mrb[0].mxu0
  %2548 = vmatprep.mubr.bf16.mxu0 %v1756
  %2549 = vmatmul.mubr.bf16.gmra.mrb[0].mxu0 %v1123
  %v2550 = vpop.f32.mrb[0].mxu0
  %v2551 = vadd.f32 %v2006, %v2550
  %v2552 = vpop.f32.mrb[0].mxu0
  %v2553 = vpop.f32.mrb[0].mxu0
  %v2554 = vadd.f32 %v2009, %v2553
  %v2555 = vpop.f32.mrb[0].mxu0
  %2556 = vmatprep.mubr.bf16.mxu0 %v1759
  %2557 = vmatmul.mubr.bf16.gmra.mrb[0].mxu0 %v1127
  %v2558 = vpop.f32.mrb[0].mxu0
  %v2559 = vadd.f32 %v2014, %v2558
  %v2560 = vpop.f32.mrb[0].mxu0
  %v2561 = vpop.f32.mrb[0].mxu0
  %v2562 = vadd.f32 %v2017, %v2561
  %v2563 = vpop.f32.mrb[0].mxu0
  %2564 = vmatprep.mubr.bf16.mxu0 %v1762
  %2565 = vmatmul.mubr.bf16.gmra.mrb[0].mxu0 %v1131
  %v2566 = vpop.f32.mrb[0].mxu0
  %v2567 = vadd.f32 %v2022, %v2566
  %v2568 = vpop.f32.mrb[0].mxu0
  %v2569 = vpop.f32.mrb[0].mxu0
  %v2570 = vadd.f32 %v2025, %v2569
  %v2571 = vpop.f32.mrb[0].mxu0
  %2572 = vmatprep.mubr.bf16.mxu0 %v1765
  %2573 = vmatmul.mubr.bf16.gmra.mrb[0].mxu0 %v1135
  %v2574 = vpop.f32.mrb[0].mxu0
  %v2575 = vadd.f32 %v2030, %v2574
  %v2576 = vpop.f32.mrb[0].mxu0
  %v2577 = vpop.f32.mrb[0].mxu0
  %v2578 = vadd.f32 %v2033, %v2577
  %v2579 = vpop.f32.mrb[0].mxu0
  %2580 = vmatprep.mubr.bf16.mxu0 %v1768
  %2581 = vmatmul.mubr.bf16.gmra.mrb[0].mxu0 %v1139
  %v2582 = vpop.f32.mrb[0].mxu0
  %v2583 = vadd.f32 %v2038, %v2582
  %v2584 = vpop.f32.mrb[0].mxu0
  %v2585 = vpop.f32.mrb[0].mxu0
  %v2586 = vadd.f32 %v2041, %v2585
  %v2587 = vpop.f32.mrb[0].mxu0
  %2588 = vmatprep.mubr.bf16.mxu0 %v1771
  %2589 = vmatmul.mubr.bf16.gmra.mrb[0].mxu0 %v1143
  %v2590 = vpop.f32.mrb[0].mxu0
  %v2591 = vadd.f32 %v2046, %v2590
  %v2592 = vpop.f32.mrb[0].mxu0
  %v2593 = vpop.f32.mrb[0].mxu0
  %v2594 = vadd.f32 %v2049, %v2593
  %v2595 = vpop.f32.mrb[0].mxu0
  %2596 = vmatprep.mubr.bf16.mxu0 %v1774
  %2597 = vmatmul.mubr.bf16.gmra.mrb[0].mxu0 %v1147
  %v2598 = vpop.f32.mrb[0].mxu0
  %v2599 = vadd.f32 %v2054, %v2598
  %v2600 = vpop.f32.mrb[0].mxu0
  %v2601 = vpop.f32.mrb[0].mxu0
  %v2602 = vadd.f32 %v2057, %v2601
  %v2603 = vpop.f32.mrb[0].mxu0
  %2604 = vmatprep.mubr.bf16.mxu0 %v1777
  %2605 = vmatmul.mubr.bf16.gmra.mrb[0].mxu0 %v1151
  %v2606 = vpop.f32.mrb[0].mxu0
  %v2607 = vadd.f32 %v2062, %v2606
  %v2608 = vpop.f32.mrb[0].mxu0
  %v2609 = vpop.f32.mrb[0].mxu0
  %v2610 = vadd.f32 %v2065, %v2609
  %v2611 = vpop.f32.mrb[0].mxu0
  %2612 = vmatprep.mubr.bf16.mxu0 %v1780
  %2613 = vmatmul.mubr.bf16.gmra.mrb[0].mxu0 %v1155
  %v2614 = vpop.f32.mrb[0].mxu0
  %v2615 = vadd.f32 %v2070, %v2614
  %v2616 = vpop.f32.mrb[0].mxu0
  %v2617 = vpop.f32.mrb[0].mxu0
  %v2618 = vadd.f32 %v2073, %v2617
  %v2619 = vpop.f32.mrb[0].mxu0
  %2620 = vmatprep.mubr.bf16.mxu0 %v1783
  %2621 = vmatmul.mubr.bf16.gmra.mrb[0].mxu0 %v1159
  %v2622 = vpop.f32.mrb[0].mxu0
  %v2623 = vadd.f32 %v2078, %v2622
  %v2624 = vpop.f32.mrb[0].mxu0
  %v2625 = vpop.f32.mrb[0].mxu0
  %v2626 = vadd.f32 %v2081, %v2625
  %v2627 = vpop.f32.mrb[0].mxu0
  %2628 = vmatprep.mubr.bf16.mxu0 %v1786
  %2629 = vmatmul.mubr.bf16.gmra.mrb[0].mxu0 %v1163
  %v2630 = vpop.f32.mrb[0].mxu0
  %v2631 = vadd.f32 %v2086, %v2630
  %v2632 = vpop.f32.mrb[0].mxu0
  %v2633 = vpop.f32.mrb[0].mxu0
  %v2634 = vadd.f32 %v2089, %v2633
  %v2635 = vpop.f32.mrb[0].mxu0
  %2636 = vmatprep.mubr.bf16.mxu0 %v1789
  %2637 = vmatmul.mubr.bf16.gmra.mrb[0].mxu0 %v1167
  %v2638 = vpop.f32.mrb[0].mxu0
  %v2639 = vadd.f32 %v2094, %v2638
  %v2640 = vpop.f32.mrb[0].mxu0
  %v2641 = vpop.f32.mrb[0].mxu0
  %v2642 = vadd.f32 %v2097, %v2641
  %v2643 = vpop.f32.mrb[0].mxu0
  %2644 = vmatprep.mubr.bf16.mxu0 %v1792
  %2645 = vmatmul.mubr.bf16.gmra.mrb[0].mxu0 %v1171
  %v2646 = vpop.f32.mrb[0].mxu0
  %v2647 = vadd.f32 %v2102, %v2646
  %v2648 = vpop.f32.mrb[0].mxu0
  %v2649 = vpop.f32.mrb[0].mxu0
  %v2650 = vadd.f32 %v2105, %v2649
  %v2651 = vpop.f32.mrb[0].mxu0
  %2652 = vmatprep.mubr.bf16.mxu0 %v1795
  %2653 = vmatmul.mubr.bf16.gmra.mrb[0].mxu0 %v1175
  %v2654 = vpop.f32.mrb[0].mxu0
  %v2655 = vadd.f32 %v2110, %v2654
  %v2656 = vpop.f32.mrb[0].mxu0
  %v2657 = vpop.f32.mrb[0].mxu0
  %v2658 = vadd.f32 %v2113, %v2657
  %v2659 = vpop.f32.mrb[0].mxu0
  %2660 = vmatprep.mubr.bf16.mxu0 %v1798
  %2661 = vmatmul.mubr.bf16.gmra.mrb[0].mxu0 %v1179
  %v2662 = vpop.f32.mrb[0].mxu0
  %v2663 = vadd.f32 %v2118, %v2662
  %v2664 = vpop.f32.mrb[0].mxu0
  %v2665 = vpop.f32.mrb[0].mxu0
  %v2666 = vadd.f32 %v2121, %v2665
  %v2667 = vpop.f32.mrb[0].mxu0
  %2668 = vmatprep.mubr.bf16.mxu0 %v1801
  %2669 = vmatmul.mubr.bf16.gmra.mrb[0].mxu0 %v1183
  %v2670 = vpop.f32.mrb[0].mxu0
  %v2671 = vadd.f32 %v2126, %v2670
  %v2672 = vpop.f32.mrb[0].mxu0
  %v2673 = vpop.f32.mrb[0].mxu0
  %v2674 = vadd.f32 %v2129, %v2673
  %v2675 = vpop.f32.mrb[0].mxu0
  %2676 = vmatprep.mubr.bf16.mxu0 %v1804
  %2677 = vmatmul.mubr.bf16.gmra.mrb[0].mxu0 %v1187
  %v2678 = vpop.f32.mrb[0].mxu0
  %v2679 = vadd.f32 %v2134, %v2678
  %v2680 = vpop.f32.mrb[0].mxu0
  %v2681 = vpop.f32.mrb[0].mxu0
  %v2682 = vadd.f32 %v2137, %v2681
  %v2683 = vpop.f32.mrb[0].mxu0
  %2684 = vmatprep.mubr.bf16.mxu0 %v1807
  %2685 = vmatmul.mubr.bf16.gmra.mrb[0].mxu0 %v1191
  %v2686 = vpop.f32.mrb[0].mxu0
  %v2687 = vadd.f32 %v2142, %v2686
  %v2688 = vpop.f32.mrb[0].mxu0
  %v2689 = vpop.f32.mrb[0].mxu0
  %v2690 = vadd.f32 %v2145, %v2689
  %v2691 = vpop.f32.mrb[0].mxu0
  %2692 = vmatprep.mubr.bf16.mxu0 %v1810
  %2693 = vmatmul.mubr.bf16.gmra.mrb[0].mxu0 %v1195
  %v2694 = vpop.f32.mrb[0].mxu0
  %v2695 = vadd.f32 %v2150, %v2694
  %v2696 = vpop.f32.mrb[0].mxu0
  %v2697 = vpop.f32.mrb[0].mxu0
  %v2698 = vadd.f32 %v2153, %v2697
  %v2699 = vpop.f32.mrb[0].mxu0
  %2700 = vmatprep.mubr.bf16.mxu0 %v1813
  %2701 = vmatmul.mubr.bf16.gmra.mrb[0].mxu0 %v1199
  %v2702 = vpop.f32.mrb[0].mxu0
  %v2703 = vadd.f32 %v2158, %v2702
  %v2704 = vpop.f32.mrb[0].mxu0
  %v2705 = vpop.f32.mrb[0].mxu0
  %v2706 = vadd.f32 %v2161, %v2705
  %v2707 = vpop.f32.mrb[0].mxu0
  %2708 = vmatprep.mubr.bf16.mxu0 %v1816
  %2709 = vmatmul.mubr.bf16.gmra.mrb[0].mxu0 %v1203
  %v2710 = vpop.f32.mrb[0].mxu0
  %v2711 = vadd.f32 %v2166, %v2710
  %v2712 = vpop.f32.mrb[0].mxu0
  %v2713 = vpop.f32.mrb[0].mxu0
  %v2714 = vadd.f32 %v2169, %v2713
  %v2715 = vpop.f32.mrb[0].mxu0
  %2716 = vmatprep.mubr.bf16.mxu0 %v1819
  %2717 = vmatmul.mubr.bf16.gmra.mrb[0].mxu0 %v1207
  %v2718 = vpop.f32.mrb[0].mxu0
  %v2719 = vadd.f32 %v2174, %v2718
  %v2720 = vpop.f32.mrb[0].mxu0
  %v2721 = vpop.f32.mrb[0].mxu0
  %v2722 = vadd.f32 %v2177, %v2721
  %v2723 = vpop.f32.mrb[0].mxu0
  %2724 = vmatprep.mubr.bf16.mxu0 %v1822
  %2725 = vmatmul.mubr.bf16.gmra.mrb[0].mxu0 %v1211
  %v2726 = vpop.f32.mrb[0].mxu0
  %v2727 = vadd.f32 %v2182, %v2726
  %v2728 = vpop.f32.mrb[0].mxu0
  %v2729 = vpop.f32.mrb[0].mxu0
  %v2730 = vadd.f32 %v2185, %v2729
  %v2731 = vpop.f32.mrb[0].mxu0
  %2732 = vmatprep.mubr.bf16.mxu0 %v1825
  %2733 = vmatmul.mubr.bf16.gmra.mrb[0].mxu0 %v1215
  %v2734 = vpop.f32.mrb[0].mxu0
  %v2735 = vadd.f32 %v2190, %v2734
  %v2736 = vpop.f32.mrb[0].mxu0
  %v2737 = vpop.f32.mrb[0].mxu0
  %v2738 = vadd.f32 %v2193, %v2737
  %v2739 = vpop.f32.mrb[0].mxu0
  %2740 = vmatprep.mubr.bf16.mxu0 %v1828
  %2741 = vmatmul.mubr.bf16.gmra.mrb[0].mxu0 %v1219
  %v2742 = vpop.f32.mrb[0].mxu0
  %v2743 = vadd.f32 %v2198, %v2742
  %v2744 = vpop.f32.mrb[0].mxu0
  %v2745 = vpop.f32.mrb[0].mxu0
  %v2746 = vadd.f32 %v2201, %v2745
  %v2747 = vpop.f32.mrb[0].mxu0
  %2748 = vmatprep.mubr.bf16.mxu0 %v1831
  %2749 = vmatmul.mubr.bf16.gmra.mrb[0].mxu0 %v1223
  %v2750 = vpop.f32.mrb[0].mxu0
  %v2751 = vadd.f32 %v2206, %v2750
  %v2752 = vpop.f32.mrb[0].mxu0
  %v2753 = vpop.f32.mrb[0].mxu0
  %v2754 = vadd.f32 %v2209, %v2753
  %v2755 = vpop.f32.mrb[0].mxu0
  %2756 = vmatprep.mubr.bf16.mxu0 %v1834
  %2757 = vmatmul.mubr.bf16.gmra.mrb[0].mxu0 %v1227
  %v2758 = vpop.f32.mrb[0].mxu0
  %v2759 = vadd.f32 %v2214, %v2758
  %v2760 = vpop.f32.mrb[0].mxu0
  %v2761 = vpop.f32.mrb[0].mxu0
  %v2762 = vadd.f32 %v2217, %v2761
  %v2763 = vpop.f32.mrb[0].mxu0
  %2764 = vmatprep.mubr.bf16.mxu0 %v1837
  %2765 = vmatmul.mubr.bf16.gmra.mrb[0].mxu0 %v1231
  %v2766 = vpop.f32.mrb[0].mxu0
  %v2767 = vadd.f32 %v2222, %v2766
  %v2768 = vpop.f32.mrb[0].mxu0
  %v2769 = vpop.f32.mrb[0].mxu0
  %v2770 = vadd.f32 %v2225, %v2769
  %v2771 = vpop.f32.mrb[0].mxu0
  %2772 = vmatprep.mubr.bf16.mxu0 %v1840
  %2773 = vmatmul.mubr.bf16.gmra.mrb[0].mxu0 %v1235
  %v2774 = vpop.f32.mrb[0].mxu0
  %v2775 = vadd.f32 %v2230, %v2774
  %v2776 = vpop.f32.mrb[0].mxu0
  %v2777 = vpop.f32.mrb[0].mxu0
  %v2778 = vadd.f32 %v2233, %v2777
  %v2779 = vpop.f32.mrb[0].mxu0
  %2780 = vmatprep.mubr.bf16.mxu0 %v1843
  %2781 = vmatmul.mubr.bf16.gmra.mrb[0].mxu0 %v1239
  %v2782 = vpop.f32.mrb[0].mxu0
  %v2783 = vadd.f32 %v2238, %v2782
  %v2784 = vpop.f32.mrb[0].mxu0
  %v2785 = vpop.f32.mrb[0].mxu0
  %v2786 = vadd.f32 %v2241, %v2785
  %v2787 = vpop.f32.mrb[0].mxu0
  %2788 = vmatprep.mubr.bf16.mxu0 %v1846
  %2789 = vmatmul.mubr.bf16.gmra.mrb[0].mxu0 %v1243
  %v2790 = vpop.f32.mrb[0].mxu0
  %v2791 = vadd.f32 %v2246, %v2790
  %v2792 = vpop.f32.mrb[0].mxu0
  %v2793 = vpop.f32.mrb[0].mxu0
  %v2794 = vadd.f32 %v2249, %v2793
  %v2795 = vpop.f32.mrb[0].mxu0
  %2796 = vmatprep.mubr.bf16.mxu0 %v1849
  %2797 = vmatmul.mubr.bf16.gmra.mrb[0].mxu0 %v1247
  %v2798 = vpop.f32.mrb[0].mxu0
  %v2799 = vadd.f32 %v2254, %v2798
  %v2800 = vpop.f32.mrb[0].mxu0
  %v2801 = vpop.f32.mrb[0].mxu0
  %v2802 = vadd.f32 %v2257, %v2801
  %v2803 = vpop.f32.mrb[0].mxu0
  %2804 = vmatprep.mubr.bf16.mxu0 %v1852
  %2805 = vmatmul.mubr.bf16.gmra.mrb[0].mxu0 %v1251
  %v2806 = vpop.f32.mrb[0].mxu0
  %v2807 = vadd.f32 %v2262, %v2806
  %v2808 = vpop.f32.mrb[0].mxu0
  %v2809 = vpop.f32.mrb[0].mxu0
  %v2810 = vadd.f32 %v2265, %v2809
  %v2811 = vpop.f32.mrb[0].mxu0
  %2812 = vmatprep.mubr.bf16.mxu0 %v1855
  %2813 = vmatmul.mubr.bf16.gmra.mrb[0].mxu0 %v1255
  %v2814 = vpop.f32.mrb[0].mxu0
  %v2815 = vadd.f32 %v2270, %v2814
  %v2816 = vpop.f32.mrb[0].mxu0
  %v2817 = vpop.f32.mrb[0].mxu0
  %v2818 = vadd.f32 %v2273, %v2817
  %v2819 = vpop.f32.mrb[0].mxu0
  %2820 = vmatprep.mubr.bf16.mxu0 %v1858
  %2821 = vmatmul.mubr.bf16.gmra.mrb[0].mxu0 %v1259
  %v2822 = vpop.f32.mrb[0].mxu0
  %v2823 = vadd.f32 %v2278, %v2822
  %v2824 = vpop.f32.mrb[0].mxu0
  %v2825 = vpop.f32.mrb[0].mxu0
  %v2826 = vadd.f32 %v2281, %v2825
  %v2827 = vpop.f32.mrb[0].mxu0
  %2828 = vmatprep.mubr.bf16.mxu0 %v1861
  %2829 = vmatmul.mubr.bf16.gmra.mrb[0].mxu0 %v1263
  %v2830 = vpop.f32.mrb[0].mxu0
  %v2831 = vadd.f32 %v2286, %v2830
  %v2832 = vpop.f32.mrb[0].mxu0
  %v2833 = vpop.f32.mrb[0].mxu0
  %v2834 = vadd.f32 %v2289, %v2833
  %v2835 = vpop.f32.mrb[0].mxu0
  %2836 = vmatprep.mubr.bf16.mxu0 %v1864
  %2837 = vmatmul.mubr.bf16.gmra.mrb[0].mxu0 %v1267
  %v2838 = vpop.f32.mrb[0].mxu0
  %v2839 = vadd.f32 %v2294, %v2838
  %v2840 = vpop.f32.mrb[0].mxu0
  %v2841 = vpop.f32.mrb[0].mxu0
  %v2842 = vadd.f32 %v2297, %v2841
  %v2843 = vpop.f32.mrb[0].mxu0
  %2844 = vmatprep.mubr.bf16.mxu0 %v1867
  %2845 = vmatmul.mubr.bf16.gmra.mrb[0].mxu0 %v1271
  %v2846 = vpop.f32.mrb[0].mxu0
  %v2847 = vadd.f32 %v2302, %v2846
  %v2848 = vpop.f32.mrb[0].mxu0
  %v2849 = vpop.f32.mrb[0].mxu0
  %v2850 = vadd.f32 %v2305, %v2849
  %v2851 = vpop.f32.mrb[0].mxu0
  %2852 = vmatprep.mubr.bf16.mxu0 %v1870
  %2853 = vmatmul.mubr.bf16.gmra.mrb[0].mxu0 %v1275
  %v2854 = vpop.f32.mrb[0].mxu0
  %v2855 = vadd.f32 %v2310, %v2854
  %v2856 = vpop.f32.mrb[0].mxu0
  %v2857 = vpop.f32.mrb[0].mxu0
  %v2858 = vadd.f32 %v2313, %v2857
  %v2859 = vpop.f32.mrb[0].mxu0
  %2860 = vmatprep.mubr.bf16.mxu0 %v1873
  %2861 = vmatmul.mubr.bf16.gmra.mrb[0].mxu0 %v1279
  %v2862 = vpop.f32.mrb[0].mxu0
  %v2863 = vadd.f32 %v2318, %v2862
  %v2864 = vpop.f32.mrb[0].mxu0
  %v2865 = vpop.f32.mrb[0].mxu0
  %v2866 = vadd.f32 %v2321, %v2865
  %v2867 = vpop.f32.mrb[0].mxu0
  %2868 = vmatprep.mubr.bf16.mxu0 %v1876
  %2869 = vmatmul.mubr.bf16.gmra.mrb[0].mxu0 %v1283
  %v2870 = vpop.f32.mrb[0].mxu0
  %v2871 = vadd.f32 %v2326, %v2870
  %v2872 = vpop.f32.mrb[0].mxu0
  %v2873 = vpop.f32.mrb[0].mxu0
  %v2874 = vadd.f32 %v2329, %v2873
  %v2875 = vpop.f32.mrb[0].mxu0
  %2876 = vmatprep.mubr.bf16.mxu0 %v1879
  %2877 = vmatmul.mubr.bf16.gmra.mrb[0].mxu0 %v1287
  %v2878 = vpop.f32.mrb[0].mxu0
  %v2879 = vadd.f32 %v2334, %v2878
  %v2880 = vpop.f32.mrb[0].mxu0
  %v2881 = vpop.f32.mrb[0].mxu0
  %v2882 = vadd.f32 %v2337, %v2881
  %v2883 = vpop.f32.mrb[0].mxu0
  %2884 = vmatprep.mubr.bf16.mxu0 %v1882
  %2885 = vmatmul.mubr.bf16.gmra.mrb[0].mxu0 %v1291
  %v2886 = vpop.f32.mrb[0].mxu0
  %v2887 = vadd.f32 %v2342, %v2886
  %v2888 = vpop.f32.mrb[0].mxu0
  %v2889 = vpop.f32.mrb[0].mxu0
  %v2890 = vadd.f32 %v2345, %v2889
  %v2891 = vpop.f32.mrb[0].mxu0
  %2892 = vmatprep.mubr.bf16.mxu0 %v1885
  %2893 = vmatmul.mubr.bf16.gmra.mrb[0].mxu0 %v1295
  %v2894 = vpop.f32.mrb[0].mxu0
  %v2895 = vadd.f32 %v2350, %v2894
  %v2896 = vpop.f32.mrb[0].mxu0
  %v2897 = vpop.f32.mrb[0].mxu0
  %v2898 = vadd.f32 %v2353, %v2897
  %v2899 = vpop.f32.mrb[0].mxu0
  %2900 = vmatprep.mubr.bf16.mxu0 %v1888
  %2901 = vmatmul.mubr.bf16.gmra.mrb[0].mxu0 %v1299
  %v2902 = vpop.f32.mrb[0].mxu0
  %v2903 = vadd.f32 %v2358, %v2902
  %v2904 = vpop.f32.mrb[0].mxu0
  %v2905 = vpop.f32.mrb[0].mxu0
  %v2906 = vadd.f32 %v2361, %v2905
  %v2907 = vpop.f32.mrb[0].mxu0
  %2908 = vmatprep.mubr.bf16.mxu0 %v1891
  %2909 = vmatmul.mubr.bf16.gmra.mrb[0].mxu0 %v1303
  %v2910 = vpop.f32.mrb[0].mxu0
  %v2911 = vadd.f32 %v2366, %v2910
  %v2912 = vpop.f32.mrb[0].mxu0
  %v2913 = vpop.f32.mrb[0].mxu0
  %v2914 = vadd.f32 %v2369, %v2913
  %v2915 = vpop.f32.mrb[0].mxu0
  %2916 = vmatprep.mubr.bf16.mxu0 %v1894
  %2917 = vmatmul.mubr.bf16.gmra.mrb[0].mxu0 %v1307
  %v2918 = vpop.f32.mrb[0].mxu0
  %v2919 = vadd.f32 %v2374, %v2918
  %v2920 = vpop.f32.mrb[0].mxu0
  %v2921 = vpop.f32.mrb[0].mxu0
  %v2922 = vadd.f32 %v2377, %v2921
  %v2923 = vpop.f32.mrb[0].mxu0
  %2924 = vmatprep.mubr.bf16.mxu0 %v1897
  %2925 = vmatmul.mubr.bf16.gmra.mrb[0].mxu0 %v1311
  %v2926 = vpop.f32.mrb[0].mxu0
  %v2927 = vadd.f32 %v2382, %v2926
  %v2928 = vpop.f32.mrb[0].mxu0
  %v2929 = vpop.f32.mrb[0].mxu0
  %v2930 = vadd.f32 %v2385, %v2929
  %v2931 = vpop.f32.mrb[0].mxu0
  %2932 = vmatprep.mubr.bf16.mxu0 %v1900
  %2933 = vmatmul.mubr.bf16.gmra.mrb[0].mxu0 %v1315
  %v2934 = vpop.f32.mrb[0].mxu0
  %v2935 = vadd.f32 %v2390, %v2934
  %v2936 = vpop.f32.mrb[0].mxu0
  %v2937 = vpop.f32.mrb[0].mxu0
  %v2938 = vadd.f32 %v2393, %v2937
  %v2939 = vpop.f32.mrb[0].mxu0
  %2940 = vmatprep.mubr.bf16.mxu0 %v1903
  %2941 = vmatmul.mubr.bf16.gmra.mrb[0].mxu0 %v1319
  %v2942 = vpop.f32.mrb[0].mxu0
  %v2943 = vadd.f32 %v2398, %v2942
  %v2944 = vpop.f32.mrb[0].mxu0
  %v2945 = vpop.f32.mrb[0].mxu0
  %v2946 = vadd.f32 %v2401, %v2945
  %v2947 = vpop.f32.mrb[0].mxu0
  %2948 = vmatprep.mubr.bf16.mxu0 %v1906
  %2949 = vmatmul.mubr.bf16.gmra.mrb[0].mxu0 %v1323
  %v2950 = vpop.f32.mrb[0].mxu0
  %v2951 = vadd.f32 %v2406, %v2950
  %v2952 = vpop.f32.mrb[0].mxu0
  %v2953 = vpop.f32.mrb[0].mxu0
  %v2954 = vadd.f32 %v2409, %v2953
  %v2955 = vpop.f32.mrb[0].mxu0
  %2956 = vmatprep.mubr.bf16.mxu0 %v1909
  %2957 = vmatmul.mubr.bf16.gmra.mrb[0].mxu0 %v1327
  %v2958 = vpop.f32.mrb[0].mxu0
  %v2959 = vadd.f32 %v2414, %v2958
  %v2960 = vpop.f32.mrb[0].mxu0
  %v2961 = vpop.f32.mrb[0].mxu0
  %v2962 = vadd.f32 %v2417, %v2961
  %v2963 = vpop.f32.mrb[0].mxu0
  %2964 = vmatprep.mubr.bf16.mxu0 %v1912
  %2965 = vmatmul.mubr.bf16.gmra.mrb[0].mxu0 %v1331
  %v2966 = vpop.f32.mrb[0].mxu0
  %v2967 = vadd.f32 %v2422, %v2966
  %v2968 = vpop.f32.mrb[0].mxu0
  %v2969 = vpop.f32.mrb[0].mxu0
  %v2970 = vadd.f32 %v2425, %v2969
  %v2971 = vpop.f32.mrb[0].mxu0
  %2972 = vmatprep.mubr.bf16.mxu0 %v1915
  %2973 = vmatmul.mubr.bf16.gmra.mrb[0].mxu0 %v1335
  %v2974 = vpop.f32.mrb[0].mxu0
  %v2975 = vadd.f32 %v2430, %v2974
  %v2976 = vpop.f32.mrb[0].mxu0
  %v2977 = vpop.f32.mrb[0].mxu0
  %v2978 = vadd.f32 %v2433, %v2977
  %v2979 = vpop.f32.mrb[0].mxu0
  %2980 = vmatprep.mubr.bf16.mxu0 %v1918
  %2981 = vmatmul.mubr.bf16.gmra.mrb[0].mxu0 %v1339
  %v2982 = vpop.f32.mrb[0].mxu0
  %v2983 = vadd.f32 %v2438, %v2982
  %v2984 = vpop.f32.mrb[0].mxu0
  %v2985 = vpop.f32.mrb[0].mxu0
  %v2986 = vadd.f32 %v2441, %v2985
  %v2987 = vpop.f32.mrb[0].mxu0
  %2988 = vmatprep.mubr.bf16.mxu0 %v1921
  %2989 = vmatmul.mubr.bf16.gmra.mrb[0].mxu0 %v1343
  %v2990 = vpop.f32.mrb[0].mxu0
  %v2991 = vadd.f32 %v2446, %v2990
  %v2992 = vpop.f32.mrb[0].mxu0
  %v2993 = vpop.f32.mrb[0].mxu0
  %v2994 = vadd.f32 %v2449, %v2993
  %v2995 = vpop.f32.mrb[0].mxu0
  %2996 = vmatprep.mubr.bf16.mxu0 %v1924
  %2997 = vmatmul.mubr.bf16.gmra.mrb[0].mxu0 %v1347
  %v2998 = vpop.f32.mrb[0].mxu0
  %v2999 = vadd.f32 %v2454, %v2998
  %v3000 = vpop.f32.mrb[0].mxu0
  %v3001 = vpop.f32.mrb[0].mxu0
  %v3002 = vadd.f32 %v2457, %v3001
  %v3003 = vpop.f32.mrb[0].mxu0
  %3004 = vmatprep.mubr.bf16.mxu0 %v1927
  %3005 = vmatmul.mubr.bf16.gmra.mrb[0].mxu0 %v1351
  %v3006 = vpop.f32.mrb[0].mxu0
  %v3007 = vadd.f32 %v2462, %v3006
  %v3008 = vpop.f32.mrb[0].mxu0
  %v3009 = vpop.f32.mrb[0].mxu0
  %v3010 = vadd.f32 %v2465, %v3009
  %v3011 = vpop.f32.mrb[0].mxu0
  %3012 = vmatprep.mubr.bf16.mxu0 %v1930
  %3013 = vmatmul.mubr.bf16.gmra.mrb[0].mxu0 %v1355
  %v3014 = vpop.f32.mrb[0].mxu0
  %v3015 = vadd.f32 %v2470, %v3014
  %v3016 = vpop.f32.mrb[0].mxu0
  %v3017 = vpop.f32.mrb[0].mxu0
  %v3018 = vadd.f32 %v2473, %v3017
  %v3019 = vpop.f32.mrb[0].mxu0
  %3020 = vmatprep.mubr.bf16.mxu0 %v1933
  %3021 = vmatmul.mubr.bf16.gmra.mrb[0].mxu0 %v1359
  %v3022 = vpop.f32.mrb[0].mxu0
  %v3023 = vadd.f32 %v2478, %v3022
  %v3024 = vpop.f32.mrb[0].mxu0
  %v3025 = vpop.f32.mrb[0].mxu0
  %v3026 = vadd.f32 %v2481, %v3025
  %v3027 = vpop.f32.mrb[0].mxu0
  %3028 = vdwg.mxu0
  %v3029 = vld [vmem:[%s2] sm:$0x1]
  %v3030 = vld [vmem:[%s3] sm:$0x1]
  %vm3031 = vcmask 89088
  %v3032 = vsel %vm3031, %v2519, 0.0
  %v3033 = vsel %vm3031, %v2522, 0.0
  %v3034 = vadd.f32 %v3032, %v3033
  %v3035 = vsel %vm3031, %v2527, 0.0
  %v3036 = vadd.f32 %v3034, %v3035
  %v3037 = vsel %vm3031, %v2530, 0.0
  %v3038 = vadd.f32 %v3036, %v3037
  %v3039 = vsel %vm3031, %v2535, 0.0
  %v3040 = vadd.f32 %v3038, %v3039
  %v3041 = vsel %vm3031, %v2538, 0.0
  %v3042 = vadd.f32 %v3040, %v3041
  %v3043 = vsel %vm3031, %v2543, 0.0
  %v3044 = vadd.f32 %v3042, %v3043
  %v3045 = vsel %vm3031, %v2546, 0.0
  %v3046 = vadd.f32 %v3044, %v3045
  %v3047 = vsel %vm3031, %v2551, 0.0
  %v3048 = vadd.f32 %v3046, %v3047
  %v3049 = vsel %vm3031, %v2554, 0.0
  %v3050 = vadd.f32 %v3048, %v3049
  %v3051 = vsel %vm3031, %v2559, 0.0
  %v3052 = vadd.f32 %v3050, %v3051
  %v3053 = vsel %vm3031, %v2562, 0.0
  %v3054 = vadd.f32 %v3052, %v3053
  %v3055 = vsel %vm3031, %v2567, 0.0
  %v3056 = vadd.f32 %v3054, %v3055
  %v3057 = vsel %vm3031, %v2570, 0.0
  %v3058 = vadd.f32 %v3056, %v3057
  %v3059 = vsel %vm3031, %v2575, 0.0
  %v3060 = vadd.f32 %v3058, %v3059
  %v3061 = vsel %vm3031, %v2578, 0.0
  %v3062 = vadd.f32 %v3060, %v3061
  %v3063 = vsel %vm3031, %v2583, 0.0
  %v3064 = vadd.f32 %v3062, %v3063
  %v3065 = vsel %vm3031, %v2586, 0.0
  %v3066 = vadd.f32 %v3064, %v3065
  %v3067 = vsel %vm3031, %v2591, 0.0
  %v3068 = vadd.f32 %v3066, %v3067
  %v3069 = vsel %vm3031, %v2594, 0.0
  %v3070 = vadd.f32 %v3068, %v3069
  %v3071 = vsel %vm3031, %v2599, 0.0
  %v3072 = vadd.f32 %v3070, %v3071
  %v3073 = vsel %vm3031, %v2602, 0.0
  %v3074 = vadd.f32 %v3072, %v3073
  %v3075 = vsel %vm3031, %v2607, 0.0
  %v3076 = vadd.f32 %v3074, %v3075
  %v3077 = vsel %vm3031, %v2610, 0.0
  %v3078 = vadd.f32 %v3076, %v3077
  %v3079 = vsel %vm3031, %v2615, 0.0
  %v3080 = vadd.f32 %v3078, %v3079
  %v3081 = vsel %vm3031, %v2618, 0.0
  %v3082 = vadd.f32 %v3080, %v3081
  %v3083 = vsel %vm3031, %v2623, 0.0
  %v3084 = vadd.f32 %v3082, %v3083
  %v3085 = vsel %vm3031, %v2626, 0.0
  %v3086 = vadd.f32 %v3084, %v3085
  %v3087 = vsel %vm3031, %v2631, 0.0
  %v3088 = vadd.f32 %v3086, %v3087
  %v3089 = vsel %vm3031, %v2634, 0.0
  %v3090 = vadd.f32 %v3088, %v3089
  %v3091 = vsel %vm3031, %v2639, 0.0
  %v3092 = vadd.f32 %v3090, %v3091
  %v3093 = vsel %vm3031, %v2642, 0.0
  %v3094 = vadd.f32 %v3092, %v3093
  %v3095 = vsel %vm3031, %v2647, 0.0
  %v3096 = vadd.f32 %v3094, %v3095
  %v3097 = vsel %vm3031, %v2650, 0.0
  %v3098 = vadd.f32 %v3096, %v3097
  %v3099 = vsel %vm3031, %v2655, 0.0
  %v3100 = vadd.f32 %v3098, %v3099
  %v3101 = vsel %vm3031, %v2658, 0.0
  %v3102 = vadd.f32 %v3100, %v3101
  %v3103 = vsel %vm3031, %v2663, 0.0
  %v3104 = vadd.f32 %v3102, %v3103
  %v3105 = vsel %vm3031, %v2666, 0.0
  %v3106 = vadd.f32 %v3104, %v3105
  %v3107 = vsel %vm3031, %v2671, 0.0
  %v3108 = vadd.f32 %v3106, %v3107
  %v3109 = vsel %vm3031, %v2674, 0.0
  %v3110 = vadd.f32 %v3108, %v3109
  %v3111 = vsel %vm3031, %v2679, 0.0
  %v3112 = vadd.f32 %v3110, %v3111
  %v3113 = vsel %vm3031, %v2682, 0.0
  %v3114 = vadd.f32 %v3112, %v3113
  %v3115 = vsel %vm3031, %v2687, 0.0
  %v3116 = vadd.f32 %v3114, %v3115
  %v3117 = vsel %vm3031, %v2690, 0.0
  %v3118 = vadd.f32 %v3116, %v3117
  %v3119 = vsel %vm3031, %v2695, 0.0
  %v3120 = vadd.f32 %v3118, %v3119
  %v3121 = vsel %vm3031, %v2698, 0.0
  %v3122 = vadd.f32 %v3120, %v3121
  %v3123 = vsel %vm3031, %v2703, 0.0
  %v3124 = vadd.f32 %v3122, %v3123
  %v3125 = vsel %vm3031, %v2706, 0.0
  %v3126 = vadd.f32 %v3124, %v3125
  %v3127 = vsel %vm3031, %v2711, 0.0
  %v3128 = vadd.f32 %v3126, %v3127
  %v3129 = vsel %vm3031, %v2714, 0.0
  %v3130 = vadd.f32 %v3128, %v3129
  %v3131 = vsel %vm3031, %v2719, 0.0
  %v3132 = vadd.f32 %v3130, %v3131
  %v3133 = vsel %vm3031, %v2722, 0.0
  %v3134 = vadd.f32 %v3132, %v3133
  %v3135 = vsel %vm3031, %v2727, 0.0
  %v3136 = vadd.f32 %v3134, %v3135
  %v3137 = vsel %vm3031, %v2730, 0.0
  %v3138 = vadd.f32 %v3136, %v3137
  %v3139 = vsel %vm3031, %v2735, 0.0
  %v3140 = vadd.f32 %v3138, %v3139
  %v3141 = vsel %vm3031, %v2738, 0.0
  %v3142 = vadd.f32 %v3140, %v3141
  %v3143 = vsel %vm3031, %v2743, 0.0
  %v3144 = vadd.f32 %v3142, %v3143
  %v3145 = vsel %vm3031, %v2746, 0.0
  %v3146 = vadd.f32 %v3144, %v3145
  %v3147 = vsel %vm3031, %v2751, 0.0
  %v3148 = vadd.f32 %v3146, %v3147
  %v3149 = vsel %vm3031, %v2754, 0.0
  %v3150 = vadd.f32 %v3148, %v3149
  %v3151 = vsel %vm3031, %v2759, 0.0
  %v3152 = vadd.f32 %v3150, %v3151
  %v3153 = vsel %vm3031, %v2762, 0.0
  %v3154 = vadd.f32 %v3152, %v3153
  %v3155 = vsel %vm3031, %v2767, 0.0
  %v3156 = vadd.f32 %v3154, %v3155
  %v3157 = vsel %vm3031, %v2770, 0.0
  %v3158 = vadd.f32 %v3156, %v3157
  %v3159 = vsel %vm3031, %v2775, 0.0
  %v3160 = vadd.f32 %v3158, %v3159
  %v3161 = vsel %vm3031, %v2778, 0.0
  %v3162 = vadd.f32 %v3160, %v3161
  %v3163 = vsel %vm3031, %v2783, 0.0
  %v3164 = vadd.f32 %v3162, %v3163
  %v3165 = vsel %vm3031, %v2786, 0.0
  %v3166 = vadd.f32 %v3164, %v3165
  %v3167 = vsel %vm3031, %v2791, 0.0
  %v3168 = vadd.f32 %v3166, %v3167
  %v3169 = vsel %vm3031, %v2794, 0.0
  %v3170 = vadd.f32 %v3168, %v3169
  %v3171 = vsel %vm3031, %v2799, 0.0
  %v3172 = vadd.f32 %v3170, %v3171
  %v3173 = vsel %vm3031, %v2802, 0.0
  %v3174 = vadd.f32 %v3172, %v3173
  %v3175 = vsel %vm3031, %v2807, 0.0
  %v3176 = vadd.f32 %v3174, %v3175
  %v3177 = vsel %vm3031, %v2810, 0.0
  %v3178 = vadd.f32 %v3176, %v3177
  %v3179 = vsel %vm3031, %v2815, 0.0
  %v3180 = vadd.f32 %v3178, %v3179
  %v3181 = vsel %vm3031, %v2818, 0.0
  %v3182 = vadd.f32 %v3180, %v3181
  %v3183 = vsel %vm3031, %v2823, 0.0
  %v3184 = vadd.f32 %v3182, %v3183
  %v3185 = vsel %vm3031, %v2826, 0.0
  %v3186 = vadd.f32 %v3184, %v3185
  %v3187 = vsel %vm3031, %v2831, 0.0
  %v3188 = vadd.f32 %v3186, %v3187
  %v3189 = vsel %vm3031, %v2834, 0.0
  %v3190 = vadd.f32 %v3188, %v3189
  %v3191 = vsel %vm3031, %v2839, 0.0
  %v3192 = vadd.f32 %v3190, %v3191
  %v3193 = vsel %vm3031, %v2842, 0.0
  %v3194 = vadd.f32 %v3192, %v3193
  %v3195 = vsel %vm3031, %v2847, 0.0
  %v3196 = vadd.f32 %v3194, %v3195
  %v3197 = vsel %vm3031, %v2850, 0.0
  %v3198 = vadd.f32 %v3196, %v3197
  %v3199 = vsel %vm3031, %v2855, 0.0
  %v3200 = vadd.f32 %v3198, %v3199
  %v3201 = vsel %vm3031, %v2858, 0.0
  %v3202 = vadd.f32 %v3200, %v3201
  %v3203 = vsel %vm3031, %v2863, 0.0
  %v3204 = vadd.f32 %v3202, %v3203
  %v3205 = vsel %vm3031, %v2866, 0.0
  %v3206 = vadd.f32 %v3204, %v3205
  %v3207 = vsel %vm3031, %v2871, 0.0
  %v3208 = vadd.f32 %v3206, %v3207
  %v3209 = vsel %vm3031, %v2874, 0.0
  %v3210 = vadd.f32 %v3208, %v3209
  %v3211 = vsel %vm3031, %v2879, 0.0
  %v3212 = vadd.f32 %v3210, %v3211
  %v3213 = vsel %vm3031, %v2882, 0.0
  %v3214 = vadd.f32 %v3212, %v3213
  %v3215 = vsel %vm3031, %v2887, 0.0
  %v3216 = vadd.f32 %v3214, %v3215
  %v3217 = vsel %vm3031, %v2890, 0.0
  %v3218 = vadd.f32 %v3216, %v3217
  %v3219 = vsel %vm3031, %v2895, 0.0
  %v3220 = vadd.f32 %v3218, %v3219
  %v3221 = vsel %vm3031, %v2898, 0.0
  %v3222 = vadd.f32 %v3220, %v3221
  %v3223 = vsel %vm3031, %v2903, 0.0
  %v3224 = vadd.f32 %v3222, %v3223
  %v3225 = vsel %vm3031, %v2906, 0.0
  %v3226 = vadd.f32 %v3224, %v3225
  %v3227 = vsel %vm3031, %v2911, 0.0
  %v3228 = vadd.f32 %v3226, %v3227
  %v3229 = vsel %vm3031, %v2914, 0.0
  %v3230 = vadd.f32 %v3228, %v3229
  %v3231 = vsel %vm3031, %v2919, 0.0
  %v3232 = vadd.f32 %v3230, %v3231
  %v3233 = vsel %vm3031, %v2922, 0.0
  %v3234 = vadd.f32 %v3232, %v3233
  %v3235 = vsel %vm3031, %v2927, 0.0
  %v3236 = vadd.f32 %v3234, %v3235
  %v3237 = vsel %vm3031, %v2930, 0.0
  %v3238 = vadd.f32 %v3236, %v3237
  %v3239 = vsel %vm3031, %v2935, 0.0
  %v3240 = vadd.f32 %v3238, %v3239
  %v3241 = vsel %vm3031, %v2938, 0.0
  %v3242 = vadd.f32 %v3240, %v3241
  %v3243 = vsel %vm3031, %v2943, 0.0
  %v3244 = vadd.f32 %v3242, %v3243
  %v3245 = vsel %vm3031, %v2946, 0.0
  %v3246 = vadd.f32 %v3244, %v3245
  %v3247 = vsel %vm3031, %v2951, 0.0
  %v3248 = vadd.f32 %v3246, %v3247
  %v3249 = vsel %vm3031, %v2954, 0.0
  %v3250 = vadd.f32 %v3248, %v3249
  %v3251 = vsel %vm3031, %v2959, 0.0
  %v3252 = vadd.f32 %v3250, %v3251
  %v3253 = vsel %vm3031, %v2962, 0.0
  %v3254 = vadd.f32 %v3252, %v3253
  %v3255 = vsel %vm3031, %v2967, 0.0
  %v3256 = vadd.f32 %v3254, %v3255
  %v3257 = vsel %vm3031, %v2970, 0.0
  %v3258 = vadd.f32 %v3256, %v3257
  %v3259 = vsel %vm3031, %v2975, 0.0
  %v3260 = vadd.f32 %v3258, %v3259
  %v3261 = vsel %vm3031, %v2978, 0.0
  %v3262 = vadd.f32 %v3260, %v3261
  %v3263 = vsel %vm3031, %v2983, 0.0
  %v3264 = vadd.f32 %v3262, %v3263
  %v3265 = vsel %vm3031, %v2986, 0.0
  %v3266 = vadd.f32 %v3264, %v3265
  %v3267 = vsel %vm3031, %v2991, 0.0
  %v3268 = vadd.f32 %v3266, %v3267
  %v3269 = vsel %vm3031, %v2994, 0.0
  %v3270 = vadd.f32 %v3268, %v3269
  %v3271 = vsel %vm3031, %v2999, 0.0
  %v3272 = vadd.f32 %v3270, %v3271
  %v3273 = vsel %vm3031, %v3002, 0.0
  %v3274 = vadd.f32 %v3272, %v3273
  %v3275 = vsel %vm3031, %v3007, 0.0
  %v3276 = vadd.f32 %v3274, %v3275
  %v3277 = vsel %vm3031, %v3010, 0.0
  %v3278 = vadd.f32 %v3276, %v3277
  %v3279 = vsel %vm3031, %v3015, 0.0
  %v3280 = vadd.f32 %v3278, %v3279
  %v3281 = vsel %vm3031, %v3018, 0.0
  %v3282 = vadd.f32 %v3280, %v3281
  %v3283 = vsel %vm3031, %v3023, 0.0
  %v3284 = vadd.f32 %v3282, %v3283
  %v3285 = vsel %vm3031, %v3026, 0.0
  %v3286 = vadd.f32 %v3284, %v3285
  %v3287 = vrot.slane %v3286, 4
  %v3288 = vadd.f32 %v3286, %v3287
  %v3289 = vrot.slane %v3288, 2
  %v3290 = vadd.f32 %v3288, %v3289
  %v3291 = vrot.slane %v3290, 1
  %v3292 = vadd.f32 %v3290, %v3291
  %v3293 = vmul.f32 %v2519, %v2519
  %v3294 = vmul.f32 %v2522, %v2522
  %v3295 = vmul.f32 %v2527, %v2527
  %v3296 = vmul.f32 %v2530, %v2530
  %v3297 = vmul.f32 %v2535, %v2535
  %v3298 = vmul.f32 %v2538, %v2538
  %v3299 = vmul.f32 %v2543, %v2543
  %v3300 = vmul.f32 %v2546, %v2546
  %v3301 = vmul.f32 %v2551, %v2551
  %v3302 = vmul.f32 %v2554, %v2554
  %v3303 = vmul.f32 %v2559, %v2559
  %v3304 = vmul.f32 %v2562, %v2562
  %v3305 = vmul.f32 %v2567, %v2567
  %v3306 = vmul.f32 %v2570, %v2570
  %v3307 = vmul.f32 %v2575, %v2575
  %v3308 = vmul.f32 %v2578, %v2578
  %v3309 = vmul.f32 %v2583, %v2583
  %v3310 = vmul.f32 %v2586, %v2586
  %v3311 = vmul.f32 %v2591, %v2591
  %v3312 = vmul.f32 %v2594, %v2594
  %v3313 = vmul.f32 %v2599, %v2599
  %v3314 = vmul.f32 %v2602, %v2602
  %v3315 = vmul.f32 %v2607, %v2607
  %v3316 = vmul.f32 %v2610, %v2610
  %v3317 = vmul.f32 %v2615, %v2615
  %v3318 = vmul.f32 %v2618, %v2618
  %v3319 = vmul.f32 %v2623, %v2623
  %v3320 = vmul.f32 %v2626, %v2626
  %v3321 = vmul.f32 %v2631, %v2631
  %v3322 = vmul.f32 %v2634, %v2634
  %v3323 = vmul.f32 %v2639, %v2639
  %v3324 = vmul.f32 %v2642, %v2642
  %v3325 = vmul.f32 %v2647, %v2647
  %v3326 = vmul.f32 %v2650, %v2650
  %v3327 = vmul.f32 %v2655, %v2655
  %v3328 = vmul.f32 %v2658, %v2658
  %v3329 = vmul.f32 %v2663, %v2663
  %v3330 = vmul.f32 %v2666, %v2666
  %v3331 = vmul.f32 %v2671, %v2671
  %v3332 = vmul.f32 %v2674, %v2674
  %v3333 = vmul.f32 %v2679, %v2679
  %v3334 = vmul.f32 %v2682, %v2682
  %v3335 = vmul.f32 %v2687, %v2687
  %v3336 = vmul.f32 %v2690, %v2690
  %v3337 = vmul.f32 %v2695, %v2695
  %v3338 = vmul.f32 %v2698, %v2698
  %v3339 = vmul.f32 %v2703, %v2703
  %v3340 = vmul.f32 %v2706, %v2706
  %v3341 = vmul.f32 %v2711, %v2711
  %v3342 = vmul.f32 %v2714, %v2714
  %v3343 = vmul.f32 %v2719, %v2719
  %v3344 = vmul.f32 %v2722, %v2722
  %v3345 = vmul.f32 %v2727, %v2727
  %v3346 = vmul.f32 %v2730, %v2730
  %v3347 = vmul.f32 %v2735, %v2735
  %v3348 = vmul.f32 %v2738, %v2738
  %v3349 = vmul.f32 %v2743, %v2743
  %v3350 = vmul.f32 %v2746, %v2746
  %v3351 = vmul.f32 %v2751, %v2751
  %v3352 = vmul.f32 %v2754, %v2754
  %v3353 = vmul.f32 %v2759, %v2759
  %v3354 = vmul.f32 %v2762, %v2762
  %v3355 = vmul.f32 %v2767, %v2767
  %v3356 = vmul.f32 %v2770, %v2770
  %v3357 = vmul.f32 %v2775, %v2775
  %v3358 = vmul.f32 %v2778, %v2778
  %v3359 = vmul.f32 %v2783, %v2783
  %v3360 = vmul.f32 %v2786, %v2786
  %v3361 = vmul.f32 %v2791, %v2791
  %v3362 = vmul.f32 %v2794, %v2794
  %v3363 = vmul.f32 %v2799, %v2799
  %v3364 = vmul.f32 %v2802, %v2802
  %v3365 = vmul.f32 %v2807, %v2807
  %v3366 = vmul.f32 %v2810, %v2810
  %v3367 = vmul.f32 %v2815, %v2815
  %v3368 = vmul.f32 %v2818, %v2818
  %v3369 = vmul.f32 %v2823, %v2823
  %v3370 = vmul.f32 %v2826, %v2826
  %v3371 = vmul.f32 %v2831, %v2831
  %v3372 = vmul.f32 %v2834, %v2834
  %v3373 = vmul.f32 %v2839, %v2839
  %v3374 = vmul.f32 %v2842, %v2842
  %v3375 = vmul.f32 %v2847, %v2847
  %v3376 = vmul.f32 %v2850, %v2850
  %v3377 = vmul.f32 %v2855, %v2855
  %v3378 = vmul.f32 %v2858, %v2858
  %v3379 = vmul.f32 %v2863, %v2863
  %v3380 = vmul.f32 %v2866, %v2866
  %v3381 = vmul.f32 %v2871, %v2871
  %v3382 = vmul.f32 %v2874, %v2874
  %v3383 = vmul.f32 %v2879, %v2879
  %v3384 = vmul.f32 %v2882, %v2882
  %v3385 = vmul.f32 %v2887, %v2887
  %v3386 = vmul.f32 %v2890, %v2890
  %v3387 = vmul.f32 %v2895, %v2895
  %v3388 = vmul.f32 %v2898, %v2898
  %v3389 = vmul.f32 %v2903, %v2903
  %v3390 = vmul.f32 %v2906, %v2906
  %v3391 = vmul.f32 %v2911, %v2911
  %v3392 = vmul.f32 %v2914, %v2914
  %v3393 = vmul.f32 %v2919, %v2919
  %v3394 = vmul.f32 %v2922, %v2922
  %v3395 = vmul.f32 %v2927, %v2927
  %v3396 = vmul.f32 %v2930, %v2930
  %v3397 = vmul.f32 %v2935, %v2935
  %v3398 = vmul.f32 %v2938, %v2938
  %v3399 = vmul.f32 %v2943, %v2943
  %v3400 = vmul.f32 %v2946, %v2946
  %v3401 = vmul.f32 %v2951, %v2951
  %v3402 = vmul.f32 %v2954, %v2954
  %v3403 = vmul.f32 %v2959, %v2959
  %v3404 = vmul.f32 %v2962, %v2962
  %v3405 = vmul.f32 %v2967, %v2967
  %v3406 = vmul.f32 %v2970, %v2970
  %v3407 = vmul.f32 %v2975, %v2975
  %v3408 = vmul.f32 %v2978, %v2978
  %v3409 = vmul.f32 %v2983, %v2983
  %v3410 = vmul.f32 %v2986, %v2986
  %v3411 = vmul.f32 %v2991, %v2991
  %v3412 = vmul.f32 %v2994, %v2994
  %v3413 = vmul.f32 %v2999, %v2999
  %v3414 = vmul.f32 %v3002, %v3002
  %v3415 = vmul.f32 %v3007, %v3007
  %v3416 = vmul.f32 %v3010, %v3010
  %v3417 = vmul.f32 %v3015, %v3015
  %v3418 = vmul.f32 %v3018, %v3018
  %v3419 = vmul.f32 %v3023, %v3023
  %v3420 = vmul.f32 %v3026, %v3026
  %v3421 = vsel %vm3031, %v3293, 0.0
  %v3422 = vsel %vm3031, %v3294, 0.0
  %v3423 = vadd.f32 %v3421, %v3422
  %v3424 = vsel %vm3031, %v3295, 0.0
  %v3425 = vadd.f32 %v3423, %v3424
  %v3426 = vsel %vm3031, %v3296, 0.0
  %v3427 = vadd.f32 %v3425, %v3426
  %v3428 = vsel %vm3031, %v3297, 0.0
  %v3429 = vadd.f32 %v3427, %v3428
  %v3430 = vsel %vm3031, %v3298, 0.0
  %v3431 = vadd.f32 %v3429, %v3430
  %v3432 = vsel %vm3031, %v3299, 0.0
  %v3433 = vadd.f32 %v3431, %v3432
  %v3434 = vsel %vm3031, %v3300, 0.0
  %v3435 = vadd.f32 %v3433, %v3434
  %v3436 = vsel %vm3031, %v3301, 0.0
  %v3437 = vadd.f32 %v3435, %v3436
  %v3438 = vsel %vm3031, %v3302, 0.0
  %v3439 = vadd.f32 %v3437, %v3438
  %v3440 = vsel %vm3031, %v3303, 0.0
  %v3441 = vadd.f32 %v3439, %v3440
  %v3442 = vsel %vm3031, %v3304, 0.0
  %v3443 = vadd.f32 %v3441, %v3442
  %v3444 = vsel %vm3031, %v3305, 0.0
  %v3445 = vadd.f32 %v3443, %v3444
  %v3446 = vsel %vm3031, %v3306, 0.0
  %v3447 = vadd.f32 %v3445, %v3446
  %v3448 = vsel %vm3031, %v3307, 0.0
  %v3449 = vadd.f32 %v3447, %v3448
  %v3450 = vsel %vm3031, %v3308, 0.0
  %v3451 = vadd.f32 %v3449, %v3450
  %v3452 = vsel %vm3031, %v3309, 0.0
  %v3453 = vadd.f32 %v3451, %v3452
  %v3454 = vsel %vm3031, %v3310, 0.0
  %v3455 = vadd.f32 %v3453, %v3454
  %v3456 = vsel %vm3031, %v3311, 0.0
  %v3457 = vadd.f32 %v3455, %v3456
  %v3458 = vsel %vm3031, %v3312, 0.0
  %v3459 = vadd.f32 %v3457, %v3458
  %v3460 = vsel %vm3031, %v3313, 0.0
  %v3461 = vadd.f32 %v3459, %v3460
  %v3462 = vsel %vm3031, %v3314, 0.0
  %v3463 = vadd.f32 %v3461, %v3462
  %v3464 = vsel %vm3031, %v3315, 0.0
  %v3465 = vadd.f32 %v3463, %v3464
  %v3466 = vsel %vm3031, %v3316, 0.0
  %v3467 = vadd.f32 %v3465, %v3466
  %v3468 = vsel %vm3031, %v3317, 0.0
  %v3469 = vadd.f32 %v3467, %v3468
  %v3470 = vsel %vm3031, %v3318, 0.0
  %v3471 = vadd.f32 %v3469, %v3470
  %v3472 = vsel %vm3031, %v3319, 0.0
  %v3473 = vadd.f32 %v3471, %v3472
  %v3474 = vsel %vm3031, %v3320, 0.0
  %v3475 = vadd.f32 %v3473, %v3474
  %v3476 = vsel %vm3031, %v3321, 0.0
  %v3477 = vadd.f32 %v3475, %v3476
  %v3478 = vsel %vm3031, %v3322, 0.0
  %v3479 = vadd.f32 %v3477, %v3478
  %v3480 = vsel %vm3031, %v3323, 0.0
  %v3481 = vadd.f32 %v3479, %v3480
  %v3482 = vsel %vm3031, %v3324, 0.0
  %v3483 = vadd.f32 %v3481, %v3482
  %v3484 = vsel %vm3031, %v3325, 0.0
  %v3485 = vadd.f32 %v3483, %v3484
  %v3486 = vsel %vm3031, %v3326, 0.0
  %v3487 = vadd.f32 %v3485, %v3486
  %v3488 = vsel %vm3031, %v3327, 0.0
  %v3489 = vadd.f32 %v3487, %v3488
  %v3490 = vsel %vm3031, %v3328, 0.0
  %v3491 = vadd.f32 %v3489, %v3490
  %v3492 = vsel %vm3031, %v3329, 0.0
  %v3493 = vadd.f32 %v3491, %v3492
  %v3494 = vsel %vm3031, %v3330, 0.0
  %v3495 = vadd.f32 %v3493, %v3494
  %v3496 = vsel %vm3031, %v3331, 0.0
  %v3497 = vadd.f32 %v3495, %v3496
  %v3498 = vsel %vm3031, %v3332, 0.0
  %v3499 = vadd.f32 %v3497, %v3498
  %v3500 = vsel %vm3031, %v3333, 0.0
  %v3501 = vadd.f32 %v3499, %v3500
  %v3502 = vsel %vm3031, %v3334, 0.0
  %v3503 = vadd.f32 %v3501, %v3502
  %v3504 = vsel %vm3031, %v3335, 0.0
  %v3505 = vadd.f32 %v3503, %v3504
  %v3506 = vsel %vm3031, %v3336, 0.0
  %v3507 = vadd.f32 %v3505, %v3506
  %v3508 = vsel %vm3031, %v3337, 0.0
  %v3509 = vadd.f32 %v3507, %v3508
  %v3510 = vsel %vm3031, %v3338, 0.0
  %v3511 = vadd.f32 %v3509, %v3510
  %v3512 = vsel %vm3031, %v3339, 0.0
  %v3513 = vadd.f32 %v3511, %v3512
  %v3514 = vsel %vm3031, %v3340, 0.0
  %v3515 = vadd.f32 %v3513, %v3514
  %v3516 = vsel %vm3031, %v3341, 0.0
  %v3517 = vadd.f32 %v3515, %v3516
  %v3518 = vsel %vm3031, %v3342, 0.0
  %v3519 = vadd.f32 %v3517, %v3518
  %v3520 = vsel %vm3031, %v3343, 0.0
  %v3521 = vadd.f32 %v3519, %v3520
  %v3522 = vsel %vm3031, %v3344, 0.0
  %v3523 = vadd.f32 %v3521, %v3522
  %v3524 = vsel %vm3031, %v3345, 0.0
  %v3525 = vadd.f32 %v3523, %v3524
  %v3526 = vsel %vm3031, %v3346, 0.0
  %v3527 = vadd.f32 %v3525, %v3526
  %v3528 = vsel %vm3031, %v3347, 0.0
  %v3529 = vadd.f32 %v3527, %v3528
  %v3530 = vsel %vm3031, %v3348, 0.0
  %v3531 = vadd.f32 %v3529, %v3530
  %v3532 = vsel %vm3031, %v3349, 0.0
  %v3533 = vadd.f32 %v3531, %v3532
  %v3534 = vsel %vm3031, %v3350, 0.0
  %v3535 = vadd.f32 %v3533, %v3534
  %v3536 = vsel %vm3031, %v3351, 0.0
  %v3537 = vadd.f32 %v3535, %v3536
  %v3538 = vsel %vm3031, %v3352, 0.0
  %v3539 = vadd.f32 %v3537, %v3538
  %v3540 = vsel %vm3031, %v3353, 0.0
  %v3541 = vadd.f32 %v3539, %v3540
  %v3542 = vsel %vm3031, %v3354, 0.0
  %v3543 = vadd.f32 %v3541, %v3542
  %v3544 = vsel %vm3031, %v3355, 0.0
  %v3545 = vadd.f32 %v3543, %v3544
  %v3546 = vsel %vm3031, %v3356, 0.0
  %v3547 = vadd.f32 %v3545, %v3546
  %v3548 = vsel %vm3031, %v3357, 0.0
  %v3549 = vadd.f32 %v3547, %v3548
  %v3550 = vsel %vm3031, %v3358, 0.0
  %v3551 = vadd.f32 %v3549, %v3550
  %v3552 = vsel %vm3031, %v3359, 0.0
  %v3553 = vadd.f32 %v3551, %v3552
  %v3554 = vsel %vm3031, %v3360, 0.0
  %v3555 = vadd.f32 %v3553, %v3554
  %v3556 = vsel %vm3031, %v3361, 0.0
  %v3557 = vadd.f32 %v3555, %v3556
  %v3558 = vsel %vm3031, %v3362, 0.0
  %v3559 = vadd.f32 %v3557, %v3558
  %v3560 = vsel %vm3031, %v3363, 0.0
  %v3561 = vadd.f32 %v3559, %v3560
  %v3562 = vsel %vm3031, %v3364, 0.0
  %v3563 = vadd.f32 %v3561, %v3562
  %v3564 = vsel %vm3031, %v3365, 0.0
  %v3565 = vadd.f32 %v3563, %v3564
  %v3566 = vsel %vm3031, %v3366, 0.0
  %v3567 = vadd.f32 %v3565, %v3566
  %v3568 = vsel %vm3031, %v3367, 0.0
  %v3569 = vadd.f32 %v3567, %v3568
  %v3570 = vsel %vm3031, %v3368, 0.0
  %v3571 = vadd.f32 %v3569, %v3570
  %v3572 = vsel %vm3031, %v3369, 0.0
  %v3573 = vadd.f32 %v3571, %v3572
  %v3574 = vsel %vm3031, %v3370, 0.0
  %v3575 = vadd.f32 %v3573, %v3574
  %v3576 = vsel %vm3031, %v3371, 0.0
  %v3577 = vadd.f32 %v3575, %v3576
  %v3578 = vsel %vm3031, %v3372, 0.0
  %v3579 = vadd.f32 %v3577, %v3578
  %v3580 = vsel %vm3031, %v3373, 0.0
  %v3581 = vadd.f32 %v3579, %v3580
  %v3582 = vsel %vm3031, %v3374, 0.0
  %v3583 = vadd.f32 %v3581, %v3582
  %v3584 = vsel %vm3031, %v3375, 0.0
  %v3585 = vadd.f32 %v3583, %v3584
  %v3586 = vsel %vm3031, %v3376, 0.0
  %v3587 = vadd.f32 %v3585, %v3586
  %v3588 = vsel %vm3031, %v3377, 0.0
  %v3589 = vadd.f32 %v3587, %v3588
  %v3590 = vsel %vm3031, %v3378, 0.0
  %v3591 = vadd.f32 %v3589, %v3590
  %v3592 = vsel %vm3031, %v3379, 0.0
  %v3593 = vadd.f32 %v3591, %v3592
  %v3594 = vsel %vm3031, %v3380, 0.0
  %v3595 = vadd.f32 %v3593, %v3594
  %v3596 = vsel %vm3031, %v3381, 0.0
  %v3597 = vadd.f32 %v3595, %v3596
  %v3598 = vsel %vm3031, %v3382, 0.0
  %v3599 = vadd.f32 %v3597, %v3598
  %v3600 = vsel %vm3031, %v3383, 0.0
  %v3601 = vadd.f32 %v3599, %v3600
  %v3602 = vsel %vm3031, %v3384, 0.0
  %v3603 = vadd.f32 %v3601, %v3602
  %v3604 = vsel %vm3031, %v3385, 0.0
  %v3605 = vadd.f32 %v3603, %v3604
  %v3606 = vsel %vm3031, %v3386, 0.0
  %v3607 = vadd.f32 %v3605, %v3606
  %v3608 = vsel %vm3031, %v3387, 0.0
  %v3609 = vadd.f32 %v3607, %v3608
  %v3610 = vsel %vm3031, %v3388, 0.0
  %v3611 = vadd.f32 %v3609, %v3610
  %v3612 = vsel %vm3031, %v3389, 0.0
  %v3613 = vadd.f32 %v3611, %v3612
  %v3614 = vsel %vm3031, %v3390, 0.0
  %v3615 = vadd.f32 %v3613, %v3614
  %v3616 = vsel %vm3031, %v3391, 0.0
  %v3617 = vadd.f32 %v3615, %v3616
  %v3618 = vsel %vm3031, %v3392, 0.0
  %v3619 = vadd.f32 %v3617, %v3618
  %v3620 = vsel %vm3031, %v3393, 0.0
  %v3621 = vadd.f32 %v3619, %v3620
  %v3622 = vsel %vm3031, %v3394, 0.0
  %v3623 = vadd.f32 %v3621, %v3622
  %v3624 = vsel %vm3031, %v3395, 0.0
  %v3625 = vadd.f32 %v3623, %v3624
  %v3626 = vsel %vm3031, %v3396, 0.0
  %v3627 = vadd.f32 %v3625, %v3626
  %v3628 = vsel %vm3031, %v3397, 0.0
  %v3629 = vadd.f32 %v3627, %v3628
  %v3630 = vsel %vm3031, %v3398, 0.0
  %v3631 = vadd.f32 %v3629, %v3630
  %v3632 = vsel %vm3031, %v3399, 0.0
  %v3633 = vadd.f32 %v3631, %v3632
  %v3634 = vsel %vm3031, %v3400, 0.0
  %v3635 = vadd.f32 %v3633, %v3634
  %v3636 = vsel %vm3031, %v3401, 0.0
  %v3637 = vadd.f32 %v3635, %v3636
  %v3638 = vsel %vm3031, %v3402, 0.0
  %v3639 = vadd.f32 %v3637, %v3638
  %v3640 = vsel %vm3031, %v3403, 0.0
  %v3641 = vadd.f32 %v3639, %v3640
  %v3642 = vsel %vm3031, %v3404, 0.0
  %v3643 = vadd.f32 %v3641, %v3642
  %v3644 = vsel %vm3031, %v3405, 0.0
  %v3645 = vadd.f32 %v3643, %v3644
  %v3646 = vsel %vm3031, %v3406, 0.0
  %v3647 = vadd.f32 %v3645, %v3646
  %v3648 = vsel %vm3031, %v3407, 0.0
  %v3649 = vadd.f32 %v3647, %v3648
  %v3650 = vsel %vm3031, %v3408, 0.0
  %v3651 = vadd.f32 %v3649, %v3650
  %v3652 = vsel %vm3031, %v3409, 0.0
  %v3653 = vadd.f32 %v3651, %v3652
  %v3654 = vsel %vm3031, %v3410, 0.0
  %v3655 = vadd.f32 %v3653, %v3654
  %v3656 = vsel %vm3031, %v3411, 0.0
  %v3657 = vadd.f32 %v3655, %v3656
  %v3658 = vsel %vm3031, %v3412, 0.0
  %v3659 = vadd.f32 %v3657, %v3658
  %v3660 = vsel %vm3031, %v3413, 0.0
  %v3661 = vadd.f32 %v3659, %v3660
  %v3662 = vsel %vm3031, %v3414, 0.0
  %v3663 = vadd.f32 %v3661, %v3662
  %v3664 = vsel %vm3031, %v3415, 0.0
  %v3665 = vadd.f32 %v3663, %v3664
  %v3666 = vsel %vm3031, %v3416, 0.0
  %v3667 = vadd.f32 %v3665, %v3666
  %v3668 = vsel %vm3031, %v3417, 0.0
  %v3669 = vadd.f32 %v3667, %v3668
  %v3670 = vsel %vm3031, %v3418, 0.0
  %v3671 = vadd.f32 %v3669, %v3670
  %v3672 = vsel %vm3031, %v3419, 0.0
  %v3673 = vadd.f32 %v3671, %v3672
  %v3674 = vsel %vm3031, %v3420, 0.0
  %v3675 = vadd.f32 %v3673, %v3674
  %v3676 = vrot.slane %v3675, 4
  %v3677 = vadd.f32 %v3675, %v3676
  %v3678 = vrot.slane %v3677, 2
  %v3679 = vadd.f32 %v3677, %v3678
  %v3680 = vrot.slane %v3679, 1
  %v3681 = vadd.f32 %v3679, %v3680
  %v3682 = vmul.f32 %v3292, 0.0009765625
  %v3683 = vmul.f32 %v3681, 0.0009765625
  %v3684 = vmul.f32 %v3682, %v3682
  %v3685 = vsub.f32 %v3683, %v3684
  %v3686 = vmax.f32 %v3685, 0.0
  %v3687 = vadd.f32 %v3686, 1e-05
  %v3688 = vrsqrt.pop %v3687
  %v3689 = vmul.f32 %v3029, %v3688
  %v3690 = vmul.f32 %v3682, %v3689
  %v3691 = vsub.f32 %v3030, %v3690
  %v3693 = vlaneseq
  %v3694 = vshrl.u32 %v3693, 7
  %v3695 = vsub.s32 0, %v3694
  %v3696 = vrot.slane %v3689, %v3695
  %v3698 = vmul.f32 %v2519, %v3696
  %v3699 = vmul.f32 %v2522, %v3696
  %v3700 = vmul.f32 %v2527, %v3696
  %v3701 = vmul.f32 %v2530, %v3696
  %v3702 = vmul.f32 %v2535, %v3696
  %v3703 = vmul.f32 %v2538, %v3696
  %v3704 = vmul.f32 %v2543, %v3696
  %v3705 = vmul.f32 %v2546, %v3696
  %v3706 = vmul.f32 %v2551, %v3696
  %v3707 = vmul.f32 %v2554, %v3696
  %v3708 = vmul.f32 %v2559, %v3696
  %v3709 = vmul.f32 %v2562, %v3696
  %v3710 = vmul.f32 %v2567, %v3696
  %v3711 = vmul.f32 %v2570, %v3696
  %v3712 = vmul.f32 %v2575, %v3696
  %v3713 = vmul.f32 %v2578, %v3696
  %v3714 = vmul.f32 %v2583, %v3696
  %v3715 = vmul.f32 %v2586, %v3696
  %v3716 = vmul.f32 %v2591, %v3696
  %v3717 = vmul.f32 %v2594, %v3696
  %v3718 = vmul.f32 %v2599, %v3696
  %v3719 = vmul.f32 %v2602, %v3696
  %v3720 = vmul.f32 %v2607, %v3696
  %v3721 = vmul.f32 %v2610, %v3696
  %v3722 = vmul.f32 %v2615, %v3696
  %v3723 = vmul.f32 %v2618, %v3696
  %v3724 = vmul.f32 %v2623, %v3696
  %v3725 = vmul.f32 %v2626, %v3696
  %v3726 = vmul.f32 %v2631, %v3696
  %v3727 = vmul.f32 %v2634, %v3696
  %v3728 = vmul.f32 %v2639, %v3696
  %v3729 = vmul.f32 %v2642, %v3696
  %v3730 = vmul.f32 %v2647, %v3696
  %v3731 = vmul.f32 %v2650, %v3696
  %v3732 = vmul.f32 %v2655, %v3696
  %v3733 = vmul.f32 %v2658, %v3696
  %v3734 = vmul.f32 %v2663, %v3696
  %v3735 = vmul.f32 %v2666, %v3696
  %v3736 = vmul.f32 %v2671, %v3696
  %v3737 = vmul.f32 %v2674, %v3696
  %v3738 = vmul.f32 %v2679, %v3696
  %v3739 = vmul.f32 %v2682, %v3696
  %v3740 = vmul.f32 %v2687, %v3696
  %v3741 = vmul.f32 %v2690, %v3696
  %v3742 = vmul.f32 %v2695, %v3696
  %v3743 = vmul.f32 %v2698, %v3696
  %v3744 = vmul.f32 %v2703, %v3696
  %v3745 = vmul.f32 %v2706, %v3696
  %v3746 = vmul.f32 %v2711, %v3696
  %v3747 = vmul.f32 %v2714, %v3696
  %v3748 = vmul.f32 %v2719, %v3696
  %v3749 = vmul.f32 %v2722, %v3696
  %v3750 = vmul.f32 %v2727, %v3696
  %v3751 = vmul.f32 %v2730, %v3696
  %v3752 = vmul.f32 %v2735, %v3696
  %v3753 = vmul.f32 %v2738, %v3696
  %v3754 = vmul.f32 %v2743, %v3696
  %v3755 = vmul.f32 %v2746, %v3696
  %v3756 = vmul.f32 %v2751, %v3696
  %v3757 = vmul.f32 %v2754, %v3696
  %v3758 = vmul.f32 %v2759, %v3696
  %v3759 = vmul.f32 %v2762, %v3696
  %v3760 = vmul.f32 %v2767, %v3696
  %v3761 = vmul.f32 %v2770, %v3696
  %v3762 = vmul.f32 %v2775, %v3696
  %v3763 = vmul.f32 %v2778, %v3696
  %v3764 = vmul.f32 %v2783, %v3696
  %v3765 = vmul.f32 %v2786, %v3696
  %v3766 = vmul.f32 %v2791, %v3696
  %v3767 = vmul.f32 %v2794, %v3696
  %v3768 = vmul.f32 %v2799, %v3696
  %v3769 = vmul.f32 %v2802, %v3696
  %v3770 = vmul.f32 %v2807, %v3696
  %v3771 = vmul.f32 %v2810, %v3696
  %v3772 = vmul.f32 %v2815, %v3696
  %v3773 = vmul.f32 %v2818, %v3696
  %v3774 = vmul.f32 %v2823, %v3696
  %v3775 = vmul.f32 %v2826, %v3696
  %v3776 = vmul.f32 %v2831, %v3696
  %v3777 = vmul.f32 %v2834, %v3696
  %v3778 = vmul.f32 %v2839, %v3696
  %v3779 = vmul.f32 %v2842, %v3696
  %v3780 = vmul.f32 %v2847, %v3696
  %v3781 = vmul.f32 %v2850, %v3696
  %v3782 = vmul.f32 %v2855, %v3696
  %v3783 = vmul.f32 %v2858, %v3696
  %v3784 = vmul.f32 %v2863, %v3696
  %v3785 = vmul.f32 %v2866, %v3696
  %v3786 = vmul.f32 %v2871, %v3696
  %v3787 = vmul.f32 %v2874, %v3696
  %v3788 = vmul.f32 %v2879, %v3696
  %v3789 = vmul.f32 %v2882, %v3696
  %v3790 = vmul.f32 %v2887, %v3696
  %v3791 = vmul.f32 %v2890, %v3696
  %v3792 = vmul.f32 %v2895, %v3696
  %v3793 = vmul.f32 %v2898, %v3696
  %v3794 = vmul.f32 %v2903, %v3696
  %v3795 = vmul.f32 %v2906, %v3696
  %v3796 = vmul.f32 %v2911, %v3696
  %v3797 = vmul.f32 %v2914, %v3696
  %v3798 = vmul.f32 %v2919, %v3696
  %v3799 = vmul.f32 %v2922, %v3696
  %v3800 = vmul.f32 %v2927, %v3696
  %v3801 = vmul.f32 %v2930, %v3696
  %v3802 = vmul.f32 %v2935, %v3696
  %v3803 = vmul.f32 %v2938, %v3696
  %v3804 = vmul.f32 %v2943, %v3696
  %v3805 = vmul.f32 %v2946, %v3696
  %v3806 = vmul.f32 %v2951, %v3696
  %v3807 = vmul.f32 %v2954, %v3696
  %v3808 = vmul.f32 %v2959, %v3696
  %v3809 = vmul.f32 %v2962, %v3696
  %v3810 = vmul.f32 %v2967, %v3696
  %v3811 = vmul.f32 %v2970, %v3696
  %v3812 = vmul.f32 %v2975, %v3696
  %v3813 = vmul.f32 %v2978, %v3696
  %v3814 = vmul.f32 %v2983, %v3696
  %v3815 = vmul.f32 %v2986, %v3696
  %v3816 = vmul.f32 %v2991, %v3696
  %v3817 = vmul.f32 %v2994, %v3696
  %v3818 = vmul.f32 %v2999, %v3696
  %v3819 = vmul.f32 %v3002, %v3696
  %v3820 = vmul.f32 %v3007, %v3696
  %v3821 = vmul.f32 %v3010, %v3696
  %v3822 = vmul.f32 %v3015, %v3696
  %v3823 = vmul.f32 %v3018, %v3696
  %v3824 = vmul.f32 %v3023, %v3696
  %v3825 = vmul.f32 %v3026, %v3696
  %v3827 = vlaneseq
  %v3828 = vshrl.u32 %v3827, 7
  %v3829 = vsub.s32 0, %v3828
  %v3830 = vrot.slane %v3691, %v3829
  %v3832 = vadd.f32 %v3698, %v3830
  %v3833 = vadd.f32 %v3699, %v3830
  %v3834 = vadd.f32 %v3700, %v3830
  %v3835 = vadd.f32 %v3701, %v3830
  %v3836 = vadd.f32 %v3702, %v3830
  %v3837 = vadd.f32 %v3703, %v3830
  %v3838 = vadd.f32 %v3704, %v3830
  %v3839 = vadd.f32 %v3705, %v3830
  %v3840 = vadd.f32 %v3706, %v3830
  %v3841 = vadd.f32 %v3707, %v3830
  %v3842 = vadd.f32 %v3708, %v3830
  %v3843 = vadd.f32 %v3709, %v3830
  %v3844 = vadd.f32 %v3710, %v3830
  %v3845 = vadd.f32 %v3711, %v3830
  %v3846 = vadd.f32 %v3712, %v3830
  %v3847 = vadd.f32 %v3713, %v3830
  %v3848 = vadd.f32 %v3714, %v3830
  %v3849 = vadd.f32 %v3715, %v3830
  %v3850 = vadd.f32 %v3716, %v3830
  %v3851 = vadd.f32 %v3717, %v3830
  %v3852 = vadd.f32 %v3718, %v3830
  %v3853 = vadd.f32 %v3719, %v3830
  %v3854 = vadd.f32 %v3720, %v3830
  %v3855 = vadd.f32 %v3721, %v3830
  %v3856 = vadd.f32 %v3722, %v3830
  %v3857 = vadd.f32 %v3723, %v3830
  %v3858 = vadd.f32 %v3724, %v3830
  %v3859 = vadd.f32 %v3725, %v3830
  %v3860 = vadd.f32 %v3726, %v3830
  %v3861 = vadd.f32 %v3727, %v3830
  %v3862 = vadd.f32 %v3728, %v3830
  %v3863 = vadd.f32 %v3729, %v3830
  %v3864 = vadd.f32 %v3730, %v3830
  %v3865 = vadd.f32 %v3731, %v3830
  %v3866 = vadd.f32 %v3732, %v3830
  %v3867 = vadd.f32 %v3733, %v3830
  %v3868 = vadd.f32 %v3734, %v3830
  %v3869 = vadd.f32 %v3735, %v3830
  %v3870 = vadd.f32 %v3736, %v3830
  %v3871 = vadd.f32 %v3737, %v3830
  %v3872 = vadd.f32 %v3738, %v3830
  %v3873 = vadd.f32 %v3739, %v3830
  %v3874 = vadd.f32 %v3740, %v3830
  %v3875 = vadd.f32 %v3741, %v3830
  %v3876 = vadd.f32 %v3742, %v3830
  %v3877 = vadd.f32 %v3743, %v3830
  %v3878 = vadd.f32 %v3744, %v3830
  %v3879 = vadd.f32 %v3745, %v3830
  %v3880 = vadd.f32 %v3746, %v3830
  %v3881 = vadd.f32 %v3747, %v3830
  %v3882 = vadd.f32 %v3748, %v3830
  %v3883 = vadd.f32 %v3749, %v3830
  %v3884 = vadd.f32 %v3750, %v3830
  %v3885 = vadd.f32 %v3751, %v3830
  %v3886 = vadd.f32 %v3752, %v3830
  %v3887 = vadd.f32 %v3753, %v3830
  %v3888 = vadd.f32 %v3754, %v3830
  %v3889 = vadd.f32 %v3755, %v3830
  %v3890 = vadd.f32 %v3756, %v3830
  %v3891 = vadd.f32 %v3757, %v3830
  %v3892 = vadd.f32 %v3758, %v3830
  %v3893 = vadd.f32 %v3759, %v3830
  %v3894 = vadd.f32 %v3760, %v3830
  %v3895 = vadd.f32 %v3761, %v3830
  %v3896 = vadd.f32 %v3762, %v3830
  %v3897 = vadd.f32 %v3763, %v3830
  %v3898 = vadd.f32 %v3764, %v3830
  %v3899 = vadd.f32 %v3765, %v3830
  %v3900 = vadd.f32 %v3766, %v3830
  %v3901 = vadd.f32 %v3767, %v3830
  %v3902 = vadd.f32 %v3768, %v3830
  %v3903 = vadd.f32 %v3769, %v3830
  %v3904 = vadd.f32 %v3770, %v3830
  %v3905 = vadd.f32 %v3771, %v3830
  %v3906 = vadd.f32 %v3772, %v3830
  %v3907 = vadd.f32 %v3773, %v3830
  %v3908 = vadd.f32 %v3774, %v3830
  %v3909 = vadd.f32 %v3775, %v3830
  %v3910 = vadd.f32 %v3776, %v3830
  %v3911 = vadd.f32 %v3777, %v3830
  %v3912 = vadd.f32 %v3778, %v3830
  %v3913 = vadd.f32 %v3779, %v3830
  %v3914 = vadd.f32 %v3780, %v3830
  %v3915 = vadd.f32 %v3781, %v3830
  %v3916 = vadd.f32 %v3782, %v3830
  %v3917 = vadd.f32 %v3783, %v3830
  %v3918 = vadd.f32 %v3784, %v3830
  %v3919 = vadd.f32 %v3785, %v3830
  %v3920 = vadd.f32 %v3786, %v3830
  %v3921 = vadd.f32 %v3787, %v3830
  %v3922 = vadd.f32 %v3788, %v3830
  %v3923 = vadd.f32 %v3789, %v3830
  %v3924 = vadd.f32 %v3790, %v3830
  %v3925 = vadd.f32 %v3791, %v3830
  %v3926 = vadd.f32 %v3792, %v3830
  %v3927 = vadd.f32 %v3793, %v3830
  %v3928 = vadd.f32 %v3794, %v3830
  %v3929 = vadd.f32 %v3795, %v3830
  %v3930 = vadd.f32 %v3796, %v3830
  %v3931 = vadd.f32 %v3797, %v3830
  %v3932 = vadd.f32 %v3798, %v3830
  %v3933 = vadd.f32 %v3799, %v3830
  %v3934 = vadd.f32 %v3800, %v3830
  %v3935 = vadd.f32 %v3801, %v3830
  %v3936 = vadd.f32 %v3802, %v3830
  %v3937 = vadd.f32 %v3803, %v3830
  %v3938 = vadd.f32 %v3804, %v3830
  %v3939 = vadd.f32 %v3805, %v3830
  %v3940 = vadd.f32 %v3806, %v3830
  %v3941 = vadd.f32 %v3807, %v3830
  %v3942 = vadd.f32 %v3808, %v3830
  %v3943 = vadd.f32 %v3809, %v3830
  %v3944 = vadd.f32 %v3810, %v3830
  %v3945 = vadd.f32 %v3811, %v3830
  %v3946 = vadd.f32 %v3812, %v3830
  %v3947 = vadd.f32 %v3813, %v3830
  %v3948 = vadd.f32 %v3814, %v3830
  %v3949 = vadd.f32 %v3815, %v3830
  %v3950 = vadd.f32 %v3816, %v3830
  %v3951 = vadd.f32 %v3817, %v3830
  %v3952 = vadd.f32 %v3818, %v3830
  %v3953 = vadd.f32 %v3819, %v3830
  %v3954 = vadd.f32 %v3820, %v3830
  %v3955 = vadd.f32 %v3821, %v3830
  %v3956 = vadd.f32 %v3822, %v3830
  %v3957 = vadd.f32 %v3823, %v3830
  %v3958 = vadd.f32 %v3824, %v3830
  %v3959 = vadd.f32 %v3825, %v3830
  %vm3960 = vcmp.ge.f32.partialorder %v3832, 0.0
  %vm3961 = vcmp.ge.f32.partialorder %v3833, 0.0
  %vm3962 = vcmp.ge.f32.partialorder %v3834, 0.0
  %vm3963 = vcmp.ge.f32.partialorder %v3835, 0.0
  %vm3964 = vcmp.ge.f32.partialorder %v3836, 0.0
  %vm3965 = vcmp.ge.f32.partialorder %v3837, 0.0
  %vm3966 = vcmp.ge.f32.partialorder %v3838, 0.0
  %vm3967 = vcmp.ge.f32.partialorder %v3839, 0.0
  %vm3968 = vcmp.ge.f32.partialorder %v3840, 0.0
  %vm3969 = vcmp.ge.f32.partialorder %v3841, 0.0
  %vm3970 = vcmp.ge.f32.partialorder %v3842, 0.0
  %vm3971 = vcmp.ge.f32.partialorder %v3843, 0.0
  %vm3972 = vcmp.ge.f32.partialorder %v3844, 0.0
  %vm3973 = vcmp.ge.f32.partialorder %v3845, 0.0
  %vm3974 = vcmp.ge.f32.partialorder %v3846, 0.0
  %vm3975 = vcmp.ge.f32.partialorder %v3847, 0.0
  %vm3976 = vcmp.ge.f32.partialorder %v3848, 0.0
  %vm3977 = vcmp.ge.f32.partialorder %v3849, 0.0
  %vm3978 = vcmp.ge.f32.partialorder %v3850, 0.0
  %vm3979 = vcmp.ge.f32.partialorder %v3851, 0.0
  %vm3980 = vcmp.ge.f32.partialorder %v3852, 0.0
  %vm3981 = vcmp.ge.f32.partialorder %v3853, 0.0
  %vm3982 = vcmp.ge.f32.partialorder %v3854, 0.0
  %vm3983 = vcmp.ge.f32.partialorder %v3855, 0.0
  %vm3984 = vcmp.ge.f32.partialorder %v3856, 0.0
  %vm3985 = vcmp.ge.f32.partialorder %v3857, 0.0
  %vm3986 = vcmp.ge.f32.partialorder %v3858, 0.0
  %vm3987 = vcmp.ge.f32.partialorder %v3859, 0.0
  %vm3988 = vcmp.ge.f32.partialorder %v3860, 0.0
  %vm3989 = vcmp.ge.f32.partialorder %v3861, 0.0
  %vm3990 = vcmp.ge.f32.partialorder %v3862, 0.0
  %vm3991 = vcmp.ge.f32.partialorder %v3863, 0.0
  %vm3992 = vcmp.ge.f32.partialorder %v3864, 0.0
  %vm3993 = vcmp.ge.f32.partialorder %v3865, 0.0
  %vm3994 = vcmp.ge.f32.partialorder %v3866, 0.0
  %vm3995 = vcmp.ge.f32.partialorder %v3867, 0.0
  %vm3996 = vcmp.ge.f32.partialorder %v3868, 0.0
  %vm3997 = vcmp.ge.f32.partialorder %v3869, 0.0
  %vm3998 = vcmp.ge.f32.partialorder %v3870, 0.0
  %vm3999 = vcmp.ge.f32.partialorder %v3871, 0.0
  %vm4000 = vcmp.ge.f32.partialorder %v3872, 0.0
  %vm4001 = vcmp.ge.f32.partialorder %v3873, 0.0
  %vm4002 = vcmp.ge.f32.partialorder %v3874, 0.0
  %vm4003 = vcmp.ge.f32.partialorder %v3875, 0.0
  %vm4004 = vcmp.ge.f32.partialorder %v3876, 0.0
  %vm4005 = vcmp.ge.f32.partialorder %v3877, 0.0
  %vm4006 = vcmp.ge.f32.partialorder %v3878, 0.0
  %vm4007 = vcmp.ge.f32.partialorder %v3879, 0.0
  %vm4008 = vcmp.ge.f32.partialorder %v3880, 0.0
  %vm4009 = vcmp.ge.f32.partialorder %v3881, 0.0
  %vm4010 = vcmp.ge.f32.partialorder %v3882, 0.0
  %vm4011 = vcmp.ge.f32.partialorder %v3883, 0.0
  %vm4012 = vcmp.ge.f32.partialorder %v3884, 0.0
  %vm4013 = vcmp.ge.f32.partialorder %v3885, 0.0
  %vm4014 = vcmp.ge.f32.partialorder %v3886, 0.0
  %vm4015 = vcmp.ge.f32.partialorder %v3887, 0.0
  %vm4016 = vcmp.ge.f32.partialorder %v3888, 0.0
  %vm4017 = vcmp.ge.f32.partialorder %v3889, 0.0
  %vm4018 = vcmp.ge.f32.partialorder %v3890, 0.0
  %vm4019 = vcmp.ge.f32.partialorder %v3891, 0.0
  %vm4020 = vcmp.ge.f32.partialorder %v3892, 0.0
  %vm4021 = vcmp.ge.f32.partialorder %v3893, 0.0
  %vm4022 = vcmp.ge.f32.partialorder %v3894, 0.0
  %vm4023 = vcmp.ge.f32.partialorder %v3895, 0.0
  %vm4024 = vcmp.ge.f32.partialorder %v3896, 0.0
  %vm4025 = vcmp.ge.f32.partialorder %v3897, 0.0
  %vm4026 = vcmp.ge.f32.partialorder %v3898, 0.0
  %vm4027 = vcmp.ge.f32.partialorder %v3899, 0.0
  %vm4028 = vcmp.ge.f32.partialorder %v3900, 0.0
  %vm4029 = vcmp.ge.f32.partialorder %v3901, 0.0
  %vm4030 = vcmp.ge.f32.partialorder %v3902, 0.0
  %vm4031 = vcmp.ge.f32.partialorder %v3903, 0.0
  %vm4032 = vcmp.ge.f32.partialorder %v3904, 0.0
  %vm4033 = vcmp.ge.f32.partialorder %v3905, 0.0
  %vm4034 = vcmp.ge.f32.partialorder %v3906, 0.0
  %vm4035 = vcmp.ge.f32.partialorder %v3907, 0.0
  %vm4036 = vcmp.ge.f32.partialorder %v3908, 0.0
  %vm4037 = vcmp.ge.f32.partialorder %v3909, 0.0
  %vm4038 = vcmp.ge.f32.partialorder %v3910, 0.0
  %vm4039 = vcmp.ge.f32.partialorder %v3911, 0.0
  %vm4040 = vcmp.ge.f32.partialorder %v3912, 0.0
  %vm4041 = vcmp.ge.f32.partialorder %v3913, 0.0
  %vm4042 = vcmp.ge.f32.partialorder %v3914, 0.0
  %vm4043 = vcmp.ge.f32.partialorder %v3915, 0.0
  %vm4044 = vcmp.ge.f32.partialorder %v3916, 0.0
  %vm4045 = vcmp.ge.f32.partialorder %v3917, 0.0
  %vm4046 = vcmp.ge.f32.partialorder %v3918, 0.0
  %vm4047 = vcmp.ge.f32.partialorder %v3919, 0.0
  %vm4048 = vcmp.ge.f32.partialorder %v3920, 0.0
  %vm4049 = vcmp.ge.f32.partialorder %v3921, 0.0
  %vm4050 = vcmp.ge.f32.partialorder %v3922, 0.0
  %vm4051 = vcmp.ge.f32.partialorder %v3923, 0.0
  %vm4052 = vcmp.ge.f32.partialorder %v3924, 0.0
  %vm4053 = vcmp.ge.f32.partialorder %v3925, 0.0
  %vm4054 = vcmp.ge.f32.partialorder %v3926, 0.0
  %vm4055 = vcmp.ge.f32.partialorder %v3927, 0.0
  %vm4056 = vcmp.ge.f32.partialorder %v3928, 0.0
  %vm4057 = vcmp.ge.f32.partialorder %v3929, 0.0
  %vm4058 = vcmp.ge.f32.partialorder %v3930, 0.0
  %vm4059 = vcmp.ge.f32.partialorder %v3931, 0.0
  %vm4060 = vcmp.ge.f32.partialorder %v3932, 0.0
  %vm4061 = vcmp.ge.f32.partialorder %v3933, 0.0
  %vm4062 = vcmp.ge.f32.partialorder %v3934, 0.0
  %vm4063 = vcmp.ge.f32.partialorder %v3935, 0.0
  %vm4064 = vcmp.ge.f32.partialorder %v3936, 0.0
  %vm4065 = vcmp.ge.f32.partialorder %v3937, 0.0
  %vm4066 = vcmp.ge.f32.partialorder %v3938, 0.0
  %vm4067 = vcmp.ge.f32.partialorder %v3939, 0.0
  %vm4068 = vcmp.ge.f32.partialorder %v3940, 0.0
  %vm4069 = vcmp.ge.f32.partialorder %v3941, 0.0
  %vm4070 = vcmp.ge.f32.partialorder %v3942, 0.0
  %vm4071 = vcmp.ge.f32.partialorder %v3943, 0.0
  %vm4072 = vcmp.ge.f32.partialorder %v3944, 0.0
  %vm4073 = vcmp.ge.f32.partialorder %v3945, 0.0
  %vm4074 = vcmp.ge.f32.partialorder %v3946, 0.0
  %vm4075 = vcmp.ge.f32.partialorder %v3947, 0.0
  %vm4076 = vcmp.ge.f32.partialorder %v3948, 0.0
  %vm4077 = vcmp.ge.f32.partialorder %v3949, 0.0
  %vm4078 = vcmp.ge.f32.partialorder %v3950, 0.0
  %vm4079 = vcmp.ge.f32.partialorder %v3951, 0.0
  %vm4080 = vcmp.ge.f32.partialorder %v3952, 0.0
  %vm4081 = vcmp.ge.f32.partialorder %v3953, 0.0
  %vm4082 = vcmp.ge.f32.partialorder %v3954, 0.0
  %vm4083 = vcmp.ge.f32.partialorder %v3955, 0.0
  %vm4084 = vcmp.ge.f32.partialorder %v3956, 0.0
  %vm4085 = vcmp.ge.f32.partialorder %v3957, 0.0
  %vm4086 = vcmp.ge.f32.partialorder %v3958, 0.0
  %vm4087 = vcmp.ge.f32.partialorder %v3959, 0.0
  %v4088 = vmul.f32 %v3832, 0.01
  %v4089 = vmul.f32 %v3833, 0.01
  %v4090 = vmul.f32 %v3834, 0.01
  %v4091 = vmul.f32 %v3835, 0.01
  %v4092 = vmul.f32 %v3836, 0.01
  %v4093 = vmul.f32 %v3837, 0.01
  %v4094 = vmul.f32 %v3838, 0.01
  %v4095 = vmul.f32 %v3839, 0.01
  %v4096 = vmul.f32 %v3840, 0.01
  %v4097 = vmul.f32 %v3841, 0.01
  %v4098 = vmul.f32 %v3842, 0.01
  %v4099 = vmul.f32 %v3843, 0.01
  %v4100 = vmul.f32 %v3844, 0.01
  %v4101 = vmul.f32 %v3845, 0.01
  %v4102 = vmul.f32 %v3846, 0.01
  %v4103 = vmul.f32 %v3847, 0.01
  %v4104 = vmul.f32 %v3848, 0.01
  %v4105 = vmul.f32 %v3849, 0.01
  %v4106 = vmul.f32 %v3850, 0.01
  %v4107 = vmul.f32 %v3851, 0.01
  %v4108 = vmul.f32 %v3852, 0.01
  %v4109 = vmul.f32 %v3853, 0.01
  %v4110 = vmul.f32 %v3854, 0.01
  %v4111 = vmul.f32 %v3855, 0.01
  %v4112 = vmul.f32 %v3856, 0.01
  %v4113 = vmul.f32 %v3857, 0.01
  %v4114 = vmul.f32 %v3858, 0.01
  %v4115 = vmul.f32 %v3859, 0.01
  %v4116 = vmul.f32 %v3860, 0.01
  %v4117 = vmul.f32 %v3861, 0.01
  %v4118 = vmul.f32 %v3862, 0.01
  %v4119 = vmul.f32 %v3863, 0.01
  %v4120 = vmul.f32 %v3864, 0.01
  %v4121 = vmul.f32 %v3865, 0.01
  %v4122 = vmul.f32 %v3866, 0.01
  %v4123 = vmul.f32 %v3867, 0.01
  %v4124 = vmul.f32 %v3868, 0.01
  %v4125 = vmul.f32 %v3869, 0.01
  %v4126 = vmul.f32 %v3870, 0.01
  %v4127 = vmul.f32 %v3871, 0.01
  %v4128 = vmul.f32 %v3872, 0.01
  %v4129 = vmul.f32 %v3873, 0.01
  %v4130 = vmul.f32 %v3874, 0.01
  %v4131 = vmul.f32 %v3875, 0.01
  %v4132 = vmul.f32 %v3876, 0.01
  %v4133 = vmul.f32 %v3877, 0.01
  %v4134 = vmul.f32 %v3878, 0.01
  %v4135 = vmul.f32 %v3879, 0.01
  %v4136 = vmul.f32 %v3880, 0.01
  %v4137 = vmul.f32 %v3881, 0.01
  %v4138 = vmul.f32 %v3882, 0.01
  %v4139 = vmul.f32 %v3883, 0.01
  %v4140 = vmul.f32 %v3884, 0.01
  %v4141 = vmul.f32 %v3885, 0.01
  %v4142 = vmul.f32 %v3886, 0.01
  %v4143 = vmul.f32 %v3887, 0.01
  %v4144 = vmul.f32 %v3888, 0.01
  %v4145 = vmul.f32 %v3889, 0.01
  %v4146 = vmul.f32 %v3890, 0.01
  %v4147 = vmul.f32 %v3891, 0.01
  %v4148 = vmul.f32 %v3892, 0.01
  %v4149 = vmul.f32 %v3893, 0.01
  %v4150 = vmul.f32 %v3894, 0.01
  %v4151 = vmul.f32 %v3895, 0.01
  %v4152 = vmul.f32 %v3896, 0.01
  %v4153 = vmul.f32 %v3897, 0.01
  %v4154 = vmul.f32 %v3898, 0.01
  %v4155 = vmul.f32 %v3899, 0.01
  %v4156 = vmul.f32 %v3900, 0.01
  %v4157 = vmul.f32 %v3901, 0.01
  %v4158 = vmul.f32 %v3902, 0.01
  %v4159 = vmul.f32 %v3903, 0.01
  %v4160 = vmul.f32 %v3904, 0.01
  %v4161 = vmul.f32 %v3905, 0.01
  %v4162 = vmul.f32 %v3906, 0.01
  %v4163 = vmul.f32 %v3907, 0.01
  %v4164 = vmul.f32 %v3908, 0.01
  %v4165 = vmul.f32 %v3909, 0.01
  %v4166 = vmul.f32 %v3910, 0.01
  %v4167 = vmul.f32 %v3911, 0.01
  %v4168 = vmul.f32 %v3912, 0.01
  %v4169 = vmul.f32 %v3913, 0.01
  %v4170 = vmul.f32 %v3914, 0.01
  %v4171 = vmul.f32 %v3915, 0.01
  %v4172 = vmul.f32 %v3916, 0.01
  %v4173 = vmul.f32 %v3917, 0.01
  %v4174 = vmul.f32 %v3918, 0.01
  %v4175 = vmul.f32 %v3919, 0.01
  %v4176 = vmul.f32 %v3920, 0.01
  %v4177 = vmul.f32 %v3921, 0.01
  %v4178 = vmul.f32 %v3922, 0.01
  %v4179 = vmul.f32 %v3923, 0.01
  %v4180 = vmul.f32 %v3924, 0.01
  %v4181 = vmul.f32 %v3925, 0.01
  %v4182 = vmul.f32 %v3926, 0.01
  %v4183 = vmul.f32 %v3927, 0.01
  %v4184 = vmul.f32 %v3928, 0.01
  %v4185 = vmul.f32 %v3929, 0.01
  %v4186 = vmul.f32 %v3930, 0.01
  %v4187 = vmul.f32 %v3931, 0.01
  %v4188 = vmul.f32 %v3932, 0.01
  %v4189 = vmul.f32 %v3933, 0.01
  %v4190 = vmul.f32 %v3934, 0.01
  %v4191 = vmul.f32 %v3935, 0.01
  %v4192 = vmul.f32 %v3936, 0.01
  %v4193 = vmul.f32 %v3937, 0.01
  %v4194 = vmul.f32 %v3938, 0.01
  %v4195 = vmul.f32 %v3939, 0.01
  %v4196 = vmul.f32 %v3940, 0.01
  %v4197 = vmul.f32 %v3941, 0.01
  %v4198 = vmul.f32 %v3942, 0.01
  %v4199 = vmul.f32 %v3943, 0.01
  %v4200 = vmul.f32 %v3944, 0.01
  %v4201 = vmul.f32 %v3945, 0.01
  %v4202 = vmul.f32 %v3946, 0.01
  %v4203 = vmul.f32 %v3947, 0.01
  %v4204 = vmul.f32 %v3948, 0.01
  %v4205 = vmul.f32 %v3949, 0.01
  %v4206 = vmul.f32 %v3950, 0.01
  %v4207 = vmul.f32 %v3951, 0.01
  %v4208 = vmul.f32 %v3952, 0.01
  %v4209 = vmul.f32 %v3953, 0.01
  %v4210 = vmul.f32 %v3954, 0.01
  %v4211 = vmul.f32 %v3955, 0.01
  %v4212 = vmul.f32 %v3956, 0.01
  %v4213 = vmul.f32 %v3957, 0.01
  %v4214 = vmul.f32 %v3958, 0.01
  %v4215 = vmul.f32 %v3959, 0.01
  %v4216 = vsel %vm3960, %v3832, %v4088
  %v4217 = vsel %vm3961, %v3833, %v4089
  %v4218 = vsel %vm3962, %v3834, %v4090
  %v4219 = vsel %vm3963, %v3835, %v4091
  %v4220 = vsel %vm3964, %v3836, %v4092
  %v4221 = vsel %vm3965, %v3837, %v4093
  %v4222 = vsel %vm3966, %v3838, %v4094
  %v4223 = vsel %vm3967, %v3839, %v4095
  %v4224 = vsel %vm3968, %v3840, %v4096
  %v4225 = vsel %vm3969, %v3841, %v4097
  %v4226 = vsel %vm3970, %v3842, %v4098
  %v4227 = vsel %vm3971, %v3843, %v4099
  %v4228 = vsel %vm3972, %v3844, %v4100
  %v4229 = vsel %vm3973, %v3845, %v4101
  %v4230 = vsel %vm3974, %v3846, %v4102
  %v4231 = vsel %vm3975, %v3847, %v4103
  %v4232 = vsel %vm3976, %v3848, %v4104
  %v4233 = vsel %vm3977, %v3849, %v4105
  %v4234 = vsel %vm3978, %v3850, %v4106
  %v4235 = vsel %vm3979, %v3851, %v4107
  %v4236 = vsel %vm3980, %v3852, %v4108
  %v4237 = vsel %vm3981, %v3853, %v4109
  %v4238 = vsel %vm3982, %v3854, %v4110
  %v4239 = vsel %vm3983, %v3855, %v4111
  %v4240 = vsel %vm3984, %v3856, %v4112
  %v4241 = vsel %vm3985, %v3857, %v4113
  %v4242 = vsel %vm3986, %v3858, %v4114
  %v4243 = vsel %vm3987, %v3859, %v4115
  %v4244 = vsel %vm3988, %v3860, %v4116
  %v4245 = vsel %vm3989, %v3861, %v4117
  %v4246 = vsel %vm3990, %v3862, %v4118
  %v4247 = vsel %vm3991, %v3863, %v4119
  %v4248 = vsel %vm3992, %v3864, %v4120
  %v4249 = vsel %vm3993, %v3865, %v4121
  %v4250 = vsel %vm3994, %v3866, %v4122
  %v4251 = vsel %vm3995, %v3867, %v4123
  %v4252 = vsel %vm3996, %v3868, %v4124
  %v4253 = vsel %vm3997, %v3869, %v4125
  %v4254 = vsel %vm3998, %v3870, %v4126
  %v4255 = vsel %vm3999, %v3871, %v4127
  %v4256 = vsel %vm4000, %v3872, %v4128
  %v4257 = vsel %vm4001, %v3873, %v4129
  %v4258 = vsel %vm4002, %v3874, %v4130
  %v4259 = vsel %vm4003, %v3875, %v4131
  %v4260 = vsel %vm4004, %v3876, %v4132
  %v4261 = vsel %vm4005, %v3877, %v4133
  %v4262 = vsel %vm4006, %v3878, %v4134
  %v4263 = vsel %vm4007, %v3879, %v4135
  %v4264 = vsel %vm4008, %v3880, %v4136
  %v4265 = vsel %vm4009, %v3881, %v4137
  %v4266 = vsel %vm4010, %v3882, %v4138
  %v4267 = vsel %vm4011, %v3883, %v4139
  %v4268 = vsel %vm4012, %v3884, %v4140
  %v4269 = vsel %vm4013, %v3885, %v4141
  %v4270 = vsel %vm4014, %v3886, %v4142
  %v4271 = vsel %vm4015, %v3887, %v4143
  %v4272 = vsel %vm4016, %v3888, %v4144
  %v4273 = vsel %vm4017, %v3889, %v4145
  %v4274 = vsel %vm4018, %v3890, %v4146
  %v4275 = vsel %vm4019, %v3891, %v4147
  %v4276 = vsel %vm4020, %v3892, %v4148
  %v4277 = vsel %vm4021, %v3893, %v4149
  %v4278 = vsel %vm4022, %v3894, %v4150
  %v4279 = vsel %vm4023, %v3895, %v4151
  %v4280 = vsel %vm4024, %v3896, %v4152
  %v4281 = vsel %vm4025, %v3897, %v4153
  %v4282 = vsel %vm4026, %v3898, %v4154
  %v4283 = vsel %vm4027, %v3899, %v4155
  %v4284 = vsel %vm4028, %v3900, %v4156
  %v4285 = vsel %vm4029, %v3901, %v4157
  %v4286 = vsel %vm4030, %v3902, %v4158
  %v4287 = vsel %vm4031, %v3903, %v4159
  %v4288 = vsel %vm4032, %v3904, %v4160
  %v4289 = vsel %vm4033, %v3905, %v4161
  %v4290 = vsel %vm4034, %v3906, %v4162
  %v4291 = vsel %vm4035, %v3907, %v4163
  %v4292 = vsel %vm4036, %v3908, %v4164
  %v4293 = vsel %vm4037, %v3909, %v4165
  %v4294 = vsel %vm4038, %v3910, %v4166
  %v4295 = vsel %vm4039, %v3911, %v4167
  %v4296 = vsel %vm4040, %v3912, %v4168
  %v4297 = vsel %vm4041, %v3913, %v4169
  %v4298 = vsel %vm4042, %v3914, %v4170
  %v4299 = vsel %vm4043, %v3915, %v4171
  %v4300 = vsel %vm4044, %v3916, %v4172
  %v4301 = vsel %vm4045, %v3917, %v4173
  %v4302 = vsel %vm4046, %v3918, %v4174
  %v4303 = vsel %vm4047, %v3919, %v4175
  %v4304 = vsel %vm4048, %v3920, %v4176
  %v4305 = vsel %vm4049, %v3921, %v4177
  %v4306 = vsel %vm4050, %v3922, %v4178
  %v4307 = vsel %vm4051, %v3923, %v4179
  %v4308 = vsel %vm4052, %v3924, %v4180
  %v4309 = vsel %vm4053, %v3925, %v4181
  %v4310 = vsel %vm4054, %v3926, %v4182
  %v4311 = vsel %vm4055, %v3927, %v4183
  %v4312 = vsel %vm4056, %v3928, %v4184
  %v4313 = vsel %vm4057, %v3929, %v4185
  %v4314 = vsel %vm4058, %v3930, %v4186
  %v4315 = vsel %vm4059, %v3931, %v4187
  %v4316 = vsel %vm4060, %v3932, %v4188
  %v4317 = vsel %vm4061, %v3933, %v4189
  %v4318 = vsel %vm4062, %v3934, %v4190
  %v4319 = vsel %vm4063, %v3935, %v4191
  %v4320 = vsel %vm4064, %v3936, %v4192
  %v4321 = vsel %vm4065, %v3937, %v4193
  %v4322 = vsel %vm4066, %v3938, %v4194
  %v4323 = vsel %vm4067, %v3939, %v4195
  %v4324 = vsel %vm4068, %v3940, %v4196
  %v4325 = vsel %vm4069, %v3941, %v4197
  %v4326 = vsel %vm4070, %v3942, %v4198
  %v4327 = vsel %vm4071, %v3943, %v4199
  %v4328 = vsel %vm4072, %v3944, %v4200
  %v4329 = vsel %vm4073, %v3945, %v4201
  %v4330 = vsel %vm4074, %v3946, %v4202
  %v4331 = vsel %vm4075, %v3947, %v4203
  %v4332 = vsel %vm4076, %v3948, %v4204
  %v4333 = vsel %vm4077, %v3949, %v4205
  %v4334 = vsel %vm4078, %v3950, %v4206
  %v4335 = vsel %vm4079, %v3951, %v4207
  %v4336 = vsel %vm4080, %v3952, %v4208
  %v4337 = vsel %vm4081, %v3953, %v4209
  %v4338 = vsel %vm4082, %v3954, %v4210
  %v4339 = vsel %vm4083, %v3955, %v4211
  %v4340 = vsel %vm4084, %v3956, %v4212
  %v4341 = vsel %vm4085, %v3957, %v4213
  %v4342 = vsel %vm4086, %v3958, %v4214
  %v4343 = vsel %vm4087, %v3959, %v4215
  %4344 = vst.msk [vmem:[%s4] sm:$0xff] %vm3031, %v4216
  %4345 = vst.msk [vmem:[%s4 + $0x8] sm:$0xff] %vm3031, %v4217
  %4346 = vst.msk [vmem:[%s4 + $0x10] sm:$0xff] %vm3031, %v4218
  %4347 = vst.msk [vmem:[%s4 + $0x18] sm:$0xff] %vm3031, %v4219
  %4348 = vst.msk [vmem:[%s4 + $0x20] sm:$0xff] %vm3031, %v4220
  %4349 = vst.msk [vmem:[%s4 + $0x28] sm:$0xff] %vm3031, %v4221
  %4350 = vst.msk [vmem:[%s4 + $0x30] sm:$0xff] %vm3031, %v4222
  %4351 = vst.msk [vmem:[%s4 + $0x38] sm:$0xff] %vm3031, %v4223
  %4352 = vst.msk [vmem:[%s4 + $0x40] sm:$0xff] %vm3031, %v4224
  %4353 = vst.msk [vmem:[%s4 + $0x48] sm:$0xff] %vm3031, %v4225
  %4354 = vst.msk [vmem:[%s4 + $0x50] sm:$0xff] %vm3031, %v4226
  %4355 = vst.msk [vmem:[%s4 + $0x58] sm:$0xff] %vm3031, %v4227
  %4356 = vst.msk [vmem:[%s4 + $0x60] sm:$0xff] %vm3031, %v4228
  %4357 = vst.msk [vmem:[%s4 + $0x68] sm:$0xff] %vm3031, %v4229
  %4358 = vst.msk [vmem:[%s4 + $0x70] sm:$0xff] %vm3031, %v4230
  %4359 = vst.msk [vmem:[%s4 + $0x78] sm:$0xff] %vm3031, %v4231
  %4360 = vst.msk [vmem:[%s4 + $0x80] sm:$0xff] %vm3031, %v4232
  %4361 = vst.msk [vmem:[%s4 + $0x88] sm:$0xff] %vm3031, %v4233
  %4362 = vst.msk [vmem:[%s4 + $0x90] sm:$0xff] %vm3031, %v4234
  %4363 = vst.msk [vmem:[%s4 + $0x98] sm:$0xff] %vm3031, %v4235
  %4364 = vst.msk [vmem:[%s4 + $0xa0] sm:$0xff] %vm3031, %v4236
  %4365 = vst.msk [vmem:[%s4 + $0xa8] sm:$0xff] %vm3031, %v4237
  %4366 = vst.msk [vmem:[%s4 + $0xb0] sm:$0xff] %vm3031, %v4238
  %4367 = vst.msk [vmem:[%s4 + $0xb8] sm:$0xff] %vm3031, %v4239
  %4368 = vst.msk [vmem:[%s4 + $0xc0] sm:$0xff] %vm3031, %v4240
  %4369 = vst.msk [vmem:[%s4 + $0xc8] sm:$0xff] %vm3031, %v4241
  %4370 = vst.msk [vmem:[%s4 + $0xd0] sm:$0xff] %vm3031, %v4242
  %4371 = vst.msk [vmem:[%s4 + $0xd8] sm:$0xff] %vm3031, %v4243
  %4372 = vst.msk [vmem:[%s4 + $0xe0] sm:$0xff] %vm3031, %v4244
  %4373 = vst.msk [vmem:[%s4 + $0xe8] sm:$0xff] %vm3031, %v4245
  %4374 = vst.msk [vmem:[%s4 + $0xf0] sm:$0xff] %vm3031, %v4246
  %4375 = vst.msk [vmem:[%s4 + $0xf8] sm:$0xff] %vm3031, %v4247
  %4376 = vst.msk [vmem:[%s4 + $0x100] sm:$0xff] %vm3031, %v4248
  %4377 = vst.msk [vmem:[%s4 + $0x108] sm:$0xff] %vm3031, %v4249
  %4378 = vst.msk [vmem:[%s4 + $0x110] sm:$0xff] %vm3031, %v4250
  %4379 = vst.msk [vmem:[%s4 + $0x118] sm:$0xff] %vm3031, %v4251
  %4380 = vst.msk [vmem:[%s4 + $0x120] sm:$0xff] %vm3031, %v4252
  %4381 = vst.msk [vmem:[%s4 + $0x128] sm:$0xff] %vm3031, %v4253
  %4382 = vst.msk [vmem:[%s4 + $0x130] sm:$0xff] %vm3031, %v4254
  %4383 = vst.msk [vmem:[%s4 + $0x138] sm:$0xff] %vm3031, %v4255
  %4384 = vst.msk [vmem:[%s4 + $0x140] sm:$0xff] %vm3031, %v4256
  %4385 = vst.msk [vmem:[%s4 + $0x148] sm:$0xff] %vm3031, %v4257
  %4386 = vst.msk [vmem:[%s4 + $0x150] sm:$0xff] %vm3031, %v4258
  %4387 = vst.msk [vmem:[%s4 + $0x158] sm:$0xff] %vm3031, %v4259
  %4388 = vst.msk [vmem:[%s4 + $0x160] sm:$0xff] %vm3031, %v4260
  %4389 = vst.msk [vmem:[%s4 + $0x168] sm:$0xff] %vm3031, %v4261
  %4390 = vst.msk [vmem:[%s4 + $0x170] sm:$0xff] %vm3031, %v4262
  %4391 = vst.msk [vmem:[%s4 + $0x178] sm:$0xff] %vm3031, %v4263
  %4392 = vst.msk [vmem:[%s4 + $0x180] sm:$0xff] %vm3031, %v4264
  %4393 = vst.msk [vmem:[%s4 + $0x188] sm:$0xff] %vm3031, %v4265
  %4394 = vst.msk [vmem:[%s4 + $0x190] sm:$0xff] %vm3031, %v4266
  %4395 = vst.msk [vmem:[%s4 + $0x198] sm:$0xff] %vm3031, %v4267
  %4396 = vst.msk [vmem:[%s4 + $0x1a0] sm:$0xff] %vm3031, %v4268
  %4397 = vst.msk [vmem:[%s4 + $0x1a8] sm:$0xff] %vm3031, %v4269
  %4398 = vst.msk [vmem:[%s4 + $0x1b0] sm:$0xff] %vm3031, %v4270
  %4399 = vst.msk [vmem:[%s4 + $0x1b8] sm:$0xff] %vm3031, %v4271
  %4400 = vst.msk [vmem:[%s4 + $0x1c0] sm:$0xff] %vm3031, %v4272
  %4401 = vst.msk [vmem:[%s4 + $0x1c8] sm:$0xff] %vm3031, %v4273
  %4402 = vst.msk [vmem:[%s4 + $0x1d0] sm:$0xff] %vm3031, %v4274
  %4403 = vst.msk [vmem:[%s4 + $0x1d8] sm:$0xff] %vm3031, %v4275
  %4404 = vst.msk [vmem:[%s4 + $0x1e0] sm:$0xff] %vm3031, %v4276
  %4405 = vst.msk [vmem:[%s4 + $0x1e8] sm:$0xff] %vm3031, %v4277
  %4406 = vst.msk [vmem:[%s4 + $0x1f0] sm:$0xff] %vm3031, %v4278
  %4407 = vst.msk [vmem:[%s4 + $0x1f8] sm:$0xff] %vm3031, %v4279
  %4408 = vst.msk [vmem:[%s4 + $0x200] sm:$0xff] %vm3031, %v4280
  %4409 = vst.msk [vmem:[%s4 + $0x208] sm:$0xff] %vm3031, %v4281
  %4410 = vst.msk [vmem:[%s4 + $0x210] sm:$0xff] %vm3031, %v4282
  %4411 = vst.msk [vmem:[%s4 + $0x218] sm:$0xff] %vm3031, %v4283
  %4412 = vst.msk [vmem:[%s4 + $0x220] sm:$0xff] %vm3031, %v4284
  %4413 = vst.msk [vmem:[%s4 + $0x228] sm:$0xff] %vm3031, %v4285
  %4414 = vst.msk [vmem:[%s4 + $0x230] sm:$0xff] %vm3031, %v4286
  %4415 = vst.msk [vmem:[%s4 + $0x238] sm:$0xff] %vm3031, %v4287
  %4416 = vst.msk [vmem:[%s4 + $0x240] sm:$0xff] %vm3031, %v4288
  %4417 = vst.msk [vmem:[%s4 + $0x248] sm:$0xff] %vm3031, %v4289
  %4418 = vst.msk [vmem:[%s4 + $0x250] sm:$0xff] %vm3031, %v4290
  %4419 = vst.msk [vmem:[%s4 + $0x258] sm:$0xff] %vm3031, %v4291
  %4420 = vst.msk [vmem:[%s4 + $0x260] sm:$0xff] %vm3031, %v4292
  %4421 = vst.msk [vmem:[%s4 + $0x268] sm:$0xff] %vm3031, %v4293
  %4422 = vst.msk [vmem:[%s4 + $0x270] sm:$0xff] %vm3031, %v4294
  %4423 = vst.msk [vmem:[%s4 + $0x278] sm:$0xff] %vm3031, %v4295
  %4424 = vst.msk [vmem:[%s4 + $0x280] sm:$0xff] %vm3031, %v4296
  %4425 = vst.msk [vmem:[%s4 + $0x288] sm:$0xff] %vm3031, %v4297
  %4426 = vst.msk [vmem:[%s4 + $0x290] sm:$0xff] %vm3031, %v4298
  %4427 = vst.msk [vmem:[%s4 + $0x298] sm:$0xff] %vm3031, %v4299
  %4428 = vst.msk [vmem:[%s4 + $0x2a0] sm:$0xff] %vm3031, %v4300
  %4429 = vst.msk [vmem:[%s4 + $0x2a8] sm:$0xff] %vm3031, %v4301
  %4430 = vst.msk [vmem:[%s4 + $0x2b0] sm:$0xff] %vm3031, %v4302
  %4431 = vst.msk [vmem:[%s4 + $0x2b8] sm:$0xff] %vm3031, %v4303
  %4432 = vst.msk [vmem:[%s4 + $0x2c0] sm:$0xff] %vm3031, %v4304
  %4433 = vst.msk [vmem:[%s4 + $0x2c8] sm:$0xff] %vm3031, %v4305
  %4434 = vst.msk [vmem:[%s4 + $0x2d0] sm:$0xff] %vm3031, %v4306
  %4435 = vst.msk [vmem:[%s4 + $0x2d8] sm:$0xff] %vm3031, %v4307
  %4436 = vst.msk [vmem:[%s4 + $0x2e0] sm:$0xff] %vm3031, %v4308
  %4437 = vst.msk [vmem:[%s4 + $0x2e8] sm:$0xff] %vm3031, %v4309
  %4438 = vst.msk [vmem:[%s4 + $0x2f0] sm:$0xff] %vm3031, %v4310
  %4439 = vst.msk [vmem:[%s4 + $0x2f8] sm:$0xff] %vm3031, %v4311
  %4440 = vst.msk [vmem:[%s4 + $0x300] sm:$0xff] %vm3031, %v4312
  %4441 = vst.msk [vmem:[%s4 + $0x308] sm:$0xff] %vm3031, %v4313
  %4442 = vst.msk [vmem:[%s4 + $0x310] sm:$0xff] %vm3031, %v4314
  %4443 = vst.msk [vmem:[%s4 + $0x318] sm:$0xff] %vm3031, %v4315
  %4444 = vst.msk [vmem:[%s4 + $0x320] sm:$0xff] %vm3031, %v4316
  %4445 = vst.msk [vmem:[%s4 + $0x328] sm:$0xff] %vm3031, %v4317
  %4446 = vst.msk [vmem:[%s4 + $0x330] sm:$0xff] %vm3031, %v4318
  %4447 = vst.msk [vmem:[%s4 + $0x338] sm:$0xff] %vm3031, %v4319
  %4448 = vst.msk [vmem:[%s4 + $0x340] sm:$0xff] %vm3031, %v4320
  %4449 = vst.msk [vmem:[%s4 + $0x348] sm:$0xff] %vm3031, %v4321
  %4450 = vst.msk [vmem:[%s4 + $0x350] sm:$0xff] %vm3031, %v4322
  %4451 = vst.msk [vmem:[%s4 + $0x358] sm:$0xff] %vm3031, %v4323
  %4452 = vst.msk [vmem:[%s4 + $0x360] sm:$0xff] %vm3031, %v4324
  %4453 = vst.msk [vmem:[%s4 + $0x368] sm:$0xff] %vm3031, %v4325
  %4454 = vst.msk [vmem:[%s4 + $0x370] sm:$0xff] %vm3031, %v4326
  %4455 = vst.msk [vmem:[%s4 + $0x378] sm:$0xff] %vm3031, %v4327
  %4456 = vst.msk [vmem:[%s4 + $0x380] sm:$0xff] %vm3031, %v4328
  %4457 = vst.msk [vmem:[%s4 + $0x388] sm:$0xff] %vm3031, %v4329
  %4458 = vst.msk [vmem:[%s4 + $0x390] sm:$0xff] %vm3031, %v4330
  %4459 = vst.msk [vmem:[%s4 + $0x398] sm:$0xff] %vm3031, %v4331
  %4460 = vst.msk [vmem:[%s4 + $0x3a0] sm:$0xff] %vm3031, %v4332
  %4461 = vst.msk [vmem:[%s4 + $0x3a8] sm:$0xff] %vm3031, %v4333
  %4462 = vst.msk [vmem:[%s4 + $0x3b0] sm:$0xff] %vm3031, %v4334
  %4463 = vst.msk [vmem:[%s4 + $0x3b8] sm:$0xff] %vm3031, %v4335
  %4464 = vst.msk [vmem:[%s4 + $0x3c0] sm:$0xff] %vm3031, %v4336
  %4465 = vst.msk [vmem:[%s4 + $0x3c8] sm:$0xff] %vm3031, %v4337
  %4466 = vst.msk [vmem:[%s4 + $0x3d0] sm:$0xff] %vm3031, %v4338
  %4467 = vst.msk [vmem:[%s4 + $0x3d8] sm:$0xff] %vm3031, %v4339
  %4468 = vst.msk [vmem:[%s4 + $0x3e0] sm:$0xff] %vm3031, %v4340
  %4469 = vst.msk [vmem:[%s4 + $0x3e8] sm:$0xff] %vm3031, %v4341
  %4470 = vst.msk [vmem:[%s4 + $0x3f0] sm:$0xff] %vm3031, %v4342
  %4471 = vst.msk [vmem:[%s4 + $0x3f8] sm:$0xff] %vm3031, %v4343
  // Predicated region
  $region18: #{inception_forward.7} parent=0 // pred_check
    _
  $region19: #{inception_forward.7} parent=0 // pred_check_branch
    %4473 = sbr.rel (0) target = $region21
  $region20: #{inception_forward.7} parent=0 // pred_region
    _
  $region21: #{inception_forward.7} parent=0 // pred_fallthru
    _
  // Predicated region
  $region22: #{inception_forward.7} parent=0 // pred_check
    _
  $region23: #{inception_forward.7} parent=0 // pred_check_branch
    %4475 = sbr.rel (0) target = $region25
  $region24: #{inception_forward.7} parent=0 // pred_region
    _
  $region25: #{inception_forward.7} parent=0 // pred_fallthru
    _

// kernel: inception_forward.8
$region0: #{inception_forward.8}
  #allocation0 [shape = 'u32[]', space=smem, size = 0x4, offset = 0x4, fixed_abs, tag = 'smem constant byte address 0x4 - core index']
  #allocation1 [shape = 'u32[144,128]{1,0:T(1,128)}', space=vmem, size = 0x12000, scoped, tag = 'internal scratch']
  %s0 = inlined_call_operand.vmem [shape: bf16[128,297], index: 0, kind: input, shape index: {}]
  %s1 = inlined_call_operand.vmem [shape: bf16[297,17], index: 1, kind: input, shape index: {}]
  %s2 = inlined_call_operand.vmem [shape: f32[1,17], index: 2, kind: input, shape index: {}]
  %s3 = inlined_call_operand.vmem [shape: f32[1,17], index: 3, kind: input, shape index: {}]
  %s4 = inlined_call_operand.vmem [shape: f32[128,17], index: 4, kind: output, shape index: {}]
  %s5 = sld [smem:[#allocation0]]
  $region26: #{inception_forward.8} parent=0
    _
  %s7 = ssub.s32 1, %s5
  %s8 = scalar_select 0, %s7, %s5
  // Predicated region
  $region2: #{inception_forward.8} parent=0 // pred_check
    _
  $region3: #{inception_forward.8} parent=0 // pred_check_branch
    %10 = sbr.rel (0) target = $region5
  $region4: #{inception_forward.8} parent=0 // pred_region
    _
  $region5: #{inception_forward.8} parent=0 // pred_fallthru
    _
  // Predicated region
  $region6: #{inception_forward.8} parent=0 // pred_check
    _
  $region7: #{inception_forward.8} parent=0 // pred_check_branch
    %12 = sbr.rel (0) target = $region9
  $region8: #{inception_forward.8} parent=0 // pred_region
    _
  $region9: #{inception_forward.8} parent=0 // pred_fallthru
    _
  // Predicated region
  $region10: #{inception_forward.8} parent=0 // pred_check
    _
  $region11: #{inception_forward.8} parent=0 // pred_check_branch
    %14 = sbr.rel (0) target = $region13
  $region12: #{inception_forward.8} parent=0 // pred_region
    _
  $region13: #{inception_forward.8} parent=0 // pred_fallthru
    _
  // Predicated region
  $region14: #{inception_forward.8} parent=0 // pred_check
    _
  $region15: #{inception_forward.8} parent=0 // pred_check_branch
    %16 = sbr.rel (0) target = $region17
  $region16: #{inception_forward.8} parent=0 // pred_region
    _
  $region17: #{inception_forward.8} parent=0 // pred_fallthru
    _
  %v18 = vld [vmem:[%s0] sm:$0xff]
  %v19 = vld [vmem:[%s0 + $0x8] sm:$0xf]
  %v20 = vld [vmem:[%s0 + $0xc] sm:$0xff]
  %v21 = vld [vmem:[%s0 + $0x14] sm:$0xf]
  %v22 = vld [vmem:[%s0 + $0x18] sm:$0xff]
  %v23 = vld [vmem:[%s0 + $0x20] sm:$0xf]
  %v24 = vld [vmem:[%s0 + $0x24] sm:$0xff]
  %v25 = vld [vmem:[%s0 + $0x2c] sm:$0xf]
  %v26 = vld [vmem:[%s0 + $0x30] sm:$0xff]
  %v27 = vld [vmem:[%s0 + $0x38] sm:$0xf]
  %v28 = vld [vmem:[%s0 + $0x3c] sm:$0xff]
  %v29 = vld [vmem:[%s0 + $0x44] sm:$0xf]
  %v30 = vld [vmem:[%s0 + $0x48] sm:$0xff]
  %v31 = vld [vmem:[%s0 + $0x50] sm:$0xf]
  %v32 = vld [vmem:[%s0 + $0x54] sm:$0xff]
  %v33 = vld [vmem:[%s0 + $0x5c] sm:$0xf]
  %v34 = vld [vmem:[%s0 + $0x60] sm:$0xff]
  %v35 = vld [vmem:[%s0 + $0x68] sm:$0xf]
  %v36 = vld [vmem:[%s0 + $0x6c] sm:$0xff]
  %v37 = vld [vmem:[%s0 + $0x74] sm:$0xf]
  %v38 = vld [vmem:[%s0 + $0x78] sm:$0xff]
  %v39 = vld [vmem:[%s0 + $0x80] sm:$0xf]
  %v40 = vld [vmem:[%s0 + $0x84] sm:$0xff]
  %v41 = vld [vmem:[%s0 + $0x8c] sm:$0xf]
  %v42 = vld [vmem:[%s0 + $0x90] sm:$0xff]
  %v43 = vld [vmem:[%s0 + $0x98] sm:$0xf]
  %v44 = vld [vmem:[%s0 + $0x9c] sm:$0xff]
  %v45 = vld [vmem:[%s0 + $0xa4] sm:$0xf]
  %v46 = vld [vmem:[%s0 + $0xa8] sm:$0xff]
  %v47 = vld [vmem:[%s0 + $0xb0] sm:$0xf]
  %v48 = vld [vmem:[%s0 + $0xb4] sm:$0xff]
  %v49 = vld [vmem:[%s0 + $0xbc] sm:$0xf]
  %v50 = vld [vmem:[%s1] sm:$0xf]
  %v51 = vld [vmem:[%s1 + $0x4] sm:$0xf]
  %v52 = vld [vmem:[%s1 + $0x8] sm:$0xf]
  %v53 = vld [vmem:[%s1 + $0xc] sm:$0xf]
  %v54 = vld [vmem:[%s1 + $0x10] sm:$0xf]
  %v55 = vld [vmem:[%s1 + $0x14] sm:$0xf]
  %v56 = vld [vmem:[%s1 + $0x18] sm:$0xf]
  %v57 = vld [vmem:[%s1 + $0x1c] sm:$0xf]
  %v58 = vld [vmem:[%s1 + $0x20] sm:$0xf]
  %v59 = vld [vmem:[%s1 + $0x24] sm:$0xf]
  %v60 = vld [vmem:[%s1 + $0x28] sm:$0xf]
  %v61 = vld [vmem:[%s1 + $0x2c] sm:$0xf]
  %v62 = vld [vmem:[%s1 + $0x30] sm:$0xf]
  %v63 = vld [vmem:[%s1 + $0x34] sm:$0xf]
  %v64 = vld [vmem:[%s1 + $0x38] sm:$0xf]
  %v65 = vld [vmem:[%s1 + $0x3c] sm:$0xf]
  %v66 = vld [vmem:[%s1 + $0x40] sm:$0xf]
  %v67 = vld [vmem:[%s1 + $0x44] sm:$0xf]
  %v68 = vld [vmem:[%s1 + $0x48] sm:$0xf]
  %v69 = vld [vmem:[%s1 + $0x4c] sm:$0xf]
  %v70 = vld [vmem:[%s1 + $0x50] sm:$0xf]
  %v71 = vld [vmem:[%s1 + $0x54] sm:$0xf]
  %v72 = vld [vmem:[%s1 + $0x58] sm:$0xf]
  %v73 = vld [vmem:[%s1 + $0x5c] sm:$0xf]
  %v74 = vld [vmem:[%s1 + $0x60] sm:$0xf]
  %v75 = vld [vmem:[%s1 + $0x64] sm:$0xf]
  %v76 = vld [vmem:[%s1 + $0x68] sm:$0xf]
  %v77 = vld [vmem:[%s1 + $0x6c] sm:$0xf]
  %v78 = vld [vmem:[%s1 + $0x70] sm:$0xf]
  %v79 = vld [vmem:[%s1 + $0x74] sm:$0xf]
  %v80 = vld [vmem:[%s1 + $0x78] sm:$0xf]
  %v81 = vld [vmem:[%s1 + $0x7c] sm:$0xf]
  %v82 = vld [vmem:[%s1 + $0x80] sm:$0xf]
  %v83 = vld [vmem:[%s1 + $0x84] sm:$0xf]
  %v84 = vld [vmem:[%s1 + $0x88] sm:$0xf]
  %v85 = vld [vmem:[%s1 + $0x8c] sm:$0xf]
  %v86 = vld [vmem:[%s1 + $0x90] sm:$0xf]
  %v87 = vld [vmem:[%s1 + $0x94] sm:$0x1]
  %v120 = vunpack.c.l.b16 %v18
  %v121 = vunpack.c.h.b16 %v18
  %v122 = vunpack.c.l.b16 %v19
  %v123 = vunpack.c.l.b16 %v20
  %v124 = vunpack.c.h.b16 %v20
  %v125 = vunpack.c.l.b16 %v21
  %v126 = vunpack.c.l.b16 %v22
  %v127 = vunpack.c.h.b16 %v22
  %v128 = vunpack.c.l.b16 %v23
  %v129 = vunpack.c.l.b16 %v24
  %v130 = vunpack.c.h.b16 %v24
  %v131 = vunpack.c.l.b16 %v25
  %v132 = vunpack.c.l.b16 %v26
  %v133 = vunpack.c.h.b16 %v26
  %v134 = vunpack.c.l.b16 %v27
  %v135 = vunpack.c.l.b16 %v28
  %v136 = vunpack.c.h.b16 %v28
  %v137 = vunpack.c.l.b16 %v29
  %v138 = vunpack.c.l.b16 %v30
  %v139 = vunpack.c.h.b16 %v30
  %v140 = vunpack.c.l.b16 %v31
  %v141 = vunpack.c.l.b16 %v32
  %v142 = vunpack.c.h.b16 %v32
  %v143 = vunpack.c.l.b16 %v33
  %v144 = vunpack.c.l.b16 %v34
  %v145 = vunpack.c.h.b16 %v34
  %v146 = vunpack.c.l.b16 %v35
  %v147 = vunpack.c.l.b16 %v36
  %v148 = vunpack.c.h.b16 %v36
  %v149 = vunpack.c.l.b16 %v37
  %v150 = vunpack.c.l.b16 %v38
  %v151 = vunpack.c.h.b16 %v38
  %v152 = vunpack.c.l.b16 %v39
  %v153 = vunpack.c.l.b16 %v40
  %v154 = vunpack.c.h.b16 %v40
  %v155 = vunpack.c.l.b16 %v41
  %v156 = vunpack.c.l.b16 %v42
  %v157 = vunpack.c.h.b16 %v42
  %v158 = vunpack.c.l.b16 %v43
  %v159 = vunpack.c.l.b16 %v44
  %v160 = vunpack.c.h.b16 %v44
  %v161 = vunpack.c.l.b16 %v45
  %v162 = vunpack.c.l.b16 %v46
  %v163 = vunpack.c.h.b16 %v46
  %v164 = vunpack.c.l.b16 %v47
  %v165 = vunpack.c.l.b16 %v48
  %v166 = vunpack.c.h.b16 %v48
  %v167 = vunpack.c.l.b16 %v49
  %v168 = vpack.c.b16 %v123, %v120
  %v169 = vpack.c.b16 %v124, %v121
  %v170 = vpack.c.b16 %v125, %v122
  %v171 = vpack.c.b16 %v129, %v126
  %v172 = vpack.c.b16 %v130, %v127
  %v173 = vpack.c.b16 %v131, %v128
  %v174 = vpack.c.b16 %v135, %v132
  %v175 = vpack.c.b16 %v136, %v133
  %v176 = vpack.c.b16 %v137, %v134
  %v177 = vpack.c.b16 %v141, %v138
  %v178 = vpack.c.b16 %v142, %v139
  %v179 = vpack.c.b16 %v143, %v140
  %v180 = vpack.c.b16 %v147, %v144
  %v181 = vpack.c.b16 %v148, %v145
  %v182 = vpack.c.b16 %v149, %v146
  %v183 = vpack.c.b16 %v153, %v150
  %v184 = vpack.c.b16 %v154, %v151
  %v185 = vpack.c.b16 %v155, %v152
  %v186 = vpack.c.b16 %v159, %v156
  %v187 = vpack.c.b16 %v160, %v157
  %v188 = vpack.c.b16 %v161, %v158
  %v189 = vpack.c.b16 %v165, %v162
  %v190 = vpack.c.b16 %v166, %v163
  %v191 = vpack.c.b16 %v167, %v164
  %v246 = vunpack.c.l.b16 %v50
  %v247 = vunpack.c.l.b16 %v51
  %v248 = vunpack.c.l.b16 %v52
  %v249 = vunpack.c.l.b16 %v53
  %v250 = vunpack.c.l.b16 %v54
  %v251 = vunpack.c.l.b16 %v55
  %v252 = vunpack.c.l.b16 %v56
  %v253 = vunpack.c.l.b16 %v57
  %v254 = vunpack.c.l.b16 %v58
  %v255 = vunpack.c.l.b16 %v59
  %v256 = vunpack.c.l.b16 %v60
  %v257 = vunpack.c.l.b16 %v61
  %v258 = vunpack.c.l.b16 %v62
  %v259 = vunpack.c.l.b16 %v63
  %v260 = vunpack.c.l.b16 %v64
  %v261 = vunpack.c.l.b16 %v65
  %v262 = vunpack.c.l.b16 %v66
  %v263 = vunpack.c.l.b16 %v67
  %v264 = vunpack.c.l.b16 %v68
  %v265 = vunpack.c.l.b16 %v69
  %v266 = vunpack.c.l.b16 %v70
  %v267 = vunpack.c.l.b16 %v71
  %v268 = vunpack.c.l.b16 %v72
  %v269 = vunpack.c.l.b16 %v73
  %v270 = vunpack.c.l.b16 %v74
  %v271 = vunpack.c.l.b16 %v75
  %v272 = vunpack.c.l.b16 %v76
  %v273 = vunpack.c.l.b16 %v77
  %v274 = vunpack.c.l.b16 %v78
  %v275 = vunpack.c.l.b16 %v79
  %v276 = vunpack.c.l.b16 %v80
  %v277 = vunpack.c.l.b16 %v81
  %v278 = vunpack.c.l.b16 %v82
  %v279 = vunpack.c.l.b16 %v83
  %v280 = vunpack.c.l.b16 %v84
  %v281 = vunpack.c.l.b16 %v85
  %v282 = vunpack.c.l.b16 %v86
  %v283 = vunpack.c.l.b16 %v87
  %v284 = vpack.c.b16 %v247, %v246
  %v285 = vpack.c.b16 %v249, %v248
  %v286 = vpack.c.b16 %v251, %v250
  %v287 = vpack.c.b16 %v253, %v252
  %v288 = vpack.c.b16 %v255, %v254
  %v289 = vpack.c.b16 %v257, %v256
  %v290 = vpack.c.b16 %v259, %v258
  %v291 = vpack.c.b16 %v261, %v260
  %v292 = vpack.c.b16 %v263, %v262
  %v293 = vpack.c.b16 %v265, %v264
  %v294 = vpack.c.b16 %v267, %v266
  %v295 = vpack.c.b16 %v269, %v268
  %v296 = vpack.c.b16 %v271, %v270
  %v297 = vpack.c.b16 %v273, %v272
  %v298 = vpack.c.b16 %v275, %v274
  %v299 = vpack.c.b16 %v277, %v276
  %v300 = vpack.c.b16 %v279, %v278
  %v301 = vpack.c.b16 %v281, %v280
  %v302 = vpack.c.b16 %v283, %v282
  %vm321 = vcmask 334848
  %v323 = vsel %vm321, %v170, 0
  %v326 = vsel %vm321, %v173, 0
  %v329 = vsel %vm321, %v176, 0
  %v332 = vsel %vm321, %v179, 0
  %v335 = vsel %vm321, %v182, 0
  %v338 = vsel %vm321, %v185, 0
  %v341 = vsel %vm321, %v188, 0
  %v344 = vsel %vm321, %v191, 0
  %vm346 = vcmask 1043456
  %vm347 = vcmask 1044480
  %v348 = vsel %vm346, 4294967295, 65535
  %v349 = vsel %vm347, %v348, 0
  %v351 = vand.u32 %v302, %v349
  %353 = vmatprep.subr.bf16.mxu0 0
  %354 = vmatpush1.bf16.msra.mxu0 %v284
  %355 = vmatprep.subr.bf16.mxu0 0
  %356 = vmatpush1.bf16.msra.mxu0 %v285
  %357 = vmatprep.subr.bf16.mxu0 0
  %358 = vmatpush1.bf16.msra.mxu0 %v286
  %359 = vmatprep.subr.bf16.mxu0 0
  %360 = vmatpush1.bf16.msra.mxu0 %v287
  %361 = vmatprep.subr.bf16.mxu0 0
  %362 = vmatpush1.bf16.msra.mxu0 %v288
  %363 = vmatprep.subr.bf16.mxu0 0
  %364 = vmatpush1.bf16.msra.mxu0 %v289
  %365 = vmatprep.subr.bf16.mxu0 0
  %366 = vmatpush1.bf16.msra.mxu0 %v290
  %367 = vmatprep.subr.bf16.mxu0 0
  %368 = vmatpush1.bf16.msra.mxu0 %v291
  %369 = vmatprep.subr.bf16.mxu0 0
  %370 = vmatpush1.bf16.msra.mxu0 %v292
  %371 = vmatprep.subr.bf16.mxu0 0
  %372 = vmatpush1.bf16.msra.mxu0 %v293
  %373 = vmatprep.subr.bf16.mxu0 0
  %374 = vmatpush1.bf16.msra.mxu0 %v294
  %375 = vmatprep.subr.bf16.mxu0 0
  %376 = vmatpush1.bf16.msra.mxu0 %v295
  %377 = vmatprep.subr.bf16.mxu0 0
  %378 = vmatpush1.bf16.msra.mxu0 %v296
  %379 = vmatprep.subr.bf16.mxu0 0
  %380 = vmatpush1.bf16.msra.mxu0 %v297
  %381 = vmatprep.subr.bf16.mxu0 0
  %382 = vmatpush1.bf16.msra.mxu0 %v298
  %383 = vmatprep.subr.bf16.mxu0 0
  %384 = vmatpush1.bf16.msra.mxu0 %v299
  %385 = vmatprep.mubr.bf16.mxu0 %v169
  %386 = vmatmul.mubr.bf16.gmra.mrb[0].mxu0 %v168
  %v387 = vpop.f32.mrb[0].mxu0
  %v388 = vadd.f32 0.0, %v387
  %v389 = vpop.f32.mrb[0].mxu0
  %v390 = vpop.f32.mrb[0].mxu0
  %v391 = vadd.f32 0.0, %v390
  %v392 = vpop.f32.mrb[0].mxu0
  %393 = vmatprep.mubr.bf16.mxu0 %v172
  %394 = vmatmul.mubr.bf16.gmra.mrb[0].mxu0 %v171
  %v395 = vpop.f32.mrb[0].mxu0
  %v396 = vadd.f32 0.0, %v395
  %v397 = vpop.f32.mrb[0].mxu0
  %v398 = vpop.f32.mrb[0].mxu0
  %v399 = vadd.f32 0.0, %v398
  %v400 = vpop.f32.mrb[0].mxu0
  %401 = vmatprep.mubr.bf16.mxu0 %v175
  %402 = vmatmul.mubr.bf16.gmra.mrb[0].mxu0 %v174
  %v403 = vpop.f32.mrb[0].mxu0
  %v404 = vadd.f32 0.0, %v403
  %v405 = vpop.f32.mrb[0].mxu0
  %v406 = vpop.f32.mrb[0].mxu0
  %v407 = vadd.f32 0.0, %v406
  %v408 = vpop.f32.mrb[0].mxu0
  %409 = vmatprep.mubr.bf16.mxu0 %v178
  %410 = vmatmul.mubr.bf16.gmra.mrb[0].mxu0 %v177
  %v411 = vpop.f32.mrb[0].mxu0
  %v412 = vadd.f32 0.0, %v411
  %v413 = vpop.f32.mrb[0].mxu0
  %v414 = vpop.f32.mrb[0].mxu0
  %v415 = vadd.f32 0.0, %v414
  %v416 = vpop.f32.mrb[0].mxu0
  %417 = vmatprep.mubr.bf16.mxu0 %v181
  %418 = vmatmul.mubr.bf16.gmra.mrb[0].mxu0 %v180
  %v419 = vpop.f32.mrb[0].mxu0
  %v420 = vadd.f32 0.0, %v419
  %v421 = vpop.f32.mrb[0].mxu0
  %v422 = vpop.f32.mrb[0].mxu0
  %v423 = vadd.f32 0.0, %v422
  %v424 = vpop.f32.mrb[0].mxu0
  %425 = vmatprep.mubr.bf16.mxu0 %v184
  %426 = vmatmul.mubr.bf16.gmra.mrb[0].mxu0 %v183
  %v427 = vpop.f32.mrb[0].mxu0
  %v428 = vadd.f32 0.0, %v427
  %v429 = vpop.f32.mrb[0].mxu0
  %v430 = vpop.f32.mrb[0].mxu0
  %v431 = vadd.f32 0.0, %v430
  %v432 = vpop.f32.mrb[0].mxu0
  %433 = vmatprep.mubr.bf16.mxu0 %v187
  %434 = vmatmul.mubr.bf16.gmra.mrb[0].mxu0 %v186
  %v435 = vpop.f32.mrb[0].mxu0
  %v436 = vadd.f32 0.0, %v435
  %v437 = vpop.f32.mrb[0].mxu0
  %v438 = vpop.f32.mrb[0].mxu0
  %v439 = vadd.f32 0.0, %v438
  %v440 = vpop.f32.mrb[0].mxu0
  %441 = vmatprep.mubr.bf16.mxu0 %v190
  %442 = vmatmul.mubr.bf16.gmra.mrb[0].mxu0 %v189
  %v443 = vpop.f32.mrb[0].mxu0
  %v444 = vadd.f32 0.0, %v443
  %v445 = vpop.f32.mrb[0].mxu0
  %v446 = vpop.f32.mrb[0].mxu0
  %v447 = vadd.f32 0.0, %v446
  %v448 = vpop.f32.mrb[0].mxu0
  %449 = vdwg.mxu0
  %450 = vmatprep.subr.bf16.mxu0 0
  %451 = vmatpush1.bf16.msra.mxu0 %v300
  %452 = vmatprep.subr.bf16.mxu0 0
  %453 = vmatpush1.bf16.msra.mxu0 %v301
  %454 = vmatprep.subr.bf16.mxu0 0
  %455 = vmatpush1.bf16.msra.mxu0 %v351
  %456 = vmatprep.subr.bf16.mxu0 0
  %457 = vmatpush1.bf16.msra.mxu0 0
  %458 = vmatprep.subr.bf16.mxu0 0
  %459 = vmatpush1.bf16.msra.mxu0 0
  %460 = vmatprep.subr.bf16.mxu0 0
  %461 = vmatpush1.bf16.msra.mxu0 0
  %462 = vmatprep.subr.bf16.mxu0 0
  %463 = vmatpush1.bf16.msra.mxu0 0
  %464 = vmatprep.subr.bf16.mxu0 0
  %465 = vmatpush1.bf16.msra.mxu0 0
  %466 = vmatprep.subr.bf16.mxu0 0
  %467 = vmatpush1.bf16.msra.mxu0 0
  %468 = vmatprep.subr.bf16.mxu0 0
  %469 = vmatpush1.bf16.msra.mxu0 0
  %470 = vmatprep.subr.bf16.mxu0 0
  %471 = vmatpush1.bf16.msra.mxu0 0
  %472 = vmatprep.subr.bf16.mxu0 0
  %473 = vmatpush1.bf16.msra.mxu0 0
  %474 = vmatprep.subr.bf16.mxu0 0
  %475 = vmatpush1.bf16.msra.mxu0 0
  %476 = vmatprep.subr.bf16.mxu0 0
  %477 = vmatpush1.bf16.msra.mxu0 0
  %478 = vmatprep.subr.bf16.mxu0 0
  %479 = vmatpush1.bf16.msra.mxu0 0
  %480 = vmatprep.subr.bf16.mxu0 0
  %481 = vmatpush1.bf16.msra.mxu0 0
  %482 = vmatprep.mubr.bf16.mxu0 0
  %483 = vmatmul.mubr.bf16.gmra.mrb[0].mxu0 %v323
  %v484 = vpop.f32.mrb[0].mxu0
  %v485 = vadd.f32 %v388, %v484
  %v486 = vpop.f32.mrb[0].mxu0
  %v487 = vpop.f32.mrb[0].mxu0
  %v488 = vadd.f32 %v391, %v487
  %v489 = vpop.f32.mrb[0].mxu0
  %490 = vmatprep.mubr.bf16.mxu0 0
  %491 = vmatmul.mubr.bf16.gmra.mrb[0].mxu0 %v326
  %v492 = vpop.f32.mrb[0].mxu0
  %v493 = vadd.f32 %v396, %v492
  %v494 = vpop.f32.mrb[0].mxu0
  %v495 = vpop.f32.mrb[0].mxu0
  %v496 = vadd.f32 %v399, %v495
  %v497 = vpop.f32.mrb[0].mxu0
  %498 = vmatprep.mubr.bf16.mxu0 0
  %499 = vmatmul.mubr.bf16.gmra.mrb[0].mxu0 %v329
  %v500 = vpop.f32.mrb[0].mxu0
  %v501 = vadd.f32 %v404, %v500
  %v502 = vpop.f32.mrb[0].mxu0
  %v503 = vpop.f32.mrb[0].mxu0
  %v504 = vadd.f32 %v407, %v503
  %v505 = vpop.f32.mrb[0].mxu0
  %506 = vmatprep.mubr.bf16.mxu0 0
  %507 = vmatmul.mubr.bf16.gmra.mrb[0].mxu0 %v332
  %v508 = vpop.f32.mrb[0].mxu0
  %v509 = vadd.f32 %v412, %v508
  %v510 = vpop.f32.mrb[0].mxu0
  %v511 = vpop.f32.mrb[0].mxu0
  %v512 = vadd.f32 %v415, %v511
  %v513 = vpop.f32.mrb[0].mxu0
  %514 = vmatprep.mubr.bf16.mxu0 0
  %515 = vmatmul.mubr.bf16.gmra.mrb[0].mxu0 %v335
  %v516 = vpop.f32.mrb[0].mxu0
  %v517 = vadd.f32 %v420, %v516
  %v518 = vpop.f32.mrb[0].mxu0
  %v519 = vpop.f32.mrb[0].mxu0
  %v520 = vadd.f32 %v423, %v519
  %v521 = vpop.f32.mrb[0].mxu0
  %522 = vmatprep.mubr.bf16.mxu0 0
  %523 = vmatmul.mubr.bf16.gmra.mrb[0].mxu0 %v338
  %v524 = vpop.f32.mrb[0].mxu0
  %v525 = vadd.f32 %v428, %v524
  %v526 = vpop.f32.mrb[0].mxu0
  %v527 = vpop.f32.mrb[0].mxu0
  %v528 = vadd.f32 %v431, %v527
  %v529 = vpop.f32.mrb[0].mxu0
  %530 = vmatprep.mubr.bf16.mxu0 0
  %531 = vmatmul.mubr.bf16.gmra.mrb[0].mxu0 %v341
  %v532 = vpop.f32.mrb[0].mxu0
  %v533 = vadd.f32 %v436, %v532
  %v534 = vpop.f32.mrb[0].mxu0
  %v535 = vpop.f32.mrb[0].mxu0
  %v536 = vadd.f32 %v439, %v535
  %v537 = vpop.f32.mrb[0].mxu0
  %538 = vmatprep.mubr.bf16.mxu0 0
  %539 = vmatmul.mubr.bf16.gmra.mrb[0].mxu0 %v344
  %v540 = vpop.f32.mrb[0].mxu0
  %v541 = vadd.f32 %v444, %v540
  %v542 = vpop.f32.mrb[0].mxu0
  %v543 = vpop.f32.mrb[0].mxu0
  %v544 = vadd.f32 %v447, %v543
  %v545 = vpop.f32.mrb[0].mxu0
  %546 = vdwg.mxu0
  %v547 = vld [vmem:[%s2] sm:$0x1]
  %v548 = vld [vmem:[%s3] sm:$0x1]
  %vm549 = vcmask 138240
  %v550 = vsel %vm549, %v485, 0.0
  %v551 = vsel %vm549, %v488, 0.0
  %v552 = vadd.f32 %v550, %v551
  %v553 = vsel %vm549, %v493, 0.0
  %v554 = vadd.f32 %v552, %v553
  %v555 = vsel %vm549, %v496, 0.0
  %v556 = vadd.f32 %v554, %v555
  %v557 = vsel %vm549, %v501, 0.0
  %v558 = vadd.f32 %v556, %v557
  %v559 = vsel %vm549, %v504, 0.0
  %v560 = vadd.f32 %v558, %v559
  %v561 = vsel %vm549, %v509, 0.0
  %v562 = vadd.f32 %v560, %v561
  %v563 = vsel %vm549, %v512, 0.0
  %v564 = vadd.f32 %v562, %v563
  %v565 = vsel %vm549, %v517, 0.0
  %v566 = vadd.f32 %v564, %v565
  %v567 = vsel %vm549, %v520, 0.0
  %v568 = vadd.f32 %v566, %v567
  %v569 = vsel %vm549, %v525, 0.0
  %v570 = vadd.f32 %v568, %v569
  %v571 = vsel %vm549, %v528, 0.0
  %v572 = vadd.f32 %v570, %v571
  %v573 = vsel %vm549, %v533, 0.0
  %v574 = vadd.f32 %v572, %v573
  %v575 = vsel %vm549, %v536, 0.0
  %v576 = vadd.f32 %v574, %v575
  %v577 = vsel %vm549, %v541, 0.0
  %v578 = vadd.f32 %v576, %v577
  %v579 = vsel %vm549, %v544, 0.0
  %v580 = vadd.f32 %v578, %v579
  %v581 = vrot.slane %v580, 4
  %v582 = vadd.f32 %v580, %v581
  %v583 = vrot.slane %v582, 2
  %v584 = vadd.f32 %v582, %v583
  %v585 = vrot.slane %v584, 1
  %v586 = vadd.f32 %v584, %v585
  %v587 = vmul.f32 %v485, %v485
  %v588 = vmul.f32 %v488, %v488
  %v589 = vmul.f32 %v493, %v493
  %v590 = vmul.f32 %v496, %v496
  %v591 = vmul.f32 %v501, %v501
  %v592 = vmul.f32 %v504, %v504
  %v593 = vmul.f32 %v509, %v509
  %v594 = vmul.f32 %v512, %v512
  %v595 = vmul.f32 %v517, %v517
  %v596 = vmul.f32 %v520, %v520
  %v597 = vmul.f32 %v525, %v525
  %v598 = vmul.f32 %v528, %v528
  %v599 = vmul.f32 %v533, %v533
  %v600 = vmul.f32 %v536, %v536
  %v601 = vmul.f32 %v541, %v541
  %v602 = vmul.f32 %v544, %v544
  %v603 = vsel %vm549, %v587, 0.0
  %v604 = vsel %vm549, %v588, 0.0
  %v605 = vadd.f32 %v603, %v604
  %v606 = vsel %vm549, %v589, 0.0
  %v607 = vadd.f32 %v605, %v606
  %v608 = vsel %vm549, %v590, 0.0
  %v609 = vadd.f32 %v607, %v608
  %v610 = vsel %vm549, %v591, 0.0
  %v611 = vadd.f32 %v609, %v610
  %v612 = vsel %vm549, %v592, 0.0
  %v613 = vadd.f32 %v611, %v612
  %v614 = vsel %vm549, %v593, 0.0
  %v615 = vadd.f32 %v613, %v614
  %v616 = vsel %vm549, %v594, 0.0
  %v617 = vadd.f32 %v615, %v616
  %v618 = vsel %vm549, %v595, 0.0
  %v619 = vadd.f32 %v617, %v618
  %v620 = vsel %vm549, %v596, 0.0
  %v621 = vadd.f32 %v619, %v620
  %v622 = vsel %vm549, %v597, 0.0
  %v623 = vadd.f32 %v621, %v622
  %v624 = vsel %vm549, %v598, 0.0
  %v625 = vadd.f32 %v623, %v624
  %v626 = vsel %vm549, %v599, 0.0
  %v627 = vadd.f32 %v625, %v626
  %v628 = vsel %vm549, %v600, 0.0
  %v629 = vadd.f32 %v627, %v628
  %v630 = vsel %vm549, %v601, 0.0
  %v631 = vadd.f32 %v629, %v630
  %v632 = vsel %vm549, %v602, 0.0
  %v633 = vadd.f32 %v631, %v632
  %v634 = vrot.slane %v633, 4
  %v635 = vadd.f32 %v633, %v634
  %v636 = vrot.slane %v635, 2
  %v637 = vadd.f32 %v635, %v636
  %v638 = vrot.slane %v637, 1
  %v639 = vadd.f32 %v637, %v638
  %v640 = vmul.f32 %v586, 0.0078125
  %v641 = vmul.f32 %v639, 0.0078125
  %v642 = vmul.f32 %v640, %v640
  %v643 = vsub.f32 %v641, %v642
  %v644 = vmax.f32 %v643, 0.0
  %v645 = vadd.f32 %v644, 1e-05
  %v646 = vrsqrt.pop %v645
  %v647 = vmul.f32 %v547, %v646
  %v648 = vmul.f32 %v640, %v647
  %v649 = vsub.f32 %v548, %v648
  %v651 = vlaneseq
  %v652 = vshrl.u32 %v651, 7
  %v653 = vsub.s32 0, %v652
  %v654 = vrot.slane %v647, %v653
  %v656 = vmul.f32 %v485, %v654
  %v657 = vmul.f32 %v488, %v654
  %v658 = vmul.f32 %v493, %v654
  %v659 = vmul.f32 %v496, %v654
  %v660 = vmul.f32 %v501, %v654
  %v661 = vmul.f32 %v504, %v654
  %v662 = vmul.f32 %v509, %v654
  %v663 = vmul.f32 %v512, %v654
  %v664 = vmul.f32 %v517, %v654
  %v665 = vmul.f32 %v520, %v654
  %v666 = vmul.f32 %v525, %v654
  %v667 = vmul.f32 %v528, %v654
  %v668 = vmul.f32 %v533, %v654
  %v669 = vmul.f32 %v536, %v654
  %v670 = vmul.f32 %v541, %v654
  %v671 = vmul.f32 %v544, %v654
  %v673 = vlaneseq
  %v674 = vshrl.u32 %v673, 7
  %v675 = vsub.s32 0, %v674
  %v676 = vrot.slane %v649, %v675
  %v678 = vadd.f32 %v656, %v676
  %v679 = vadd.f32 %v657, %v676
  %v680 = vadd.f32 %v658, %v676
  %v681 = vadd.f32 %v659, %v676
  %v682 = vadd.f32 %v660, %v676
  %v683 = vadd.f32 %v661, %v676
  %v684 = vadd.f32 %v662, %v676
  %v685 = vadd.f32 %v663, %v676
  %v686 = vadd.f32 %v664, %v676
  %v687 = vadd.f32 %v665, %v676
  %v688 = vadd.f32 %v666, %v676
  %v689 = vadd.f32 %v667, %v676
  %v690 = vadd.f32 %v668, %v676
  %v691 = vadd.f32 %v669, %v676
  %v692 = vadd.f32 %v670, %v676
  %v693 = vadd.f32 %v671, %v676
  %vm694 = vcmp.ge.f32.partialorder %v678, 0.0
  %vm695 = vcmp.ge.f32.partialorder %v679, 0.0
  %vm696 = vcmp.ge.f32.partialorder %v680, 0.0
  %vm697 = vcmp.ge.f32.partialorder %v681, 0.0
  %vm698 = vcmp.ge.f32.partialorder %v682, 0.0
  %vm699 = vcmp.ge.f32.partialorder %v683, 0.0
  %vm700 = vcmp.ge.f32.partialorder %v684, 0.0
  %vm701 = vcmp.ge.f32.partialorder %v685, 0.0
  %vm702 = vcmp.ge.f32.partialorder %v686, 0.0
  %vm703 = vcmp.ge.f32.partialorder %v687, 0.0
  %vm704 = vcmp.ge.f32.partialorder %v688, 0.0
  %vm705 = vcmp.ge.f32.partialorder %v689, 0.0
  %vm706 = vcmp.ge.f32.partialorder %v690, 0.0
  %vm707 = vcmp.ge.f32.partialorder %v691, 0.0
  %vm708 = vcmp.ge.f32.partialorder %v692, 0.0
  %vm709 = vcmp.ge.f32.partialorder %v693, 0.0
  %v710 = vmul.f32 %v678, 0.01
  %v711 = vmul.f32 %v679, 0.01
  %v712 = vmul.f32 %v680, 0.01
  %v713 = vmul.f32 %v681, 0.01
  %v714 = vmul.f32 %v682, 0.01
  %v715 = vmul.f32 %v683, 0.01
  %v716 = vmul.f32 %v684, 0.01
  %v717 = vmul.f32 %v685, 0.01
  %v718 = vmul.f32 %v686, 0.01
  %v719 = vmul.f32 %v687, 0.01
  %v720 = vmul.f32 %v688, 0.01
  %v721 = vmul.f32 %v689, 0.01
  %v722 = vmul.f32 %v690, 0.01
  %v723 = vmul.f32 %v691, 0.01
  %v724 = vmul.f32 %v692, 0.01
  %v725 = vmul.f32 %v693, 0.01
  %v726 = vsel %vm694, %v678, %v710
  %v727 = vsel %vm695, %v679, %v711
  %v728 = vsel %vm696, %v680, %v712
  %v729 = vsel %vm697, %v681, %v713
  %v730 = vsel %vm698, %v682, %v714
  %v731 = vsel %vm699, %v683, %v715
  %v732 = vsel %vm700, %v684, %v716
  %v733 = vsel %vm701, %v685, %v717
  %v734 = vsel %vm702, %v686, %v718
  %v735 = vsel %vm703, %v687, %v719
  %v736 = vsel %vm704, %v688, %v720
  %v737 = vsel %vm705, %v689, %v721
  %v738 = vsel %vm706, %v690, %v722
  %v739 = vsel %vm707, %v691, %v723
  %v740 = vsel %vm708, %v692, %v724
  %v741 = vsel %vm709, %v693, %v725
  %742 = vst.msk [vmem:[%s4] sm:$0xff] %vm549, %v726
  %743 = vst.msk [vmem:[%s4 + $0x8] sm:$0xff] %vm549, %v727
  %744 = vst.msk [vmem:[%s4 + $0x10] sm:$0xff] %vm549, %v728
  %745 = vst.msk [vmem:[%s4 + $0x18] sm:$0xff] %vm549, %v729
  %746 = vst.msk [vmem:[%s4 + $0x20] sm:$0xff] %vm549, %v730
  %747 = vst.msk [vmem:[%s4 + $0x28] sm:$0xff] %vm549, %v731
  %748 = vst.msk [vmem:[%s4 + $0x30] sm:$0xff] %vm549, %v732
  %749 = vst.msk [vmem:[%s4 + $0x38] sm:$0xff] %vm549, %v733
  %750 = vst.msk [vmem:[%s4 + $0x40] sm:$0xff] %vm549, %v734
  %751 = vst.msk [vmem:[%s4 + $0x48] sm:$0xff] %vm549, %v735
  %752 = vst.msk [vmem:[%s4 + $0x50] sm:$0xff] %vm549, %v736
  %753 = vst.msk [vmem:[%s4 + $0x58] sm:$0xff] %vm549, %v737
  %754 = vst.msk [vmem:[%s4 + $0x60] sm:$0xff] %vm549, %v738
  %755 = vst.msk [vmem:[%s4 + $0x68] sm:$0xff] %vm549, %v739
  %756 = vst.msk [vmem:[%s4 + $0x70] sm:$0xff] %vm549, %v740
  %757 = vst.msk [vmem:[%s4 + $0x78] sm:$0xff] %vm549, %v741
  // Predicated region
  $region18: #{inception_forward.8} parent=0 // pred_check
    _
  $region19: #{inception_forward.8} parent=0 // pred_check_branch
    %759 = sbr.rel (0) target = $region21
  $region20: #{inception_forward.8} parent=0 // pred_region
    _
  $region21: #{inception_forward.8} parent=0 // pred_fallthru
    _
  // Predicated region
  $region22: #{inception_forward.8} parent=0 // pred_check
    _
  $region23: #{inception_forward.8} parent=0 // pred_check_branch
    %761 = sbr.rel (0) target = $region25
  $region24: #{inception_forward.8} parent=0 // pred_region
    _
  $region25: #{inception_forward.8} parent=0 // pred_fallthru
    _

// kernel: inception_forward.9
$region0: #{inception_forward.9}
  #allocation0 [shape = 'u32[]', space=smem, size = 0x4, offset = 0x4, fixed_abs, tag = 'smem constant byte address 0x4 - core index']
  #allocation1 [shape = 'u32[144,128]{1,0:T(1,128)}', space=vmem, size = 0x12000, scoped, tag = 'internal scratch']
  %s0 = inlined_call_operand.vmem [shape: bf16[128,459], index: 0, kind: input, shape index: {}]
  %s1 = inlined_call_operand.vmem [shape: bf16[459,8], index: 1, kind: input, shape index: {}]
  %s2 = inlined_call_operand.vmem [shape: f32[1,8], index: 2, kind: input, shape index: {}]
  %s3 = inlined_call_operand.vmem [shape: f32[1,8], index: 3, kind: input, shape index: {}]
  %s4 = inlined_call_operand.vmem [shape: f32[128,8], index: 4, kind: output, shape index: {}]
  %s5 = sld [smem:[#allocation0]]
  $region26: #{inception_forward.9} parent=0
    _
  %s7 = ssub.s32 1, %s5
  %s8 = scalar_select 0, %s7, %s5
  // Predicated region
  $region2: #{inception_forward.9} parent=0 // pred_check
    _
  $region3: #{inception_forward.9} parent=0 // pred_check_branch
    %10 = sbr.rel (0) target = $region5
  $region4: #{inception_forward.9} parent=0 // pred_region
    _
  $region5: #{inception_forward.9} parent=0 // pred_fallthru
    _
  // Predicated region
  $region6: #{inception_forward.9} parent=0 // pred_check
    _
  $region7: #{inception_forward.9} parent=0 // pred_check_branch
    %12 = sbr.rel (0) target = $region9
  $region8: #{inception_forward.9} parent=0 // pred_region
    _
  $region9: #{inception_forward.9} parent=0 // pred_fallthru
    _
  // Predicated region
  $region10: #{inception_forward.9} parent=0 // pred_check
    _
  $region11: #{inception_forward.9} parent=0 // pred_check_branch
    %14 = sbr.rel (0) target = $region13
  $region12: #{inception_forward.9} parent=0 // pred_region
    _
  $region13: #{inception_forward.9} parent=0 // pred_fallthru
    _
  // Predicated region
  $region14: #{inception_forward.9} parent=0 // pred_check
    _
  $region15: #{inception_forward.9} parent=0 // pred_check_branch
    %16 = sbr.rel (0) target = $region17
  $region16: #{inception_forward.9} parent=0 // pred_region
    _
  $region17: #{inception_forward.9} parent=0 // pred_fallthru
    _
  %v18 = vld [vmem:[%s0] sm:$0xff]
  %v19 = vld [vmem:[%s0 + $0x8] sm:$0xff]
  %v20 = vld [vmem:[%s0 + $0x10] sm:$0xff]
  %v21 = vld [vmem:[%s0 + $0x18] sm:$0xff]
  %v22 = vld [vmem:[%s0 + $0x20] sm:$0xff]
  %v23 = vld [vmem:[%s0 + $0x28] sm:$0xff]
  %v24 = vld [vmem:[%s0 + $0x30] sm:$0xff]
  %v25 = vld [vmem:[%s0 + $0x38] sm:$0xff]
  %v26 = vld [vmem:[%s0 + $0x40] sm:$0xff]
  %v27 = vld [vmem:[%s0 + $0x48] sm:$0xff]
  %v28 = vld [vmem:[%s0 + $0x50] sm:$0xff]
  %v29 = vld [vmem:[%s0 + $0x58] sm:$0xff]
  %v30 = vld [vmem:[%s0 + $0x60] sm:$0xff]
  %v31 = vld [vmem:[%s0 + $0x68] sm:$0xff]
  %v32 = vld [vmem:[%s0 + $0x70] sm:$0xff]
  %v33 = vld [vmem:[%s0 + $0x78] sm:$0xff]
  %v34 = vld [vmem:[%s0 + $0x80] sm:$0xff]
  %v35 = vld [vmem:[%s0 + $0x88] sm:$0xff]
  %v36 = vld [vmem:[%s0 + $0x90] sm:$0xff]
  %v37 = vld [vmem:[%s0 + $0x98] sm:$0xff]
  %v38 = vld [vmem:[%s0 + $0xa0] sm:$0xff]
  %v39 = vld [vmem:[%s0 + $0xa8] sm:$0xff]
  %v40 = vld [vmem:[%s0 + $0xb0] sm:$0xff]
  %v41 = vld [vmem:[%s0 + $0xb8] sm:$0xff]
  %v42 = vld [vmem:[%s0 + $0xc0] sm:$0xff]
  %v43 = vld [vmem:[%s0 + $0xc8] sm:$0xff]
  %v44 = vld [vmem:[%s0 + $0xd0] sm:$0xff]
  %v45 = vld [vmem:[%s0 + $0xd8] sm:$0xff]
  %v46 = vld [vmem:[%s0 + $0xe0] sm:$0xff]
  %v47 = vld [vmem:[%s0 + $0xe8] sm:$0xff]
  %v48 = vld [vmem:[%s0 + $0xf0] sm:$0xff]
  %v49 = vld [vmem:[%s0 + $0xf8] sm:$0xff]
  %v50 = vld [vmem:[%s1] sm:$0xf]
  %v51 = vld [vmem:[%s1 + $0x4] sm:$0xf]
  %v52 = vld [vmem:[%s1 + $0x8] sm:$0xf]
  %v53 = vld [vmem:[%s1 + $0xc] sm:$0xf]
  %v54 = vld [vmem:[%s1 + $0x10] sm:$0xf]
  %v55 = vld [vmem:[%s1 + $0x14] sm:$0xf]
  %v56 = vld [vmem:[%s1 + $0x18] sm:$0xf]
  %v57 = vld [vmem:[%s1 + $0x1c] sm:$0xf]
  %v58 = vld [vmem:[%s1 + $0x20] sm:$0xf]
  %v59 = vld [vmem:[%s1 + $0x24] sm:$0xf]
  %v60 = vld [vmem:[%s1 + $0x28] sm:$0xf]
  %v61 = vld [vmem:[%s1 + $0x2c] sm:$0xf]
  %v62 = vld [vmem:[%s1 + $0x30] sm:$0xf]
  %v63 = vld [vmem:[%s1 + $0x34] sm:$0xf]
  %v64 = vld [vmem:[%s1 + $0x38] sm:$0xf]
  %v65 = vld [vmem:[%s1 + $0x3c] sm:$0xf]
  %v66 = vld [vmem:[%s1 + $0x40] sm:$0xf]
  %v67 = vld [vmem:[%s1 + $0x44] sm:$0xf]
  %v68 = vld [vmem:[%s1 + $0x48] sm:$0xf]
  %v69 = vld [vmem:[%s1 + $0x4c] sm:$0xf]
  %v70 = vld [vmem:[%s1 + $0x50] sm:$0xf]
  %v71 = vld [vmem:[%s1 + $0x54] sm:$0xf]
  %v72 = vld [vmem:[%s1 + $0x58] sm:$0xf]
  %v73 = vld [vmem:[%s1 + $0x5c] sm:$0xf]
  %v74 = vld [vmem:[%s1 + $0x60] sm:$0xf]
  %v75 = vld [vmem:[%s1 + $0x64] sm:$0xf]
  %v76 = vld [vmem:[%s1 + $0x68] sm:$0xf]
  %v77 = vld [vmem:[%s1 + $0x6c] sm:$0xf]
  %v78 = vld [vmem:[%s1 + $0x70] sm:$0xf]
  %v79 = vld [vmem:[%s1 + $0x74] sm:$0xf]
  %v80 = vld [vmem:[%s1 + $0x78] sm:$0xf]
  %v81 = vld [vmem:[%s1 + $0x7c] sm:$0xf]
  %v82 = vld [vmem:[%s1 + $0x80] sm:$0xf]
  %v83 = vld [vmem:[%s1 + $0x84] sm:$0xf]
  %v84 = vld [vmem:[%s1 + $0x88] sm:$0xf]
  %v85 = vld [vmem:[%s1 + $0x8c] sm:$0xf]
  %v86 = vld [vmem:[%s1 + $0x90] sm:$0xf]
  %v87 = vld [vmem:[%s1 + $0x94] sm:$0xf]
  %v88 = vld [vmem:[%s1 + $0x98] sm:$0xf]
  %v89 = vld [vmem:[%s1 + $0x9c] sm:$0xf]
  %v90 = vld [vmem:[%s1 + $0xa0] sm:$0xf]
  %v91 = vld [vmem:[%s1 + $0xa4] sm:$0xf]
  %v92 = vld [vmem:[%s1 + $0xa8] sm:$0xf]
  %v93 = vld [vmem:[%s1 + $0xac] sm:$0xf]
  %v94 = vld [vmem:[%s1 + $0xb0] sm:$0xf]
  %v95 = vld [vmem:[%s1 + $0xb4] sm:$0xf]
  %v96 = vld [vmem:[%s1 + $0xb8] sm:$0xf]
  %v97 = vld [vmem:[%s1 + $0xbc] sm:$0xf]
  %v98 = vld [vmem:[%s1 + $0xc0] sm:$0xf]
  %v99 = vld [vmem:[%s1 + $0xc4] sm:$0xf]
  %v100 = vld [vmem:[%s1 + $0xc8] sm:$0xf]
  %v101 = vld [vmem:[%s1 + $0xcc] sm:$0xf]
  %v102 = vld [vmem:[%s1 + $0xd0] sm:$0xf]
  %v103 = vld [vmem:[%s1 + $0xd4] sm:$0xf]
  %v104 = vld [vmem:[%s1 + $0xd8] sm:$0xf]
  %v105 = vld [vmem:[%s1 + $0xdc] sm:$0xf]
  %v106 = vld [vmem:[%s1 + $0xe0] sm:$0xf]
  %v107 = vld [vmem:[%s1 + $0xe4] sm:$0x3]
  %v140 = vunpack.c.l.b16 %v18
  %v141 = vunpack.c.h.b16 %v18
  %v142 = vunpack.c.l.b16 %v19
  %v143 = vunpack.c.h.b16 %v19
  %v144 = vunpack.c.l.b16 %v20
  %v145 = vunpack.c.h.b16 %v20
  %v146 = vunpack.c.l.b16 %v21
  %v147 = vunpack.c.h.b16 %v21
  %v148 = vunpack.c.l.b16 %v22
  %v149 = vunpack.c.h.b16 %v22
  %v150 = vunpack.c.l.b16 %v23
  %v151 = vunpack.c.h.b16 %v23
  %v152 = vunpack.c.l.b16 %v24
  %v153 = vunpack.c.h.b16 %v24
  %v154 = vunpack.c.l.b16 %v25
  %v155 = vunpack.c.h.b16 %v25
  %v156 = vunpack.c.l.b16 %v26
  %v157 = vunpack.c.h.b16 %v26
  %v158 = vunpack.c.l.b16 %v27
  %v159 = vunpack.c.h.b16 %v27
  %v160 = vunpack.c.l.b16 %v28
  %v161 = vunpack.c.h.b16 %v28
  %v162 = vunpack.c.l.b16 %v29
  %v163 = vunpack.c.h.b16 %v29
  %v164 = vunpack.c.l.b16 %v30
  %v165 = vunpack.c.h.b16 %v30
  %v166 = vunpack.c.l.b16 %v31
  %v167 = vunpack.c.h.b16 %v31
  %v168 = vunpack.c.l.b16 %v32
  %v169 = vunpack.c.h.b16 %v32
  %v170 = vunpack.c.l.b16 %v33
  %v171 = vunpack.c.h.b16 %v33
  %v172 = vunpack.c.l.b16 %v34
  %v173 = vunpack.c.h.b16 %v34
  %v174 = vunpack.c.l.b16 %v35
  %v175 = vunpack.c.h.b16 %v35
  %v176 = vunpack.c.l.b16 %v36
  %v177 = vunpack.c.h.b16 %v36
  %v178 = vunpack.c.l.b16 %v37
  %v179 = vunpack.c.h.b16 %v37
  %v180 = vunpack.c.l.b16 %v38
  %v181 = vunpack.c.h.b16 %v38
  %v182 = vunpack.c.l.b16 %v39
  %v183 = vunpack.c.h.b16 %v39
  %v184 = vunpack.c.l.b16 %v40
  %v185 = vunpack.c.h.b16 %v40
  %v186 = vunpack.c.l.b16 %v41
  %v187 = vunpack.c.h.b16 %v41
  %v188 = vunpack.c.l.b16 %v42
  %v189 = vunpack.c.h.b16 %v42
  %v190 = vunpack.c.l.b16 %v43
  %v191 = vunpack.c.h.b16 %v43
  %v192 = vunpack.c.l.b16 %v44
  %v193 = vunpack.c.h.b16 %v44
  %v194 = vunpack.c.l.b16 %v45
  %v195 = vunpack.c.h.b16 %v45
  %v196 = vunpack.c.l.b16 %v46
  %v197 = vunpack.c.h.b16 %v46
  %v198 = vunpack.c.l.b16 %v47
  %v199 = vunpack.c.h.b16 %v47
  %v200 = vunpack.c.l.b16 %v48
  %v201 = vunpack.c.h.b16 %v48
  %v202 = vunpack.c.l.b16 %v49
  %v203 = vunpack.c.h.b16 %v49
  %v204 = vpack.c.b16 %v144, %v140
  %v205 = vpack.c.b16 %v145, %v141
  %v206 = vpack.c.b16 %v146, %v142
  %v207 = vpack.c.b16 %v147, %v143
  %v208 = vpack.c.b16 %v152, %v148
  %v209 = vpack.c.b16 %v153, %v149
  %v210 = vpack.c.b16 %v154, %v150
  %v211 = vpack.c.b16 %v155, %v151
  %v212 = vpack.c.b16 %v160, %v156
  %v213 = vpack.c.b16 %v161, %v157
  %v214 = vpack.c.b16 %v162, %v158
  %v215 = vpack.c.b16 %v163, %v159
  %v216 = vpack.c.b16 %v168, %v164
  %v217 = vpack.c.b16 %v169, %v165
  %v218 = vpack.c.b16 %v170, %v166
  %v219 = vpack.c.b16 %v171, %v167
  %v220 = vpack.c.b16 %v176, %v172
  %v221 = vpack.c.b16 %v177, %v173
  %v222 = vpack.c.b16 %v178, %v174
  %v223 = vpack.c.b16 %v179, %v175
  %v224 = vpack.c.b16 %v184, %v180
  %v225 = vpack.c.b16 %v185, %v181
  %v226 = vpack.c.b16 %v186, %v182
  %v227 = vpack.c.b16 %v187, %v183
  %v228 = vpack.c.b16 %v192, %v188
  %v229 = vpack.c.b16 %v193, %v189
  %v230 = vpack.c.b16 %v194, %v190
  %v231 = vpack.c.b16 %v195, %v191
  %v232 = vpack.c.b16 %v200, %v196
  %v233 = vpack.c.b16 %v201, %v197
  %v234 = vpack.c.b16 %v202, %v198
  %v235 = vpack.c.b16 %v203, %v199
  %v318 = vunpack.c.l.b16 %v50
  %v319 = vunpack.c.l.b16 %v51
  %v320 = vunpack.c.l.b16 %v52
  %v321 = vunpack.c.l.b16 %v53
  %v322 = vunpack.c.l.b16 %v54
  %v323 = vunpack.c.l.b16 %v55
  %v324 = vunpack.c.l.b16 %v56
  %v325 = vunpack.c.l.b16 %v57
  %v326 = vunpack.c.l.b16 %v58
  %v327 = vunpack.c.l.b16 %v59
  %v328 = vunpack.c.l.b16 %v60
  %v329 = vunpack.c.l.b16 %v61
  %v330 = vunpack.c.l.b16 %v62
  %v331 = vunpack.c.l.b16 %v63
  %v332 = vunpack.c.l.b16 %v64
  %v333 = vunpack.c.l.b16 %v65
  %v334 = vunpack.c.l.b16 %v66
  %v335 = vunpack.c.l.b16 %v67
  %v336 = vunpack.c.l.b16 %v68
  %v337 = vunpack.c.l.b16 %v69
  %v338 = vunpack.c.l.b16 %v70
  %v339 = vunpack.c.l.b16 %v71
  %v340 = vunpack.c.l.b16 %v72
  %v341 = vunpack.c.l.b16 %v73
  %v342 = vunpack.c.l.b16 %v74
  %v343 = vunpack.c.l.b16 %v75
  %v344 = vunpack.c.l.b16 %v76
  %v345 = vunpack.c.l.b16 %v77
  %v346 = vunpack.c.l.b16 %v78
  %v347 = vunpack.c.l.b16 %v79
  %v348 = vunpack.c.l.b16 %v80
  %v349 = vunpack.c.l.b16 %v81
  %v350 = vunpack.c.l.b16 %v82
  %v351 = vunpack.c.l.b16 %v83
  %v352 = vunpack.c.l.b16 %v84
  %v353 = vunpack.c.l.b16 %v85
  %v354 = vunpack.c.l.b16 %v86
  %v355 = vunpack.c.l.b16 %v87
  %v356 = vunpack.c.l.b16 %v88
  %v357 = vunpack.c.l.b16 %v89
  %v358 = vunpack.c.l.b16 %v90
  %v359 = vunpack.c.l.b16 %v91
  %v360 = vunpack.c.l.b16 %v92
  %v361 = vunpack.c.l.b16 %v93
  %v362 = vunpack.c.l.b16 %v94
  %v363 = vunpack.c.l.b16 %v95
  %v364 = vunpack.c.l.b16 %v96
  %v365 = vunpack.c.l.b16 %v97
  %v366 = vunpack.c.l.b16 %v98
  %v367 = vunpack.c.l.b16 %v99
  %v368 = vunpack.c.l.b16 %v100
  %v369 = vunpack.c.l.b16 %v101
  %v370 = vunpack.c.l.b16 %v102
  %v371 = vunpack.c.l.b16 %v103
  %v372 = vunpack.c.l.b16 %v104
  %v373 = vunpack.c.l.b16 %v105
  %v374 = vunpack.c.l.b16 %v106
  %v375 = vunpack.c.l.b16 %v107
  %v376 = vpack.c.b16 %v319, %v318
  %v377 = vpack.c.b16 %v321, %v320
  %v378 = vpack.c.b16 %v323, %v322
  %v379 = vpack.c.b16 %v325, %v324
  %v380 = vpack.c.b16 %v327, %v326
  %v381 = vpack.c.b16 %v329, %v328
  %v382 = vpack.c.b16 %v331, %v330
  %v383 = vpack.c.b16 %v333, %v332
  %v384 = vpack.c.b16 %v335, %v334
  %v385 = vpack.c.b16 %v337, %v336
  %v386 = vpack.c.b16 %v339, %v338
  %v387 = vpack.c.b16 %v341, %v340
  %v388 = vpack.c.b16 %v343, %v342
  %v389 = vpack.c.b16 %v345, %v344
  %v390 = vpack.c.b16 %v347, %v346
  %v391 = vpack.c.b16 %v349, %v348
  %v392 = vpack.c.b16 %v351, %v350
  %v393 = vpack.c.b16 %v353, %v352
  %v394 = vpack.c.b16 %v355, %v354
  %v395 = vpack.c.b16 %v357, %v356
  %v396 = vpack.c.b16 %v359, %v358
  %v397 = vpack.c.b16 %v361, %v360
  %v398 = vpack.c.b16 %v363, %v362
  %v399 = vpack.c.b16 %v365, %v364
  %v400 = vpack.c.b16 %v367, %v366
  %v401 = vpack.c.b16 %v369, %v368
  %v402 = vpack.c.b16 %v371, %v370
  %v403 = vpack.c.b16 %v373, %v372
  %v404 = vpack.c.b16 %v375, %v374
  %vm433 = vcmask 613376
  %v435 = vsel %vm433, %v207, 0
  %v438 = vsel %vm433, %v211, 0
  %v441 = vsel %vm433, %v215, 0
  %v444 = vsel %vm433, %v219, 0
  %v447 = vsel %vm433, %v223, 0
  %v450 = vsel %vm433, %v227, 0
  %v453 = vsel %vm433, %v231, 0
  %v456 = vsel %vm433, %v235, 0
  %vm458 = vcmask 1044480
  %vm459 = vcmask 1045504
  %v460 = vsel %vm458, 4294967295, 65535
  %v461 = vsel %vm459, %v460, 0
  %v463 = vand.u32 %v404, %v461
  %465 = vmatprep.subr.bf16.mxu0 0
  %466 = vmatpush1.bf16.msra.mxu0 %v376
  %467 = vmatprep.subr.bf16.mxu0 0
  %468 = vmatpush1.bf16.msra.mxu0 %v377
  %469 = vmatprep.subr.bf16.mxu0 0
  %470 = vmatpush1.bf16.msra.mxu0 %v378
  %471 = vmatprep.subr.bf16.mxu0 0
  %472 = vmatpush1.bf16.msra.mxu0 %v379
  %473 = vmatprep.subr.bf16.mxu0 0
  %474 = vmatpush1.bf16.msra.mxu0 %v380
  %475 = vmatprep.subr.bf16.mxu0 0
  %476 = vmatpush1.bf16.msra.mxu0 %v381
  %477 = vmatprep.subr.bf16.mxu0 0
  %478 = vmatpush1.bf16.msra.mxu0 %v382
  %479 = vmatprep.subr.bf16.mxu0 0
  %480 = vmatpush1.bf16.msra.mxu0 %v383
  %481 = vmatprep.subr.bf16.mxu0 0
  %482 = vmatpush1.bf16.msra.mxu0 %v384
  %483 = vmatprep.subr.bf16.mxu0 0
  %484 = vmatpush1.bf16.msra.mxu0 %v385
  %485 = vmatprep.subr.bf16.mxu0 0
  %486 = vmatpush1.bf16.msra.mxu0 %v386
  %487 = vmatprep.subr.bf16.mxu0 0
  %488 = vmatpush1.bf16.msra.mxu0 %v387
  %489 = vmatprep.subr.bf16.mxu0 0
  %490 = vmatpush1.bf16.msra.mxu0 %v388
  %491 = vmatprep.subr.bf16.mxu0 0
  %492 = vmatpush1.bf16.msra.mxu0 %v389
  %493 = vmatprep.subr.bf16.mxu0 0
  %494 = vmatpush1.bf16.msra.mxu0 %v390
  %495 = vmatprep.subr.bf16.mxu0 0
  %496 = vmatpush1.bf16.msra.mxu0 %v391
  %497 = vmatprep.mubr.bf16.mxu0 %v205
  %498 = vmatmul.mubr.bf16.gmra.mrb[0].mxu0 %v204
  %v499 = vpop.f32.mrb[0].mxu0
  %v500 = vadd.f32 0.0, %v499
  %v501 = vpop.f32.mrb[0].mxu0
  %v502 = vpop.f32.mrb[0].mxu0
  %v503 = vadd.f32 0.0, %v502
  %v504 = vpop.f32.mrb[0].mxu0
  %505 = vmatprep.mubr.bf16.mxu0 %v209
  %506 = vmatmul.mubr.bf16.gmra.mrb[0].mxu0 %v208
  %v507 = vpop.f32.mrb[0].mxu0
  %v508 = vadd.f32 0.0, %v507
  %v509 = vpop.f32.mrb[0].mxu0
  %v510 = vpop.f32.mrb[0].mxu0
  %v511 = vadd.f32 0.0, %v510
  %v512 = vpop.f32.mrb[0].mxu0
  %513 = vmatprep.mubr.bf16.mxu0 %v213
  %514 = vmatmul.mubr.bf16.gmra.mrb[0].mxu0 %v212
  %v515 = vpop.f32.mrb[0].mxu0
  %v516 = vadd.f32 0.0, %v515
  %v517 = vpop.f32.mrb[0].mxu0
  %v518 = vpop.f32.mrb[0].mxu0
  %v519 = vadd.f32 0.0, %v518
  %v520 = vpop.f32.mrb[0].mxu0
  %521 = vmatprep.mubr.bf16.mxu0 %v217
  %522 = vmatmul.mubr.bf16.gmra.mrb[0].mxu0 %v216
  %v523 = vpop.f32.mrb[0].mxu0
  %v524 = vadd.f32 0.0, %v523
  %v525 = vpop.f32.mrb[0].mxu0
  %v526 = vpop.f32.mrb[0].mxu0
  %v527 = vadd.f32 0.0, %v526
  %v528 = vpop.f32.mrb[0].mxu0
  %529 = vmatprep.mubr.bf16.mxu0 %v221
  %530 = vmatmul.mubr.bf16.gmra.mrb[0].mxu0 %v220
  %v531 = vpop.f32.mrb[0].mxu0
  %v532 = vadd.f32 0.0, %v531
  %v533 = vpop.f32.mrb[0].mxu0
  %v534 = vpop.f32.mrb[0].mxu0
  %v535 = vadd.f32 0.0, %v534
  %v536 = vpop.f32.mrb[0].mxu0
  %537 = vmatprep.mubr.bf16.mxu0 %v225
  %538 = vmatmul.mubr.bf16.gmra.mrb[0].mxu0 %v224
  %v539 = vpop.f32.mrb[0].mxu0
  %v540 = vadd.f32 0.0, %v539
  %v541 = vpop.f32.mrb[0].mxu0
  %v542 = vpop.f32.mrb[0].mxu0
  %v543 = vadd.f32 0.0, %v542
  %v544 = vpop.f32.mrb[0].mxu0
  %545 = vmatprep.mubr.bf16.mxu0 %v229
  %546 = vmatmul.mubr.bf16.gmra.mrb[0].mxu0 %v228
  %v547 = vpop.f32.mrb[0].mxu0
  %v548 = vadd.f32 0.0, %v547
  %v549 = vpop.f32.mrb[0].mxu0
  %v550 = vpop.f32.mrb[0].mxu0
  %v551 = vadd.f32 0.0, %v550
  %v552 = vpop.f32.mrb[0].mxu0
  %553 = vmatprep.mubr.bf16.mxu0 %v233
  %554 = vmatmul.mubr.bf16.gmra.mrb[0].mxu0 %v232
  %v555 = vpop.f32.mrb[0].mxu0
  %v556 = vadd.f32 0.0, %v555
  %v557 = vpop.f32.mrb[0].mxu0
  %v558 = vpop.f32.mrb[0].mxu0
  %v559 = vadd.f32 0.0, %v558
  %v560 = vpop.f32.mrb[0].mxu0
  %561 = vdwg.mxu0
  %562 = vmatprep.subr.bf16.mxu0 0
  %563 = vmatpush1.bf16.msra.mxu0 %v392
  %564 = vmatprep.subr.bf16.mxu0 0
  %565 = vmatpush1.bf16.msra.mxu0 %v393
  %566 = vmatprep.subr.bf16.mxu0 0
  %567 = vmatpush1.bf16.msra.mxu0 %v394
  %568 = vmatprep.subr.bf16.mxu0 0
  %569 = vmatpush1.bf16.msra.mxu0 %v395
  %570 = vmatprep.subr.bf16.mxu0 0
  %571 = vmatpush1.bf16.msra.mxu0 %v396
  %572 = vmatprep.subr.bf16.mxu0 0
  %573 = vmatpush1.bf16.msra.mxu0 %v397
  %574 = vmatprep.subr.bf16.mxu0 0
  %575 = vmatpush1.bf16.msra.mxu0 %v398
  %576 = vmatprep.subr.bf16.mxu0 0
  %577 = vmatpush1.bf16.msra.mxu0 %v399
  %578 = vmatprep.subr.bf16.mxu0 0
  %579 = vmatpush1.bf16.msra.mxu0 %v400
  %580 = vmatprep.subr.bf16.mxu0 0
  %581 = vmatpush1.bf16.msra.mxu0 %v401
  %582 = vmatprep.subr.bf16.mxu0 0
  %583 = vmatpush1.bf16.msra.mxu0 %v402
  %584 = vmatprep.subr.bf16.mxu0 0
  %585 = vmatpush1.bf16.msra.mxu0 %v403
  %586 = vmatprep.subr.bf16.mxu0 0
  %587 = vmatpush1.bf16.msra.mxu0 %v463
  %588 = vmatprep.subr.bf16.mxu0 0
  %589 = vmatpush1.bf16.msra.mxu0 0
  %590 = vmatprep.subr.bf16.mxu0 0
  %591 = vmatpush1.bf16.msra.mxu0 0
  %592 = vmatprep.subr.bf16.mxu0 0
  %593 = vmatpush1.bf16.msra.mxu0 0
  %594 = vmatprep.mubr.bf16.mxu0 %v435
  %595 = vmatmul.mubr.bf16.gmra.mrb[0].mxu0 %v206
  %v596 = vpop.f32.mrb[0].mxu0
  %v597 = vadd.f32 %v500, %v596
  %v598 = vpop.f32.mrb[0].mxu0
  %v599 = vpop.f32.mrb[0].mxu0
  %v600 = vadd.f32 %v503, %v599
  %v601 = vpop.f32.mrb[0].mxu0
  %602 = vmatprep.mubr.bf16.mxu0 %v438
  %603 = vmatmul.mubr.bf16.gmra.mrb[0].mxu0 %v210
  %v604 = vpop.f32.mrb[0].mxu0
  %v605 = vadd.f32 %v508, %v604
  %v606 = vpop.f32.mrb[0].mxu0
  %v607 = vpop.f32.mrb[0].mxu0
  %v608 = vadd.f32 %v511, %v607
  %v609 = vpop.f32.mrb[0].mxu0
  %610 = vmatprep.mubr.bf16.mxu0 %v441
  %611 = vmatmul.mubr.bf16.gmra.mrb[0].mxu0 %v214
  %v612 = vpop.f32.mrb[0].mxu0
  %v613 = vadd.f32 %v516, %v612
  %v614 = vpop.f32.mrb[0].mxu0
  %v615 = vpop.f32.mrb[0].mxu0
  %v616 = vadd.f32 %v519, %v615
  %v617 = vpop.f32.mrb[0].mxu0
  %618 = vmatprep.mubr.bf16.mxu0 %v444
  %619 = vmatmul.mubr.bf16.gmra.mrb[0].mxu0 %v218
  %v620 = vpop.f32.mrb[0].mxu0
  %v621 = vadd.f32 %v524, %v620
  %v622 = vpop.f32.mrb[0].mxu0
  %v623 = vpop.f32.mrb[0].mxu0
  %v624 = vadd.f32 %v527, %v623
  %v625 = vpop.f32.mrb[0].mxu0
  %626 = vmatprep.mubr.bf16.mxu0 %v447
  %627 = vmatmul.mubr.bf16.gmra.mrb[0].mxu0 %v222
  %v628 = vpop.f32.mrb[0].mxu0
  %v629 = vadd.f32 %v532, %v628
  %v630 = vpop.f32.mrb[0].mxu0
  %v631 = vpop.f32.mrb[0].mxu0
  %v632 = vadd.f32 %v535, %v631
  %v633 = vpop.f32.mrb[0].mxu0
  %634 = vmatprep.mubr.bf16.mxu0 %v450
  %635 = vmatmul.mubr.bf16.gmra.mrb[0].mxu0 %v226
  %v636 = vpop.f32.mrb[0].mxu0
  %v637 = vadd.f32 %v540, %v636
  %v638 = vpop.f32.mrb[0].mxu0
  %v639 = vpop.f32.mrb[0].mxu0
  %v640 = vadd.f32 %v543, %v639
  %v641 = vpop.f32.mrb[0].mxu0
  %642 = vmatprep.mubr.bf16.mxu0 %v453
  %643 = vmatmul.mubr.bf16.gmra.mrb[0].mxu0 %v230
  %v644 = vpop.f32.mrb[0].mxu0
  %v645 = vadd.f32 %v548, %v644
  %v646 = vpop.f32.mrb[0].mxu0
  %v647 = vpop.f32.mrb[0].mxu0
  %v648 = vadd.f32 %v551, %v647
  %v649 = vpop.f32.mrb[0].mxu0
  %650 = vmatprep.mubr.bf16.mxu0 %v456
  %651 = vmatmul.mubr.bf16.gmra.mrb[0].mxu0 %v234
  %v652 = vpop.f32.mrb[0].mxu0
  %v653 = vadd.f32 %v556, %v652
  %v654 = vpop.f32.mrb[0].mxu0
  %v655 = vpop.f32.mrb[0].mxu0
  %v656 = vadd.f32 %v559, %v655
  %v657 = vpop.f32.mrb[0].mxu0
  %658 = vdwg.mxu0
  %v659 = vld [vmem:[%s2] sm:$0x1]
  %v660 = vld [vmem:[%s3] sm:$0x1]
  %vm661 = vcmask 64512
  %v662 = vsel %vm661, %v597, 0.0
  %v663 = vsel %vm661, %v600, 0.0
  %v664 = vadd.f32 %v662, %v663
  %v665 = vsel %vm661, %v605, 0.0
  %v666 = vadd.f32 %v664, %v665
  %v667 = vsel %vm661, %v608, 0.0
  %v668 = vadd.f32 %v666, %v667
  %v669 = vsel %vm661, %v613, 0.0
  %v670 = vadd.f32 %v668, %v669
  %v671 = vsel %vm661, %v616, 0.0
  %v672 = vadd.f32 %v670, %v671
  %v673 = vsel %vm661, %v621, 0.0
  %v674 = vadd.f32 %v672, %v673
  %v675 = vsel %vm661, %v624, 0.0
  %v676 = vadd.f32 %v674, %v675
  %v677 = vsel %vm661, %v629, 0.0
  %v678 = vadd.f32 %v676, %v677
  %v679 = vsel %vm661, %v632, 0.0
  %v680 = vadd.f32 %v678, %v679
  %v681 = vsel %vm661, %v637, 0.0
  %v682 = vadd.f32 %v680, %v681
  %v683 = vsel %vm661, %v640, 0.0
  %v684 = vadd.f32 %v682, %v683
  %v685 = vsel %vm661, %v645, 0.0
  %v686 = vadd.f32 %v684, %v685
  %v687 = vsel %vm661, %v648, 0.0
  %v688 = vadd.f32 %v686, %v687
  %v689 = vsel %vm661, %v653, 0.0
  %v690 = vadd.f32 %v688, %v689
  %v691 = vsel %vm661, %v656, 0.0
  %v692 = vadd.f32 %v690, %v691
  %v693 = vrot.slane %v692, 4
  %v694 = vadd.f32 %v692, %v693
  %v695 = vrot.slane %v694, 2
  %v696 = vadd.f32 %v694, %v695
  %v697 = vrot.slane %v696, 1
  %v698 = vadd.f32 %v696, %v697
  %v699 = vmul.f32 %v597, %v597
  %v700 = vmul.f32 %v600, %v600
  %v701 = vmul.f32 %v605, %v605
  %v702 = vmul.f32 %v608, %v608
  %v703 = vmul.f32 %v613, %v613
  %v704 = vmul.f32 %v616, %v616
  %v705 = vmul.f32 %v621, %v621
  %v706 = vmul.f32 %v624, %v624
  %v707 = vmul.f32 %v629, %v629
  %v708 = vmul.f32 %v632, %v632
  %v709 = vmul.f32 %v637, %v637
  %v710 = vmul.f32 %v640, %v640
  %v711 = vmul.f32 %v645, %v645
  %v712 = vmul.f32 %v648, %v648
  %v713 = vmul.f32 %v653, %v653
  %v714 = vmul.f32 %v656, %v656
  %v715 = vsel %vm661, %v699, 0.0
  %v716 = vsel %vm661, %v700, 0.0
  %v717 = vadd.f32 %v715, %v716
  %v718 = vsel %vm661, %v701, 0.0
  %v719 = vadd.f32 %v717, %v718
  %v720 = vsel %vm661, %v702, 0.0
  %v721 = vadd.f32 %v719, %v720
  %v722 = vsel %vm661, %v703, 0.0
  %v723 = vadd.f32 %v721, %v722
  %v724 = vsel %vm661, %v704, 0.0
  %v725 = vadd.f32 %v723, %v724
  %v726 = vsel %vm661, %v705, 0.0
  %v727 = vadd.f32 %v725, %v726
  %v728 = vsel %vm661, %v706, 0.0
  %v729 = vadd.f32 %v727, %v728
  %v730 = vsel %vm661, %v707, 0.0
  %v731 = vadd.f32 %v729, %v730
  %v732 = vsel %vm661, %v708, 0.0
  %v733 = vadd.f32 %v731, %v732
  %v734 = vsel %vm661, %v709, 0.0
  %v735 = vadd.f32 %v733, %v734
  %v736 = vsel %vm661, %v710, 0.0
  %v737 = vadd.f32 %v735, %v736
  %v738 = vsel %vm661, %v711, 0.0
  %v739 = vadd.f32 %v737, %v738
  %v740 = vsel %vm661, %v712, 0.0
  %v741 = vadd.f32 %v739, %v740
  %v742 = vsel %vm661, %v713, 0.0
  %v743 = vadd.f32 %v741, %v742
  %v744 = vsel %vm661, %v714, 0.0
  %v745 = vadd.f32 %v743, %v744
  %v746 = vrot.slane %v745, 4
  %v747 = vadd.f32 %v745, %v746
  %v748 = vrot.slane %v747, 2
  %v749 = vadd.f32 %v747, %v748
  %v750 = vrot.slane %v749, 1
  %v751 = vadd.f32 %v749, %v750
  %v752 = vmul.f32 %v698, 0.0078125
  %v753 = vmul.f32 %v751, 0.0078125
  %v754 = vmul.f32 %v752, %v752
  %v755 = vsub.f32 %v753, %v754
  %v756 = vmax.f32 %v755, 0.0
  %v757 = vadd.f32 %v756, 1e-05
  %v758 = vrsqrt.pop %v757
  %v759 = vmul.f32 %v659, %v758
  %v760 = vmul.f32 %v752, %v759
  %v761 = vsub.f32 %v660, %v760
  %v763 = vlaneseq
  %v764 = vshrl.u32 %v763, 7
  %v765 = vsub.s32 0, %v764
  %v766 = vrot.slane %v759, %v765
  %v768 = vmul.f32 %v597, %v766
  %v769 = vmul.f32 %v600, %v766
  %v770 = vmul.f32 %v605, %v766
  %v771 = vmul.f32 %v608, %v766
  %v772 = vmul.f32 %v613, %v766
  %v773 = vmul.f32 %v616, %v766
  %v774 = vmul.f32 %v621, %v766
  %v775 = vmul.f32 %v624, %v766
  %v776 = vmul.f32 %v629, %v766
  %v777 = vmul.f32 %v632, %v766
  %v778 = vmul.f32 %v637, %v766
  %v779 = vmul.f32 %v640, %v766
  %v780 = vmul.f32 %v645, %v766
  %v781 = vmul.f32 %v648, %v766
  %v782 = vmul.f32 %v653, %v766
  %v783 = vmul.f32 %v656, %v766
  %v785 = vlaneseq
  %v786 = vshrl.u32 %v785, 7
  %v787 = vsub.s32 0, %v786
  %v788 = vrot.slane %v761, %v787
  %v790 = vadd.f32 %v768, %v788
  %v791 = vadd.f32 %v769, %v788
  %v792 = vadd.f32 %v770, %v788
  %v793 = vadd.f32 %v771, %v788
  %v794 = vadd.f32 %v772, %v788
  %v795 = vadd.f32 %v773, %v788
  %v796 = vadd.f32 %v774, %v788
  %v797 = vadd.f32 %v775, %v788
  %v798 = vadd.f32 %v776, %v788
  %v799 = vadd.f32 %v777, %v788
  %v800 = vadd.f32 %v778, %v788
  %v801 = vadd.f32 %v779, %v788
  %v802 = vadd.f32 %v780, %v788
  %v803 = vadd.f32 %v781, %v788
  %v804 = vadd.f32 %v782, %v788
  %v805 = vadd.f32 %v783, %v788
  %vm806 = vcmp.ge.f32.partialorder %v790, 0.0
  %vm807 = vcmp.ge.f32.partialorder %v791, 0.0
  %vm808 = vcmp.ge.f32.partialorder %v792, 0.0
  %vm809 = vcmp.ge.f32.partialorder %v793, 0.0
  %vm810 = vcmp.ge.f32.partialorder %v794, 0.0
  %vm811 = vcmp.ge.f32.partialorder %v795, 0.0
  %vm812 = vcmp.ge.f32.partialorder %v796, 0.0
  %vm813 = vcmp.ge.f32.partialorder %v797, 0.0
  %vm814 = vcmp.ge.f32.partialorder %v798, 0.0
  %vm815 = vcmp.ge.f32.partialorder %v799, 0.0
  %vm816 = vcmp.ge.f32.partialorder %v800, 0.0
  %vm817 = vcmp.ge.f32.partialorder %v801, 0.0
  %vm818 = vcmp.ge.f32.partialorder %v802, 0.0
  %vm819 = vcmp.ge.f32.partialorder %v803, 0.0
  %vm820 = vcmp.ge.f32.partialorder %v804, 0.0
  %vm821 = vcmp.ge.f32.partialorder %v805, 0.0
  %v822 = vmul.f32 %v790, 0.01
  %v823 = vmul.f32 %v791, 0.01
  %v824 = vmul.f32 %v792, 0.01
  %v825 = vmul.f32 %v793, 0.01
  %v826 = vmul.f32 %v794, 0.01
  %v827 = vmul.f32 %v795, 0.01
  %v828 = vmul.f32 %v796, 0.01
  %v829 = vmul.f32 %v797, 0.01
  %v830 = vmul.f32 %v798, 0.01
  %v831 = vmul.f32 %v799, 0.01
  %v832 = vmul.f32 %v800, 0.01
  %v833 = vmul.f32 %v801, 0.01
  %v834 = vmul.f32 %v802, 0.01
  %v835 = vmul.f32 %v803, 0.01
  %v836 = vmul.f32 %v804, 0.01
  %v837 = vmul.f32 %v805, 0.01
  %v838 = vsel %vm806, %v790, %v822
  %v839 = vsel %vm807, %v791, %v823
  %v840 = vsel %vm808, %v792, %v824
  %v841 = vsel %vm809, %v793, %v825
  %v842 = vsel %vm810, %v794, %v826
  %v843 = vsel %vm811, %v795, %v827
  %v844 = vsel %vm812, %v796, %v828
  %v845 = vsel %vm813, %v797, %v829
  %v846 = vsel %vm814, %v798, %v830
  %v847 = vsel %vm815, %v799, %v831
  %v848 = vsel %vm816, %v800, %v832
  %v849 = vsel %vm817, %v801, %v833
  %v850 = vsel %vm818, %v802, %v834
  %v851 = vsel %vm819, %v803, %v835
  %v852 = vsel %vm820, %v804, %v836
  %v853 = vsel %vm821, %v805, %v837
  %854 = vst.msk [vmem:[%s4] sm:$0xff] %vm661, %v838
  %855 = vst.msk [vmem:[%s4 + $0x8] sm:$0xff] %vm661, %v839
  %856 = vst.msk [vmem:[%s4 + $0x10] sm:$0xff] %vm661, %v840
  %857 = vst.msk [vmem:[%s4 + $0x18] sm:$0xff] %vm661, %v841
  %858 = vst.msk [vmem:[%s4 + $0x20] sm:$0xff] %vm661, %v842
  %859 = vst.msk [vmem:[%s4 + $0x28] sm:$0xff] %vm661, %v843
  %860 = vst.msk [vmem:[%s4 + $0x30] sm:$0xff] %vm661, %v844
  %861 = vst.msk [vmem:[%s4 + $0x38] sm:$0xff] %vm661, %v845
  %862 = vst.msk [vmem:[%s4 + $0x40] sm:$0xff] %vm661, %v846
  %863 = vst.msk [vmem:[%s4 + $0x48] sm:$0xff] %vm661, %v847
  %864 = vst.msk [vmem:[%s4 + $0x50] sm:$0xff] %vm661, %v848
  %865 = vst.msk [vmem:[%s4 + $0x58] sm:$0xff] %vm661, %v849
  %866 = vst.msk [vmem:[%s4 + $0x60] sm:$0xff] %vm661, %v850
  %867 = vst.msk [vmem:[%s4 + $0x68] sm:$0xff] %vm661, %v851
  %868 = vst.msk [vmem:[%s4 + $0x70] sm:$0xff] %vm661, %v852
  %869 = vst.msk [vmem:[%s4 + $0x78] sm:$0xff] %vm661, %v853
  // Predicated region
  $region18: #{inception_forward.9} parent=0 // pred_check
    _
  $region19: #{inception_forward.9} parent=0 // pred_check_branch
    %871 = sbr.rel (0) target = $region21
  $region20: #{inception_forward.9} parent=0 // pred_region
    _
  $region21: #{inception_forward.9} parent=0 // pred_fallthru
    _
  // Predicated region
  $region22: #{inception_forward.9} parent=0 // pred_check
    _
  $region23: #{inception_forward.9} parent=0 // pred_check_branch
    %873 = sbr.rel (0) target = $region25
  $region24: #{inception_forward.9} parent=0 // pred_region
    _
  $region25: #{inception_forward.9} parent=0 // pred_fallthru
    _

// kernel: inception_forward.10
$region0: #{inception_forward.10}
  #allocation0 [shape = 'u32[]', space=smem, size = 0x4, offset = 0x4, fixed_abs, tag = 'smem constant byte address 0x4 - core index']
  #allocation1 [shape = 'u32[144,128]{1,0:T(1,128)}', space=vmem, size = 0x12000, scoped, tag = 'internal scratch']
  %s0 = inlined_call_operand.vmem [shape: bf16[128,1000], index: 0, kind: input, shape index: {}]
  %s1 = inlined_call_operand.vmem [shape: bf16[1000,21], index: 1, kind: input, shape index: {}]
  %s2 = inlined_call_operand.vmem [shape: f32[1,21], index: 2, kind: input, shape index: {}]
  %s3 = inlined_call_operand.vmem [shape: f32[1,21], index: 3, kind: input, shape index: {}]
  %s4 = inlined_call_operand.vmem [shape: f32[128,21], index: 4, kind: output, shape index: {}]
  %s5 = sld [smem:[#allocation0]]
  $region26: #{inception_forward.10} parent=0
    _
  %s7 = ssub.s32 1, %s5
  %s8 = scalar_select 0, %s7, %s5
  // Predicated region
  $region2: #{inception_forward.10} parent=0 // pred_check
    _
  $region3: #{inception_forward.10} parent=0 // pred_check_branch
    %10 = sbr.rel (0) target = $region5
  $region4: #{inception_forward.10} parent=0 // pred_region
    _
  $region5: #{inception_forward.10} parent=0 // pred_fallthru
    _
  // Predicated region
  $region6: #{inception_forward.10} parent=0 // pred_check
    _
  $region7: #{inception_forward.10} parent=0 // pred_check_branch
    %12 = sbr.rel (0) target = $region9
  $region8: #{inception_forward.10} parent=0 // pred_region
    _
  $region9: #{inception_forward.10} parent=0 // pred_fallthru
    _
  // Predicated region
  $region10: #{inception_forward.10} parent=0 // pred_check
    _
  $region11: #{inception_forward.10} parent=0 // pred_check_branch
    %14 = sbr.rel (0) target = $region13
  $region12: #{inception_forward.10} parent=0 // pred_region
    _
  $region13: #{inception_forward.10} parent=0 // pred_fallthru
    _
  // Predicated region
  $region14: #{inception_forward.10} parent=0 // pred_check
    _
  $region15: #{inception_forward.10} parent=0 // pred_check_branch
    %16 = sbr.rel (0) target = $region17
  $region16: #{inception_forward.10} parent=0 // pred_region
    _
  $region17: #{inception_forward.10} parent=0 // pred_fallthru
    _
  %v18 = vld [vmem:[%s0] sm:$0xff]
  %v19 = vld [vmem:[%s0 + $0x8] sm:$0xff]
  %v20 = vld [vmem:[%s0 + $0x10] sm:$0xff]
  %v21 = vld [vmem:[%s0 + $0x18] sm:$0xff]
  %v22 = vld [vmem:[%s0 + $0x20] sm:$0xff]
  %v23 = vld [vmem:[%s0 + $0x28] sm:$0xff]
  %v24 = vld [vmem:[%s0 + $0x30] sm:$0xff]
  %v25 = vld [vmem:[%s0 + $0x38] sm:$0xff]
  %v26 = vld [vmem:[%s0 + $0x40] sm:$0xff]
  %v27 = vld [vmem:[%s0 + $0x48] sm:$0xff]
  %v28 = vld [vmem:[%s0 + $0x50] sm:$0xff]
  %v29 = vld [vmem:[%s0 + $0x58] sm:$0xff]
  %v30 = vld [vmem:[%s0 + $0x60] sm:$0xff]
  %v31 = vld [vmem:[%s0 + $0x68] sm:$0xff]
  %v32 = vld [vmem:[%s0 + $0x70] sm:$0xff]
  %v33 = vld [vmem:[%s0 + $0x78] sm:$0xff]
  %v34 = vld [vmem:[%s0 + $0x80] sm:$0xff]
  %v35 = vld [vmem:[%s0 + $0x88] sm:$0xff]
  %v36 = vld [vmem:[%s0 + $0x90] sm:$0xff]
  %v37 = vld [vmem:[%s0 + $0x98] sm:$0xff]
  %v38 = vld [vmem:[%s0 + $0xa0] sm:$0xff]
  %v39 = vld [vmem:[%s0 + $0xa8] sm:$0xff]
  %v40 = vld [vmem:[%s0 + $0xb0] sm:$0xff]
  %v41 = vld [vmem:[%s0 + $0xb8] sm:$0xff]
  %v42 = vld [vmem:[%s0 + $0xc0] sm:$0xff]
  %v43 = vld [vmem:[%s0 + $0xc8] sm:$0xff]
  %v44 = vld [vmem:[%s0 + $0xd0] sm:$0xff]
  %v45 = vld [vmem:[%s0 + $0xd8] sm:$0xff]
  %v46 = vld [vmem:[%s0 + $0xe0] sm:$0xff]
  %v47 = vld [vmem:[%s0 + $0xe8] sm:$0xff]
  %v48 = vld [vmem:[%s0 + $0xf0] sm:$0xff]
  %v49 = vld [vmem:[%s0 + $0xf8] sm:$0xff]
  %v50 = vld [vmem:[%s0 + $0x100] sm:$0xff]
  %v51 = vld [vmem:[%s0 + $0x108] sm:$0xff]
  %v52 = vld [vmem:[%s0 + $0x110] sm:$0xff]
  %v53 = vld [vmem:[%s0 + $0x118] sm:$0xff]
  %v54 = vld [vmem:[%s0 + $0x120] sm:$0xff]
  %v55 = vld [vmem:[%s0 + $0x128] sm:$0xff]
  %v56 = vld [vmem:[%s0 + $0x130] sm:$0xff]
  %v57 = vld [vmem:[%s0 + $0x138] sm:$0xff]
  %v58 = vld [vmem:[%s0 + $0x140] sm:$0xff]
  %v59 = vld [vmem:[%s0 + $0x148] sm:$0xff]
  %v60 = vld [vmem:[%s0 + $0x150] sm:$0xff]
  %v61 = vld [vmem:[%s0 + $0x158] sm:$0xff]
  %v62 = vld [vmem:[%s0 + $0x160] sm:$0xff]
  %v63 = vld [vmem:[%s0 + $0x168] sm:$0xff]
  %v64 = vld [vmem:[%s0 + $0x170] sm:$0xff]
  %v65 = vld [vmem:[%s0 + $0x178] sm:$0xff]
  %v66 = vld [vmem:[%s0 + $0x180] sm:$0xff]
  %v67 = vld [vmem:[%s0 + $0x188] sm:$0xff]
  %v68 = vld [vmem:[%s0 + $0x190] sm:$0xff]
  %v69 = vld [vmem:[%s0 + $0x198] sm:$0xff]
  %v70 = vld [vmem:[%s0 + $0x1a0] sm:$0xff]
  %v71 = vld [vmem:[%s0 + $0x1a8] sm:$0xff]
  %v72 = vld [vmem:[%s0 + $0x1b0] sm:$0xff]
  %v73 = vld [vmem:[%s0 + $0x1b8] sm:$0xff]
  %v74 = vld [vmem:[%s0 + $0x1c0] sm:$0xff]
  %v75 = vld [vmem:[%s0 + $0x1c8] sm:$0xff]
  %v76 = vld [vmem:[%s0 + $0x1d0] sm:$0xff]
  %v77 = vld [vmem:[%s0 + $0x1d8] sm:$0xff]
  %v78 = vld [vmem:[%s0 + $0x1e0] sm:$0xff]
  %v79 = vld [vmem:[%s0 + $0x1e8] sm:$0xff]
  %v80 = vld [vmem:[%s0 + $0x1f0] sm:$0xff]
  %v81 = vld [vmem:[%s0 + $0x1f8] sm:$0xff]
  %v82 = vld [vmem:[%s1] sm:$0xf]
  %v83 = vld [vmem:[%s1 + $0x4] sm:$0xf]
  %v84 = vld [vmem:[%s1 + $0x8] sm:$0xf]
  %v85 = vld [vmem:[%s1 + $0xc] sm:$0xf]
  %v86 = vld [vmem:[%s1 + $0x10] sm:$0xf]
  %v87 = vld [vmem:[%s1 + $0x14] sm:$0xf]
  %v88 = vld [vmem:[%s1 + $0x18] sm:$0xf]
  %v89 = vld [vmem:[%s1 + $0x1c] sm:$0xf]
  %v90 = vld [vmem:[%s1 + $0x20] sm:$0xf]
  %v91 = vld [vmem:[%s1 + $0x24] sm:$0xf]
  %v92 = vld [vmem:[%s1 + $0x28] sm:$0xf]
  %v93 = vld [vmem:[%s1 + $0x2c] sm:$0xf]
  %v94 = vld [vmem:[%s1 + $0x30] sm:$0xf]
  %v95 = vld [vmem:[%s1 + $0x34] sm:$0xf]
  %v96 = vld [vmem:[%s1 + $0x38] sm:$0xf]
  %v97 = vld [vmem:[%s1 + $0x3c] sm:$0xf]
  %v98 = vld [vmem:[%s1 + $0x40] sm:$0xf]
  %v99 = vld [vmem:[%s1 + $0x44] sm:$0xf]
  %v100 = vld [vmem:[%s1 + $0x48] sm:$0xf]
  %v101 = vld [vmem:[%s1 + $0x4c] sm:$0xf]
  %v102 = vld [vmem:[%s1 + $0x50] sm:$0xf]
  %v103 = vld [vmem:[%s1 + $0x54] sm:$0xf]
  %v104 = vld [vmem:[%s1 + $0x58] sm:$0xf]
  %v105 = vld [vmem:[%s1 + $0x5c] sm:$0xf]
  %v106 = vld [vmem:[%s1 + $0x60] sm:$0xf]
  %v107 = vld [vmem:[%s1 + $0x64] sm:$0xf]
  %v108 = vld [vmem:[%s1 + $0x68] sm:$0xf]
  %v109 = vld [vmem:[%s1 + $0x6c] sm:$0xf]
  %v110 = vld [vmem:[%s1 + $0x70] sm:$0xf]
  %v111 = vld [vmem:[%s1 + $0x74] sm:$0xf]
  %v112 = vld [vmem:[%s1 + $0x78] sm:$0xf]
  %v113 = vld [vmem:[%s1 + $0x7c] sm:$0xf]
  %v114 = vld [vmem:[%s1 + $0x80] sm:$0xf]
  %v115 = vld [vmem:[%s1 + $0x84] sm:$0xf]
  %v116 = vld [vmem:[%s1 + $0x88] sm:$0xf]
  %v117 = vld [vmem:[%s1 + $0x8c] sm:$0xf]
  %v118 = vld [vmem:[%s1 + $0x90] sm:$0xf]
  %v119 = vld [vmem:[%s1 + $0x94] sm:$0xf]
  %v120 = vld [vmem:[%s1 + $0x98] sm:$0xf]
  %v121 = vld [vmem:[%s1 + $0x9c] sm:$0xf]
  %v122 = vld [vmem:[%s1 + $0xa0] sm:$0xf]
  %v123 = vld [vmem:[%s1 + $0xa4] sm:$0xf]
  %v124 = vld [vmem:[%s1 + $0xa8] sm:$0xf]
  %v125 = vld [vmem:[%s1 + $0xac] sm:$0xf]
  %v126 = vld [vmem:[%s1 + $0xb0] sm:$0xf]
  %v127 = vld [vmem:[%s1 + $0xb4] sm:$0xf]
  %v128 = vld [vmem:[%s1 + $0xb8] sm:$0xf]
  %v129 = vld [vmem:[%s1 + $0xbc] sm:$0xf]
  %v130 = vld [vmem:[%s1 + $0xc0] sm:$0xf]
  %v131 = vld [vmem:[%s1 + $0xc4] sm:$0xf]
  %v132 = vld [vmem:[%s1 + $0xc8] sm:$0xf]
  %v133 = vld [vmem:[%s1 + $0xcc] sm:$0xf]
  %v134 = vld [vmem:[%s1 + $0xd0] sm:$0xf]
  %v135 = vld [vmem:[%s1 + $0xd4] sm:$0xf]
  %v136 = vld [vmem:[%s1 + $0xd8] sm:$0xf]
  %v137 = vld [vmem:[%s1 + $0xdc] sm:$0xf]
  %v138 = vld [vmem:[%s1 + $0xe0] sm:$0xf]
  %v139 = vld [vmem:[%s1 + $0xe4] sm:$0xf]
  %v140 = vld [vmem:[%s1 + $0xe8] sm:$0xf]
  %v141 = vld [vmem:[%s1 + $0xec] sm:$0xf]
  %v142 = vld [vmem:[%s1 + $0xf0] sm:$0xf]
  %v143 = vld [vmem:[%s1 + $0xf4] sm:$0xf]
  %v144 = vld [vmem:[%s1 + $0xf8] sm:$0xf]
  %v145 = vld [vmem:[%s1 + $0xfc] sm:$0xf]
  %v146 = vld [vmem:[%s1 + $0x100] sm:$0xf]
  %v147 = vld [vmem:[%s1 + $0x104] sm:$0xf]
  %v148 = vld [vmem:[%s1 + $0x108] sm:$0xf]
  %v149 = vld [vmem:[%s1 + $0x10c] sm:$0xf]
  %v150 = vld [vmem:[%s1 + $0x110] sm:$0xf]
  %v151 = vld [vmem:[%s1 + $0x114] sm:$0xf]
  %v152 = vld [vmem:[%s1 + $0x118] sm:$0xf]
  %v153 = vld [vmem:[%s1 + $0x11c] sm:$0xf]
  %v154 = vld [vmem:[%s1 + $0x120] sm:$0xf]
  %v155 = vld [vmem:[%s1 + $0x124] sm:$0xf]
  %v156 = vld [vmem:[%s1 + $0x128] sm:$0xf]
  %v157 = vld [vmem:[%s1 + $0x12c] sm:$0xf]
  %v158 = vld [vmem:[%s1 + $0x130] sm:$0xf]
  %v159 = vld [vmem:[%s1 + $0x134] sm:$0xf]
  %v160 = vld [vmem:[%s1 + $0x138] sm:$0xf]
  %v161 = vld [vmem:[%s1 + $0x13c] sm:$0xf]
  %v162 = vld [vmem:[%s1 + $0x140] sm:$0xf]
  %v163 = vld [vmem:[%s1 + $0x144] sm:$0xf]
  %v164 = vld [vmem:[%s1 + $0x148] sm:$0xf]
  %v165 = vld [vmem:[%s1 + $0x14c] sm:$0xf]
  %v166 = vld [vmem:[%s1 + $0x150] sm:$0xf]
  %v167 = vld [vmem:[%s1 + $0x154] sm:$0xf]
  %v168 = vld [vmem:[%s1 + $0x158] sm:$0xf]
  %v169 = vld [vmem:[%s1 + $0x15c] sm:$0xf]
  %v170 = vld [vmem:[%s1 + $0x160] sm:$0xf]
  %v171 = vld [vmem:[%s1 + $0x164] sm:$0xf]
  %v172 = vld [vmem:[%s1 + $0x168] sm:$0xf]
  %v173 = vld [vmem:[%s1 + $0x16c] sm:$0xf]
  %v174 = vld [vmem:[%s1 + $0x170] sm:$0xf]
  %v175 = vld [vmem:[%s1 + $0x174] sm:$0xf]
  %v176 = vld [vmem:[%s1 + $0x178] sm:$0xf]
  %v177 = vld [vmem:[%s1 + $0x17c] sm:$0xf]
  %v178 = vld [vmem:[%s1 + $0x180] sm:$0xf]
  %v179 = vld [vmem:[%s1 + $0x184] sm:$0xf]
  %v180 = vld [vmem:[%s1 + $0x188] sm:$0xf]
  %v181 = vld [vmem:[%s1 + $0x18c] sm:$0xf]
  %v182 = vld [vmem:[%s1 + $0x190] sm:$0xf]
  %v183 = vld [vmem:[%s1 + $0x194] sm:$0xf]
  %v184 = vld [vmem:[%s1 + $0x198] sm:$0xf]
  %v185 = vld [vmem:[%s1 + $0x19c] sm:$0xf]
  %v186 = vld [vmem:[%s1 + $0x1a0] sm:$0xf]
  %v187 = vld [vmem:[%s1 + $0x1a4] sm:$0xf]
  %v188 = vld [vmem:[%s1 + $0x1a8] sm:$0xf]
  %v189 = vld [vmem:[%s1 + $0x1ac] sm:$0xf]
  %v190 = vld [vmem:[%s1 + $0x1b0] sm:$0xf]
  %v191 = vld [vmem:[%s1 + $0x1b4] sm:$0xf]
  %v192 = vld [vmem:[%s1 + $0x1b8] sm:$0xf]
  %v193 = vld [vmem:[%s1 + $0x1bc] sm:$0xf]
  %v194 = vld [vmem:[%s1 + $0x1c0] sm:$0xf]
  %v195 = vld [vmem:[%s1 + $0x1c4] sm:$0xf]
  %v196 = vld [vmem:[%s1 + $0x1c8] sm:$0xf]
  %v197 = vld [vmem:[%s1 + $0x1cc] sm:$0xf]
  %v198 = vld [vmem:[%s1 + $0x1d0] sm:$0xf]
  %v199 = vld [vmem:[%s1 + $0x1d4] sm:$0xf]
  %v200 = vld [vmem:[%s1 + $0x1d8] sm:$0xf]
  %v201 = vld [vmem:[%s1 + $0x1dc] sm:$0xf]
  %v202 = vld [vmem:[%s1 + $0x1e0] sm:$0xf]
  %v203 = vld [vmem:[%s1 + $0x1e4] sm:$0xf]
  %v204 = vld [vmem:[%s1 + $0x1e8] sm:$0xf]
  %v205 = vld [vmem:[%s1 + $0x1ec] sm:$0xf]
  %v206 = vld [vmem:[%s1 + $0x1f0] sm:$0xf]
  %v271 = vunpack.c.l.b16 %v18
  %v272 = vunpack.c.h.b16 %v18
  %v273 = vunpack.c.l.b16 %v19
  %v274 = vunpack.c.h.b16 %v19
  %v275 = vunpack.c.l.b16 %v20
  %v276 = vunpack.c.h.b16 %v20
  %v277 = vunpack.c.l.b16 %v21
  %v278 = vunpack.c.h.b16 %v21
  %v279 = vunpack.c.l.b16 %v22
  %v280 = vunpack.c.h.b16 %v22
  %v281 = vunpack.c.l.b16 %v23
  %v282 = vunpack.c.h.b16 %v23
  %v283 = vunpack.c.l.b16 %v24
  %v284 = vunpack.c.h.b16 %v24
  %v285 = vunpack.c.l.b16 %v25
  %v286 = vunpack.c.h.b16 %v25
  %v287 = vunpack.c.l.b16 %v26
  %v288 = vunpack.c.h.b16 %v26
  %v289 = vunpack.c.l.b16 %v27
  %v290 = vunpack.c.h.b16 %v27
  %v291 = vunpack.c.l.b16 %v28
  %v292 = vunpack.c.h.b16 %v28
  %v293 = vunpack.c.l.b16 %v29
  %v294 = vunpack.c.h.b16 %v29
  %v295 = vunpack.c.l.b16 %v30
  %v296 = vunpack.c.h.b16 %v30
  %v297 = vunpack.c.l.b16 %v31
  %v298 = vunpack.c.h.b16 %v31
  %v299 = vunpack.c.l.b16 %v32
  %v300 = vunpack.c.h.b16 %v32
  %v301 = vunpack.c.l.b16 %v33
  %v302 = vunpack.c.h.b16 %v33
  %v303 = vunpack.c.l.b16 %v34
  %v304 = vunpack.c.h.b16 %v34
  %v305 = vunpack.c.l.b16 %v35
  %v306 = vunpack.c.h.b16 %v35
  %v307 = vunpack.c.l.b16 %v36
  %v308 = vunpack.c.h.b16 %v36
  %v309 = vunpack.c.l.b16 %v37
  %v310 = vunpack.c.h.b16 %v37
  %v311 = vunpack.c.l.b16 %v38
  %v312 = vunpack.c.h.b16 %v38
  %v313 = vunpack.c.l.b16 %v39
  %v314 = vunpack.c.h.b16 %v39
  %v315 = vunpack.c.l.b16 %v40
  %v316 = vunpack.c.h.b16 %v40
  %v317 = vunpack.c.l.b16 %v41
  %v318 = vunpack.c.h.b16 %v41
  %v319 = vunpack.c.l.b16 %v42
  %v320 = vunpack.c.h.b16 %v42
  %v321 = vunpack.c.l.b16 %v43
  %v322 = vunpack.c.h.b16 %v43
  %v323 = vunpack.c.l.b16 %v44
  %v324 = vunpack.c.h.b16 %v44
  %v325 = vunpack.c.l.b16 %v45
  %v326 = vunpack.c.h.b16 %v45
  %v327 = vunpack.c.l.b16 %v46
  %v328 = vunpack.c.h.b16 %v46
  %v329 = vunpack.c.l.b16 %v47
  %v330 = vunpack.c.h.b16 %v47
  %v331 = vunpack.c.l.b16 %v48
  %v332 = vunpack.c.h.b16 %v48
  %v333 = vunpack.c.l.b16 %v49
  %v334 = vunpack.c.h.b16 %v49
  %v335 = vunpack.c.l.b16 %v50
  %v336 = vunpack.c.h.b16 %v50
  %v337 = vunpack.c.l.b16 %v51
  %v338 = vunpack.c.h.b16 %v51
  %v339 = vunpack.c.l.b16 %v52
  %v340 = vunpack.c.h.b16 %v52
  %v341 = vunpack.c.l.b16 %v53
  %v342 = vunpack.c.h.b16 %v53
  %v343 = vunpack.c.l.b16 %v54
  %v344 = vunpack.c.h.b16 %v54
  %v345 = vunpack.c.l.b16 %v55
  %v346 = vunpack.c.h.b16 %v55
  %v347 = vunpack.c.l.b16 %v56
  %v348 = vunpack.c.h.b16 %v56
  %v349 = vunpack.c.l.b16 %v57
  %v350 = vunpack.c.h.b16 %v57
  %v351 = vunpack.c.l.b16 %v58
  %v352 = vunpack.c.h.b16 %v58
  %v353 = vunpack.c.l.b16 %v59
  %v354 = vunpack.c.h.b16 %v59
  %v355 = vunpack.c.l.b16 %v60
  %v356 = vunpack.c.h.b16 %v60
  %v357 = vunpack.c.l.b16 %v61
  %v358 = vunpack.c.h.b16 %v61
  %v359 = vunpack.c.l.b16 %v62
  %v360 = vunpack.c.h.b16 %v62
  %v361 = vunpack.c.l.b16 %v63
  %v362 = vunpack.c.h.b16 %v63
  %v363 = vunpack.c.l.b16 %v64
  %v364 = vunpack.c.h.b16 %v64
  %v365 = vunpack.c.l.b16 %v65
  %v366 = vunpack.c.h.b16 %v65
  %v367 = vunpack.c.l.b16 %v66
  %v368 = vunpack.c.h.b16 %v66
  %v369 = vunpack.c.l.b16 %v67
  %v370 = vunpack.c.h.b16 %v67
  %v371 = vunpack.c.l.b16 %v68
  %v372 = vunpack.c.h.b16 %v68
  %v373 = vunpack.c.l.b16 %v69
  %v374 = vunpack.c.h.b16 %v69
  %v375 = vunpack.c.l.b16 %v70
  %v376 = vunpack.c.h.b16 %v70
  %v377 = vunpack.c.l.b16 %v71
  %v378 = vunpack.c.h.b16 %v71
  %v379 = vunpack.c.l.b16 %v72
  %v380 = vunpack.c.h.b16 %v72
  %v381 = vunpack.c.l.b16 %v73
  %v382 = vunpack.c.h.b16 %v73
  %v383 = vunpack.c.l.b16 %v74
  %v384 = vunpack.c.h.b16 %v74
  %v385 = vunpack.c.l.b16 %v75
  %v386 = vunpack.c.h.b16 %v75
  %v387 = vunpack.c.l.b16 %v76
  %v388 = vunpack.c.h.b16 %v76
  %v389 = vunpack.c.l.b16 %v77
  %v390 = vunpack.c.h.b16 %v77
  %v391 = vunpack.c.l.b16 %v78
  %v392 = vunpack.c.h.b16 %v78
  %v393 = vunpack.c.l.b16 %v79
  %v394 = vunpack.c.h.b16 %v79
  %v395 = vunpack.c.l.b16 %v80
  %v396 = vunpack.c.h.b16 %v80
  %v397 = vunpack.c.l.b16 %v81
  %v398 = vunpack.c.h.b16 %v81
  %v399 = vpack.c.b16 %v279, %v271
  %v400 = vpack.c.b16 %v280, %v272
  %v401 = vpack.c.b16 %v281, %v273
  %v402 = vpack.c.b16 %v282, %v274
  %v403 = vpack.c.b16 %v283, %v275
  %v404 = vpack.c.b16 %v284, %v276
  %v405 = vpack.c.b16 %v285, %v277
  %v406 = vpack.c.b16 %v286, %v278
  %v407 = vpack.c.b16 %v295, %v287
  %v408 = vpack.c.b16 %v296, %v288
  %v409 = vpack.c.b16 %v297, %v289
  %v410 = vpack.c.b16 %v298, %v290
  %v411 = vpack.c.b16 %v299, %v291
  %v412 = vpack.c.b16 %v300, %v292
  %v413 = vpack.c.b16 %v301, %v293
  %v414 = vpack.c.b16 %v302, %v294
  %v415 = vpack.c.b16 %v311, %v303
  %v416 = vpack.c.b16 %v312, %v304
  %v417 = vpack.c.b16 %v313, %v305
  %v418 = vpack.c.b16 %v314, %v306
  %v419 = vpack.c.b16 %v315, %v307
  %v420 = vpack.c.b16 %v316, %v308
  %v421 = vpack.c.b16 %v317, %v309
  %v422 = vpack.c.b16 %v318, %v310
  %v423 = vpack.c.b16 %v327, %v319
  %v424 = vpack.c.b16 %v328, %v320
  %v425 = vpack.c.b16 %v329, %v321
  %v426 = vpack.c.b16 %v330, %v322
  %v427 = vpack.c.b16 %v331, %v323
  %v428 = vpack.c.b16 %v332, %v324
  %v429 = vpack.c.b16 %v333, %v325
  %v430 = vpack.c.b16 %v334, %v326
  %v431 = vpack.c.b16 %v343, %v335
  %v432 = vpack.c.b16 %v344, %v336
  %v433 = vpack.c.b16 %v345, %v337
  %v434 = vpack.c.b16 %v346, %v338
  %v435 = vpack.c.b16 %v347, %v339
  %v436 = vpack.c.b16 %v348, %v340
  %v437 = vpack.c.b16 %v349, %v341
  %v438 = vpack.c.b16 %v350, %v342
  %v439 = vpack.c.b16 %v359, %v351
  %v440 = vpack.c.b16 %v360, %v352
  %v441 = vpack.c.b16 %v361, %v353
  %v442 = vpack.c.b16 %v362, %v354
  %v443 = vpack.c.b16 %v363, %v355
  %v444 = vpack.c.b16 %v364, %v356
  %v445 = vpack.c.b16 %v365, %v357
  %v446 = vpack.c.b16 %v366, %v358
  %v447 = vpack.c.b16 %v375, %v367
  %v448 = vpack.c.b16 %v376, %v368
  %v449 = vpack.c.b16 %v377, %v369
  %v450 = vpack.c.b16 %v378, %v370
  %v451 = vpack.c.b16 %v379, %v371
  %v452 = vpack.c.b16 %v380, %v372
  %v453 = vpack.c.b16 %v381, %v373
  %v454 = vpack.c.b16 %v382, %v374
  %v455 = vpack.c.b16 %v391, %v383
  %v456 = vpack.c.b16 %v392, %v384
  %v457 = vpack.c.b16 %v393, %v385
  %v458 = vpack.c.b16 %v394, %v386
  %v459 = vpack.c.b16 %v395, %v387
  %v460 = vpack.c.b16 %v396, %v388
  %v461 = vpack.c.b16 %v397, %v389
  %v462 = vpack.c.b16 %v398, %v390
  %v644 = vunpack.c.l.b16 %v82
  %v645 = vunpack.c.l.b16 %v83
  %v646 = vunpack.c.l.b16 %v84
  %v647 = vunpack.c.l.b16 %v85
  %v648 = vunpack.c.l.b16 %v86
  %v649 = vunpack.c.l.b16 %v87
  %v650 = vunpack.c.l.b16 %v88
  %v651 = vunpack.c.l.b16 %v89
  %v652 = vunpack.c.l.b16 %v90
  %v653 = vunpack.c.l.b16 %v91
  %v654 = vunpack.c.l.b16 %v92
  %v655 = vunpack.c.l.b16 %v93
  %v656 = vunpack.c.l.b16 %v94
  %v657 = vunpack.c.l.b16 %v95
  %v658 = vunpack.c.l.b16 %v96
  %v659 = vunpack.c.l.b16 %v97
  %v660 = vunpack.c.l.b16 %v98
  %v661 = vunpack.c.l.b16 %v99
  %v662 = vunpack.c.l.b16 %v100
  %v663 = vunpack.c.l.b16 %v101
  %v664 = vunpack.c.l.b16 %v102
  %v665 = vunpack.c.l.b16 %v103
  %v666 = vunpack.c.l.b16 %v104
  %v667 = vunpack.c.l.b16 %v105
  %v668 = vunpack.c.l.b16 %v106
  %v669 = vunpack.c.l.b16 %v107
  %v670 = vunpack.c.l.b16 %v108
  %v671 = vunpack.c.l.b16 %v109
  %v672 = vunpack.c.l.b16 %v110
  %v673 = vunpack.c.l.b16 %v111
  %v674 = vunpack.c.l.b16 %v112
  %v675 = vunpack.c.l.b16 %v113
  %v676 = vunpack.c.l.b16 %v114
  %v677 = vunpack.c.l.b16 %v115
  %v678 = vunpack.c.l.b16 %v116
  %v679 = vunpack.c.l.b16 %v117
  %v680 = vunpack.c.l.b16 %v118
  %v681 = vunpack.c.l.b16 %v119
  %v682 = vunpack.c.l.b16 %v120
  %v683 = vunpack.c.l.b16 %v121
  %v684 = vunpack.c.l.b16 %v122
  %v685 = vunpack.c.l.b16 %v123
  %v686 = vunpack.c.l.b16 %v124
  %v687 = vunpack.c.l.b16 %v125
  %v688 = vunpack.c.l.b16 %v126
  %v689 = vunpack.c.l.b16 %v127
  %v690 = vunpack.c.l.b16 %v128
  %v691 = vunpack.c.l.b16 %v129
  %v692 = vunpack.c.l.b16 %v130
  %v693 = vunpack.c.l.b16 %v131
  %v694 = vunpack.c.l.b16 %v132
  %v695 = vunpack.c.l.b16 %v133
  %v696 = vunpack.c.l.b16 %v134
  %v697 = vunpack.c.l.b16 %v135
  %v698 = vunpack.c.l.b16 %v136
  %v699 = vunpack.c.l.b16 %v137
  %v700 = vunpack.c.l.b16 %v138
  %v701 = vunpack.c.l.b16 %v139
  %v702 = vunpack.c.l.b16 %v140
  %v703 = vunpack.c.l.b16 %v141
  %v704 = vunpack.c.l.b16 %v142
  %v705 = vunpack.c.l.b16 %v143
  %v706 = vunpack.c.l.b16 %v144
  %v707 = vunpack.c.l.b16 %v145
  %v708 = vunpack.c.l.b16 %v146
  %v709 = vunpack.c.l.b16 %v147
  %v710 = vunpack.c.l.b16 %v148
  %v711 = vunpack.c.l.b16 %v149
  %v712 = vunpack.c.l.b16 %v150
  %v713 = vunpack.c.l.b16 %v151
  %v714 = vunpack.c.l.b16 %v152
  %v715 = vunpack.c.l.b16 %v153
  %v716 = vunpack.c.l.b16 %v154
  %v717 = vunpack.c.l.b16 %v155
  %v718 = vunpack.c.l.b16 %v156
  %v719 = vunpack.c.l.b16 %v157
  %v720 = vunpack.c.l.b16 %v158
  %v721 = vunpack.c.l.b16 %v159
  %v722 = vunpack.c.l.b16 %v160
  %v723 = vunpack.c.l.b16 %v161
  %v724 = vunpack.c.l.b16 %v162
  %v725 = vunpack.c.l.b16 %v163
  %v726 = vunpack.c.l.b16 %v164
  %v727 = vunpack.c.l.b16 %v165
  %v728 = vunpack.c.l.b16 %v166
  %v729 = vunpack.c.l.b16 %v167
  %v730 = vunpack.c.l.b16 %v168
  %v731 = vunpack.c.l.b16 %v169
  %v732 = vunpack.c.l.b16 %v170
  %v733 = vunpack.c.l.b16 %v171
  %v734 = vunpack.c.l.b16 %v172
  %v735 = vunpack.c.l.b16 %v173
  %v736 = vunpack.c.l.b16 %v174
  %v737 = vunpack.c.l.b16 %v175
  %v738 = vunpack.c.l.b16 %v176
  %v739 = vunpack.c.l.b16 %v177
  %v740 = vunpack.c.l.b16 %v178
  %v741 = vunpack.c.l.b16 %v179
  %v742 = vunpack.c.l.b16 %v180
  %v743 = vunpack.c.l.b16 %v181
  %v744 = vunpack.c.l.b16 %v182
  %v745 = vunpack.c.l.b16 %v183
  %v746 = vunpack.c.l.b16 %v184
  %v747 = vunpack.c.l.b16 %v185
  %v748 = vunpack.c.l.b16 %v186
  %v749 = vunpack.c.l.b16 %v187
  %v750 = vunpack.c.l.b16 %v188
  %v751 = vunpack.c.l.b16 %v189
  %v752 = vunpack.c.l.b16 %v190
  %v753 = vunpack.c.l.b16 %v191
  %v754 = vunpack.c.l.b16 %v192
  %v755 = vunpack.c.l.b16 %v193
  %v756 = vunpack.c.l.b16 %v194
  %v757 = vunpack.c.l.b16 %v195
  %v758 = vunpack.c.l.b16 %v196
  %v759 = vunpack.c.l.b16 %v197
  %v760 = vunpack.c.l.b16 %v198
  %v761 = vunpack.c.l.b16 %v199
  %v762 = vunpack.c.l.b16 %v200
  %v763 = vunpack.c.l.b16 %v201
  %v764 = vunpack.c.l.b16 %v202
  %v765 = vunpack.c.l.b16 %v203
  %v766 = vunpack.c.l.b16 %v204
  %v767 = vunpack.c.l.b16 %v205
  %v768 = vunpack.c.l.b16 %v206
  %v769 = vpack.c.b16 %v645, %v644
  %v770 = vpack.c.b16 %v647, %v646
  %v771 = vpack.c.b16 %v649, %v648
  %v772 = vpack.c.b16 %v651, %v650
  %v773 = vpack.c.b16 %v653, %v652
  %v774 = vpack.c.b16 %v655, %v654
  %v775 = vpack.c.b16 %v657, %v656
  %v776 = vpack.c.b16 %v659, %v658
  %v777 = vpack.c.b16 %v661, %v660
  %v778 = vpack.c.b16 %v663, %v662
  %v779 = vpack.c.b16 %v665, %v664
  %v780 = vpack.c.b16 %v667, %v666
  %v781 = vpack.c.b16 %v669, %v668
  %v782 = vpack.c.b16 %v671, %v670
  %v783 = vpack.c.b16 %v673, %v672
  %v784 = vpack.c.b16 %v675, %v674
  %v785 = vpack.c.b16 %v677, %v676
  %v786 = vpack.c.b16 %v679, %v678
  %v787 = vpack.c.b16 %v681, %v680
  %v788 = vpack.c.b16 %v683, %v682
  %v789 = vpack.c.b16 %v685, %v684
  %v790 = vpack.c.b16 %v687, %v686
  %v791 = vpack.c.b16 %v689, %v688
  %v792 = vpack.c.b16 %v691, %v690
  %v793 = vpack.c.b16 %v693, %v692
  %v794 = vpack.c.b16 %v695, %v694
  %v795 = vpack.c.b16 %v697, %v696
  %v796 = vpack.c.b16 %v699, %v698
  %v797 = vpack.c.b16 %v701, %v700
  %v798 = vpack.c.b16 %v703, %v702
  %v799 = vpack.c.b16 %v705, %v704
  %v800 = vpack.c.b16 %v707, %v706
  %v801 = vpack.c.b16 %v709, %v708
  %v802 = vpack.c.b16 %v711, %v710
  %v803 = vpack.c.b16 %v713, %v712
  %v804 = vpack.c.b16 %v715, %v714
  %v805 = vpack.c.b16 %v717, %v716
  %v806 = vpack.c.b16 %v719, %v718
  %v807 = vpack.c.b16 %v721, %v720
  %v808 = vpack.c.b16 %v723, %v722
  %v809 = vpack.c.b16 %v725, %v724
  %v810 = vpack.c.b16 %v727, %v726
  %v811 = vpack.c.b16 %v729, %v728
  %v812 = vpack.c.b16 %v731, %v730
  %v813 = vpack.c.b16 %v733, %v732
  %v814 = vpack.c.b16 %v735, %v734
  %v815 = vpack.c.b16 %v737, %v736
  %v816 = vpack.c.b16 %v739, %v738
  %v817 = vpack.c.b16 %v741, %v740
  %v818 = vpack.c.b16 %v743, %v742
  %v819 = vpack.c.b16 %v745, %v744
  %v820 = vpack.c.b16 %v747, %v746
  %v821 = vpack.c.b16 %v749, %v748
  %v822 = vpack.c.b16 %v751, %v750
  %v823 = vpack.c.b16 %v753, %v752
  %v824 = vpack.c.b16 %v755, %v754
  %v825 = vpack.c.b16 %v757, %v756
  %v826 = vpack.c.b16 %v759, %v758
  %v827 = vpack.c.b16 %v761, %v760
  %v828 = vpack.c.b16 %v763, %v762
  %v829 = vpack.c.b16 %v765, %v764
  %v830 = vpack.c.b16 %v767, %v766
  %v831 = vpack.c.b16 %v768, %v768
  %vm894 = vcmask 850944
  %v896 = vsel %vm894, %v406, 0
  %v899 = vsel %vm894, %v414, 0
  %v902 = vsel %vm894, %v422, 0
  %v905 = vsel %vm894, %v430, 0
  %v908 = vsel %vm894, %v438, 0
  %v911 = vsel %vm894, %v446, 0
  %v914 = vsel %vm894, %v454, 0
  %v917 = vsel %vm894, %v462, 0
  %vm919 = vcmask 1043456
  %v921 = vsel %vm919, %v831, 0
  %923 = vmatprep.subr.bf16.mxu0 0
  %924 = vmatpush1.bf16.msra.mxu0 %v769
  %925 = vmatprep.subr.bf16.mxu0 0
  %926 = vmatpush1.bf16.msra.mxu0 %v770
  %927 = vmatprep.subr.bf16.mxu0 0
  %928 = vmatpush1.bf16.msra.mxu0 %v771
  %929 = vmatprep.subr.bf16.mxu0 0
  %930 = vmatpush1.bf16.msra.mxu0 %v772
  %931 = vmatprep.subr.bf16.mxu0 0
  %932 = vmatpush1.bf16.msra.mxu0 %v773
  %933 = vmatprep.subr.bf16.mxu0 0
  %934 = vmatpush1.bf16.msra.mxu0 %v774
  %935 = vmatprep.subr.bf16.mxu0 0
  %936 = vmatpush1.bf16.msra.mxu0 %v775
  %937 = vmatprep.subr.bf16.mxu0 0
  %938 = vmatpush1.bf16.msra.mxu0 %v776
  %939 = vmatprep.subr.bf16.mxu0 0
  %940 = vmatpush1.bf16.msra.mxu0 %v777
  %941 = vmatprep.subr.bf16.mxu0 0
  %942 = vmatpush1.bf16.msra.mxu0 %v778
  %943 = vmatprep.subr.bf16.mxu0 0
  %944 = vmatpush1.bf16.msra.mxu0 %v779
  %945 = vmatprep.subr.bf16.mxu0 0
  %946 = vmatpush1.bf16.msra.mxu0 %v780
  %947 = vmatprep.subr.bf16.mxu0 0
  %948 = vmatpush1.bf16.msra.mxu0 %v781
  %949 = vmatprep.subr.bf16.mxu0 0
  %950 = vmatpush1.bf16.msra.mxu0 %v782
  %951 = vmatprep.subr.bf16.mxu0 0
  %952 = vmatpush1.bf16.msra.mxu0 %v783
  %953 = vmatprep.subr.bf16.mxu0 0
  %954 = vmatpush1.bf16.msra.mxu0 %v784
  %955 = vmatprep.mubr.bf16.mxu0 %v400
  %956 = vmatmul.mubr.bf16.gmra.mrb[0].mxu0 %v399
  %v957 = vpop.f32.mrb[0].mxu0
  %v958 = vadd.f32 0.0, %v957
  %v959 = vpop.f32.mrb[0].mxu0
  %v960 = vpop.f32.mrb[0].mxu0
  %v961 = vadd.f32 0.0, %v960
  %v962 = vpop.f32.mrb[0].mxu0
  %963 = vmatprep.mubr.bf16.mxu0 %v408
  %964 = vmatmul.mubr.bf16.gmra.mrb[0].mxu0 %v407
  %v965 = vpop.f32.mrb[0].mxu0
  %v966 = vadd.f32 0.0, %v965
  %v967 = vpop.f32.mrb[0].mxu0
  %v968 = vpop.f32.mrb[0].mxu0
  %v969 = vadd.f32 0.0, %v968
  %v970 = vpop.f32.mrb[0].mxu0
  %971 = vmatprep.mubr.bf16.mxu0 %v416
  %972 = vmatmul.mubr.bf16.gmra.mrb[0].mxu0 %v415
  %v973 = vpop.f32.mrb[0].mxu0
  %v974 = vadd.f32 0.0, %v973
  %v975 = vpop.f32.mrb[0].mxu0
  %v976 = vpop.f32.mrb[0].mxu0
  %v977 = vadd.f32 0.0, %v976
  %v978 = vpop.f32.mrb[0].mxu0
  %979 = vmatprep.mubr.bf16.mxu0 %v424
  %980 = vmatmul.mubr.bf16.gmra.mrb[0].mxu0 %v423
  %v981 = vpop.f32.mrb[0].mxu0
  %v982 = vadd.f32 0.0, %v981
  %v983 = vpop.f32.mrb[0].mxu0
  %v984 = vpop.f32.mrb[0].mxu0
  %v985 = vadd.f32 0.0, %v984
  %v986 = vpop.f32.mrb[0].mxu0
  %987 = vmatprep.mubr.bf16.mxu0 %v432
  %988 = vmatmul.mubr.bf16.gmra.mrb[0].mxu0 %v431
  %v989 = vpop.f32.mrb[0].mxu0
  %v990 = vadd.f32 0.0, %v989
  %v991 = vpop.f32.mrb[0].mxu0
  %v992 = vpop.f32.mrb[0].mxu0
  %v993 = vadd.f32 0.0, %v992
  %v994 = vpop.f32.mrb[0].mxu0
  %995 = vmatprep.mubr.bf16.mxu0 %v440
  %996 = vmatmul.mubr.bf16.gmra.mrb[0].mxu0 %v439
  %v997 = vpop.f32.mrb[0].mxu0
  %v998 = vadd.f32 0.0, %v997
  %v999 = vpop.f32.mrb[0].mxu0
  %v1000 = vpop.f32.mrb[0].mxu0
  %v1001 = vadd.f32 0.0, %v1000
  %v1002 = vpop.f32.mrb[0].mxu0
  %1003 = vmatprep.mubr.bf16.mxu0 %v448
  %1004 = vmatmul.mubr.bf16.gmra.mrb[0].mxu0 %v447
  %v1005 = vpop.f32.mrb[0].mxu0
  %v1006 = vadd.f32 0.0, %v1005
  %v1007 = vpop.f32.mrb[0].mxu0
  %v1008 = vpop.f32.mrb[0].mxu0
  %v1009 = vadd.f32 0.0, %v1008
  %v1010 = vpop.f32.mrb[0].mxu0
  %1011 = vmatprep.mubr.bf16.mxu0 %v456
  %1012 = vmatmul.mubr.bf16.gmra.mrb[0].mxu0 %v455
  %v1013 = vpop.f32.mrb[0].mxu0
  %v1014 = vadd.f32 0.0, %v1013
  %v1015 = vpop.f32.mrb[0].mxu0
  %v1016 = vpop.f32.mrb[0].mxu0
  %v1017 = vadd.f32 0.0, %v1016
  %v1018 = vpop.f32.mrb[0].mxu0
  %1019 = vdwg.mxu0
  %1020 = vmatprep.subr.bf16.mxu0 0
  %1021 = vmatpush1.bf16.msra.mxu0 %v785
  %1022 = vmatprep.subr.bf16.mxu0 0
  %1023 = vmatpush1.bf16.msra.mxu0 %v786
  %1024 = vmatprep.subr.bf16.mxu0 0
  %1025 = vmatpush1.bf16.msra.mxu0 %v787
  %1026 = vmatprep.subr.bf16.mxu0 0
  %1027 = vmatpush1.bf16.msra.mxu0 %v788
  %1028 = vmatprep.subr.bf16.mxu0 0
  %1029 = vmatpush1.bf16.msra.mxu0 %v789
  %1030 = vmatprep.subr.bf16.mxu0 0
  %1031 = vmatpush1.bf16.msra.mxu0 %v790
  %1032 = vmatprep.subr.bf16.mxu0 0
  %1033 = vmatpush1.bf16.msra.mxu0 %v791
  %1034 = vmatprep.subr.bf16.mxu0 0
  %1035 = vmatpush1.bf16.msra.mxu0 %v792
  %1036 = vmatprep.subr.bf16.mxu0 0
  %1037 = vmatpush1.bf16.msra.mxu0 %v793
  %1038 = vmatprep.subr.bf16.mxu0 0
  %1039 = vmatpush1.bf16.msra.mxu0 %v794
  %1040 = vmatprep.subr.bf16.mxu0 0
  %1041 = vmatpush1.bf16.msra.mxu0 %v795
  %1042 = vmatprep.subr.bf16.mxu0 0
  %1043 = vmatpush1.bf16.msra.mxu0 %v796
  %1044 = vmatprep.subr.bf16.mxu0 0
  %1045 = vmatpush1.bf16.msra.mxu0 %v797
  %1046 = vmatprep.subr.bf16.mxu0 0
  %1047 = vmatpush1.bf16.msra.mxu0 %v798
  %1048 = vmatprep.subr.bf16.mxu0 0
  %1049 = vmatpush1.bf16.msra.mxu0 %v799
  %1050 = vmatprep.subr.bf16.mxu0 0
  %1051 = vmatpush1.bf16.msra.mxu0 %v800
  %1052 = vmatprep.mubr.bf16.mxu0 %v402
  %1053 = vmatmul.mubr.bf16.gmra.mrb[0].mxu0 %v401
  %v1054 = vpop.f32.mrb[0].mxu0
  %v1055 = vadd.f32 %v958, %v1054
  %v1056 = vpop.f32.mrb[0].mxu0
  %v1057 = vpop.f32.mrb[0].mxu0
  %v1058 = vadd.f32 %v961, %v1057
  %v1059 = vpop.f32.mrb[0].mxu0
  %1060 = vmatprep.mubr.bf16.mxu0 %v410
  %1061 = vmatmul.mubr.bf16.gmra.mrb[0].mxu0 %v409
  %v1062 = vpop.f32.mrb[0].mxu0
  %v1063 = vadd.f32 %v966, %v1062
  %v1064 = vpop.f32.mrb[0].mxu0
  %v1065 = vpop.f32.mrb[0].mxu0
  %v1066 = vadd.f32 %v969, %v1065
  %v1067 = vpop.f32.mrb[0].mxu0
  %1068 = vmatprep.mubr.bf16.mxu0 %v418
  %1069 = vmatmul.mubr.bf16.gmra.mrb[0].mxu0 %v417
  %v1070 = vpop.f32.mrb[0].mxu0
  %v1071 = vadd.f32 %v974, %v1070
  %v1072 = vpop.f32.mrb[0].mxu0
  %v1073 = vpop.f32.mrb[0].mxu0
  %v1074 = vadd.f32 %v977, %v1073
  %v1075 = vpop.f32.mrb[0].mxu0
  %1076 = vmatprep.mubr.bf16.mxu0 %v426
  %1077 = vmatmul.mubr.bf16.gmra.mrb[0].mxu0 %v425
  %v1078 = vpop.f32.mrb[0].mxu0
  %v1079 = vadd.f32 %v982, %v1078
  %v1080 = vpop.f32.mrb[0].mxu0
  %v1081 = vpop.f32.mrb[0].mxu0
  %v1082 = vadd.f32 %v985, %v1081
  %v1083 = vpop.f32.mrb[0].mxu0
  %1084 = vmatprep.mubr.bf16.mxu0 %v434
  %1085 = vmatmul.mubr.bf16.gmra.mrb[0].mxu0 %v433
  %v1086 = vpop.f32.mrb[0].mxu0
  %v1087 = vadd.f32 %v990, %v1086
  %v1088 = vpop.f32.mrb[0].mxu0
  %v1089 = vpop.f32.mrb[0].mxu0
  %v1090 = vadd.f32 %v993, %v1089
  %v1091 = vpop.f32.mrb[0].mxu0
  %1092 = vmatprep.mubr.bf16.mxu0 %v442
  %1093 = vmatmul.mubr.bf16.gmra.mrb[0].mxu0 %v441
  %v1094 = vpop.f32.mrb[0].mxu0
  %v1095 = vadd.f32 %v998, %v1094
  %v1096 = vpop.f32.mrb[0].mxu0
  %v1097 = vpop.f32.mrb[0].mxu0
  %v1098 = vadd.f32 %v1001, %v1097
  %v1099 = vpop.f32.mrb[0].mxu0
  %1100 = vmatprep.mubr.bf16.mxu0 %v450
  %1101 = vmatmul.mubr.bf16.gmra.mrb[0].mxu0 %v449
  %v1102 = vpop.f32.mrb[0].mxu0
  %v1103 = vadd.f32 %v1006, %v1102
  %v1104 = vpop.f32.mrb[0].mxu0
  %v1105 = vpop.f32.mrb[0].mxu0
  %v1106 = vadd.f32 %v1009, %v1105
  %v1107 = vpop.f32.mrb[0].mxu0
  %1108 = vmatprep.mubr.bf16.mxu0 %v458
  %1109 = vmatmul.mubr.bf16.gmra.mrb[0].mxu0 %v457
  %v1110 = vpop.f32.mrb[0].mxu0
  %v1111 = vadd.f32 %v1014, %v1110
  %v1112 = vpop.f32.mrb[0].mxu0
  %v1113 = vpop.f32.mrb[0].mxu0
  %v1114 = vadd.f32 %v1017, %v1113
  %v1115 = vpop.f32.mrb[0].mxu0
  %1116 = vdwg.mxu0
  %1117 = vmatprep.subr.bf16.mxu0 0
  %1118 = vmatpush1.bf16.msra.mxu0 %v801
  %1119 = vmatprep.subr.bf16.mxu0 0
  %1120 = vmatpush1.bf16.msra.mxu0 %v802
  %1121 = vmatprep.subr.bf16.mxu0 0
  %1122 = vmatpush1.bf16.msra.mxu0 %v803
  %1123 = vmatprep.subr.bf16.mxu0 0
  %1124 = vmatpush1.bf16.msra.mxu0 %v804
  %1125 = vmatprep.subr.bf16.mxu0 0
  %1126 = vmatpush1.bf16.msra.mxu0 %v805
  %1127 = vmatprep.subr.bf16.mxu0 0
  %1128 = vmatpush1.bf16.msra.mxu0 %v806
  %1129 = vmatprep.subr.bf16.mxu0 0
  %1130 = vmatpush1.bf16.msra.mxu0 %v807
  %1131 = vmatprep.subr.bf16.mxu0 0
  %1132 = vmatpush1.bf16.msra.mxu0 %v808
  %1133 = vmatprep.subr.bf16.mxu0 0
  %1134 = vmatpush1.bf16.msra.mxu0 %v809
  %1135 = vmatprep.subr.bf16.mxu0 0
  %1136 = vmatpush1.bf16.msra.mxu0 %v810
  %1137 = vmatprep.subr.bf16.mxu0 0
  %1138 = vmatpush1.bf16.msra.mxu0 %v811
  %1139 = vmatprep.subr.bf16.mxu0 0
  %1140 = vmatpush1.bf16.msra.mxu0 %v812
  %1141 = vmatprep.subr.bf16.mxu0 0
  %1142 = vmatpush1.bf16.msra.mxu0 %v813
  %1143 = vmatprep.subr.bf16.mxu0 0
  %1144 = vmatpush1.bf16.msra.mxu0 %v814
  %1145 = vmatprep.subr.bf16.mxu0 0
  %1146 = vmatpush1.bf16.msra.mxu0 %v815
  %1147 = vmatprep.subr.bf16.mxu0 0
  %1148 = vmatpush1.bf16.msra.mxu0 %v816
  %1149 = vmatprep.mubr.bf16.mxu0 %v404
  %1150 = vmatmul.mubr.bf16.gmra.mrb[0].mxu0 %v403
  %v1151 = vpop.f32.mrb[0].mxu0
  %v1152 = vadd.f32 %v1055, %v1151
  %v1153 = vpop.f32.mrb[0].mxu0
  %v1154 = vpop.f32.mrb[0].mxu0
  %v1155 = vadd.f32 %v1058, %v1154
  %v1156 = vpop.f32.mrb[0].mxu0
  %1157 = vmatprep.mubr.bf16.mxu0 %v412
  %1158 = vmatmul.mubr.bf16.gmra.mrb[0].mxu0 %v411
  %v1159 = vpop.f32.mrb[0].mxu0
  %v1160 = vadd.f32 %v1063, %v1159
  %v1161 = vpop.f32.mrb[0].mxu0
  %v1162 = vpop.f32.mrb[0].mxu0
  %v1163 = vadd.f32 %v1066, %v1162
  %v1164 = vpop.f32.mrb[0].mxu0
  %1165 = vmatprep.mubr.bf16.mxu0 %v420
  %1166 = vmatmul.mubr.bf16.gmra.mrb[0].mxu0 %v419
  %v1167 = vpop.f32.mrb[0].mxu0
  %v1168 = vadd.f32 %v1071, %v1167
  %v1169 = vpop.f32.mrb[0].mxu0
  %v1170 = vpop.f32.mrb[0].mxu0
  %v1171 = vadd.f32 %v1074, %v1170
  %v1172 = vpop.f32.mrb[0].mxu0
  %1173 = vmatprep.mubr.bf16.mxu0 %v428
  %1174 = vmatmul.mubr.bf16.gmra.mrb[0].mxu0 %v427
  %v1175 = vpop.f32.mrb[0].mxu0
  %v1176 = vadd.f32 %v1079, %v1175
  %v1177 = vpop.f32.mrb[0].mxu0
  %v1178 = vpop.f32.mrb[0].mxu0
  %v1179 = vadd.f32 %v1082, %v1178
  %v1180 = vpop.f32.mrb[0].mxu0
  %1181 = vmatprep.mubr.bf16.mxu0 %v436
  %1182 = vmatmul.mubr.bf16.gmra.mrb[0].mxu0 %v435
  %v1183 = vpop.f32.mrb[0].mxu0
  %v1184 = vadd.f32 %v1087, %v1183
  %v1185 = vpop.f32.mrb[0].mxu0
  %v1186 = vpop.f32.mrb[0].mxu0
  %v1187 = vadd.f32 %v1090, %v1186
  %v1188 = vpop.f32.mrb[0].mxu0
  %1189 = vmatprep.mubr.bf16.mxu0 %v444
  %1190 = vmatmul.mubr.bf16.gmra.mrb[0].mxu0 %v443
  %v1191 = vpop.f32.mrb[0].mxu0
  %v1192 = vadd.f32 %v1095, %v1191
  %v1193 = vpop.f32.mrb[0].mxu0
  %v1194 = vpop.f32.mrb[0].mxu0
  %v1195 = vadd.f32 %v1098, %v1194
  %v1196 = vpop.f32.mrb[0].mxu0
  %1197 = vmatprep.mubr.bf16.mxu0 %v452
  %1198 = vmatmul.mubr.bf16.gmra.mrb[0].mxu0 %v451
  %v1199 = vpop.f32.mrb[0].mxu0
  %v1200 = vadd.f32 %v1103, %v1199
  %v1201 = vpop.f32.mrb[0].mxu0
  %v1202 = vpop.f32.mrb[0].mxu0
  %v1203 = vadd.f32 %v1106, %v1202
  %v1204 = vpop.f32.mrb[0].mxu0
  %1205 = vmatprep.mubr.bf16.mxu0 %v460
  %1206 = vmatmul.mubr.bf16.gmra.mrb[0].mxu0 %v459
  %v1207 = vpop.f32.mrb[0].mxu0
  %v1208 = vadd.f32 %v1111, %v1207
  %v1209 = vpop.f32.mrb[0].mxu0
  %v1210 = vpop.f32.mrb[0].mxu0
  %v1211 = vadd.f32 %v1114, %v1210
  %v1212 = vpop.f32.mrb[0].mxu0
  %1213 = vdwg.mxu0
  %1214 = vmatprep.subr.bf16.mxu0 0
  %1215 = vmatpush1.bf16.msra.mxu0 %v817
  %1216 = vmatprep.subr.bf16.mxu0 0
  %1217 = vmatpush1.bf16.msra.mxu0 %v818
  %1218 = vmatprep.subr.bf16.mxu0 0
  %1219 = vmatpush1.bf16.msra.mxu0 %v819
  %1220 = vmatprep.subr.bf16.mxu0 0
  %1221 = vmatpush1.bf16.msra.mxu0 %v820
  %1222 = vmatprep.subr.bf16.mxu0 0
  %1223 = vmatpush1.bf16.msra.mxu0 %v821
  %1224 = vmatprep.subr.bf16.mxu0 0
  %1225 = vmatpush1.bf16.msra.mxu0 %v822
  %1226 = vmatprep.subr.bf16.mxu0 0
  %1227 = vmatpush1.bf16.msra.mxu0 %v823
  %1228 = vmatprep.subr.bf16.mxu0 0
  %1229 = vmatpush1.bf16.msra.mxu0 %v824
  %1230 = vmatprep.subr.bf16.mxu0 0
  %1231 = vmatpush1.bf16.msra.mxu0 %v825
  %1232 = vmatprep.subr.bf16.mxu0 0
  %1233 = vmatpush1.bf16.msra.mxu0 %v826
  %1234 = vmatprep.subr.bf16.mxu0 0
  %1235 = vmatpush1.bf16.msra.mxu0 %v827
  %1236 = vmatprep.subr.bf16.mxu0 0
  %1237 = vmatpush1.bf16.msra.mxu0 %v828
  %1238 = vmatprep.subr.bf16.mxu0 0
  %1239 = vmatpush1.bf16.msra.mxu0 %v829
  %1240 = vmatprep.subr.bf16.mxu0 0
  %1241 = vmatpush1.bf16.msra.mxu0 %v830
  %1242 = vmatprep.subr.bf16.mxu0 0
  %1243 = vmatpush1.bf16.msra.mxu0 %v921
  %1244 = vmatprep.subr.bf16.mxu0 0
  %1245 = vmatpush1.bf16.msra.mxu0 0
  %1246 = vmatprep.mubr.bf16.mxu0 %v896
  %1247 = vmatmul.mubr.bf16.gmra.mrb[0].mxu0 %v405
  %v1248 = vpop.f32.mrb[0].mxu0
  %v1249 = vadd.f32 %v1152, %v1248
  %v1250 = vpop.f32.mrb[0].mxu0
  %v1251 = vpop.f32.mrb[0].mxu0
  %v1252 = vadd.f32 %v1155, %v1251
  %v1253 = vpop.f32.mrb[0].mxu0
  %1254 = vmatprep.mubr.bf16.mxu0 %v899
  %1255 = vmatmul.mubr.bf16.gmra.mrb[0].mxu0 %v413
  %v1256 = vpop.f32.mrb[0].mxu0
  %v1257 = vadd.f32 %v1160, %v1256
  %v1258 = vpop.f32.mrb[0].mxu0
  %v1259 = vpop.f32.mrb[0].mxu0
  %v1260 = vadd.f32 %v1163, %v1259
  %v1261 = vpop.f32.mrb[0].mxu0
  %1262 = vmatprep.mubr.bf16.mxu0 %v902
  %1263 = vmatmul.mubr.bf16.gmra.mrb[0].mxu0 %v421
  %v1264 = vpop.f32.mrb[0].mxu0
  %v1265 = vadd.f32 %v1168, %v1264
  %v1266 = vpop.f32.mrb[0].mxu0
  %v1267 = vpop.f32.mrb[0].mxu0
  %v1268 = vadd.f32 %v1171, %v1267
  %v1269 = vpop.f32.mrb[0].mxu0
  %1270 = vmatprep.mubr.bf16.mxu0 %v905
  %1271 = vmatmul.mubr.bf16.gmra.mrb[0].mxu0 %v429
  %v1272 = vpop.f32.mrb[0].mxu0
  %v1273 = vadd.f32 %v1176, %v1272
  %v1274 = vpop.f32.mrb[0].mxu0
  %v1275 = vpop.f32.mrb[0].mxu0
  %v1276 = vadd.f32 %v1179, %v1275
  %v1277 = vpop.f32.mrb[0].mxu0
  %1278 = vmatprep.mubr.bf16.mxu0 %v908
  %1279 = vmatmul.mubr.bf16.gmra.mrb[0].mxu0 %v437
  %v1280 = vpop.f32.mrb[0].mxu0
  %v1281 = vadd.f32 %v1184, %v1280
  %v1282 = vpop.f32.mrb[0].mxu0
  %v1283 = vpop.f32.mrb[0].mxu0
  %v1284 = vadd.f32 %v1187, %v1283
  %v1285 = vpop.f32.mrb[0].mxu0
  %1286 = vmatprep.mubr.bf16.mxu0 %v911
  %1287 = vmatmul.mubr.bf16.gmra.mrb[0].mxu0 %v445
  %v1288 = vpop.f32.mrb[0].mxu0
  %v1289 = vadd.f32 %v1192, %v1288
  %v1290 = vpop.f32.mrb[0].mxu0
  %v1291 = vpop.f32.mrb[0].mxu0
  %v1292 = vadd.f32 %v1195, %v1291
  %v1293 = vpop.f32.mrb[0].mxu0
  %1294 = vmatprep.mubr.bf16.mxu0 %v914
  %1295 = vmatmul.mubr.bf16.gmra.mrb[0].mxu0 %v453
  %v1296 = vpop.f32.mrb[0].mxu0
  %v1297 = vadd.f32 %v1200, %v1296
  %v1298 = vpop.f32.mrb[0].mxu0
  %v1299 = vpop.f32.mrb[0].mxu0
  %v1300 = vadd.f32 %v1203, %v1299
  %v1301 = vpop.f32.mrb[0].mxu0
  %1302 = vmatprep.mubr.bf16.mxu0 %v917
  %1303 = vmatmul.mubr.bf16.gmra.mrb[0].mxu0 %v461
  %v1304 = vpop.f32.mrb[0].mxu0
  %v1305 = vadd.f32 %v1208, %v1304
  %v1306 = vpop.f32.mrb[0].mxu0
  %v1307 = vpop.f32.mrb[0].mxu0
  %v1308 = vadd.f32 %v1211, %v1307
  %v1309 = vpop.f32.mrb[0].mxu0
  %1310 = vdwg.mxu0
  %v1311 = vld [vmem:[%s2] sm:$0x1]
  %v1312 = vld [vmem:[%s3] sm:$0x1]
  %vm1313 = vcmask 171008
  %v1314 = vsel %vm1313, %v1249, 0.0
  %v1315 = vsel %vm1313, %v1252, 0.0
  %v1316 = vadd.f32 %v1314, %v1315
  %v1317 = vsel %vm1313, %v1257, 0.0
  %v1318 = vadd.f32 %v1316, %v1317
  %v1319 = vsel %vm1313, %v1260, 0.0
  %v1320 = vadd.f32 %v1318, %v1319
  %v1321 = vsel %vm1313, %v1265, 0.0
  %v1322 = vadd.f32 %v1320, %v1321
  %v1323 = vsel %vm1313, %v1268, 0.0
  %v1324 = vadd.f32 %v1322, %v1323
  %v1325 = vsel %vm1313, %v1273, 0.0
  %v1326 = vadd.f32 %v1324, %v1325
  %v1327 = vsel %vm1313, %v1276, 0.0
  %v1328 = vadd.f32 %v1326, %v1327
  %v1329 = vsel %vm1313, %v1281, 0.0
  %v1330 = vadd.f32 %v1328, %v1329
  %v1331 = vsel %vm1313, %v1284, 0.0
  %v1332 = vadd.f32 %v1330, %v1331
  %v1333 = vsel %vm1313, %v1289, 0.0
  %v1334 = vadd.f32 %v1332, %v1333
  %v1335 = vsel %vm1313, %v1292, 0.0
  %v1336 = vadd.f32 %v1334, %v1335
  %v1337 = vsel %vm1313, %v1297, 0.0
  %v1338 = vadd.f32 %v1336, %v1337
  %v1339 = vsel %vm1313, %v1300, 0.0
  %v1340 = vadd.f32 %v1338, %v1339
  %v1341 = vsel %vm1313, %v1305, 0.0
  %v1342 = vadd.f32 %v1340, %v1341
  %v1343 = vsel %vm1313, %v1308, 0.0
  %v1344 = vadd.f32 %v1342, %v1343
  %v1345 = vrot.slane %v1344, 4
  %v1346 = vadd.f32 %v1344, %v1345
  %v1347 = vrot.slane %v1346, 2
  %v1348 = vadd.f32 %v1346, %v1347
  %v1349 = vrot.slane %v1348, 1
  %v1350 = vadd.f32 %v1348, %v1349
  %v1351 = vmul.f32 %v1249, %v1249
  %v1352 = vmul.f32 %v1252, %v1252
  %v1353 = vmul.f32 %v1257, %v1257
  %v1354 = vmul.f32 %v1260, %v1260
  %v1355 = vmul.f32 %v1265, %v1265
  %v1356 = vmul.f32 %v1268, %v1268
  %v1357 = vmul.f32 %v1273, %v1273
  %v1358 = vmul.f32 %v1276, %v1276
  %v1359 = vmul.f32 %v1281, %v1281
  %v1360 = vmul.f32 %v1284, %v1284
  %v1361 = vmul.f32 %v1289, %v1289
  %v1362 = vmul.f32 %v1292, %v1292
  %v1363 = vmul.f32 %v1297, %v1297
  %v1364 = vmul.f32 %v1300, %v1300
  %v1365 = vmul.f32 %v1305, %v1305
  %v1366 = vmul.f32 %v1308, %v1308
  %v1367 = vsel %vm1313, %v1351, 0.0
  %v1368 = vsel %vm1313, %v1352, 0.0
  %v1369 = vadd.f32 %v1367, %v1368
  %v1370 = vsel %vm1313, %v1353, 0.0
  %v1371 = vadd.f32 %v1369, %v1370
  %v1372 = vsel %vm1313, %v1354, 0.0
  %v1373 = vadd.f32 %v1371, %v1372
  %v1374 = vsel %vm1313, %v1355, 0.0
  %v1375 = vadd.f32 %v1373, %v1374
  %v1376 = vsel %vm1313, %v1356, 0.0
  %v1377 = vadd.f32 %v1375, %v1376
  %v1378 = vsel %vm1313, %v1357, 0.0
  %v1379 = vadd.f32 %v1377, %v1378
  %v1380 = vsel %vm1313, %v1358, 0.0
  %v1381 = vadd.f32 %v1379, %v1380
  %v1382 = vsel %vm1313, %v1359, 0.0
  %v1383 = vadd.f32 %v1381, %v1382
  %v1384 = vsel %vm1313, %v1360, 0.0
  %v1385 = vadd.f32 %v1383, %v1384
  %v1386 = vsel %vm1313, %v1361, 0.0
  %v1387 = vadd.f32 %v1385, %v1386
  %v1388 = vsel %vm1313, %v1362, 0.0
  %v1389 = vadd.f32 %v1387, %v1388
  %v1390 = vsel %vm1313, %v1363, 0.0
  %v1391 = vadd.f32 %v1389, %v1390
  %v1392 = vsel %vm1313, %v1364, 0.0
  %v1393 = vadd.f32 %v1391, %v1392
  %v1394 = vsel %vm1313, %v1365, 0.0
  %v1395 = vadd.f32 %v1393, %v1394
  %v1396 = vsel %vm1313, %v1366, 0.0
  %v1397 = vadd.f32 %v1395, %v1396
  %v1398 = vrot.slane %v1397, 4
  %v1399 = vadd.f32 %v1397, %v1398
  %v1400 = vrot.slane %v1399, 2
  %v1401 = vadd.f32 %v1399, %v1400
  %v1402 = vrot.slane %v1401, 1
  %v1403 = vadd.f32 %v1401, %v1402
  %v1404 = vmul.f32 %v1350, 0.0078125
  %v1405 = vmul.f32 %v1403, 0.0078125
  %v1406 = vmul.f32 %v1404, %v1404
  %v1407 = vsub.f32 %v1405, %v1406
  %v1408 = vmax.f32 %v1407, 0.0
  %v1409 = vadd.f32 %v1408, 1e-05
  %v1410 = vrsqrt.pop %v1409
  %v1411 = vmul.f32 %v1311, %v1410
  %v1412 = vmul.f32 %v1404, %v1411
  %v1413 = vsub.f32 %v1312, %v1412
  %v1415 = vlaneseq
  %v1416 = vshrl.u32 %v1415, 7
  %v1417 = vsub.s32 0, %v1416
  %v1418 = vrot.slane %v1411, %v1417
  %v1420 = vmul.f32 %v1249, %v1418
  %v1421 = vmul.f32 %v1252, %v1418
  %v1422 = vmul.f32 %v1257, %v1418
  %v1423 = vmul.f32 %v1260, %v1418
  %v1424 = vmul.f32 %v1265, %v1418
  %v1425 = vmul.f32 %v1268, %v1418
  %v1426 = vmul.f32 %v1273, %v1418
  %v1427 = vmul.f32 %v1276, %v1418
  %v1428 = vmul.f32 %v1281, %v1418
  %v1429 = vmul.f32 %v1284, %v1418
  %v1430 = vmul.f32 %v1289, %v1418
  %v1431 = vmul.f32 %v1292, %v1418
  %v1432 = vmul.f32 %v1297, %v1418
  %v1433 = vmul.f32 %v1300, %v1418
  %v1434 = vmul.f32 %v1305, %v1418
  %v1435 = vmul.f32 %v1308, %v1418
  %v1437 = vlaneseq
  %v1438 = vshrl.u32 %v1437, 7
  %v1439 = vsub.s32 0, %v1438
  %v1440 = vrot.slane %v1413, %v1439
  %v1442 = vadd.f32 %v1420, %v1440
  %v1443 = vadd.f32 %v1421, %v1440
  %v1444 = vadd.f32 %v1422, %v1440
  %v1445 = vadd.f32 %v1423, %v1440
  %v1446 = vadd.f32 %v1424, %v1440
  %v1447 = vadd.f32 %v1425, %v1440
  %v1448 = vadd.f32 %v1426, %v1440
  %v1449 = vadd.f32 %v1427, %v1440
  %v1450 = vadd.f32 %v1428, %v1440
  %v1451 = vadd.f32 %v1429, %v1440
  %v1452 = vadd.f32 %v1430, %v1440
  %v1453 = vadd.f32 %v1431, %v1440
  %v1454 = vadd.f32 %v1432, %v1440
  %v1455 = vadd.f32 %v1433, %v1440
  %v1456 = vadd.f32 %v1434, %v1440
  %v1457 = vadd.f32 %v1435, %v1440
  %vm1458 = vcmp.ge.f32.partialorder %v1442, 0.0
  %vm1459 = vcmp.ge.f32.partialorder %v1443, 0.0
  %vm1460 = vcmp.ge.f32.partialorder %v1444, 0.0
  %vm1461 = vcmp.ge.f32.partialorder %v1445, 0.0
  %vm1462 = vcmp.ge.f32.partialorder %v1446, 0.0
  %vm1463 = vcmp.ge.f32.partialorder %v1447, 0.0
  %vm1464 = vcmp.ge.f32.partialorder %v1448, 0.0
  %vm1465 = vcmp.ge.f32.partialorder %v1449, 0.0
  %vm1466 = vcmp.ge.f32.partialorder %v1450, 0.0
  %vm1467 = vcmp.ge.f32.partialorder %v1451, 0.0
  %vm1468 = vcmp.ge.f32.partialorder %v1452, 0.0
  %vm1469 = vcmp.ge.f32.partialorder %v1453, 0.0
  %vm1470 = vcmp.ge.f32.partialorder %v1454, 0.0
  %vm1471 = vcmp.ge.f32.partialorder %v1455, 0.0
  %vm1472 = vcmp.ge.f32.partialorder %v1456, 0.0
  %vm1473 = vcmp.ge.f32.partialorder %v1457, 0.0
  %v1474 = vmul.f32 %v1442, 0.01
  %v1475 = vmul.f32 %v1443, 0.01
  %v1476 = vmul.f32 %v1444, 0.01
  %v1477 = vmul.f32 %v1445, 0.01
  %v1478 = vmul.f32 %v1446, 0.01
  %v1479 = vmul.f32 %v1447, 0.01
  %v1480 = vmul.f32 %v1448, 0.01
  %v1481 = vmul.f32 %v1449, 0.01
  %v1482 = vmul.f32 %v1450, 0.01
  %v1483 = vmul.f32 %v1451, 0.01
  %v1484 = vmul.f32 %v1452, 0.01
  %v1485 = vmul.f32 %v1453, 0.01
  %v1486 = vmul.f32 %v1454, 0.01
  %v1487 = vmul.f32 %v1455, 0.01
  %v1488 = vmul.f32 %v1456, 0.01
  %v1489 = vmul.f32 %v1457, 0.01
  %v1490 = vsel %vm1458, %v1442, %v1474
  %v1491 = vsel %vm1459, %v1443, %v1475
  %v1492 = vsel %vm1460, %v1444, %v1476
  %v1493 = vsel %vm1461, %v1445, %v1477
  %v1494 = vsel %vm1462, %v1446, %v1478
  %v1495 = vsel %vm1463, %v1447, %v1479
  %v1496 = vsel %vm1464, %v1448, %v1480
  %v1497 = vsel %vm1465, %v1449, %v1481
  %v1498 = vsel %vm1466, %v1450, %v1482
  %v1499 = vsel %vm1467, %v1451, %v1483
  %v1500 = vsel %vm1468, %v1452, %v1484
  %v1501 = vsel %vm1469, %v1453, %v1485
  %v1502 = vsel %vm1470, %v1454, %v1486
  %v1503 = vsel %vm1471, %v1455, %v1487
  %v1504 = vsel %vm1472, %v1456, %v1488
  %v1505 = vsel %vm1473, %v1457, %v1489
  %1506 = vst.msk [vmem:[%s4] sm:$0xff] %vm1313, %v1490
  %1507 = vst.msk [vmem:[%s4 + $0x8] sm:$0xff] %vm1313, %v1491
  %1508 = vst.msk [vmem:[%s4 + $0x10] sm:$0xff] %vm1313, %v1492
  %1509 = vst.msk [vmem:[%s4 + $0x18] sm:$0xff] %vm1313, %v1493
  %1510 = vst.msk [vmem:[%s4 + $0x20] sm:$0xff] %vm1313, %v1494
  %1511 = vst.msk [vmem:[%s4 + $0x28] sm:$0xff] %vm1313, %v1495
  %1512 = vst.msk [vmem:[%s4 + $0x30] sm:$0xff] %vm1313, %v1496
  %1513 = vst.msk [vmem:[%s4 + $0x38] sm:$0xff] %vm1313, %v1497
  %1514 = vst.msk [vmem:[%s4 + $0x40] sm:$0xff] %vm1313, %v1498
  %1515 = vst.msk [vmem:[%s4 + $0x48] sm:$0xff] %vm1313, %v1499
  %1516 = vst.msk [vmem:[%s4 + $0x50] sm:$0xff] %vm1313, %v1500
  %1517 = vst.msk [vmem:[%s4 + $0x58] sm:$0xff] %vm1313, %v1501
  %1518 = vst.msk [vmem:[%s4 + $0x60] sm:$0xff] %vm1313, %v1502
  %1519 = vst.msk [vmem:[%s4 + $0x68] sm:$0xff] %vm1313, %v1503
  %1520 = vst.msk [vmem:[%s4 + $0x70] sm:$0xff] %vm1313, %v1504
  %1521 = vst.msk [vmem:[%s4 + $0x78] sm:$0xff] %vm1313, %v1505
  // Predicated region
  $region18: #{inception_forward.10} parent=0 // pred_check
    _
  $region19: #{inception_forward.10} parent=0 // pred_check_branch
    %1523 = sbr.rel (0) target = $region21
  $region20: #{inception_forward.10} parent=0 // pred_region
    _
  $region21: #{inception_forward.10} parent=0 // pred_fallthru
    _
  // Predicated region
  $region22: #{inception_forward.10} parent=0 // pred_check
    _
  $region23: #{inception_forward.10} parent=0 // pred_check_branch
    %1525 = sbr.rel (0) target = $region25
  $region24: #{inception_forward.10} parent=0 // pred_region
    _
  $region25: #{inception_forward.10} parent=0 // pred_fallthru
    _

// kernel: inception_forward.11
$region0: #{inception_forward.11}
  #allocation0 [shape = 'u32[]', space=smem, size = 0x4, offset = 0x4, fixed_abs, tag = 'smem constant byte address 0x4 - core index']
  #allocation1 [shape = 'u32[144,128]{1,0:T(1,128)}', space=vmem, size = 0x12000, scoped, tag = 'internal scratch']
  %s0 = inlined_call_operand.vmem [shape: bf16[128,567], index: 0, kind: input, shape index: {}]
  %s1 = inlined_call_operand.vmem [shape: bf16[567,10], index: 1, kind: input, shape index: {}]
  %s2 = inlined_call_operand.vmem [shape: f32[1,10], index: 2, kind: input, shape index: {}]
  %s3 = inlined_call_operand.vmem [shape: f32[1,10], index: 3, kind: input, shape index: {}]
  %s4 = inlined_call_operand.vmem [shape: bf16[10,2], index: 4, kind: input, shape index: {}]
  %s5 = inlined_call_operand.vmem [shape: f32[1,2], index: 5, kind: input, shape index: {}]
  %s6 = inlined_call_operand.vmem [shape: f32[1,2], index: 6, kind: input, shape index: {}]
  %s7 = inlined_call_operand.vmem [shape: f32[128,2], index: 7, kind: output, shape index: {}]
  %s8 = sld [smem:[#allocation0]]
  $region38: #{inception_forward.11} parent=0
    _
  %s10 = ssub.s32 1, %s8
  %s11 = scalar_select 0, %s10, %s8
  // Predicated region
  $region2: #{inception_forward.11} parent=0 // pred_check
    _
  $region3: #{inception_forward.11} parent=0 // pred_check_branch
    %13 = sbr.rel (0) target = $region5
  $region4: #{inception_forward.11} parent=0 // pred_region
    _
  $region5: #{inception_forward.11} parent=0 // pred_fallthru
    _
  // Predicated region
  $region6: #{inception_forward.11} parent=0 // pred_check
    _
  $region7: #{inception_forward.11} parent=0 // pred_check_branch
    %15 = sbr.rel (0) target = $region9
  $region8: #{inception_forward.11} parent=0 // pred_region
    _
  $region9: #{inception_forward.11} parent=0 // pred_fallthru
    _
  // Predicated region
  $region10: #{inception_forward.11} parent=0 // pred_check
    _
  $region11: #{inception_forward.11} parent=0 // pred_check_branch
    %17 = sbr.rel (0) target = $region13
  $region12: #{inception_forward.11} parent=0 // pred_region
    _
  $region13: #{inception_forward.11} parent=0 // pred_fallthru
    _
  // Predicated region
  $region14: #{inception_forward.11} parent=0 // pred_check
    _
  $region15: #{inception_forward.11} parent=0 // pred_check_branch
    %19 = sbr.rel (0) target = $region17
  $region16: #{inception_forward.11} parent=0 // pred_region
    _
  $region17: #{inception_forward.11} parent=0 // pred_fallthru
    _
  // Predicated region
  $region18: #{inception_forward.11} parent=0 // pred_check
    _
  $region19: #{inception_forward.11} parent=0 // pred_check_branch
    %21 = sbr.rel (0) target = $region21
  $region20: #{inception_forward.11} parent=0 // pred_region
    _
  $region21: #{inception_forward.11} parent=0 // pred_fallthru
    _
  // Predicated region
  $region22: #{inception_forward.11} parent=0 // pred_check
    _
  $region23: #{inception_forward.11} parent=0 // pred_check_branch
    %23 = sbr.rel (0) target = $region25
  $region24: #{inception_forward.11} parent=0 // pred_region
    _
  $region25: #{inception_forward.11} parent=0 // pred_fallthru
    _
  // Predicated region
  $region26: #{inception_forward.11} parent=0 // pred_check
    _
  $region27: #{inception_forward.11} parent=0 // pred_check_branch
    %25 = sbr.rel (0) target = $region29
  $region28: #{inception_forward.11} parent=0 // pred_region
    _
  $region29: #{inception_forward.11} parent=0 // pred_fallthru
    _
  %v27 = vld [vmem:[%s0] sm:$0xff]
  %v28 = vld [vmem:[%s0 + $0x8] sm:$0xff]
  %v29 = vld [vmem:[%s0 + $0x10] sm:$0xf]
  %v30 = vld [vmem:[%s0 + $0x14] sm:$0xff]
  %v31 = vld [vmem:[%s0 + $0x1c] sm:$0xff]
  %v32 = vld [vmem:[%s0 + $0x24] sm:$0xf]
  %v33 = vld [vmem:[%s0 + $0x28] sm:$0xff]
  %v34 = vld [vmem:[%s0 + $0x30] sm:$0xff]
  %v35 = vld [vmem:[%s0 + $0x38] sm:$0xf]
  %v36 = vld [vmem:[%s0 + $0x3c] sm:$0xff]
  %v37 = vld [vmem:[%s0 + $0x44] sm:$0xff]
  %v38 = vld [vmem:[%s0 + $0x4c] sm:$0xf]
  %v39 = vld [vmem:[%s0 + $0x50] sm:$0xff]
  %v40 = vld [vmem:[%s0 + $0x58] sm:$0xff]
  %v41 = vld [vmem:[%s0 + $0x60] sm:$0xf]
  %v42 = vld [vmem:[%s0 + $0x64] sm:$0xff]
  %v43 = vld [vmem:[%s0 + $0x6c] sm:$0xff]
  %v44 = vld [vmem:[%s0 + $0x74] sm:$0xf]
  %v45 = vld [vmem:[%s0 + $0x78] sm:$0xff]
  %v46 = vld [vmem:[%s0 + $0x80] sm:$0xff]
  %v47 = vld [vmem:[%s0 + $0x88] sm:$0xf]
  %v48 = vld [vmem:[%s0 + $0x8c] sm:$0xff]
  %v49 = vld [vmem:[%s0 + $0x94] sm:$0xff]
  %v50 = vld [vmem:[%s0 + $0x9c] sm:$0xf]
  %v51 = vld [vmem:[%s0 + $0xa0] sm:$0xff]
  %v52 = vld [vmem:[%s0 + $0xa8] sm:$0xff]
  %v53 = vld [vmem:[%s0 + $0xb0] sm:$0xf]
  %v54 = vld [vmem:[%s0 + $0xb4] sm:$0xff]
  %v55 = vld [vmem:[%s0 + $0xbc] sm:$0xff]
  %v56 = vld [vmem:[%s0 + $0xc4] sm:$0xf]
  %v57 = vld [vmem:[%s0 + $0xc8] sm:$0xff]
  %v58 = vld [vmem:[%s0 + $0xd0] sm:$0xff]
  %v59 = vld [vmem:[%s0 + $0xd8] sm:$0xf]
  %v60 = vld [vmem:[%s0 + $0xdc] sm:$0xff]
  %v61 = vld [vmem:[%s0 + $0xe4] sm:$0xff]
  %v62 = vld [vmem:[%s0 + $0xec] sm:$0xf]
  %v63 = vld [vmem:[%s0 + $0xf0] sm:$0xff]
  %v64 = vld [vmem:[%s0 + $0xf8] sm:$0xff]
  %v65 = vld [vmem:[%s0 + $0x100] sm:$0xf]
  %v66 = vld [vmem:[%s0 + $0x104] sm:$0xff]
  %v67 = vld [vmem:[%s0 + $0x10c] sm:$0xff]
  %v68 = vld [vmem:[%s0 + $0x114] sm:$0xf]
  %v69 = vld [vmem:[%s0 + $0x118] sm:$0xff]
  %v70 = vld [vmem:[%s0 + $0x120] sm:$0xff]
  %v71 = vld [vmem:[%s0 + $0x128] sm:$0xf]
  %v72 = vld [vmem:[%s0 + $0x12c] sm:$0xff]
  %v73 = vld [vmem:[%s0 + $0x134] sm:$0xff]
  %v74 = vld [vmem:[%s0 + $0x13c] sm:$0xf]
  %v75 = vld [vmem:[%s1] sm:$0xf]
  %v76 = vld [vmem:[%s1 + $0x4] sm:$0xf]
  %v77 = vld [vmem:[%s1 + $0x8] sm:$0xf]
  %v78 = vld [vmem:[%s1 + $0xc] sm:$0xf]
  %v79 = vld [vmem:[%s1 + $0x10] sm:$0xf]
  %v80 = vld [vmem:[%s1 + $0x14] sm:$0xf]
  %v81 = vld [vmem:[%s1 + $0x18] sm:$0xf]
  %v82 = vld [vmem:[%s1 + $0x1c] sm:$0xf]
  %v83 = vld [vmem:[%s1 + $0x20] sm:$0xf]
  %v84 = vld [vmem:[%s1 + $0x24] sm:$0xf]
  %v85 = vld [vmem:[%s1 + $0x28] sm:$0xf]
  %v86 = vld [vmem:[%s1 + $0x2c] sm:$0xf]
  %v87 = vld [vmem:[%s1 + $0x30] sm:$0xf]
  %v88 = vld [vmem:[%s1 + $0x34] sm:$0xf]
  %v89 = vld [vmem:[%s1 + $0x38] sm:$0xf]
  %v90 = vld [vmem:[%s1 + $0x3c] sm:$0xf]
  %v91 = vld [vmem:[%s1 + $0x40] sm:$0xf]
  %v92 = vld [vmem:[%s1 + $0x44] sm:$0xf]
  %v93 = vld [vmem:[%s1 + $0x48] sm:$0xf]
  %v94 = vld [vmem:[%s1 + $0x4c] sm:$0xf]
  %v95 = vld [vmem:[%s1 + $0x50] sm:$0xf]
  %v96 = vld [vmem:[%s1 + $0x54] sm:$0xf]
  %v97 = vld [vmem:[%s1 + $0x58] sm:$0xf]
  %v98 = vld [vmem:[%s1 + $0x5c] sm:$0xf]
  %v99 = vld [vmem:[%s1 + $0x60] sm:$0xf]
  %v100 = vld [vmem:[%s1 + $0x64] sm:$0xf]
  %v101 = vld [vmem:[%s1 + $0x68] sm:$0xf]
  %v102 = vld [vmem:[%s1 + $0x6c] sm:$0xf]
  %v103 = vld [vmem:[%s1 + $0x70] sm:$0xf]
  %v104 = vld [vmem:[%s1 + $0x74] sm:$0xf]
  %v105 = vld [vmem:[%s1 + $0x78] sm:$0xf]
  %v106 = vld [vmem:[%s1 + $0x7c] sm:$0xf]
  %v107 = vld [vmem:[%s1 + $0x80] sm:$0xf]
  %v108 = vld [vmem:[%s1 + $0x84] sm:$0xf]
  %v109 = vld [vmem:[%s1 + $0x88] sm:$0xf]
  %v110 = vld [vmem:[%s1 + $0x8c] sm:$0xf]
  %v111 = vld [vmem:[%s1 + $0x90] sm:$0xf]
  %v112 = vld [vmem:[%s1 + $0x94] sm:$0xf]
  %v113 = vld [vmem:[%s1 + $0x98] sm:$0xf]
  %v114 = vld [vmem:[%s1 + $0x9c] sm:$0xf]
  %v115 = vld [vmem:[%s1 + $0xa0] sm:$0xf]
  %v116 = vld [vmem:[%s1 + $0xa4] sm:$0xf]
  %v117 = vld [vmem:[%s1 + $0xa8] sm:$0xf]
  %v118 = vld [vmem:[%s1 + $0xac] sm:$0xf]
  %v119 = vld [vmem:[%s1 + $0xb0] sm:$0xf]
  %v120 = vld [vmem:[%s1 + $0xb4] sm:$0xf]
  %v121 = vld [vmem:[%s1 + $0xb8] sm:$0xf]
  %v122 = vld [vmem:[%s1 + $0xbc] sm:$0xf]
  %v123 = vld [vmem:[%s1 + $0xc0] sm:$0xf]
  %v124 = vld [vmem:[%s1 + $0xc4] sm:$0xf]
  %v125 = vld [vmem:[%s1 + $0xc8] sm:$0xf]
  %v126 = vld [vmem:[%s1 + $0xcc] sm:$0xf]
  %v127 = vld [vmem:[%s1 + $0xd0] sm:$0xf]
  %v128 = vld [vmem:[%s1 + $0xd4] sm:$0xf]
  %v129 = vld [vmem:[%s1 + $0xd8] sm:$0xf]
  %v130 = vld [vmem:[%s1 + $0xdc] sm:$0xf]
  %v131 = vld [vmem:[%s1 + $0xe0] sm:$0xf]
  %v132 = vld [vmem:[%s1 + $0xe4] sm:$0xf]
  %v133 = vld [vmem:[%s1 + $0xe8] sm:$0xf]
  %v134 = vld [vmem:[%s1 + $0xec] sm:$0xf]
  %v135 = vld [vmem:[%s1 + $0xf0] sm:$0xf]
  %v136 = vld [vmem:[%s1 + $0xf4] sm:$0xf]
  %v137 = vld [vmem:[%s1 + $0xf8] sm:$0xf]
  %v138 = vld [vmem:[%s1 + $0xfc] sm:$0xf]
  %v139 = vld [vmem:[%s1 + $0x100] sm:$0xf]
  %v140 = vld [vmem:[%s1 + $0x104] sm:$0xf]
  %v141 = vld [vmem:[%s1 + $0x108] sm:$0xf]
  %v142 = vld [vmem:[%s1 + $0x10c] sm:$0xf]
  %v143 = vld [vmem:[%s1 + $0x110] sm:$0xf]
  %v144 = vld [vmem:[%s1 + $0x114] sm:$0xf]
  %v145 = vld [vmem:[%s1 + $0x118] sm:$0xf]
  %v194 = vunpack.c.l.b16 %v27
  %v195 = vunpack.c.h.b16 %v27
  %v196 = vunpack.c.l.b16 %v28
  %v197 = vunpack.c.h.b16 %v28
  %v198 = vunpack.c.l.b16 %v29
  %v199 = vunpack.c.l.b16 %v30
  %v200 = vunpack.c.h.b16 %v30
  %v201 = vunpack.c.l.b16 %v31
  %v202 = vunpack.c.h.b16 %v31
  %v203 = vunpack.c.l.b16 %v32
  %v204 = vunpack.c.l.b16 %v33
  %v205 = vunpack.c.h.b16 %v33
  %v206 = vunpack.c.l.b16 %v34
  %v207 = vunpack.c.h.b16 %v34
  %v208 = vunpack.c.l.b16 %v35
  %v209 = vunpack.c.l.b16 %v36
  %v210 = vunpack.c.h.b16 %v36
  %v211 = vunpack.c.l.b16 %v37
  %v212 = vunpack.c.h.b16 %v37
  %v213 = vunpack.c.l.b16 %v38
  %v214 = vunpack.c.l.b16 %v39
  %v215 = vunpack.c.h.b16 %v39
  %v216 = vunpack.c.l.b16 %v40
  %v217 = vunpack.c.h.b16 %v40
  %v218 = vunpack.c.l.b16 %v41
  %v219 = vunpack.c.l.b16 %v42
  %v220 = vunpack.c.h.b16 %v42
  %v221 = vunpack.c.l.b16 %v43
  %v222 = vunpack.c.h.b16 %v43
  %v223 = vunpack.c.l.b16 %v44
  %v224 = vunpack.c.l.b16 %v45
  %v225 = vunpack.c.h.b16 %v45
  %v226 = vunpack.c.l.b16 %v46
  %v227 = vunpack.c.h.b16 %v46
  %v228 = vunpack.c.l.b16 %v47
  %v229 = vunpack.c.l.b16 %v48
  %v230 = vunpack.c.h.b16 %v48
  %v231 = vunpack.c.l.b16 %v49
  %v232 = vunpack.c.h.b16 %v49
  %v233 = vunpack.c.l.b16 %v50
  %v234 = vunpack.c.l.b16 %v51
  %v235 = vunpack.c.h.b16 %v51
  %v236 = vunpack.c.l.b16 %v52
  %v237 = vunpack.c.h.b16 %v52
  %v238 = vunpack.c.l.b16 %v53
  %v239 = vunpack.c.l.b16 %v54
  %v240 = vunpack.c.h.b16 %v54
  %v241 = vunpack.c.l.b16 %v55
  %v242 = vunpack.c.h.b16 %v55
  %v243 = vunpack.c.l.b16 %v56
  %v244 = vunpack.c.l.b16 %v57
  %v245 = vunpack.c.h.b16 %v57
  %v246 = vunpack.c.l.b16 %v58
  %v247 = vunpack.c.h.b16 %v58
  %v248 = vunpack.c.l.b16 %v59
  %v249 = vunpack.c.l.b16 %v60
  %v250 = vunpack.c.h.b16 %v60
  %v251 = vunpack.c.l.b16 %v61
  %v252 = vunpack.c.h.b16 %v61
  %v253 = vunpack.c.l.b16 %v62
  %v254 = vunpack.c.l.b16 %v63
  %v255 = vunpack.c.h.b16 %v63
  %v256 = vunpack.c.l.b16 %v64
  %v257 = vunpack.c.h.b16 %v64
  %v258 = vunpack.c.l.b16 %v65
  %v259 = vunpack.c.l.b16 %v66
  %v260 = vunpack.c.h.b16 %v66
  %v261 = vunpack.c.l.b16 %v67
  %v262 = vunpack.c.h.b16 %v67
  %v263 = vunpack.c.l.b16 %v68
  %v264 = vunpack.c.l.b16 %v69
  %v265 = vunpack.c.h.b16 %v69
  %v266 = vunpack.c.l.b16 %v70
  %v267 = vunpack.c.h.b16 %v70
  %v268 = vunpack.c.l.b16 %v71
  %v269 = vunpack.c.l.b16 %v72
  %v270 = vunpack.c.h.b16 %v72
  %v271 = vunpack.c.l.b16 %v73
  %v272 = vunpack.c.h.b16 %v73
  %v273 = vunpack.c.l.b16 %v74
  %v274 = vpack.c.b16 %v199, %v194
  %v275 = vpack.c.b16 %v200, %v195
  %v276 = vpack.c.b16 %v201, %v196
  %v277 = vpack.c.b16 %v202, %v197
  %v278 = vpack.c.b16 %v203, %v198
  %v279 = vpack.c.b16 %v209, %v204
  %v280 = vpack.c.b16 %v210, %v205
  %v281 = vpack.c.b16 %v211, %v206
  %v282 = vpack.c.b16 %v212, %v207
  %v283 = vpack.c.b16 %v213, %v208
  %v284 = vpack.c.b16 %v219, %v214
  %v285 = vpack.c.b16 %v220, %v215
  %v286 = vpack.c.b16 %v221, %v216
  %v287 = vpack.c.b16 %v222, %v217
  %v288 = vpack.c.b16 %v223, %v218
  %v289 = vpack.c.b16 %v229, %v224
  %v290 = vpack.c.b16 %v230, %v225
  %v291 = vpack.c.b16 %v231, %v226
  %v292 = vpack.c.b16 %v232, %v227
  %v293 = vpack.c.b16 %v233, %v228
  %v294 = vpack.c.b16 %v239, %v234
  %v295 = vpack.c.b16 %v240, %v235
  %v296 = vpack.c.b16 %v241, %v236
  %v297 = vpack.c.b16 %v242, %v237
  %v298 = vpack.c.b16 %v243, %v238
  %v299 = vpack.c.b16 %v249, %v244
  %v300 = vpack.c.b16 %v250, %v245
  %v301 = vpack.c.b16 %v251, %v246
  %v302 = vpack.c.b16 %v252, %v247
  %v303 = vpack.c.b16 %v253, %v248
  %v304 = vpack.c.b16 %v259, %v254
  %v305 = vpack.c.b16 %v260, %v255
  %v306 = vpack.c.b16 %v261, %v256
  %v307 = vpack.c.b16 %v262, %v257
  %v308 = vpack.c.b16 %v263, %v258
  %v309 = vpack.c.b16 %v269, %v264
  %v310 = vpack.c.b16 %v270, %v265
  %v311 = vpack.c.b16 %v271, %v266
  %v312 = vpack.c.b16 %v272, %v267
  %v313 = vpack.c.b16 %v273, %v268
  %v417 = vunpack.c.l.b16 %v75
  %v418 = vunpack.c.l.b16 %v76
  %v419 = vunpack.c.l.b16 %v77
  %v420 = vunpack.c.l.b16 %v78
  %v421 = vunpack.c.l.b16 %v79
  %v422 = vunpack.c.l.b16 %v80
  %v423 = vunpack.c.l.b16 %v81
  %v424 = vunpack.c.l.b16 %v82
  %v425 = vunpack.c.l.b16 %v83
  %v426 = vunpack.c.l.b16 %v84
  %v427 = vunpack.c.l.b16 %v85
  %v428 = vunpack.c.l.b16 %v86
  %v429 = vunpack.c.l.b16 %v87
  %v430 = vunpack.c.l.b16 %v88
  %v431 = vunpack.c.l.b16 %v89
  %v432 = vunpack.c.l.b16 %v90
  %v433 = vunpack.c.l.b16 %v91
  %v434 = vunpack.c.l.b16 %v92
  %v435 = vunpack.c.l.b16 %v93
  %v436 = vunpack.c.l.b16 %v94
  %v437 = vunpack.c.l.b16 %v95
  %v438 = vunpack.c.l.b16 %v96
  %v439 = vunpack.c.l.b16 %v97
  %v440 = vunpack.c.l.b16 %v98
  %v441 = vunpack.c.l.b16 %v99
  %v442 = vunpack.c.l.b16 %v100
  %v443 = vunpack.c.l.b16 %v101
  %v444 = vunpack.c.l.b16 %v102
  %v445 = vunpack.c.l.b16 %v103
  %v446 = vunpack.c.l.b16 %v104
  %v447 = vunpack.c.l.b16 %v105
  %v448 = vunpack.c.l.b16 %v106
  %v449 = vunpack.c.l.b16 %v107
  %v450 = vunpack.c.l.b16 %v108
  %v451 = vunpack.c.l.b16 %v109
  %v452 = vunpack.c.l.b16 %v110
  %v453 = vunpack.c.l.b16 %v111
  %v454 = vunpack.c.l.b16 %v112
  %v455 = vunpack.c.l.b16 %v113
  %v456 = vunpack.c.l.b16 %v114
  %v457 = vunpack.c.l.b16 %v115
  %v458 = vunpack.c.l.b16 %v116
  %v459 = vunpack.c.l.b16 %v117
  %v460 = vunpack.c.l.b16 %v118
  %v461 = vunpack.c.l.b16 %v119
  %v462 = vunpack.c.l.b16 %v120
  %v463 = vunpack.c.l.b16 %v121
  %v464 = vunpack.c.l.b16 %v122
  %v465 = vunpack.c.l.b16 %v123
  %v466 = vunpack.c.l.b16 %v124
  %v467 = vunpack.c.l.b16 %v125
  %v468 = vunpack.c.l.b16 %v126
  %v469 = vunpack.c.l.b16 %v127
  %v470 = vunpack.c.l.b16 %v128
  %v471 = vunpack.c.l.b16 %v129
  %v472 = vunpack.c.l.b16 %v130
  %v473 = vunpack.c.l.b16 %v131
  %v474 = vunpack.c.l.b16 %v132
  %v475 = vunpack.c.l.b16 %v133
  %v476 = vunpack.c.l.b16 %v134
  %v477 = vunpack.c.l.b16 %v135
  %v478 = vunpack.c.l.b16 %v136
  %v479 = vunpack.c.l.b16 %v137
  %v480 = vunpack.c.l.b16 %v138
  %v481 = vunpack.c.l.b16 %v139
  %v482 = vunpack.c.l.b16 %v140
  %v483 = vunpack.c.l.b16 %v141
  %v484 = vunpack.c.l.b16 %v142
  %v485 = vunpack.c.l.b16 %v143
  %v486 = vunpack.c.l.b16 %v144
  %v487 = vunpack.c.l.b16 %v145
  %v488 = vpack.c.b16 %v418, %v417
  %v489 = vpack.c.b16 %v420, %v419
  %v490 = vpack.c.b16 %v422, %v421
  %v491 = vpack.c.b16 %v424, %v423
  %v492 = vpack.c.b16 %v426, %v425
  %v493 = vpack.c.b16 %v428, %v427
  %v494 = vpack.c.b16 %v430, %v429
  %v495 = vpack.c.b16 %v432, %v431
  %v496 = vpack.c.b16 %v434, %v433
  %v497 = vpack.c.b16 %v436, %v435
  %v498 = vpack.c.b16 %v438, %v437
  %v499 = vpack.c.b16 %v440, %v439
  %v500 = vpack.c.b16 %v442, %v441
  %v501 = vpack.c.b16 %v444, %v443
  %v502 = vpack.c.b16 %v446, %v445
  %v503 = vpack.c.b16 %v448, %v447
  %v504 = vpack.c.b16 %v450, %v449
  %v505 = vpack.c.b16 %v452, %v451
  %v506 = vpack.c.b16 %v454, %v453
  %v507 = vpack.c.b16 %v456, %v455
  %v508 = vpack.c.b16 %v458, %v457
  %v509 = vpack.c.b16 %v460, %v459
  %v510 = vpack.c.b16 %v462, %v461
  %v511 = vpack.c.b16 %v464, %v463
  %v512 = vpack.c.b16 %v466, %v465
  %v513 = vpack.c.b16 %v468, %v467
  %v514 = vpack.c.b16 %v470, %v469
  %v515 = vpack.c.b16 %v472, %v471
  %v516 = vpack.c.b16 %v474, %v473
  %v517 = vpack.c.b16 %v476, %v475
  %v518 = vpack.c.b16 %v478, %v477
  %v519 = vpack.c.b16 %v480, %v479
  %v520 = vpack.c.b16 %v482, %v481
  %v521 = vpack.c.b16 %v484, %v483
  %v522 = vpack.c.b16 %v486, %v485
  %v523 = vpack.c.b16 %v487, %v487
  %vm559 = vcmask 449536
  %v561 = vsel %vm559, %v278, 0
  %v564 = vsel %vm559, %v283, 0
  %v567 = vsel %vm559, %v288, 0
  %v570 = vsel %vm559, %v293, 0
  %v573 = vsel %vm559, %v298, 0
  %v576 = vsel %vm559, %v303, 0
  %v579 = vsel %vm559, %v308, 0
  %v582 = vsel %vm559, %v313, 0
  %vm584 = vcmask 1042432
  %vm585 = vcmask 1043456
  %v586 = vsel %vm584, 4294967295, 65535
  %v587 = vsel %vm585, %v586, 0
  %v589 = vand.u32 %v523, %v587
  %591 = vmatprep.subr.bf16.mxu0 0
  %592 = vmatpush1.bf16.msra.mxu0 %v488
  %593 = vmatprep.subr.bf16.mxu0 0
  %594 = vmatpush1.bf16.msra.mxu0 %v489
  %595 = vmatprep.subr.bf16.mxu0 0
  %596 = vmatpush1.bf16.msra.mxu0 %v490
  %597 = vmatprep.subr.bf16.mxu0 0
  %598 = vmatpush1.bf16.msra.mxu0 %v491
  %599 = vmatprep.subr.bf16.mxu0 0
  %600 = vmatpush1.bf16.msra.mxu0 %v492
  %601 = vmatprep.subr.bf16.mxu0 0
  %602 = vmatpush1.bf16.msra.mxu0 %v493
  %603 = vmatprep.subr.bf16.mxu0 0
  %604 = vmatpush1.bf16.msra.mxu0 %v494
  %605 = vmatprep.subr.bf16.mxu0 0
  %606 = vmatpush1.bf16.msra.mxu0 %v495
  %607 = vmatprep.subr.bf16.mxu0 0
  %608 = vmatpush1.bf16.msra.mxu0 %v496
  %609 = vmatprep.subr.bf16.mxu0 0
  %610 = vmatpush1.bf16.msra.mxu0 %v497
  %611 = vmatprep.subr.bf16.mxu0 0
  %612 = vmatpush1.bf16.msra.mxu0 %v498
  %613 = vmatprep.subr.bf16.mxu0 0
  %614 = vmatpush1.bf16.msra.mxu0 %v499
  %615 = vmatprep.subr.bf16.mxu0 0
  %616 = vmatpush1.bf16.msra.mxu0 %v500
  %617 = vmatprep.subr.bf16.mxu0 0
  %618 = vmatpush1.bf16.msra.mxu0 %v501
  %619 = vmatprep.subr.bf16.mxu0 0
  %620 = vmatpush1.bf16.msra.mxu0 %v502
  %621 = vmatprep.subr.bf16.mxu0 0
  %622 = vmatpush1.bf16.msra.mxu0 %v503
  %623 = vmatprep.mubr.bf16.mxu0 %v275
  %624 = vmatmul.mubr.bf16.gmra.mrb[0].mxu0 %v274
  %v625 = vpop.f32.mrb[0].mxu0
  %v626 = vadd.f32 0.0, %v625
  %v627 = vpop.f32.mrb[0].mxu0
  %v628 = vpop.f32.mrb[0].mxu0
  %v629 = vadd.f32 0.0, %v628
  %v630 = vpop.f32.mrb[0].mxu0
  %631 = vmatprep.mubr.bf16.mxu0 %v280
  %632 = vmatmul.mubr.bf16.gmra.mrb[0].mxu0 %v279
  %v633 = vpop.f32.mrb[0].mxu0
  %v634 = vadd.f32 0.0, %v633
  %v635 = vpop.f32.mrb[0].mxu0
  %v636 = vpop.f32.mrb[0].mxu0
  %v637 = vadd.f32 0.0, %v636
  %v638 = vpop.f32.mrb[0].mxu0
  %639 = vmatprep.mubr.bf16.mxu0 %v285
  %640 = vmatmul.mubr.bf16.gmra.mrb[0].mxu0 %v284
  %v641 = vpop.f32.mrb[0].mxu0
  %v642 = vadd.f32 0.0, %v641
  %v643 = vpop.f32.mrb[0].mxu0
  %v644 = vpop.f32.mrb[0].mxu0
  %v645 = vadd.f32 0.0, %v644
  %v646 = vpop.f32.mrb[0].mxu0
  %647 = vmatprep.mubr.bf16.mxu0 %v290
  %648 = vmatmul.mubr.bf16.gmra.mrb[0].mxu0 %v289
  %v649 = vpop.f32.mrb[0].mxu0
  %v650 = vadd.f32 0.0, %v649
  %v651 = vpop.f32.mrb[0].mxu0
  %v652 = vpop.f32.mrb[0].mxu0
  %v653 = vadd.f32 0.0, %v652
  %v654 = vpop.f32.mrb[0].mxu0
  %655 = vmatprep.mubr.bf16.mxu0 %v295
  %656 = vmatmul.mubr.bf16.gmra.mrb[0].mxu0 %v294
  %v657 = vpop.f32.mrb[0].mxu0
  %v658 = vadd.f32 0.0, %v657
  %v659 = vpop.f32.mrb[0].mxu0
  %v660 = vpop.f32.mrb[0].mxu0
  %v661 = vadd.f32 0.0, %v660
  %v662 = vpop.f32.mrb[0].mxu0
  %663 = vmatprep.mubr.bf16.mxu0 %v300
  %664 = vmatmul.mubr.bf16.gmra.mrb[0].mxu0 %v299
  %v665 = vpop.f32.mrb[0].mxu0
  %v666 = vadd.f32 0.0, %v665
  %v667 = vpop.f32.mrb[0].mxu0
  %v668 = vpop.f32.mrb[0].mxu0
  %v669 = vadd.f32 0.0, %v668
  %v670 = vpop.f32.mrb[0].mxu0
  %671 = vmatprep.mubr.bf16.mxu0 %v305
  %672 = vmatmul.mubr.bf16.gmra.mrb[0].mxu0 %v304
  %v673 = vpop.f32.mrb[0].mxu0
  %v674 = vadd.f32 0.0, %v673
  %v675 = vpop.f32.mrb[0].mxu0
  %v676 = vpop.f32.mrb[0].mxu0
  %v677 = vadd.f32 0.0, %v676
  %v678 = vpop.f32.mrb[0].mxu0
  %679 = vmatprep.mubr.bf16.mxu0 %v310
  %680 = vmatmul.mubr.bf16.gmra.mrb[0].mxu0 %v309
  %v681 = vpop.f32.mrb[0].mxu0
  %v682 = vadd.f32 0.0, %v681
  %v683 = vpop.f32.mrb[0].mxu0
  %v684 = vpop.f32.mrb[0].mxu0
  %v685 = vadd.f32 0.0, %v684
  %v686 = vpop.f32.mrb[0].mxu0
  %687 = vdwg.mxu0
  %688 = vmatprep.subr.bf16.mxu0 0
  %689 = vmatpush1.bf16.msra.mxu0 %v504
  %690 = vmatprep.subr.bf16.mxu0 0
  %691 = vmatpush1.bf16.msra.mxu0 %v505
  %692 = vmatprep.subr.bf16.mxu0 0
  %693 = vmatpush1.bf16.msra.mxu0 %v506
  %694 = vmatprep.subr.bf16.mxu0 0
  %695 = vmatpush1.bf16.msra.mxu0 %v507
  %696 = vmatprep.subr.bf16.mxu0 0
  %697 = vmatpush1.bf16.msra.mxu0 %v508
  %698 = vmatprep.subr.bf16.mxu0 0
  %699 = vmatpush1.bf16.msra.mxu0 %v509
  %700 = vmatprep.subr.bf16.mxu0 0
  %701 = vmatpush1.bf16.msra.mxu0 %v510
  %702 = vmatprep.subr.bf16.mxu0 0
  %703 = vmatpush1.bf16.msra.mxu0 %v511
  %704 = vmatprep.subr.bf16.mxu0 0
  %705 = vmatpush1.bf16.msra.mxu0 %v512
  %706 = vmatprep.subr.bf16.mxu0 0
  %707 = vmatpush1.bf16.msra.mxu0 %v513
  %708 = vmatprep.subr.bf16.mxu0 0
  %709 = vmatpush1.bf16.msra.mxu0 %v514
  %710 = vmatprep.subr.bf16.mxu0 0
  %711 = vmatpush1.bf16.msra.mxu0 %v515
  %712 = vmatprep.subr.bf16.mxu0 0
  %713 = vmatpush1.bf16.msra.mxu0 %v516
  %714 = vmatprep.subr.bf16.mxu0 0
  %715 = vmatpush1.bf16.msra.mxu0 %v517
  %716 = vmatprep.subr.bf16.mxu0 0
  %717 = vmatpush1.bf16.msra.mxu0 %v518
  %718 = vmatprep.subr.bf16.mxu0 0
  %719 = vmatpush1.bf16.msra.mxu0 %v519
  %720 = vmatprep.mubr.bf16.mxu0 %v277
  %721 = vmatmul.mubr.bf16.gmra.mrb[0].mxu0 %v276
  %v722 = vpop.f32.mrb[0].mxu0
  %v723 = vadd.f32 %v626, %v722
  %v724 = vpop.f32.mrb[0].mxu0
  %v725 = vpop.f32.mrb[0].mxu0
  %v726 = vadd.f32 %v629, %v725
  %v727 = vpop.f32.mrb[0].mxu0
  %728 = vmatprep.mubr.bf16.mxu0 %v282
  %729 = vmatmul.mubr.bf16.gmra.mrb[0].mxu0 %v281
  %v730 = vpop.f32.mrb[0].mxu0
  %v731 = vadd.f32 %v634, %v730
  %v732 = vpop.f32.mrb[0].mxu0
  %v733 = vpop.f32.mrb[0].mxu0
  %v734 = vadd.f32 %v637, %v733
  %v735 = vpop.f32.mrb[0].mxu0
  %736 = vmatprep.mubr.bf16.mxu0 %v287
  %737 = vmatmul.mubr.bf16.gmra.mrb[0].mxu0 %v286
  %v738 = vpop.f32.mrb[0].mxu0
  %v739 = vadd.f32 %v642, %v738
  %v740 = vpop.f32.mrb[0].mxu0
  %v741 = vpop.f32.mrb[0].mxu0
  %v742 = vadd.f32 %v645, %v741
  %v743 = vpop.f32.mrb[0].mxu0
  %744 = vmatprep.mubr.bf16.mxu0 %v292
  %745 = vmatmul.mubr.bf16.gmra.mrb[0].mxu0 %v291
  %v746 = vpop.f32.mrb[0].mxu0
  %v747 = vadd.f32 %v650, %v746
  %v748 = vpop.f32.mrb[0].mxu0
  %v749 = vpop.f32.mrb[0].mxu0
  %v750 = vadd.f32 %v653, %v749
  %v751 = vpop.f32.mrb[0].mxu0
  %752 = vmatprep.mubr.bf16.mxu0 %v297
  %753 = vmatmul.mubr.bf16.gmra.mrb[0].mxu0 %v296
  %v754 = vpop.f32.mrb[0].mxu0
  %v755 = vadd.f32 %v658, %v754
  %v756 = vpop.f32.mrb[0].mxu0
  %v757 = vpop.f32.mrb[0].mxu0
  %v758 = vadd.f32 %v661, %v757
  %v759 = vpop.f32.mrb[0].mxu0
  %760 = vmatprep.mubr.bf16.mxu0 %v302
  %761 = vmatmul.mubr.bf16.gmra.mrb[0].mxu0 %v301
  %v762 = vpop.f32.mrb[0].mxu0
  %v763 = vadd.f32 %v666, %v762
  %v764 = vpop.f32.mrb[0].mxu0
  %v765 = vpop.f32.mrb[0].mxu0
  %v766 = vadd.f32 %v669, %v765
  %v767 = vpop.f32.mrb[0].mxu0
  %768 = vmatprep.mubr.bf16.mxu0 %v307
  %769 = vmatmul.mubr.bf16.gmra.mrb[0].mxu0 %v306
  %v770 = vpop.f32.mrb[0].mxu0
  %v771 = vadd.f32 %v674, %v770
  %v772 = vpop.f32.mrb[0].mxu0
  %v773 = vpop.f32.mrb[0].mxu0
  %v774 = vadd.f32 %v677, %v773
  %v775 = vpop.f32.mrb[0].mxu0
  %776 = vmatprep.mubr.bf16.mxu0 %v312
  %777 = vmatmul.mubr.bf16.gmra.mrb[0].mxu0 %v311
  %v778 = vpop.f32.mrb[0].mxu0
  %v779 = vadd.f32 %v682, %v778
  %v780 = vpop.f32.mrb[0].mxu0
  %v781 = vpop.f32.mrb[0].mxu0
  %v782 = vadd.f32 %v685, %v781
  %v783 = vpop.f32.mrb[0].mxu0
  %784 = vdwg.mxu0
  %785 = vmatprep.subr.bf16.mxu0 0
  %786 = vmatpush1.bf16.msra.mxu0 %v520
  %787 = vmatprep.subr.bf16.mxu0 0
  %788 = vmatpush1.bf16.msra.mxu0 %v521
  %789 = vmatprep.subr.bf16.mxu0 0
  %790 = vmatpush1.bf16.msra.mxu0 %v522
  %791 = vmatprep.subr.bf16.mxu0 0
  %792 = vmatpush1.bf16.msra.mxu0 %v589
  %793 = vmatprep.subr.bf16.mxu0 0
  %794 = vmatpush1.bf16.msra.mxu0 0
  %795 = vmatprep.subr.bf16.mxu0 0
  %796 = vmatpush1.bf16.msra.mxu0 0
  %797 = vmatprep.subr.bf16.mxu0 0
  %798 = vmatpush1.bf16.msra.mxu0 0
  %799 = vmatprep.subr.bf16.mxu0 0
  %800 = vmatpush1.bf16.msra.mxu0 0
  %801 = vmatprep.subr.bf16.mxu0 0
  %802 = vmatpush1.bf16.msra.mxu0 0
  %803 = vmatprep.subr.bf16.mxu0 0
  %804 = vmatpush1.bf16.msra.mxu0 0
  %805 = vmatprep.subr.bf16.mxu0 0
  %806 = vmatpush1.bf16.msra.mxu0 0
  %807 = vmatprep.subr.bf16.mxu0 0
  %808 = vmatpush1.bf16.msra.mxu0 0
  %809 = vmatprep.subr.bf16.mxu0 0
  %810 = vmatpush1.bf16.msra.mxu0 0
  %811 = vmatprep.subr.bf16.mxu0 0
  %812 = vmatpush1.bf16.msra.mxu0 0
  %813 = vmatprep.subr.bf16.mxu0 0
  %814 = vmatpush1.bf16.msra.mxu0 0
  %815 = vmatprep.subr.bf16.mxu0 0
  %816 = vmatpush1.bf16.msra.mxu0 0
  %817 = vmatprep.mubr.bf16.mxu0 0
  %818 = vmatmul.mubr.bf16.gmra.mrb[0].mxu0 %v561
  %v819 = vpop.f32.mrb[0].mxu0
  %v820 = vadd.f32 %v723, %v819
  %v821 = vpop.f32.mrb[0].mxu0
  %v822 = vpop.f32.mrb[0].mxu0
  %v823 = vadd.f32 %v726, %v822
  %v824 = vpop.f32.mrb[0].mxu0
  %825 = vmatprep.mubr.bf16.mxu0 0
  %826 = vmatmul.mubr.bf16.gmra.mrb[0].mxu0 %v564
  %v827 = vpop.f32.mrb[0].mxu0
  %v828 = vadd.f32 %v731, %v827
  %v829 = vpop.f32.mrb[0].mxu0
  %v830 = vpop.f32.mrb[0].mxu0
  %v831 = vadd.f32 %v734, %v830
  %v832 = vpop.f32.mrb[0].mxu0
  %833 = vmatprep.mubr.bf16.mxu0 0
  %834 = vmatmul.mubr.bf16.gmra.mrb[0].mxu0 %v567
  %v835 = vpop.f32.mrb[0].mxu0
  %v836 = vadd.f32 %v739, %v835
  %v837 = vpop.f32.mrb[0].mxu0
  %v838 = vpop.f32.mrb[0].mxu0
  %v839 = vadd.f32 %v742, %v838
  %v840 = vpop.f32.mrb[0].mxu0
  %841 = vmatprep.mubr.bf16.mxu0 0
  %842 = vmatmul.mubr.bf16.gmra.mrb[0].mxu0 %v570
  %v843 = vpop.f32.mrb[0].mxu0
  %v844 = vadd.f32 %v747, %v843
  %v845 = vpop.f32.mrb[0].mxu0
  %v846 = vpop.f32.mrb[0].mxu0
  %v847 = vadd.f32 %v750, %v846
  %v848 = vpop.f32.mrb[0].mxu0
  %849 = vmatprep.mubr.bf16.mxu0 0
  %850 = vmatmul.mubr.bf16.gmra.mrb[0].mxu0 %v573
  %v851 = vpop.f32.mrb[0].mxu0
  %v852 = vadd.f32 %v755, %v851
  %v853 = vpop.f32.mrb[0].mxu0
  %v854 = vpop.f32.mrb[0].mxu0
  %v855 = vadd.f32 %v758, %v854
  %v856 = vpop.f32.mrb[0].mxu0
  %857 = vmatprep.mubr.bf16.mxu0 0
  %858 = vmatmul.mubr.bf16.gmra.mrb[0].mxu0 %v576
  %v859 = vpop.f32.mrb[0].mxu0
  %v860 = vadd.f32 %v763, %v859
  %v861 = vpop.f32.mrb[0].mxu0
  %v862 = vpop.f32.mrb[0].mxu0
  %v863 = vadd.f32 %v766, %v862
  %v864 = vpop.f32.mrb[0].mxu0
  %865 = vmatprep.mubr.bf16.mxu0 0
  %866 = vmatmul.mubr.bf16.gmra.mrb[0].mxu0 %v579
  %v867 = vpop.f32.mrb[0].mxu0
  %v868 = vadd.f32 %v771, %v867
  %v869 = vpop.f32.mrb[0].mxu0
  %v870 = vpop.f32.mrb[0].mxu0
  %v871 = vadd.f32 %v774, %v870
  %v872 = vpop.f32.mrb[0].mxu0
  %873 = vmatprep.mubr.bf16.mxu0 0
  %874 = vmatmul.mubr.bf16.gmra.mrb[0].mxu0 %v582
  %v875 = vpop.f32.mrb[0].mxu0
  %v876 = vadd.f32 %v779, %v875
  %v877 = vpop.f32.mrb[0].mxu0
  %v878 = vpop.f32.mrb[0].mxu0
  %v879 = vadd.f32 %v782, %v878
  %v880 = vpop.f32.mrb[0].mxu0
  %881 = vdwg.mxu0
  %v882 = vld [vmem:[%s2] sm:$0x1]
  %v883 = vld [vmem:[%s3] sm:$0x1]
  %vm884 = vcmask 80896
  %v885 = vsel %vm884, %v820, 0.0
  %v886 = vsel %vm884, %v823, 0.0
  %v887 = vadd.f32 %v885, %v886
  %v888 = vsel %vm884, %v828, 0.0
  %v889 = vadd.f32 %v887, %v888
  %v890 = vsel %vm884, %v831, 0.0
  %v891 = vadd.f32 %v889, %v890
  %v892 = vsel %vm884, %v836, 0.0
  %v893 = vadd.f32 %v891, %v892
  %v894 = vsel %vm884, %v839, 0.0
  %v895 = vadd.f32 %v893, %v894
  %v896 = vsel %vm884, %v844, 0.0
  %v897 = vadd.f32 %v895, %v896
  %v898 = vsel %vm884, %v847, 0.0
  %v899 = vadd.f32 %v897, %v898
  %v900 = vsel %vm884, %v852, 0.0
  %v901 = vadd.f32 %v899, %v900
  %v902 = vsel %vm884, %v855, 0.0
  %v903 = vadd.f32 %v901, %v902
  %v904 = vsel %vm884, %v860, 0.0
  %v905 = vadd.f32 %v903, %v904
  %v906 = vsel %vm884, %v863, 0.0
  %v907 = vadd.f32 %v905, %v906
  %v908 = vsel %vm884, %v868, 0.0
  %v909 = vadd.f32 %v907, %v908
  %v910 = vsel %vm884, %v871, 0.0
  %v911 = vadd.f32 %v909, %v910
  %v912 = vsel %vm884, %v876, 0.0
  %v913 = vadd.f32 %v911, %v912
  %v914 = vsel %vm884, %v879, 0.0
  %v915 = vadd.f32 %v913, %v914
  %v916 = vrot.slane %v915, 4
  %v917 = vadd.f32 %v915, %v916
  %v918 = vrot.slane %v917, 2
  %v919 = vadd.f32 %v917, %v918
  %v920 = vrot.slane %v919, 1
  %v921 = vadd.f32 %v919, %v920
  %v922 = vmul.f32 %v820, %v820
  %v923 = vmul.f32 %v823, %v823
  %v924 = vmul.f32 %v828, %v828
  %v925 = vmul.f32 %v831, %v831
  %v926 = vmul.f32 %v836, %v836
  %v927 = vmul.f32 %v839, %v839
  %v928 = vmul.f32 %v844, %v844
  %v929 = vmul.f32 %v847, %v847
  %v930 = vmul.f32 %v852, %v852
  %v931 = vmul.f32 %v855, %v855
  %v932 = vmul.f32 %v860, %v860
  %v933 = vmul.f32 %v863, %v863
  %v934 = vmul.f32 %v868, %v868
  %v935 = vmul.f32 %v871, %v871
  %v936 = vmul.f32 %v876, %v876
  %v937 = vmul.f32 %v879, %v879
  %v938 = vsel %vm884, %v922, 0.0
  %v939 = vsel %vm884, %v923, 0.0
  %v940 = vadd.f32 %v938, %v939
  %v941 = vsel %vm884, %v924, 0.0
  %v942 = vadd.f32 %v940, %v941
  %v943 = vsel %vm884, %v925, 0.0
  %v944 = vadd.f32 %v942, %v943
  %v945 = vsel %vm884, %v926, 0.0
  %v946 = vadd.f32 %v944, %v945
  %v947 = vsel %vm884, %v927, 0.0
  %v948 = vadd.f32 %v946, %v947
  %v949 = vsel %vm884, %v928, 0.0
  %v950 = vadd.f32 %v948, %v949
  %v951 = vsel %vm884, %v929, 0.0
  %v952 = vadd.f32 %v950, %v951
  %v953 = vsel %vm884, %v930, 0.0
  %v954 = vadd.f32 %v952, %v953
  %v955 = vsel %vm884, %v931, 0.0
  %v956 = vadd.f32 %v954, %v955
  %v957 = vsel %vm884, %v932, 0.0
  %v958 = vadd.f32 %v956, %v957
  %v959 = vsel %vm884, %v933, 0.0
  %v960 = vadd.f32 %v958, %v959
  %v961 = vsel %vm884, %v934, 0.0
  %v962 = vadd.f32 %v960, %v961
  %v963 = vsel %vm884, %v935, 0.0
  %v964 = vadd.f32 %v962, %v963
  %v965 = vsel %vm884, %v936, 0.0
  %v966 = vadd.f32 %v964, %v965
  %v967 = vsel %vm884, %v937, 0.0
  %v968 = vadd.f32 %v966, %v967
  %v969 = vrot.slane %v968, 4
  %v970 = vadd.f32 %v968, %v969
  %v971 = vrot.slane %v970, 2
  %v972 = vadd.f32 %v970, %v971
  %v973 = vrot.slane %v972, 1
  %v974 = vadd.f32 %v972, %v973
  %v975 = vmul.f32 %v921, 0.0078125
  %v976 = vmul.f32 %v974, 0.0078125
  %v977 = vmul.f32 %v975, %v975
  %v978 = vsub.f32 %v976, %v977
  %v979 = vmax.f32 %v978, 0.0
  %v980 = vadd.f32 %v979, 1e-05
  %v981 = vrsqrt.pop %v980
  %v982 = vmul.f32 %v882, %v981
  %v983 = vmul.f32 %v975, %v982
  %v984 = vsub.f32 %v883, %v983
  %v986 = vlaneseq
  %v987 = vshrl.u32 %v986, 7
  %v988 = vsub.s32 0, %v987
  %v989 = vrot.slane %v982, %v988
  %v991 = vmul.f32 %v820, %v989
  %v992 = vmul.f32 %v823, %v989
  %v993 = vmul.f32 %v828, %v989
  %v994 = vmul.f32 %v831, %v989
  %v995 = vmul.f32 %v836, %v989
  %v996 = vmul.f32 %v839, %v989
  %v997 = vmul.f32 %v844, %v989
  %v998 = vmul.f32 %v847, %v989
  %v999 = vmul.f32 %v852, %v989
  %v1000 = vmul.f32 %v855, %v989
  %v1001 = vmul.f32 %v860, %v989
  %v1002 = vmul.f32 %v863, %v989
  %v1003 = vmul.f32 %v868, %v989
  %v1004 = vmul.f32 %v871, %v989
  %v1005 = vmul.f32 %v876, %v989
  %v1006 = vmul.f32 %v879, %v989
  %v1008 = vlaneseq
  %v1009 = vshrl.u32 %v1008, 7
  %v1010 = vsub.s32 0, %v1009
  %v1011 = vrot.slane %v984, %v1010
  %v1013 = vadd.f32 %v991, %v1011
  %v1014 = vadd.f32 %v992, %v1011
  %v1015 = vadd.f32 %v993, %v1011
  %v1016 = vadd.f32 %v994, %v1011
  %v1017 = vadd.f32 %v995, %v1011
  %v1018 = vadd.f32 %v996, %v1011
  %v1019 = vadd.f32 %v997, %v1011
  %v1020 = vadd.f32 %v998, %v1011
  %v1021 = vadd.f32 %v999, %v1011
  %v1022 = vadd.f32 %v1000, %v1011
  %v1023 = vadd.f32 %v1001, %v1011
  %v1024 = vadd.f32 %v1002, %v1011
  %v1025 = vadd.f32 %v1003, %v1011
  %v1026 = vadd.f32 %v1004, %v1011
  %v1027 = vadd.f32 %v1005, %v1011
  %v1028 = vadd.f32 %v1006, %v1011
  %vm1029 = vcmp.ge.f32.partialorder %v1013, 0.0
  %vm1030 = vcmp.ge.f32.partialorder %v1014, 0.0
  %vm1031 = vcmp.ge.f32.partialorder %v1015, 0.0
  %vm1032 = vcmp.ge.f32.partialorder %v1016, 0.0
  %vm1033 = vcmp.ge.f32.partialorder %v1017, 0.0
  %vm1034 = vcmp.ge.f32.partialorder %v1018, 0.0
  %vm1035 = vcmp.ge.f32.partialorder %v1019, 0.0
  %vm1036 = vcmp.ge.f32.partialorder %v1020, 0.0
  %vm1037 = vcmp.ge.f32.partialorder %v1021, 0.0
  %vm1038 = vcmp.ge.f32.partialorder %v1022, 0.0
  %vm1039 = vcmp.ge.f32.partialorder %v1023, 0.0
  %vm1040 = vcmp.ge.f32.partialorder %v1024, 0.0
  %vm1041 = vcmp.ge.f32.partialorder %v1025, 0.0
  %vm1042 = vcmp.ge.f32.partialorder %v1026, 0.0
  %vm1043 = vcmp.ge.f32.partialorder %v1027, 0.0
  %vm1044 = vcmp.ge.f32.partialorder %v1028, 0.0
  %v1045 = vmul.f32 %v1013, 0.01
  %v1046 = vmul.f32 %v1014, 0.01
  %v1047 = vmul.f32 %v1015, 0.01
  %v1048 = vmul.f32 %v1016, 0.01
  %v1049 = vmul.f32 %v1017, 0.01
  %v1050 = vmul.f32 %v1018, 0.01
  %v1051 = vmul.f32 %v1019, 0.01
  %v1052 = vmul.f32 %v1020, 0.01
  %v1053 = vmul.f32 %v1021, 0.01
  %v1054 = vmul.f32 %v1022, 0.01
  %v1055 = vmul.f32 %v1023, 0.01
  %v1056 = vmul.f32 %v1024, 0.01
  %v1057 = vmul.f32 %v1025, 0.01
  %v1058 = vmul.f32 %v1026, 0.01
  %v1059 = vmul.f32 %v1027, 0.01
  %v1060 = vmul.f32 %v1028, 0.01
  %v1061 = vsel %vm1029, %v1013, %v1045
  %v1062 = vsel %vm1030, %v1014, %v1046
  %v1063 = vsel %vm1031, %v1015, %v1047
  %v1064 = vsel %vm1032, %v1016, %v1048
  %v1065 = vsel %vm1033, %v1017, %v1049
  %v1066 = vsel %vm1034, %v1018, %v1050
  %v1067 = vsel %vm1035, %v1019, %v1051
  %v1068 = vsel %vm1036, %v1020, %v1052
  %v1069 = vsel %vm1037, %v1021, %v1053
  %v1070 = vsel %vm1038, %v1022, %v1054
  %v1071 = vsel %vm1039, %v1023, %v1055
  %v1072 = vsel %vm1040, %v1024, %v1056
  %v1073 = vsel %vm1041, %v1025, %v1057
  %v1074 = vsel %vm1042, %v1026, %v1058
  %v1075 = vsel %vm1043, %v1027, %v1059
  %v1076 = vsel %vm1044, %v1028, %v1060
  %v1077 = vpack.c.bf16 %v1062, %v1061
  %v1078 = vpack.c.bf16 %v1064, %v1063
  %v1079 = vpack.c.bf16 %v1066, %v1065
  %v1080 = vpack.c.bf16 %v1068, %v1067
  %v1081 = vpack.c.bf16 %v1070, %v1069
  %v1082 = vpack.c.bf16 %v1072, %v1071
  %v1083 = vpack.c.bf16 %v1074, %v1073
  %v1084 = vpack.c.bf16 %v1076, %v1075
  %v1085 = vld [vmem:[%s4] sm:$0xf]
  %v1086 = vld [vmem:[%s4 + $0x4] sm:$0x1]
  %v1089 = vunpack.c.l.b16 %v1085
  %v1090 = vunpack.c.l.b16 %v1086
  %v1091 = vpack.c.b16 %v1090, %v1089
  %v1093 = vsel %vm884, %v1077, 0
  %v1096 = vsel %vm884, %v1078, 0
  %v1099 = vsel %vm884, %v1079, 0
  %v1102 = vsel %vm884, %v1080, 0
  %v1105 = vsel %vm884, %v1081, 0
  %v1108 = vsel %vm884, %v1082, 0
  %v1111 = vsel %vm884, %v1083, 0
  %v1114 = vsel %vm884, %v1084, 0
  %vm1116 = vcmask 1044480
  %v1118 = vsel %vm1116, %v1091, 0
  %1120 = vmatprep.subr.bf16.mxu0 0
  %1121 = vmatpush1.bf16.msra.mxu0 %v1118
  %1122 = vmatprep.subr.bf16.mxu0 0
  %1123 = vmatpush1.bf16.msra.mxu0 0
  %1124 = vmatprep.subr.bf16.mxu0 0
  %1125 = vmatpush1.bf16.msra.mxu0 0
  %1126 = vmatprep.subr.bf16.mxu0 0
  %1127 = vmatpush1.bf16.msra.mxu0 0
  %1128 = vmatprep.subr.bf16.mxu0 0
  %1129 = vmatpush1.bf16.msra.mxu0 0
  %1130 = vmatprep.subr.bf16.mxu0 0
  %1131 = vmatpush1.bf16.msra.mxu0 0
  %1132 = vmatprep.subr.bf16.mxu0 0
  %1133 = vmatpush1.bf16.msra.mxu0 0
  %1134 = vmatprep.subr.bf16.mxu0 0
  %1135 = vmatpush1.bf16.msra.mxu0 0
  %1136 = vmatprep.subr.bf16.mxu0 0
  %1137 = vmatpush1.bf16.msra.mxu0 0
  %1138 = vmatprep.subr.bf16.mxu0 0
  %1139 = vmatpush1.bf16.msra.mxu0 0
  %1140 = vmatprep.subr.bf16.mxu0 0
  %1141 = vmatpush1.bf16.msra.mxu0 0
  %1142 = vmatprep.subr.bf16.mxu0 0
  %1143 = vmatpush1.bf16.msra.mxu0 0
  %1144 = vmatprep.subr.bf16.mxu0 0
  %1145 = vmatpush1.bf16.msra.mxu0 0
  %1146 = vmatprep.subr.bf16.mxu0 0
  %1147 = vmatpush1.bf16.msra.mxu0 0
  %1148 = vmatprep.subr.bf16.mxu0 0
  %1149 = vmatpush1.bf16.msra.mxu0 0
  %1150 = vmatprep.subr.bf16.mxu0 0
  %1151 = vmatpush1.bf16.msra.mxu0 0
  %1152 = vmatprep.mubr.bf16.mxu0 0
  %1153 = vmatmul.mubr.bf16.gmra.mrb[0].mxu0 %v1093
  %v1154 = vpop.f32.mrb[0].mxu0
  %v1155 = vadd.f32 0.0, %v1154
  %v1156 = vpop.f32.mrb[0].mxu0
  %v1157 = vpop.f32.mrb[0].mxu0
  %v1158 = vadd.f32 0.0, %v1157
  %v1159 = vpop.f32.mrb[0].mxu0
  %1160 = vmatprep.mubr.bf16.mxu0 0
  %1161 = vmatmul.mubr.bf16.gmra.mrb[0].mxu0 %v1096
  %v1162 = vpop.f32.mrb[0].mxu0
  %v1163 = vadd.f32 0.0, %v1162
  %v1164 = vpop.f32.mrb[0].mxu0
  %v1165 = vpop.f32.mrb[0].mxu0
  %v1166 = vadd.f32 0.0, %v1165
  %v1167 = vpop.f32.mrb[0].mxu0
  %1168 = vmatprep.mubr.bf16.mxu0 0
  %1169 = vmatmul.mubr.bf16.gmra.mrb[0].mxu0 %v1099
  %v1170 = vpop.f32.mrb[0].mxu0
  %v1171 = vadd.f32 0.0, %v1170
  %v1172 = vpop.f32.mrb[0].mxu0
  %v1173 = vpop.f32.mrb[0].mxu0
  %v1174 = vadd.f32 0.0, %v1173
  %v1175 = vpop.f32.mrb[0].mxu0
  %1176 = vmatprep.mubr.bf16.mxu0 0
  %1177 = vmatmul.mubr.bf16.gmra.mrb[0].mxu0 %v1102
  %v1178 = vpop.f32.mrb[0].mxu0
  %v1179 = vadd.f32 0.0, %v1178
  %v1180 = vpop.f32.mrb[0].mxu0
  %v1181 = vpop.f32.mrb[0].mxu0
  %v1182 = vadd.f32 0.0, %v1181
  %v1183 = vpop.f32.mrb[0].mxu0
  %1184 = vmatprep.mubr.bf16.mxu0 0
  %1185 = vmatmul.mubr.bf16.gmra.mrb[0].mxu0 %v1105
  %v1186 = vpop.f32.mrb[0].mxu0
  %v1187 = vadd.f32 0.0, %v1186
  %v1188 = vpop.f32.mrb[0].mxu0
  %v1189 = vpop.f32.mrb[0].mxu0
  %v1190 = vadd.f32 0.0, %v1189
  %v1191 = vpop.f32.mrb[0].mxu0
  %1192 = vmatprep.mubr.bf16.mxu0 0
  %1193 = vmatmul.mubr.bf16.gmra.mrb[0].mxu0 %v1108
  %v1194 = vpop.f32.mrb[0].mxu0
  %v1195 = vadd.f32 0.0, %v1194
  %v1196 = vpop.f32.mrb[0].mxu0
  %v1197 = vpop.f32.mrb[0].mxu0
  %v1198 = vadd.f32 0.0, %v1197
  %v1199 = vpop.f32.mrb[0].mxu0
  %1200 = vmatprep.mubr.bf16.mxu0 0
  %1201 = vmatmul.mubr.bf16.gmra.mrb[0].mxu0 %v1111
  %v1202 = vpop.f32.mrb[0].mxu0
  %v1203 = vadd.f32 0.0, %v1202
  %v1204 = vpop.f32.mrb[0].mxu0
  %v1205 = vpop.f32.mrb[0].mxu0
  %v1206 = vadd.f32 0.0, %v1205
  %v1207 = vpop.f32.mrb[0].mxu0
  %1208 = vmatprep.mubr.bf16.mxu0 0
  %1209 = vmatmul.mubr.bf16.gmra.mrb[0].mxu0 %v1114
  %v1210 = vpop.f32.mrb[0].mxu0
  %v1211 = vadd.f32 0.0, %v1210
  %v1212 = vpop.f32.mrb[0].mxu0
  %v1213 = vpop.f32.mrb[0].mxu0
  %v1214 = vadd.f32 0.0, %v1213
  %v1215 = vpop.f32.mrb[0].mxu0
  %1216 = vdwg.mxu0
  %v1217 = vld [vmem:[%s5] sm:$0x1]
  %v1218 = vld [vmem:[%s6] sm:$0x1]
  %vm1219 = vcmask 15360
  %v1220 = vsel %vm1219, %v1155, 0.0
  %v1221 = vsel %vm1219, %v1158, 0.0
  %v1222 = vadd.f32 %v1220, %v1221
  %v1223 = vsel %vm1219, %v1163, 0.0
  %v1224 = vadd.f32 %v1222, %v1223
  %v1225 = vsel %vm1219, %v1166, 0.0
  %v1226 = vadd.f32 %v1224, %v1225
  %v1227 = vsel %vm1219, %v1171, 0.0
  %v1228 = vadd.f32 %v1226, %v1227
  %v1229 = vsel %vm1219, %v1174, 0.0
  %v1230 = vadd.f32 %v1228, %v1229
  %v1231 = vsel %vm1219, %v1179, 0.0
  %v1232 = vadd.f32 %v1230, %v1231
  %v1233 = vsel %vm1219, %v1182, 0.0
  %v1234 = vadd.f32 %v1232, %v1233
  %v1235 = vsel %vm1219, %v1187, 0.0
  %v1236 = vadd.f32 %v1234, %v1235
  %v1237 = vsel %vm1219, %v1190, 0.0
  %v1238 = vadd.f32 %v1236, %v1237
  %v1239 = vsel %vm1219, %v1195, 0.0
  %v1240 = vadd.f32 %v1238, %v1239
  %v1241 = vsel %vm1219, %v1198, 0.0
  %v1242 = vadd.f32 %v1240, %v1241
  %v1243 = vsel %vm1219, %v1203, 0.0
  %v1244 = vadd.f32 %v1242, %v1243
  %v1245 = vsel %vm1219, %v1206, 0.0
  %v1246 = vadd.f32 %v1244, %v1245
  %v1247 = vsel %vm1219, %v1211, 0.0
  %v1248 = vadd.f32 %v1246, %v1247
  %v1249 = vsel %vm1219, %v1214, 0.0
  %v1250 = vadd.f32 %v1248, %v1249
  %v1251 = vrot.slane %v1250, 4
  %v1252 = vadd.f32 %v1250, %v1251
  %v1253 = vrot.slane %v1252, 2
  %v1254 = vadd.f32 %v1252, %v1253
  %v1255 = vrot.slane %v1254, 1
  %v1256 = vadd.f32 %v1254, %v1255
  %v1257 = vmul.f32 %v1155, %v1155
  %v1258 = vmul.f32 %v1158, %v1158
  %v1259 = vmul.f32 %v1163, %v1163
  %v1260 = vmul.f32 %v1166, %v1166
  %v1261 = vmul.f32 %v1171, %v1171
  %v1262 = vmul.f32 %v1174, %v1174
  %v1263 = vmul.f32 %v1179, %v1179
  %v1264 = vmul.f32 %v1182, %v1182
  %v1265 = vmul.f32 %v1187, %v1187
  %v1266 = vmul.f32 %v1190, %v1190
  %v1267 = vmul.f32 %v1195, %v1195
  %v1268 = vmul.f32 %v1198, %v1198
  %v1269 = vmul.f32 %v1203, %v1203
  %v1270 = vmul.f32 %v1206, %v1206
  %v1271 = vmul.f32 %v1211, %v1211
  %v1272 = vmul.f32 %v1214, %v1214
  %v1273 = vsel %vm1219, %v1257, 0.0
  %v1274 = vsel %vm1219, %v1258, 0.0
  %v1275 = vadd.f32 %v1273, %v1274
  %v1276 = vsel %vm1219, %v1259, 0.0
  %v1277 = vadd.f32 %v1275, %v1276
  %v1278 = vsel %vm1219, %v1260, 0.0
  %v1279 = vadd.f32 %v1277, %v1278
  %v1280 = vsel %vm1219, %v1261, 0.0
  %v1281 = vadd.f32 %v1279, %v1280
  %v1282 = vsel %vm1219, %v1262, 0.0
  %v1283 = vadd.f32 %v1281, %v1282
  %v1284 = vsel %vm1219, %v1263, 0.0
  %v1285 = vadd.f32 %v1283, %v1284
  %v1286 = vsel %vm1219, %v1264, 0.0
  %v1287 = vadd.f32 %v1285, %v1286
  %v1288 = vsel %vm1219, %v1265, 0.0
  %v1289 = vadd.f32 %v1287, %v1288
  %v1290 = vsel %vm1219, %v1266, 0.0
  %v1291 = vadd.f32 %v1289, %v1290
  %v1292 = vsel %vm1219, %v1267, 0.0
  %v1293 = vadd.f32 %v1291, %v1292
  %v1294 = vsel %vm1219, %v1268, 0.0
  %v1295 = vadd.f32 %v1293, %v1294
  %v1296 = vsel %vm1219, %v1269, 0.0
  %v1297 = vadd.f32 %v1295, %v1296
  %v1298 = vsel %vm1219, %v1270, 0.0
  %v1299 = vadd.f32 %v1297, %v1298
  %v1300 = vsel %vm1219, %v1271, 0.0
  %v1301 = vadd.f32 %v1299, %v1300
  %v1302 = vsel %vm1219, %v1272, 0.0
  %v1303 = vadd.f32 %v1301, %v1302
  %v1304 = vrot.slane %v1303, 4
  %v1305 = vadd.f32 %v1303, %v1304
  %v1306 = vrot.slane %v1305, 2
  %v1307 = vadd.f32 %v1305, %v1306
  %v1308 = vrot.slane %v1307, 1
  %v1309 = vadd.f32 %v1307, %v1308
  %v1310 = vmul.f32 %v1256, 0.0078125
  %v1311 = vmul.f32 %v1309, 0.0078125
  %v1312 = vmul.f32 %v1310, %v1310
  %v1313 = vsub.f32 %v1311, %v1312
  %v1314 = vmax.f32 %v1313, 0.0
  %v1315 = vadd.f32 %v1314, 1e-05
  %v1316 = vrsqrt.pop %v1315
  %v1317 = vmul.f32 %v1217, %v1316
  %v1318 = vmul.f32 %v1310, %v1317
  %v1319 = vsub.f32 %v1218, %v1318
  %v1321 = vlaneseq
  %v1322 = vshrl.u32 %v1321, 7
  %v1323 = vsub.s32 0, %v1322
  %v1324 = vrot.slane %v1317, %v1323
  %v1326 = vmul.f32 %v1155, %v1324
  %v1327 = vmul.f32 %v1158, %v1324
  %v1328 = vmul.f32 %v1163, %v1324
  %v1329 = vmul.f32 %v1166, %v1324
  %v1330 = vmul.f32 %v1171, %v1324
  %v1331 = vmul.f32 %v1174, %v1324
  %v1332 = vmul.f32 %v1179, %v1324
  %v1333 = vmul.f32 %v1182, %v1324
  %v1334 = vmul.f32 %v1187, %v1324
  %v1335 = vmul.f32 %v1190, %v1324
  %v1336 = vmul.f32 %v1195, %v1324
  %v1337 = vmul.f32 %v1198, %v1324
  %v1338 = vmul.f32 %v1203, %v1324
  %v1339 = vmul.f32 %v1206, %v1324
  %v1340 = vmul.f32 %v1211, %v1324
  %v1341 = vmul.f32 %v1214, %v1324
  %v1343 = vlaneseq
  %v1344 = vshrl.u32 %v1343, 7
  %v1345 = vsub.s32 0, %v1344
  %v1346 = vrot.slane %v1319, %v1345
  %v1348 = vadd.f32 %v1326, %v1346
  %v1349 = vadd.f32 %v1327, %v1346
  %v1350 = vadd.f32 %v1328, %v1346
  %v1351 = vadd.f32 %v1329, %v1346
  %v1352 = vadd.f32 %v1330, %v1346
  %v1353 = vadd.f32 %v1331, %v1346
  %v1354 = vadd.f32 %v1332, %v1346
  %v1355 = vadd.f32 %v1333, %v1346
  %v1356 = vadd.f32 %v1334, %v1346
  %v1357 = vadd.f32 %v1335, %v1346
  %v1358 = vadd.f32 %v1336, %v1346
  %v1359 = vadd.f32 %v1337, %v1346
  %v1360 = vadd.f32 %v1338, %v1346
  %v1361 = vadd.f32 %v1339, %v1346
  %v1362 = vadd.f32 %v1340, %v1346
  %v1363 = vadd.f32 %v1341, %v1346
  %vm1364 = vcmp.ge.f32.partialorder %v1348, 0.0
  %vm1365 = vcmp.ge.f32.partialorder %v1349, 0.0
  %vm1366 = vcmp.ge.f32.partialorder %v1350, 0.0
  %vm1367 = vcmp.ge.f32.partialorder %v1351, 0.0
  %vm1368 = vcmp.ge.f32.partialorder %v1352, 0.0
  %vm1369 = vcmp.ge.f32.partialorder %v1353, 0.0
  %vm1370 = vcmp.ge.f32.partialorder %v1354, 0.0
  %vm1371 = vcmp.ge.f32.partialorder %v1355, 0.0
  %vm1372 = vcmp.ge.f32.partialorder %v1356, 0.0
  %vm1373 = vcmp.ge.f32.partialorder %v1357, 0.0
  %vm1374 = vcmp.ge.f32.partialorder %v1358, 0.0
  %vm1375 = vcmp.ge.f32.partialorder %v1359, 0.0
  %vm1376 = vcmp.ge.f32.partialorder %v1360, 0.0
  %vm1377 = vcmp.ge.f32.partialorder %v1361, 0.0
  %vm1378 = vcmp.ge.f32.partialorder %v1362, 0.0
  %vm1379 = vcmp.ge.f32.partialorder %v1363, 0.0
  %v1380 = vmul.f32 %v1348, 0.01
  %v1381 = vmul.f32 %v1349, 0.01
  %v1382 = vmul.f32 %v1350, 0.01
  %v1383 = vmul.f32 %v1351, 0.01
  %v1384 = vmul.f32 %v1352, 0.01
  %v1385 = vmul.f32 %v1353, 0.01
  %v1386 = vmul.f32 %v1354, 0.01
  %v1387 = vmul.f32 %v1355, 0.01
  %v1388 = vmul.f32 %v1356, 0.01
  %v1389 = vmul.f32 %v1357, 0.01
  %v1390 = vmul.f32 %v1358, 0.01
  %v1391 = vmul.f32 %v1359, 0.01
  %v1392 = vmul.f32 %v1360, 0.01
  %v1393 = vmul.f32 %v1361, 0.01
  %v1394 = vmul.f32 %v1362, 0.01
  %v1395 = vmul.f32 %v1363, 0.01
  %v1396 = vsel %vm1364, %v1348, %v1380
  %v1397 = vsel %vm1365, %v1349, %v1381
  %v1398 = vsel %vm1366, %v1350, %v1382
  %v1399 = vsel %vm1367, %v1351, %v1383
  %v1400 = vsel %vm1368, %v1352, %v1384
  %v1401 = vsel %vm1369, %v1353, %v1385
  %v1402 = vsel %vm1370, %v1354, %v1386
  %v1403 = vsel %vm1371, %v1355, %v1387
  %v1404 = vsel %vm1372, %v1356, %v1388
  %v1405 = vsel %vm1373, %v1357, %v1389
  %v1406 = vsel %vm1374, %v1358, %v1390
  %v1407 = vsel %vm1375, %v1359, %v1391
  %v1408 = vsel %vm1376, %v1360, %v1392
  %v1409 = vsel %vm1377, %v1361, %v1393
  %v1410 = vsel %vm1378, %v1362, %v1394
  %v1411 = vsel %vm1379, %v1363, %v1395
  %1412 = vst.msk [vmem:[%s7] sm:$0xff] %vm1219, %v1396
  %1413 = vst.msk [vmem:[%s7 + $0x8] sm:$0xff] %vm1219, %v1397
  %1414 = vst.msk [vmem:[%s7 + $0x10] sm:$0xff] %vm1219, %v1398
  %1415 = vst.msk [vmem:[%s7 + $0x18] sm:$0xff] %vm1219, %v1399
  %1416 = vst.msk [vmem:[%s7 + $0x20] sm:$0xff] %vm1219, %v1400
  %1417 = vst.msk [vmem:[%s7 + $0x28] sm:$0xff] %vm1219, %v1401
  %1418 = vst.msk [vmem:[%s7 + $0x30] sm:$0xff] %vm1219, %v1402
  %1419 = vst.msk [vmem:[%s7 + $0x38] sm:$0xff] %vm1219, %v1403
  %1420 = vst.msk [vmem:[%s7 + $0x40] sm:$0xff] %vm1219, %v1404
  %1421 = vst.msk [vmem:[%s7 + $0x48] sm:$0xff] %vm1219, %v1405
  %1422 = vst.msk [vmem:[%s7 + $0x50] sm:$0xff] %vm1219, %v1406
  %1423 = vst.msk [vmem:[%s7 + $0x58] sm:$0xff] %vm1219, %v1407
  %1424 = vst.msk [vmem:[%s7 + $0x60] sm:$0xff] %vm1219, %v1408
  %1425 = vst.msk [vmem:[%s7 + $0x68] sm:$0xff] %vm1219, %v1409
  %1426 = vst.msk [vmem:[%s7 + $0x70] sm:$0xff] %vm1219, %v1410
  %1427 = vst.msk [vmem:[%s7 + $0x78] sm:$0xff] %vm1219, %v1411
  // Predicated region
  $region30: #{inception_forward.11} parent=0 // pred_check
    _
  $region31: #{inception_forward.11} parent=0 // pred_check_branch
    %1429 = sbr.rel (0) target = $region33
  $region32: #{inception_forward.11} parent=0 // pred_region
    _
  $region33: #{inception_forward.11} parent=0 // pred_fallthru
    _
  // Predicated region
  $region34: #{inception_forward.11} parent=0 // pred_check
    _
  $region35: #{inception_forward.11} parent=0 // pred_check_branch
    %1431 = sbr.rel (0) target = $region37
  $region36: #{inception_forward.11} parent=0 // pred_region
    _
  $region37: #{inception_forward.11} parent=0 // pred_fallthru
    _

</llo_original>
